<compile_context>
chip_gen: v5e
topology: v5e:2x2
jax: 0.10.0
libtpu: 0.0.40
codegen_flags: <defaults>
</compile_context>

<pallas_src>
import functools

import jax
import jax.numpy as jnp
from jax import lax
from jax.experimental import pallas as pl
from jax.experimental.pallas import tpu as pltpu

LN_EPS = 1e-5
BN_EPS = 1e-5
ROW_TILE = 512                      # feedback: 512+ row tiles ~85% of HBM roofline
VMEM_LIMIT = 32 * 1024 * 1024       # explicit scoped-VMEM budget; tiles here are tiny
_SQRT_2_OVER_PI = 0.7978845608028654
_HP = lax.Precision.HIGHEST


def _gelu(x):
    # tanh-approximate GELU (PyTorch nn.GELU default is the erf form; the tanh
    # form maps directly onto the EUP and is used consistently in both paths).
    return 0.5 * x * (1.0 + jnp.tanh(_SQRT_2_OVER_PI * (x + 0.044715 * x * x * x)))


# ----------------------------------------------------------------------------
# Pallas kernels
# ----------------------------------------------------------------------------
def _linear_kernel(x_ref, w_ref, b_ref, o_ref, *, act):
    y = jnp.dot(x_ref[...], w_ref[...], preferred_element_type=jnp.float32)
    y = y + b_ref[...]
    if act == "gelu":
        y = _gelu(y)
    o_ref[...] = y.astype(o_ref.dtype)


def _linear_residual_kernel(x_ref, r_ref, w_ref, b_ref, o_ref):
    y = jnp.dot(x_ref[...], w_ref[...], preferred_element_type=jnp.float32)
    o_ref[...] = (r_ref[...] + y + b_ref[...]).astype(o_ref.dtype)


def _layernorm_kernel(x_ref, g_ref, b_ref, o_ref):
    x = x_ref[...].astype(jnp.float32)
    mean = jnp.mean(x, axis=-1, keepdims=True)
    # one-pass variance (E[x^2] - mean^2), clamped against cancellation.
    var = jnp.maximum(jnp.mean(x * x, axis=-1, keepdims=True) - mean * mean, 0.0)
    xn = (x - mean) * lax.rsqrt(var + LN_EPS)
    o_ref[...] = (xn * g_ref[...] + b_ref[...]).astype(o_ref.dtype)


def _ln_mlp_residual_kernel(x_ref, g_ref, b_ref, w1_ref, b1_ref, w2_ref, b2_ref,
                            o_ref):
    # out = x + fc2(gelu(fc1(LN(x)))) fully fused in VMEM.
    x = x_ref[...].astype(jnp.float32)
    mean = jnp.mean(x, axis=-1, keepdims=True)
    var = jnp.maximum(jnp.mean(x * x, axis=-1, keepdims=True) - mean * mean, 0.0)
    xn = (x - mean) * lax.rsqrt(var + LN_EPS) * g_ref[...] + b_ref[...]
    h = jnp.dot(xn, w1_ref[...], preferred_element_type=jnp.float32) + b1_ref[...]
    h = _gelu(h)
    y = jnp.dot(h, w2_ref[...], preferred_element_type=jnp.float32) + b2_ref[...]
    o_ref[...] = (x + y).astype(o_ref.dtype)


# ----------------------------------------------------------------------------
# Row-tiled pallas_call helper
# ----------------------------------------------------------------------------
def _row_tiled_call(kernel_fn, row_inputs, const_inputs, out_dim, *,
                    row_tile=ROW_TILE, cost=None):
    """Tile (N, K_i) row-wise operands over a 1-D 'parallel' grid.

    Small operands (weights/bias/gamma) are passed as full blocks and stay
    resident in VMEM across grid steps.  Trailing-row padding is only applied
    when N > row_tile and N % row_tile != 0 (a no-op for the demo shapes).
    """
    n = row_inputs[0].shape[0]
    if n <= row_tile:
        tn, n_pad = n, n
    else:
        tn = row_tile
        n_pad = -(-n // tn) * tn
        if n_pad != n:
            row_inputs = [jnp.pad(a, ((0, n_pad - n), (0, 0))) for a in row_inputs]
    grid = (n_pad // tn,)

    in_specs = [pl.BlockSpec((tn, a.shape[1]), lambda i: (i, 0)) for a in row_inputs]
    in_specs += [pl.BlockSpec(a.shape, lambda i: (0, 0)) for a in const_inputs]

    out = pl.pallas_call(
        kernel_fn,
        out_shape=jax.ShapeDtypeStruct((n_pad, out_dim), jnp.float32),
        grid_spec=pltpu.PrefetchScalarGridSpec(
            num_scalar_prefetch=0,
            grid=grid,
            in_specs=in_specs,
            out_specs=pl.BlockSpec((tn, out_dim), lambda i: (i, 0)),
        ),
        compiler_params=pltpu.CompilerParams(
            dimension_semantics=("parallel",),
            vmem_limit_bytes=VMEM_LIMIT,
        ),
        cost_estimate=cost,
    )(*row_inputs, *const_inputs)
    return out[:n]


# ----------------------------------------------------------------------------
# Pallas-backed ops
# ----------------------------------------------------------------------------
def p_linear(x, w, b, act="none", row_tile=ROW_TILE):
    k, m = w.shape
    lead = x.shape[:-1]
    x2 = x.reshape(-1, k)
    n = x2.shape[0]
    cost = pl.CostEstimate(flops=2 * n * k * m,
                           transcendentals=(n * m if act == "gelu" else 0),
                           bytes_accessed=4 * (n * k + k * m + n * m + m))
    out = _row_tiled_call(functools.partial(_linear_kernel, act=act),
                          [x2], [w, b.reshape(1, m)], m,
                          row_tile=row_tile, cost=cost)
    return out.reshape(lead + (m,))


def p_linear_residual(x, res, w, b, row_tile=ROW_TILE):
    k, m = w.shape
    lead = x.shape[:-1]
    x2 = x.reshape(-1, k)
    r2 = res.reshape(-1, m)
    n = x2.shape[0]
    cost = pl.CostEstimate(flops=2 * n * k * m, transcendentals=0,
                           bytes_accessed=4 * (n * k + n * m + k * m + n * m + m))
    out = _row_tiled_call(_linear_residual_kernel, [x2, r2],
                          [w, b.reshape(1, m)], m, row_tile=row_tile, cost=cost)
    return out.reshape(lead + (m,))


def p_layernorm(x, g, b, row_tile=ROW_TILE):
    c = x.shape[-1]
    lead = x.shape[:-1]
    x2 = x.reshape(-1, c)
    n = x2.shape[0]
    cost = pl.CostEstimate(flops=8 * n * c, transcendentals=n,
                           bytes_accessed=4 * (2 * n * c + 2 * c))
    out = _row_tiled_call(_layernorm_kernel, [x2],
                          [g.reshape(1, c), b.reshape(1, c)], c,
                          row_tile=row_tile, cost=cost)
    return out.reshape(lead + (c,))


def p_ln_mlp_residual(x, g, b, w1, b1, w2, b2, row_tile=ROW_TILE):
    c = x.shape[-1]
    hdim = w1.shape[1]
    lead = x.shape[:-1]
    x2 = x.reshape(-1, c)
    n = x2.shape[0]
    cost = pl.CostEstimate(flops=4 * n * c * hdim + 12 * n * c,
                           transcendentals=n * (hdim + 1),
                           bytes_accessed=4 * (2 * n * c + 2 * c * hdim + 3 * c + hdim))
    out = _row_tiled_call(
        _ln_mlp_residual_kernel, [x2],
        [g.reshape(1, c), b.reshape(1, c), w1, b1.reshape(1, hdim), w2,
         b2.reshape(1, c)],
        c, row_tile=row_tile, cost=cost)
    return out.reshape(lead + (c,))


PALLAS_OPS = dict(linear=p_linear, linear_residual=p_linear_residual,
                  layernorm=p_layernorm, ln_mlp_residual=p_ln_mlp_residual)


# ----------------------------------------------------------------------------
# Pure-jnp reference ops (independent numerics; used only for verification)
# ----------------------------------------------------------------------------
def _ref_linear(x, w, b, act="none"):
    y = jnp.matmul(x, w, precision=_HP) + b
    return _gelu(y) if act == "gelu" else y


def _ref_linear_residual(x, res, w, b):
    return res + jnp.matmul(x, w, precision=_HP) + b


def _ref_layernorm(x, g, b):
    m = jnp.mean(x, axis=-1, keepdims=True)
    v = jnp.mean((x - m) ** 2, axis=-1, keepdims=True)   # two-pass (independent)
    return (x - m) / jnp.sqrt(v + LN_EPS) * g + b


def _ref_ln_mlp_residual(x, g, b, w1, b1, w2, b2):
    h = _ref_linear(_ref_layernorm(x, g, b), w1, b1, act="gelu")
    return x + jnp.matmul(h, w2, precision=_HP) + b2


REF_OPS = dict(linear=_ref_linear, linear_residual=_ref_linear_residual,
               layernorm=_ref_layernorm, ln_mlp_residual=_ref_ln_mlp_residual)


# ----------------------------------------------------------------------------
# Model pieces (structure shared between the Pallas and reference paths)
# ----------------------------------------------------------------------------
def _bn_fold(gamma, beta, mean, var):
    scale = gamma / jnp.sqrt(var + BN_EPS)
    return scale, beta - mean * scale


def patch_embed_pallas(x, p):
    """Conv3d(1,E/2,(3,1,1))+BN+GELU+Conv3d(E/2,E,(1,3,3))+BN, eval-mode BN folded."""
    B, T, H, W = x.shape
    e2 = p["pe_w1"].shape[-1]
    e = p["pe_w2"].shape[-1]
    # proj1: temporal k=3 conv on a single input channel -> (N,3)x(3,E/2) matmul,
    # with BN1 folded into the weights and GELU fused in the kernel epilogue.
    s1, t1 = _bn_fold(p["pe_bn1_gamma"], p["pe_bn1_beta"],
                      p["pe_bn1_mean"], p["pe_bn1_var"])
    w1 = p["pe_w1"] * s1[None, :]
    b1 = p["pe_b1"] * s1 + t1
    xp = jnp.pad(x, ((0, 0), (1, 1), (0, 0), (0, 0)))
    taps = jnp.stack([xp[:, kt:kt + T] for kt in range(3)], axis=-1)   # (B,T,H,W,3)
    y = p_linear(taps, w1, b1, act="gelu")                             # (B,T,H,W,E/2)

    # proj2: 1x3x3 spatial conv; im2col (9 taps) in glue + fused matmul/BN2 epilogue.
    # TODO(synk): for large Cin the im2col should be fused into the kernel as 9
    # accumulated (tn,Cin)x(Cin,Cout) matmuls over a halo block; at Cin=E/2=16
    # and 8x8 frames the permutator blocks dominate, not this conv.
    s2, t2 = _bn_fold(p["pe_bn2_gamma"], p["pe_bn2_beta"],
                      p["pe_bn2_mean"], p["pe_bn2_var"])
    w2 = p["pe_w2"].reshape(9 * e2, e) * s2[None, :]
    b2 = p["pe_b2"] * s2 + t2
    yp = jnp.pad(y, ((0, 0), (0, 0), (1, 1), (1, 1), (0, 0)))
    taps2 = jnp.concatenate(
        [yp[:, :, kh:kh + H, kw:kw + W, :] for kh in range(3) for kw in range(3)],
        axis=-1)
    return p_linear(taps2, w2, b2)                                     # (B,T,H,W,E)


def patch_embed_ref(x, p):
    B, T, H, W = x.shape
    e2 = p["pe_w1"].shape[-1]
    e = p["pe_w2"].shape[-1]

    def bn(z, g, b, m, v):
        return (z - m) / jnp.sqrt(v + BN_EPS) * g + b

    y = lax.conv_general_dilated(
        x.reshape(B, T, H * W, 1), p["pe_w1"].reshape(3, 1, 1, e2),
        window_strides=(1, 1), padding=((1, 1), (0, 0)),
        dimension_numbers=("NHWC", "HWIO", "NHWC"), precision=_HP)
    y = bn(y + p["pe_b1"], p["pe_bn1_gamma"], p["pe_bn1_beta"],
           p["pe_bn1_mean"], p["pe_bn1_var"])
    y = _gelu(y).reshape(B * T, H, W, e2)
    y = lax.conv_general_dilated(
        y, p["pe_w2"], window_strides=(1, 1), padding=((1, 1), (1, 1)),
        dimension_numbers=("NHWC", "HWIO", "NHWC"), precision=_HP)
    y = bn(y + p["pe_b2"], p["pe_bn2_gamma"], p["pe_bn2_beta"],
           p["pe_bn2_mean"], p["pe_bn2_var"])
    return y.reshape(B, T, H, W, e)


def spe_fc(xn, resid, bp, ops, segment_dim):
    B, T, H, W, C = xn.shape
    S = C // segment_dim
    t = xn.reshape(B, T, H, W, segment_dim, S)
    t = jnp.transpose(t, (0, 4, 2, 3, 1, 5)).reshape(B, segment_dim, H, W, T * S)
    t = ops["linear"](t, bp["spe_mlp_t_w"], bp["spe_mlp_t_b"])
    t = t.reshape(B, segment_dim, H, W, T, S)
    t = jnp.transpose(t, (0, 4, 2, 3, 1, 5)).reshape(B, T, H, W, C)
    # proj + residual fused in a single kernel
    return ops["linear_residual"](t, resid, bp["spe_proj_w"], bp["spe_proj_b"])


def spa_fc(xn, resid, bp, ops, segment_dim, tmp):
    B, T, H, W, C = xn.shape
    S = C // segment_dim
    G = H * W // tmp
    # h branch
    h = jnp.swapaxes(xn, 3, 2).reshape(B, T, G, tmp, segment_dim, S)
    h = jnp.transpose(h, (0, 1, 2, 4, 3, 5)).reshape(B, T, G, segment_dim, tmp * S)
    h = ops["linear"](h, bp["mlp_h_w"], bp["mlp_h_b"])
    h = h.reshape(B, T, G, segment_dim, tmp, S)
    h = jnp.transpose(h, (0, 1, 2, 4, 3, 5)).reshape(B, T, W, H, C)
    h = jnp.swapaxes(h, 3, 2)
    # w branch
    w = xn.reshape(B, T, G, tmp, segment_dim, S)
    w = jnp.transpose(w, (0, 1, 2, 4, 3, 5)).reshape(B, T, G, segment_dim, tmp * S)
    w = ops["linear"](w, bp["mlp_w_w"], bp["mlp_w_b"])
    w = w.reshape(B, T, G, segment_dim, tmp, S)
    w = jnp.transpose(w, (0, 1, 2, 4, 3, 5)).reshape(B, T, H, W, C)
    # c branch
    c = ops["linear"](xn, bp["mlp_c_w"], bp["mlp_c_b"])
    # re-weighting MLP on pooled features
    a = jnp.mean(h + w + c, axis=(1, 2, 3))                       # (B, C)
    a = ops["linear"](a, bp["rw_fc1_w"], bp["rw_fc1_b"], act="gelu")
    a = ops["linear"](a, bp["rw_fc2_w"], bp["rw_fc2_b"])
    a = jax.nn.softmax(jnp.transpose(a.reshape(B, C, 3), (2, 0, 1)), axis=0)
    mix = (h * a[0][:, None, None, None, :]
           + w * a[1][:, None, None, None, :]
           + c * a[2][:, None, None, None, :])
    # proj + residual fused
    return ops["linear_residual"](mix, resid, bp["spa_proj_w"], bp["spa_proj_b"])


def permutator_block(x, bp, ops, segment_dim, tmp):
    # xs = x + Spe_FC(LN(x))
    xs = spe_fc(ops["layernorm"](x, bp["s_norm1_g"], bp["s_norm1_b"]),
                x, bp, ops, segment_dim)
    # x = x + Spa_FC(LN(xs))   (residual base is the block input, as in the spec)
    x = spa_fc(ops["layernorm"](xs, bp["norm1_g"], bp["norm1_b"]),
               x, bp, ops, segment_dim, tmp)
    # x = x + MLP(LN(x))       (fused LN -> fc1 -> GELU -> fc2 -> +residual kernel)
    return ops["ln_mlp_residual"](x, bp["norm2_g"], bp["norm2_b"],
                                  bp["mlp_fc1_w"], bp["mlp_fc1_b"],
                                  bp["mlp_fc2_w"], bp["mlp_fc2_b"])


def ssmlp_forward(x, params, *, ops, patch_embed_fn, segment_dim, tmp):
    y = patch_embed_fn(x, params)                                  # (B,T,H,W,E)
    for bp in params["blocks"]:
        y = permutator_block(y, bp, ops, segment_dim, tmp)
    B, T, H, W, C = y.shape
    tokens = ops["layernorm"](y.reshape(B, T * H * W, C),
                              params["norm_g"], params["norm_b"])
    pooled = jnp.mean(tokens, axis=1)                              # (B, E)
    logits = ops["linear"](pooled, params["head_w"], params["head_b"])
    return pooled, logits


# ----------------------------------------------------------------------------
# Synthetic parameters
# ----------------------------------------------------------------------------
def init_params(key, *, band, patch, num_classes, layers, embed_dim, segment_dim):
    e = embed_dim
    e2 = e // 2
    s = e // segment_dim
    dim_spa = s * patch
    dim_spe = band * s
    hidden = e * 3        # mlp_ratio = 3
    it = iter(jax.random.split(key, 512))

    def nrm(shape, std):
        return std * jax.random.normal(next(it), shape, jnp.float32)

    def ln_pair(n):
        return (1.0 + 0.1 * jax.random.normal(next(it), (n,), jnp.float32),
                0.1 * jax.random.normal(next(it), (n,), jnp.float32))

    p = {
        "pe_w1": nrm((3, e2), 0.3),
        "pe_b1": nrm((e2,), 0.02),
        "pe_w2": nrm((3, 3, e2, e), (9 * e2) ** -0.5),
        "pe_b2": nrm((e,), 0.02),
    }
    for nm, n in (("bn1", e2), ("bn2", e)):
        p[f"pe_{nm}_gamma"] = 1.0 + 0.1 * jax.random.normal(next(it), (n,), jnp.float32)
        p[f"pe_{nm}_beta"] = 0.1 * jax.random.normal(next(it), (n,), jnp.float32)
        p[f"pe_{nm}_mean"] = 0.1 * jax.random.normal(next(it), (n,), jnp.float32)
        p[f"pe_{nm}_var"] = jax.random.uniform(next(it), (n,), jnp.float32, 0.5, 1.5)

    blocks = []
    for _ in range(layers):
        b = {}
        for nm in ("s_norm1", "norm1", "norm2"):
            b[f"{nm}_g"], b[f"{nm}_b"] = ln_pair(e)
        b["spe_mlp_t_w"] = nrm((dim_spe, dim_spe), 0.02)
        b["spe_mlp_t_b"] = nrm((dim_spe,), 0.02)
        b["spe_proj_w"] = nrm((e, e), 0.02)
        b["spe_proj_b"] = nrm((e,), 0.02)
        b["mlp_h_w"] = nrm((dim_spa, dim_spa), 0.02)
        b["mlp_h_b"] = nrm((dim_spa,), 0.02)
        b["mlp_w_w"] = nrm((dim_spa, dim_spa), 0.02)
        b["mlp_w_b"] = nrm((dim_spa,), 0.02)
        b["mlp_c_w"] = nrm((e, e), 0.02)
        b["mlp_c_b"] = nrm((e,), 0.02)
        b["rw_fc1_w"] = nrm((e, e // 4), 0.02)
        b["rw_fc1_b"] = nrm((e // 4,), 0.02)
        b["rw_fc2_w"] = nrm((e // 4, 3 * e), 0.02)
        b["rw_fc2_b"] = nrm((3 * e,), 0.02)
        b["spa_proj_w"] = nrm((e, e), 0.02)
        b["spa_proj_b"] = nrm((e,), 0.02)
        b["mlp_fc1_w"] = nrm((e, hidden), 0.02)
        b["mlp_fc1_b"] = nrm((hidden,), 0.02)
        b["mlp_fc2_w"] = nrm((hidden, e), 0.02)
        b["mlp_fc2_b"] = nrm((e,), 0.02)
        blocks.append(b)
    p["blocks"] = blocks
    p["norm_g"], p["norm_b"] = ln_pair(e)
    p["head_w"] = nrm((e, num_classes), 0.02)
    p["head_b"] = nrm((num_classes,), 0.02)
    return p


# ----------------------------------------------------------------------------
if __name__ == "__main__":
    # Small shapes consistent with SSMLP(Patch, BAND, CLASSES_NUM, layers,
    # embed_dims, segment_dim) applied to a (B, BAND, H, W) hyperspectral cube.
    B, BAND, H, W = 2, 8, 8, 8
    PATCH = 4
    NUM_CLASSES = 10
    LAYERS = 2
    EMBED_DIM = 32
    SEGMENT_DIM = 8

    key = jax.random.PRNGKey(0)
    kx, kp = jax.random.split(key)
    x = jax.random.normal(kx, (B, BAND, H, W), dtype=jnp.float32)
    params = init_params(kp, band=BAND, patch=PATCH, num_classes=NUM_CLASSES,
                         layers=LAYERS, embed_dim=EMBED_DIM,
                         segment_dim=SEGMENT_DIM)

    pallas_forward = jax.jit(functools.partial(
        ssmlp_forward, ops=PALLAS_OPS, patch_embed_fn=patch_embed_pallas,
        segment_dim=SEGMENT_DIM, tmp=PATCH))
    ref_forward = jax.jit(functools.partial(
        ssmlp_forward, ops=REF_OPS, patch_embed_fn=patch_embed_ref,
        segment_dim=SEGMENT_DIM, tmp=PATCH))

    pooled, logits = jax.block_until_ready(pallas_forward(x, params))
    pooled_ref, logits_ref = jax.block_until_ready(ref_forward(x, params))

    assert pooled.shape == (B, EMBED_DIM), pooled.shape
    assert logits.shape == (B, NUM_CLASSES), logits.shape

    tol_p = 2e-3 * (1.0 + float(jnp.max(jnp.abs(pooled_ref))))
    tol_l = 2e-3 * (1.0 + float(jnp.max(jnp.abs(logits_ref))))
    err_p = float(jnp.max(jnp.abs(pooled - pooled_ref)))
    err_l = float(jnp.max(jnp.abs(logits - logits_ref)))
    assert err_p < tol_p and err_l < tol_l, (err_p, err_l)

    print("KERNEL_OK")
</pallas_src>

<mosaic_0001>
module attributes {stable_mosaic.version = 11 : i64} {
  func.func @_linear_kernel(%arg0: i32, %arg1: memref<512x3xf32, #tpu.memory_space<vmem>>, %arg2: memref<3x16xf32, #tpu.memory_space<vmem>>, %arg3: memref<1x16xf32, #tpu.memory_space<vmem>>, %arg4: memref<512x16xf32, #tpu.memory_space<vmem>>) attributes {dimension_semantics = [#tpu.dimension_semantics<parallel>], iteration_bounds = array<i64: 2>, scalar_prefetch = 0 : i64, scratch_operands = 0 : i64, tpu.core_type = #tpu.core_type<tc>, window_params = [{transform_indices = @transform_0, window_bounds = array<i64: 512, 3>}, {pipeline_mode = #tpu.pipeline_mode<synchronous>, transform_indices = @transform_1, window_bounds = array<i64: 3, 16>}, {pipeline_mode = #tpu.pipeline_mode<synchronous>, transform_indices = @transform_2, window_bounds = array<i64: 1, 16>}, {transform_indices = @transform_3, window_bounds = array<i64: 512, 16>}]} {
    %c0 = arith.constant 0 : index
    %c0_0 = arith.constant 0 : index
    %0 = vector.load %arg1[%c0, %c0_0] : memref<512x3xf32, #tpu.memory_space<vmem>>, vector<512x3xf32>
    %c0_1 = arith.constant 0 : index
    %c0_2 = arith.constant 0 : index
    %1 = vector.load %arg2[%c0_1, %c0_2] : memref<3x16xf32, #tpu.memory_space<vmem>>, vector<3x16xf32>
    %cst = arith.constant dense<0.000000e+00> : vector<512x16xf32>
    %2 = tpu.matmul %0, %1, %cst {dimension_numbers = #tpu.dot_dimension_numbers<[1], [0], [0], [1], [0, 0, 1, 1], [], []>} : vector<512x3xf32>, vector<3x16xf32>, vector<512x16xf32> -> vector<512x16xf32>
    %c0_3 = arith.constant 0 : index
    %c0_4 = arith.constant 0 : index
    %3 = vector.load %arg3[%c0_3, %c0_4] : memref<1x16xf32, #tpu.memory_space<vmem>>, vector<1x16xf32>
    %4 = vector.broadcast %3 : vector<1x16xf32> to vector<512x16xf32>
    %5 = arith.addf %2, %4 : vector<512x16xf32>
    %cst_5 = arith.constant 5.000000e-01 : f32
    %6 = vector.broadcast %cst_5 : f32 to vector<512x16xf32>
    %7 = arith.mulf %6, %5 : vector<512x16xf32>
    %cst_6 = arith.constant 4.471500e-02 : f32
    %8 = vector.broadcast %cst_6 : f32 to vector<512x16xf32>
    %9 = arith.mulf %8, %5 : vector<512x16xf32>
    %10 = arith.mulf %9, %5 : vector<512x16xf32>
    %11 = arith.mulf %10, %5 : vector<512x16xf32>
    %12 = arith.addf %5, %11 : vector<512x16xf32>
    %cst_7 = arith.constant 0.797884583 : f32
    %13 = vector.broadcast %cst_7 : f32 to vector<512x16xf32>
    %14 = arith.mulf %13, %12 : vector<512x16xf32>
    %15 = math.tanh %14 : vector<512x16xf32>
    %cst_8 = arith.constant 1.000000e+00 : f32
    %16 = vector.broadcast %cst_8 : f32 to vector<512x16xf32>
    %17 = arith.addf %16, %15 : vector<512x16xf32>
    %18 = arith.mulf %7, %17 : vector<512x16xf32>
    %c0_9 = arith.constant 0 : index
    %c0_10 = arith.constant 0 : index
    %19 = vector.load %arg4[%c0_9, %c0_10] : memref<512x16xf32, #tpu.memory_space<vmem>>, vector<512x16xf32>
    tpu.vector_store %arg4[%c0_9, %c0_10], %18 {strides = array<i32>} : memref<512x16xf32, #tpu.memory_space<vmem>>, vector<512x16xf32>,
    return
  }
  func.func @transform_0(%arg0: i32) -> (i32, i32) {
    %c0_i32 = arith.constant 0 : i32
    %c0_i32_0 = arith.constant 0 : i32
    return %arg0, %c0_i32 : i32, i32
  }
  func.func @transform_1(%arg0: i32) -> (i32, i32) {
    %c0_i32 = arith.constant 0 : i32
    %c0_i32_0 = arith.constant 0 : i32
    %c0_i32_1 = arith.constant 0 : i32
    return %c0_i32, %c0_i32_0 : i32, i32
  }
  func.func @transform_2(%arg0: i32) -> (i32, i32) {
    %c0_i32 = arith.constant 0 : i32
    %c0_i32_0 = arith.constant 0 : i32
    %c0_i32_1 = arith.constant 0 : i32
    return %c0_i32, %c0_i32_0 : i32, i32
  }
  func.func @transform_3(%arg0: i32) -> (i32, i32) {
    %c0_i32 = arith.constant 0 : i32
    %c0_i32_0 = arith.constant 0 : i32
    return %arg0, %c0_i32 : i32, i32
  }
}

module attributes {stable_mosaic.version = 11 : i64} {
  func.func @_linear_kernel(%arg0: i32, %arg1: memref<512x144xf32, #tpu.memory_space<vmem>>, %arg2: memref<144x32xf32, #tpu.memory_space<vmem>>, %arg3: memref<1x32xf32, #tpu.memory_space<vmem>>, %arg4: memref<512x32xf32, #tpu.memory_space<vmem>>) attributes {dimension_semantics = [#tpu.dimension_semantics<parallel>], iteration_bounds = array<i64: 2>, scalar_prefetch = 0 : i64, scratch_operands = 0 : i64, tpu.core_type = #tpu.core_type<tc>, window_params = [{transform_indices = @transform_0, window_bounds = array<i64: 512, 144>}, {pipeline_mode = #tpu.pipeline_mode<synchronous>, transform_indices = @transform_1, window_bounds = array<i64: 144, 32>}, {pipeline_mode = #tpu.pipeline_mode<synchronous>, transform_indices = @transform_2, window_bounds = array<i64: 1, 32>}, {transform_indices = @transform_3, window_bounds = array<i64: 512, 32>}]} {
    %c0 = arith.constant 0 : index
    %c0_0 = arith.constant 0 : index
    %0 = vector.load %arg1[%c0, %c0_0] : memref<512x144xf32, #tpu.memory_space<vmem>>, vector<512x144xf32>
    %c0_1 = arith.constant 0 : index
    %c0_2 = arith.constant 0 : index
    %1 = vector.load %arg2[%c0_1, %c0_2] : memref<144x32xf32, #tpu.memory_space<vmem>>, vector<144x32xf32>
    %cst = arith.constant dense<0.000000e+00> : vector<512x32xf32>
    %2 = tpu.matmul %0, %1, %cst {dimension_numbers = #tpu.dot_dimension_numbers<[1], [0], [0], [1], [0, 0, 1, 1], [], []>} : vector<512x144xf32>, vector<144x32xf32>, vector<512x32xf32> -> vector<512x32xf32>
    %c0_3 = arith.constant 0 : index
    %c0_4 = arith.constant 0 : index
    %3 = vector.load %arg3[%c0_3, %c0_4] : memref<1x32xf32, #tpu.memory_space<vmem>>, vector<1x32xf32>
    %4 = vector.broadcast %3 : vector<1x32xf32> to vector<512x32xf32>
    %5 = arith.addf %2, %4 : vector<512x32xf32>
    %c0_5 = arith.constant 0 : index
    %c0_6 = arith.constant 0 : index
    %6 = vector.load %arg4[%c0_5, %c0_6] : memref<512x32xf32, #tpu.memory_space<vmem>>, vector<512x32xf32>
    tpu.vector_store %arg4[%c0_5, %c0_6], %5 {strides = array<i32>} : memref<512x32xf32, #tpu.memory_space<vmem>>, vector<512x32xf32>,
    return
  }
  func.func @transform_0(%arg0: i32) -> (i32, i32) {
    %c0_i32 = arith.constant 0 : i32
    %c0_i32_0 = arith.constant 0 : i32
    return %arg0, %c0_i32 : i32, i32
  }
  func.func @transform_1(%arg0: i32) -> (i32, i32) {
    %c0_i32 = arith.constant 0 : i32
    %c0_i32_0 = arith.constant 0 : i32
    %c0_i32_1 = arith.constant 0 : i32
    return %c0_i32, %c0_i32_0 : i32, i32
  }
  func.func @transform_2(%arg0: i32) -> (i32, i32) {
    %c0_i32 = arith.constant 0 : i32
    %c0_i32_0 = arith.constant 0 : i32
    %c0_i32_1 = arith.constant 0 : i32
    return %c0_i32, %c0_i32_0 : i32, i32
  }
  func.func @transform_3(%arg0: i32) -> (i32, i32) {
    %c0_i32 = arith.constant 0 : i32
    %c0_i32_0 = arith.constant 0 : i32
    return %arg0, %c0_i32 : i32, i32
  }
}

module attributes {stable_mosaic.version = 11 : i64} {
  func.func @_layernorm_kernel(%arg0: i32, %arg1: memref<512x32xf32, #tpu.memory_space<vmem>>, %arg2: memref<1x32xf32, #tpu.memory_space<vmem>>, %arg3: memref<1x32xf32, #tpu.memory_space<vmem>>, %arg4: memref<512x32xf32, #tpu.memory_space<vmem>>) attributes {dimension_semantics = [#tpu.dimension_semantics<parallel>], iteration_bounds = array<i64: 2>, scalar_prefetch = 0 : i64, scratch_operands = 0 : i64, tpu.core_type = #tpu.core_type<tc>, window_params = [{transform_indices = @transform_0, window_bounds = array<i64: 512, 32>}, {pipeline_mode = #tpu.pipeline_mode<synchronous>, transform_indices = @transform_1, window_bounds = array<i64: 1, 32>}, {pipeline_mode = #tpu.pipeline_mode<synchronous>, transform_indices = @transform_2, window_bounds = array<i64: 1, 32>}, {transform_indices = @transform_3, window_bounds = array<i64: 512, 32>}]} {
    %c0 = arith.constant 0 : index
    %c0_0 = arith.constant 0 : index
    %0 = vector.load %arg1[%c0, %c0_0] : memref<512x32xf32, #tpu.memory_space<vmem>>, vector<512x32xf32>
    %cst = arith.constant dense<0.000000e+00> : vector<512xf32>
    %1 = vector.multi_reduction <add>, %0, %cst [1] : vector<512x32xf32> to vector<512xf32>
    %2 = vector.shape_cast %1 : vector<512xf32> to vector<512x1xf32>
    %cst_1 = arith.constant 3.200000e+01 : f32
    %3 = vector.broadcast %cst_1 : f32 to vector<512x1xf32>
    %4 = arith.divf %2, %3 : vector<512x1xf32>
    %5 = arith.mulf %0, %0 : vector<512x32xf32>
    %cst_2 = arith.constant dense<0.000000e+00> : vector<512xf32>
    %6 = vector.multi_reduction <add>, %5, %cst_2 [1] : vector<512x32xf32> to vector<512xf32>
    %7 = vector.shape_cast %6 : vector<512xf32> to vector<512x1xf32>
    %cst_3 = arith.constant 3.200000e+01 : f32
    %8 = vector.broadcast %cst_3 : f32 to vector<512x1xf32>
    %9 = arith.divf %7, %8 : vector<512x1xf32>
    %10 = arith.mulf %4, %4 : vector<512x1xf32>
    %11 = arith.subf %9, %10 : vector<512x1xf32>
    %cst_4 = arith.constant 0.000000e+00 : f32
    %12 = vector.broadcast %cst_4 : f32 to vector<512x1xf32>
    %13 = arith.maximumf %11, %12 : vector<512x1xf32>
    %14 = vector.broadcast %4 : vector<512x1xf32> to vector<512x32xf32>
    %15 = arith.subf %0, %14 : vector<512x32xf32>
    %cst_5 = arith.constant 9.99999974E-6 : f32
    %16 = vector.broadcast %cst_5 : f32 to vector<512x1xf32>
    %17 = arith.addf %13, %16 : vector<512x1xf32>
    %18 = math.rsqrt %17 : vector<512x1xf32>
    %19 = vector.broadcast %18 : vector<512x1xf32> to vector<512x32xf32>
    %20 = arith.mulf %15, %19 : vector<512x32xf32>
    %c0_6 = arith.constant 0 : index
    %c0_7 = arith.constant 0 : index
    %21 = vector.load %arg2[%c0_6, %c0_7] : memref<1x32xf32, #tpu.memory_space<vmem>>, vector<1x32xf32>
    %22 = vector.broadcast %21 : vector<1x32xf32> to vector<512x32xf32>
    %23 = arith.mulf %20, %22 : vector<512x32xf32>
    %c0_8 = arith.constant 0 : index
    %c0_9 = arith.constant 0 : index
    %24 = vector.load %arg3[%c0_8, %c0_9] : memref<1x32xf32, #tpu.memory_space<vmem>>, vector<1x32xf32>
    %25 = vector.broadcast %24 : vector<1x32xf32> to vector<512x32xf32>
    %26 = arith.addf %23, %25 : vector<512x32xf32>
    %c0_10 = arith.constant 0 : index
    %c0_11 = arith.constant 0 : index
    %27 = vector.load %arg4[%c0_10, %c0_11] : memref<512x32xf32, #tpu.memory_space<vmem>>, vector<512x32xf32>
    tpu.vector_store %arg4[%c0_10, %c0_11], %26 {strides = array<i32>} : memref<512x32xf32, #tpu.memory_space<vmem>>, vector<512x32xf32>,
    return
  }
  func.func @transform_0(%arg0: i32) -> (i32, i32) {
    %c0_i32 = arith.constant 0 : i32
    %c0_i32_0 = arith.constant 0 : i32
    return %arg0, %c0_i32 : i32, i32
  }
  func.func @transform_1(%arg0: i32) -> (i32, i32) {
    %c0_i32 = arith.constant 0 : i32
    %c0_i32_0 = arith.constant 0 : i32
    %c0_i32_1 = arith.constant 0 : i32
    return %c0_i32, %c0_i32_0 : i32, i32
  }
  func.func @transform_2(%arg0: i32) -> (i32, i32) {
    %c0_i32 = arith.constant 0 : i32
    %c0_i32_0 = arith.constant 0 : i32
    %c0_i32_1 = arith.constant 0 : i32
    return %c0_i32, %c0_i32_0 : i32, i32
  }
  func.func @transform_3(%arg0: i32) -> (i32, i32) {
    %c0_i32 = arith.constant 0 : i32
    %c0_i32_0 = arith.constant 0 : i32
    return %arg0, %c0_i32 : i32, i32
  }
}

module attributes {stable_mosaic.version = 11 : i64} {
  func.func @_linear_kernel(%arg0: i32, %arg1: memref<512x32xf32, #tpu.memory_space<vmem>>, %arg2: memref<32x32xf32, #tpu.memory_space<vmem>>, %arg3: memref<1x32xf32, #tpu.memory_space<vmem>>, %arg4: memref<512x32xf32, #tpu.memory_space<vmem>>) attributes {dimension_semantics = [#tpu.dimension_semantics<parallel>], iteration_bounds = array<i64: 2>, scalar_prefetch = 0 : i64, scratch_operands = 0 : i64, tpu.core_type = #tpu.core_type<tc>, window_params = [{transform_indices = @transform_0, window_bounds = array<i64: 512, 32>}, {pipeline_mode = #tpu.pipeline_mode<synchronous>, transform_indices = @transform_1, window_bounds = array<i64: 32, 32>}, {pipeline_mode = #tpu.pipeline_mode<synchronous>, transform_indices = @transform_2, window_bounds = array<i64: 1, 32>}, {transform_indices = @transform_3, window_bounds = array<i64: 512, 32>}]} {
    %c0 = arith.constant 0 : index
    %c0_0 = arith.constant 0 : index
    %0 = vector.load %arg1[%c0, %c0_0] : memref<512x32xf32, #tpu.memory_space<vmem>>, vector<512x32xf32>
    %c0_1 = arith.constant 0 : index
    %c0_2 = arith.constant 0 : index
    %1 = vector.load %arg2[%c0_1, %c0_2] : memref<32x32xf32, #tpu.memory_space<vmem>>, vector<32x32xf32>
    %cst = arith.constant dense<0.000000e+00> : vector<512x32xf32>
    %2 = tpu.matmul %0, %1, %cst {dimension_numbers = #tpu.dot_dimension_numbers<[1], [0], [0], [1], [0, 0, 1, 1], [], []>} : vector<512x32xf32>, vector<32x32xf32>, vector<512x32xf32> -> vector<512x32xf32>
    %c0_3 = arith.constant 0 : index
    %c0_4 = arith.constant 0 : index
    %3 = vector.load %arg3[%c0_3, %c0_4] : memref<1x32xf32, #tpu.memory_space<vmem>>, vector<1x32xf32>
    %4 = vector.broadcast %3 : vector<1x32xf32> to vector<512x32xf32>
    %5 = arith.addf %2, %4 : vector<512x32xf32>
    %c0_5 = arith.constant 0 : index
    %c0_6 = arith.constant 0 : index
    %6 = vector.load %arg4[%c0_5, %c0_6] : memref<512x32xf32, #tpu.memory_space<vmem>>, vector<512x32xf32>
    tpu.vector_store %arg4[%c0_5, %c0_6], %5 {strides = array<i32>} : memref<512x32xf32, #tpu.memory_space<vmem>>, vector<512x32xf32>,
    return
  }
  func.func @transform_0(%arg0: i32) -> (i32, i32) {
    %c0_i32 = arith.constant 0 : i32
    %c0_i32_0 = arith.constant 0 : i32
    return %arg0, %c0_i32 : i32, i32
  }
  func.func @transform_1(%arg0: i32) -> (i32, i32) {
    %c0_i32 = arith.constant 0 : i32
    %c0_i32_0 = arith.constant 0 : i32
    %c0_i32_1 = arith.constant 0 : i32
    return %c0_i32, %c0_i32_0 : i32, i32
  }
  func.func @transform_2(%arg0: i32) -> (i32, i32) {
    %c0_i32 = arith.constant 0 : i32
    %c0_i32_0 = arith.constant 0 : i32
    %c0_i32_1 = arith.constant 0 : i32
    return %c0_i32, %c0_i32_0 : i32, i32
  }
  func.func @transform_3(%arg0: i32) -> (i32, i32) {
    %c0_i32 = arith.constant 0 : i32
    %c0_i32_0 = arith.constant 0 : i32
    return %arg0, %c0_i32 : i32, i32
  }
}

module attributes {stable_mosaic.version = 11 : i64} {
  func.func @_linear_residual_kernel(%arg0: i32, %arg1: memref<512x32xf32, #tpu.memory_space<vmem>>, %arg2: memref<512x32xf32, #tpu.memory_space<vmem>>, %arg3: memref<32x32xf32, #tpu.memory_space<vmem>>, %arg4: memref<1x32xf32, #tpu.memory_space<vmem>>, %arg5: memref<512x32xf32, #tpu.memory_space<vmem>>) attributes {dimension_semantics = [#tpu.dimension_semantics<parallel>], iteration_bounds = array<i64: 2>, scalar_prefetch = 0 : i64, scratch_operands = 0 : i64, tpu.core_type = #tpu.core_type<tc>, window_params = [{transform_indices = @transform_0, window_bounds = array<i64: 512, 32>}, {transform_indices = @transform_1, window_bounds = array<i64: 512, 32>}, {pipeline_mode = #tpu.pipeline_mode<synchronous>, transform_indices = @transform_2, window_bounds = array<i64: 32, 32>}, {pipeline_mode = #tpu.pipeline_mode<synchronous>, transform_indices = @transform_3, window_bounds = array<i64: 1, 32>}, {transform_indices = @transform_4, window_bounds = array<i64: 512, 32>}]} {
    %c0 = arith.constant 0 : index
    %c0_0 = arith.constant 0 : index
    %0 = vector.load %arg1[%c0, %c0_0] : memref<512x32xf32, #tpu.memory_space<vmem>>, vector<512x32xf32>
    %c0_1 = arith.constant 0 : index
    %c0_2 = arith.constant 0 : index
    %1 = vector.load %arg3[%c0_1, %c0_2] : memref<32x32xf32, #tpu.memory_space<vmem>>, vector<32x32xf32>
    %cst = arith.constant dense<0.000000e+00> : vector<512x32xf32>
    %2 = tpu.matmul %0, %1, %cst {dimension_numbers = #tpu.dot_dimension_numbers<[1], [0], [0], [1], [0, 0, 1, 1], [], []>} : vector<512x32xf32>, vector<32x32xf32>, vector<512x32xf32> -> vector<512x32xf32>
    %c0_3 = arith.constant 0 : index
    %c0_4 = arith.constant 0 : index
    %3 = vector.load %arg2[%c0_3, %c0_4] : memref<512x32xf32, #tpu.memory_space<vmem>>, vector<512x32xf32>
    %4 = arith.addf %3, %2 : vector<512x32xf32>
    %c0_5 = arith.constant 0 : index
    %c0_6 = arith.constant 0 : index
    %5 = vector.load %arg4[%c0_5, %c0_6] : memref<1x32xf32, #tpu.memory_space<vmem>>, vector<1x32xf32>
    %6 = vector.broadcast %5 : vector<1x32xf32> to vector<512x32xf32>
    %7 = arith.addf %4, %6 : vector<512x32xf32>
    %c0_7 = arith.constant 0 : index
    %c0_8 = arith.constant 0 : index
    %8 = vector.load %arg5[%c0_7, %c0_8] : memref<512x32xf32, #tpu.memory_space<vmem>>, vector<512x32xf32>
    tpu.vector_store %arg5[%c0_7, %c0_8], %7 {strides = array<i32>} : memref<512x32xf32, #tpu.memory_space<vmem>>, vector<512x32xf32>,
    return
  }
  func.func @transform_0(%arg0: i32) -> (i32, i32) {
    %c0_i32 = arith.constant 0 : i32
    %c0_i32_0 = arith.constant 0 : i32
    return %arg0, %c0_i32 : i32, i32
  }
  func.func @transform_1(%arg0: i32) -> (i32, i32) {
    %c0_i32 = arith.constant 0 : i32
    %c0_i32_0 = arith.constant 0 : i32
    return %arg0, %c0_i32 : i32, i32
  }
  func.func @transform_2(%arg0: i32) -> (i32, i32) {
    %c0_i32 = arith.constant 0 : i32
    %c0_i32_0 = arith.constant 0 : i32
    %c0_i32_1 = arith.constant 0 : i32
    return %c0_i32, %c0_i32_0 : i32, i32
  }
  func.func @transform_3(%arg0: i32) -> (i32, i32) {
    %c0_i32 = arith.constant 0 : i32
    %c0_i32_0 = arith.constant 0 : i32
    %c0_i32_1 = arith.constant 0 : i32
    return %c0_i32, %c0_i32_0 : i32, i32
  }
  func.func @transform_4(%arg0: i32) -> (i32, i32) {
    %c0_i32 = arith.constant 0 : i32
    %c0_i32_0 = arith.constant 0 : i32
    return %arg0, %c0_i32 : i32, i32
  }
}

module attributes {stable_mosaic.version = 11 : i64} {
  func.func @_linear_kernel(%arg0: i32, %arg1: memref<512x16xf32, #tpu.memory_space<vmem>>, %arg2: memref<16x16xf32, #tpu.memory_space<vmem>>, %arg3: memref<1x16xf32, #tpu.memory_space<vmem>>, %arg4: memref<512x16xf32, #tpu.memory_space<vmem>>) attributes {dimension_semantics = [#tpu.dimension_semantics<parallel>], iteration_bounds = array<i64: 4>, scalar_prefetch = 0 : i64, scratch_operands = 0 : i64, tpu.core_type = #tpu.core_type<tc>, window_params = [{transform_indices = @transform_0, window_bounds = array<i64: 512, 16>}, {pipeline_mode = #tpu.pipeline_mode<synchronous>, transform_indices = @transform_1, window_bounds = array<i64: 16, 16>}, {pipeline_mode = #tpu.pipeline_mode<synchronous>, transform_indices = @transform_2, window_bounds = array<i64: 1, 16>}, {transform_indices = @transform_3, window_bounds = array<i64: 512, 16>}]} {
    %c0 = arith.constant 0 : index
    %c0_0 = arith.constant 0 : index
    %0 = vector.load %arg1[%c0, %c0_0] : memref<512x16xf32, #tpu.memory_space<vmem>>, vector<512x16xf32>
    %c0_1 = arith.constant 0 : index
    %c0_2 = arith.constant 0 : index
    %1 = vector.load %arg2[%c0_1, %c0_2] : memref<16x16xf32, #tpu.memory_space<vmem>>, vector<16x16xf32>
    %cst = arith.constant dense<0.000000e+00> : vector<512x16xf32>
    %2 = tpu.matmul %0, %1, %cst {dimension_numbers = #tpu.dot_dimension_numbers<[1], [0], [0], [1], [0, 0, 1, 1], [], []>} : vector<512x16xf32>, vector<16x16xf32>, vector<512x16xf32> -> vector<512x16xf32>
    %c0_3 = arith.constant 0 : index
    %c0_4 = arith.constant 0 : index
    %3 = vector.load %arg3[%c0_3, %c0_4] : memref<1x16xf32, #tpu.memory_space<vmem>>, vector<1x16xf32>
    %4 = vector.broadcast %3 : vector<1x16xf32> to vector<512x16xf32>
    %5 = arith.addf %2, %4 : vector<512x16xf32>
    %c0_5 = arith.constant 0 : index
    %c0_6 = arith.constant 0 : index
    %6 = vector.load %arg4[%c0_5, %c0_6] : memref<512x16xf32, #tpu.memory_space<vmem>>, vector<512x16xf32>
    tpu.vector_store %arg4[%c0_5, %c0_6], %5 {strides = array<i32>} : memref<512x16xf32, #tpu.memory_space<vmem>>, vector<512x16xf32>,
    return
  }
  func.func @transform_0(%arg0: i32) -> (i32, i32) {
    %c0_i32 = arith.constant 0 : i32
    %c0_i32_0 = arith.constant 0 : i32
    return %arg0, %c0_i32 : i32, i32
  }
  func.func @transform_1(%arg0: i32) -> (i32, i32) {
    %c0_i32 = arith.constant 0 : i32
    %c0_i32_0 = arith.constant 0 : i32
    %c0_i32_1 = arith.constant 0 : i32
    return %c0_i32, %c0_i32_0 : i32, i32
  }
  func.func @transform_2(%arg0: i32) -> (i32, i32) {
    %c0_i32 = arith.constant 0 : i32
    %c0_i32_0 = arith.constant 0 : i32
    %c0_i32_1 = arith.constant 0 : i32
    return %c0_i32, %c0_i32_0 : i32, i32
  }
  func.func @transform_3(%arg0: i32) -> (i32, i32) {
    %c0_i32 = arith.constant 0 : i32
    %c0_i32_0 = arith.constant 0 : i32
    return %arg0, %c0_i32 : i32, i32
  }
}

module attributes {stable_mosaic.version = 11 : i64} {
  func.func @_linear_kernel(%arg0: i32, %arg1: memref<2x32xf32, #tpu.memory_space<vmem>>, %arg2: memref<32x8xf32, #tpu.memory_space<vmem>>, %arg3: memref<1x8xf32, #tpu.memory_space<vmem>>, %arg4: memref<2x8xf32, #tpu.memory_space<vmem>>) attributes {dimension_semantics = [#tpu.dimension_semantics<parallel>], iteration_bounds = array<i64: 1>, scalar_prefetch = 0 : i64, scratch_operands = 0 : i64, tpu.core_type = #tpu.core_type<tc>, window_params = [{transform_indices = @transform_0, window_bounds = array<i64: 2, 32>}, {pipeline_mode = #tpu.pipeline_mode<synchronous>, transform_indices = @transform_1, window_bounds = array<i64: 32, 8>}, {pipeline_mode = #tpu.pipeline_mode<synchronous>, transform_indices = @transform_2, window_bounds = array<i64: 1, 8>}, {transform_indices = @transform_3, window_bounds = array<i64: 2, 8>}]} {
    %c0 = arith.constant 0 : index
    %c0_0 = arith.constant 0 : index
    %0 = vector.load %arg1[%c0, %c0_0] : memref<2x32xf32, #tpu.memory_space<vmem>>, vector<2x32xf32>
    %c0_1 = arith.constant 0 : index
    %c0_2 = arith.constant 0 : index
    %1 = vector.load %arg2[%c0_1, %c0_2] : memref<32x8xf32, #tpu.memory_space<vmem>>, vector<32x8xf32>
    %cst = arith.constant dense<0.000000e+00> : vector<2x8xf32>
    %2 = tpu.matmul %0, %1, %cst {dimension_numbers = #tpu.dot_dimension_numbers<[1], [0], [0], [1], [0, 0, 1, 1], [], []>} : vector<2x32xf32>, vector<32x8xf32>, vector<2x8xf32> -> vector<2x8xf32>
    %c0_3 = arith.constant 0 : index
    %c0_4 = arith.constant 0 : index
    %3 = vector.load %arg3[%c0_3, %c0_4] : memref<1x8xf32, #tpu.memory_space<vmem>>, vector<1x8xf32>
    %4 = vector.broadcast %3 : vector<1x8xf32> to vector<2x8xf32>
    %5 = arith.addf %2, %4 : vector<2x8xf32>
    %cst_5 = arith.constant 5.000000e-01 : f32
    %6 = vector.broadcast %cst_5 : f32 to vector<2x8xf32>
    %7 = arith.mulf %6, %5 : vector<2x8xf32>
    %cst_6 = arith.constant 4.471500e-02 : f32
    %8 = vector.broadcast %cst_6 : f32 to vector<2x8xf32>
    %9 = arith.mulf %8, %5 : vector<2x8xf32>
    %10 = arith.mulf %9, %5 : vector<2x8xf32>
    %11 = arith.mulf %10, %5 : vector<2x8xf32>
    %12 = arith.addf %5, %11 : vector<2x8xf32>
    %cst_7 = arith.constant 0.797884583 : f32
    %13 = vector.broadcast %cst_7 : f32 to vector<2x8xf32>
    %14 = arith.mulf %13, %12 : vector<2x8xf32>
    %15 = math.tanh %14 : vector<2x8xf32>
    %cst_8 = arith.constant 1.000000e+00 : f32
    %16 = vector.broadcast %cst_8 : f32 to vector<2x8xf32>
    %17 = arith.addf %16, %15 : vector<2x8xf32>
    %18 = arith.mulf %7, %17 : vector<2x8xf32>
    %c0_9 = arith.constant 0 : index
    %c0_10 = arith.constant 0 : index
    %19 = vector.load %arg4[%c0_9, %c0_10] : memref<2x8xf32, #tpu.memory_space<vmem>>, vector<2x8xf32>
    tpu.vector_store %arg4[%c0_9, %c0_10], %18 {strides = array<i32>} : memref<2x8xf32, #tpu.memory_space<vmem>>, vector<2x8xf32>,
    return
  }
  func.func @transform_0(%arg0: i32) -> (i32, i32) {
    %c0_i32 = arith.constant 0 : i32
    %c0_i32_0 = arith.constant 0 : i32
    return %arg0, %c0_i32 : i32, i32
  }
  func.func @transform_1(%arg0: i32) -> (i32, i32) {
    %c0_i32 = arith.constant 0 : i32
    %c0_i32_0 = arith.constant 0 : i32
    %c0_i32_1 = arith.constant 0 : i32
    return %c0_i32, %c0_i32_0 : i32, i32
  }
  func.func @transform_2(%arg0: i32) -> (i32, i32) {
    %c0_i32 = arith.constant 0 : i32
    %c0_i32_0 = arith.constant 0 : i32
    %c0_i32_1 = arith.constant 0 : i32
    return %c0_i32, %c0_i32_0 : i32, i32
  }
  func.func @transform_3(%arg0: i32) -> (i32, i32) {
    %c0_i32 = arith.constant 0 : i32
    %c0_i32_0 = arith.constant 0 : i32
    return %arg0, %c0_i32 : i32, i32
  }
}

module attributes {stable_mosaic.version = 11 : i64} {
  func.func @_linear_kernel(%arg0: i32, %arg1: memref<2x8xf32, #tpu.memory_space<vmem>>, %arg2: memref<8x96xf32, #tpu.memory_space<vmem>>, %arg3: memref<1x96xf32, #tpu.memory_space<vmem>>, %arg4: memref<2x96xf32, #tpu.memory_space<vmem>>) attributes {dimension_semantics = [#tpu.dimension_semantics<parallel>], iteration_bounds = array<i64: 1>, scalar_prefetch = 0 : i64, scratch_operands = 0 : i64, tpu.core_type = #tpu.core_type<tc>, window_params = [{transform_indices = @transform_0, window_bounds = array<i64: 2, 8>}, {pipeline_mode = #tpu.pipeline_mode<synchronous>, transform_indices = @transform_1, window_bounds = array<i64: 8, 96>}, {pipeline_mode = #tpu.pipeline_mode<synchronous>, transform_indices = @transform_2, window_bounds = array<i64: 1, 96>}, {transform_indices = @transform_3, window_bounds = array<i64: 2, 96>}]} {
    %c0 = arith.constant 0 : index
    %c0_0 = arith.constant 0 : index
    %0 = vector.load %arg1[%c0, %c0_0] : memref<2x8xf32, #tpu.memory_space<vmem>>, vector<2x8xf32>
    %c0_1 = arith.constant 0 : index
    %c0_2 = arith.constant 0 : index
    %1 = vector.load %arg2[%c0_1, %c0_2] : memref<8x96xf32, #tpu.memory_space<vmem>>, vector<8x96xf32>
    %cst = arith.constant dense<0.000000e+00> : vector<2x96xf32>
    %2 = tpu.matmul %0, %1, %cst {dimension_numbers = #tpu.dot_dimension_numbers<[1], [0], [0], [1], [0, 0, 1, 1], [], []>} : vector<2x8xf32>, vector<8x96xf32>, vector<2x96xf32> -> vector<2x96xf32>
    %c0_3 = arith.constant 0 : index
    %c0_4 = arith.constant 0 : index
    %3 = vector.load %arg3[%c0_3, %c0_4] : memref<1x96xf32, #tpu.memory_space<vmem>>, vector<1x96xf32>
    %4 = vector.broadcast %3 : vector<1x96xf32> to vector<2x96xf32>
    %5 = arith.addf %2, %4 : vector<2x96xf32>
    %c0_5 = arith.constant 0 : index
    %c0_6 = arith.constant 0 : index
    %6 = vector.load %arg4[%c0_5, %c0_6] : memref<2x96xf32, #tpu.memory_space<vmem>>, vector<2x96xf32>
    tpu.vector_store %arg4[%c0_5, %c0_6], %5 {strides = array<i32>} : memref<2x96xf32, #tpu.memory_space<vmem>>, vector<2x96xf32>,
    return
  }
  func.func @transform_0(%arg0: i32) -> (i32, i32) {
    %c0_i32 = arith.constant 0 : i32
    %c0_i32_0 = arith.constant 0 : i32
    return %arg0, %c0_i32 : i32, i32
  }
  func.func @transform_1(%arg0: i32) -> (i32, i32) {
    %c0_i32 = arith.constant 0 : i32
    %c0_i32_0 = arith.constant 0 : i32
    %c0_i32_1 = arith.constant 0 : i32
    return %c0_i32, %c0_i32_0 : i32, i32
  }
  func.func @transform_2(%arg0: i32) -> (i32, i32) {
    %c0_i32 = arith.constant 0 : i32
    %c0_i32_0 = arith.constant 0 : i32
    %c0_i32_1 = arith.constant 0 : i32
    return %c0_i32, %c0_i32_0 : i32, i32
  }
  func.func @transform_3(%arg0: i32) -> (i32, i32) {
    %c0_i32 = arith.constant 0 : i32
    %c0_i32_0 = arith.constant 0 : i32
    return %arg0, %c0_i32 : i32, i32
  }
}

module attributes {stable_mosaic.version = 11 : i64} {
  func.func @_ln_mlp_residual_kernel(%arg0: i32, %arg1: memref<512x32xf32, #tpu.memory_space<vmem>>, %arg2: memref<1x32xf32, #tpu.memory_space<vmem>>, %arg3: memref<1x32xf32, #tpu.memory_space<vmem>>, %arg4: memref<32x96xf32, #tpu.memory_space<vmem>>, %arg5: memref<1x96xf32, #tpu.memory_space<vmem>>, %arg6: memref<96x32xf32, #tpu.memory_space<vmem>>, %arg7: memref<1x32xf32, #tpu.memory_space<vmem>>, %arg8: memref<512x32xf32, #tpu.memory_space<vmem>>) attributes {dimension_semantics = [#tpu.dimension_semantics<parallel>], iteration_bounds = array<i64: 2>, scalar_prefetch = 0 : i64, scratch_operands = 0 : i64, tpu.core_type = #tpu.core_type<tc>, window_params = [{transform_indices = @transform_0, window_bounds = array<i64: 512, 32>}, {pipeline_mode = #tpu.pipeline_mode<synchronous>, transform_indices = @transform_1, window_bounds = array<i64: 1, 32>}, {pipeline_mode = #tpu.pipeline_mode<synchronous>, transform_indices = @transform_2, window_bounds = array<i64: 1, 32>}, {pipeline_mode = #tpu.pipeline_mode<synchronous>, transform_indices = @transform_3, window_bounds = array<i64: 32, 96>}, {pipeline_mode = #tpu.pipeline_mode<synchronous>, transform_indices = @transform_4, window_bounds = array<i64: 1, 96>}, {pipeline_mode = #tpu.pipeline_mode<synchronous>, transform_indices = @transform_5, window_bounds = array<i64: 96, 32>}, {pipeline_mode = #tpu.pipeline_mode<synchronous>, transform_indices = @transform_6, window_bounds = array<i64: 1, 32>}, {transform_indices = @transform_7, window_bounds = array<i64: 512, 32>}]} {
    %c0 = arith.constant 0 : index
    %c0_0 = arith.constant 0 : index
    %0 = vector.load %arg1[%c0, %c0_0] : memref<512x32xf32, #tpu.memory_space<vmem>>, vector<512x32xf32>
    %cst = arith.constant dense<0.000000e+00> : vector<512xf32>
    %1 = vector.multi_reduction <add>, %0, %cst [1] : vector<512x32xf32> to vector<512xf32>
    %2 = vector.shape_cast %1 : vector<512xf32> to vector<512x1xf32>
    %cst_1 = arith.constant 3.200000e+01 : f32
    %3 = vector.broadcast %cst_1 : f32 to vector<512x1xf32>
    %4 = arith.divf %2, %3 : vector<512x1xf32>
    %5 = arith.mulf %0, %0 : vector<512x32xf32>
    %cst_2 = arith.constant dense<0.000000e+00> : vector<512xf32>
    %6 = vector.multi_reduction <add>, %5, %cst_2 [1] : vector<512x32xf32> to vector<512xf32>
    %7 = vector.shape_cast %6 : vector<512xf32> to vector<512x1xf32>
    %cst_3 = arith.constant 3.200000e+01 : f32
    %8 = vector.broadcast %cst_3 : f32 to vector<512x1xf32>
    %9 = arith.divf %7, %8 : vector<512x1xf32>
    %10 = arith.mulf %4, %4 : vector<512x1xf32>
    %11 = arith.subf %9, %10 : vector<512x1xf32>
    %cst_4 = arith.constant 0.000000e+00 : f32
    %12 = vector.broadcast %cst_4 : f32 to vector<512x1xf32>
    %13 = arith.maximumf %11, %12 : vector<512x1xf32>
    %14 = vector.broadcast %4 : vector<512x1xf32> to vector<512x32xf32>
    %15 = arith.subf %0, %14 : vector<512x32xf32>
    %cst_5 = arith.constant 9.99999974E-6 : f32
    %16 = vector.broadcast %cst_5 : f32 to vector<512x1xf32>
    %17 = arith.addf %13, %16 : vector<512x1xf32>
    %18 = math.rsqrt %17 : vector<512x1xf32>
    %19 = vector.broadcast %18 : vector<512x1xf32> to vector<512x32xf32>
    %20 = arith.mulf %15, %19 : vector<512x32xf32>
    %c0_6 = arith.constant 0 : index
    %c0_7 = arith.constant 0 : index
    %21 = vector.load %arg2[%c0_6, %c0_7] : memref<1x32xf32, #tpu.memory_space<vmem>>, vector<1x32xf32>
    %22 = vector.broadcast %21 : vector<1x32xf32> to vector<512x32xf32>
    %23 = arith.mulf %20, %22 : vector<512x32xf32>
    %c0_8 = arith.constant 0 : index
    %c0_9 = arith.constant 0 : index
    %24 = vector.load %arg3[%c0_8, %c0_9] : memref<1x32xf32, #tpu.memory_space<vmem>>, vector<1x32xf32>
    %25 = vector.broadcast %24 : vector<1x32xf32> to vector<512x32xf32>
    %26 = arith.addf %23, %25 : vector<512x32xf32>
    %c0_10 = arith.constant 0 : index
    %c0_11 = arith.constant 0 : index
    %27 = vector.load %arg4[%c0_10, %c0_11] : memref<32x96xf32, #tpu.memory_space<vmem>>, vector<32x96xf32>
    %cst_12 = arith.constant dense<0.000000e+00> : vector<512x96xf32>
    %28 = tpu.matmul %26, %27, %cst_12 {dimension_numbers = #tpu.dot_dimension_numbers<[1], [0], [0], [1], [0, 0, 1, 1], [], []>} : vector<512x32xf32>, vector<32x96xf32>, vector<512x96xf32> -> vector<512x96xf32>
    %c0_13 = arith.constant 0 : index
    %c0_14 = arith.constant 0 : index
    %29 = vector.load %arg5[%c0_13, %c0_14] : memref<1x96xf32, #tpu.memory_space<vmem>>, vector<1x96xf32>
    %30 = vector.broadcast %29 : vector<1x96xf32> to vector<512x96xf32>
    %31 = arith.addf %28, %30 : vector<512x96xf32>
    %cst_15 = arith.constant 5.000000e-01 : f32
    %32 = vector.broadcast %cst_15 : f32 to vector<512x96xf32>
    %33 = arith.mulf %32, %31 : vector<512x96xf32>
    %cst_16 = arith.constant 4.471500e-02 : f32
    %34 = vector.broadcast %cst_16 : f32 to vector<512x96xf32>
    %35 = arith.mulf %34, %31 : vector<512x96xf32>
    %36 = arith.mulf %35, %31 : vector<512x96xf32>
    %37 = arith.mulf %36, %31 : vector<512x96xf32>
    %38 = arith.addf %31, %37 : vector<512x96xf32>
    %cst_17 = arith.constant 0.797884583 : f32
    %39 = vector.broadcast %cst_17 : f32 to vector<512x96xf32>
    %40 = arith.mulf %39, %38 : vector<512x96xf32>
    %41 = math.tanh %40 : vector<512x96xf32>
    %cst_18 = arith.constant 1.000000e+00 : f32
    %42 = vector.broadcast %cst_18 : f32 to vector<512x96xf32>
    %43 = arith.addf %42, %41 : vector<512x96xf32>
    %44 = arith.mulf %33, %43 : vector<512x96xf32>
    %c0_19 = arith.constant 0 : index
    %c0_20 = arith.constant 0 : index
    %45 = vector.load %arg6[%c0_19, %c0_20] : memref<96x32xf32, #tpu.memory_space<vmem>>, vector<96x32xf32>
    %cst_21 = arith.constant dense<0.000000e+00> : vector<512x32xf32>
    %46 = tpu.matmul %44, %45, %cst_21 {dimension_numbers = #tpu.dot_dimension_numbers<[1], [0], [0], [1], [0, 0, 1, 1], [], []>} : vector<512x96xf32>, vector<96x32xf32>, vector<512x32xf32> -> vector<512x32xf32>
    %c0_22 = arith.constant 0 : index
    %c0_23 = arith.constant 0 : index
    %47 = vector.load %arg7[%c0_22, %c0_23] : memref<1x32xf32, #tpu.memory_space<vmem>>, vector<1x32xf32>
    %48 = vector.broadcast %47 : vector<1x32xf32> to vector<512x32xf32>
    %49 = arith.addf %46, %48 : vector<512x32xf32>
    %50 = arith.addf %0, %49 : vector<512x32xf32>
    %c0_24 = arith.constant 0 : index
    %c0_25 = arith.constant 0 : index
    %51 = vector.load %arg8[%c0_24, %c0_25] : memref<512x32xf32, #tpu.memory_space<vmem>>, vector<512x32xf32>
    tpu.vector_store %arg8[%c0_24, %c0_25], %50 {strides = array<i32>} : memref<512x32xf32, #tpu.memory_space<vmem>>, vector<512x32xf32>,
    return
  }
  func.func @transform_0(%arg0: i32) -> (i32, i32) {
    %c0_i32 = arith.constant 0 : i32
    %c0_i32_0 = arith.constant 0 : i32
    return %arg0, %c0_i32 : i32, i32
  }
  func.func @transform_1(%arg0: i32) -> (i32, i32) {
    %c0_i32 = arith.constant 0 : i32
    %c0_i32_0 = arith.constant 0 : i32
    %c0_i32_1 = arith.constant 0 : i32
    return %c0_i32, %c0_i32_0 : i32, i32
  }
  func.func @transform_2(%arg0: i32) -> (i32, i32) {
    %c0_i32 = arith.constant 0 : i32
    %c0_i32_0 = arith.constant 0 : i32
    %c0_i32_1 = arith.constant 0 : i32
    return %c0_i32, %c0_i32_0 : i32, i32
  }
  func.func @transform_3(%arg0: i32) -> (i32, i32) {
    %c0_i32 = arith.constant 0 : i32
    %c0_i32_0 = arith.constant 0 : i32
    %c0_i32_1 = arith.constant 0 : i32
    return %c0_i32, %c0_i32_0 : i32, i32
  }
  func.func @transform_4(%arg0: i32) -> (i32, i32) {
    %c0_i32 = arith.constant 0 : i32
    %c0_i32_0 = arith.constant 0 : i32
    %c0_i32_1 = arith.constant 0 : i32
    return %c0_i32, %c0_i32_0 : i32, i32
  }
  func.func @transform_5(%arg0: i32) -> (i32, i32) {
    %c0_i32 = arith.constant 0 : i32
    %c0_i32_0 = arith.constant 0 : i32
    %c0_i32_1 = arith.constant 0 : i32
    return %c0_i32, %c0_i32_0 : i32, i32
  }
  func.func @transform_6(%arg0: i32) -> (i32, i32) {
    %c0_i32 = arith.constant 0 : i32
    %c0_i32_0 = arith.constant 0 : i32
    %c0_i32_1 = arith.constant 0 : i32
    return %c0_i32, %c0_i32_0 : i32, i32
  }
  func.func @transform_7(%arg0: i32) -> (i32, i32) {
    %c0_i32 = arith.constant 0 : i32
    %c0_i32_0 = arith.constant 0 : i32
    return %arg0, %c0_i32 : i32, i32
  }
}

module attributes {stable_mosaic.version = 11 : i64} {
  func.func @_linear_kernel(%arg0: i32, %arg1: memref<2x32xf32, #tpu.memory_space<vmem>>, %arg2: memref<32x10xf32, #tpu.memory_space<vmem>>, %arg3: memref<1x10xf32, #tpu.memory_space<vmem>>, %arg4: memref<2x10xf32, #tpu.memory_space<vmem>>) attributes {dimension_semantics = [#tpu.dimension_semantics<parallel>], iteration_bounds = array<i64: 1>, scalar_prefetch = 0 : i64, scratch_operands = 0 : i64, tpu.core_type = #tpu.core_type<tc>, window_params = [{transform_indices = @transform_0, window_bounds = array<i64: 2, 32>}, {pipeline_mode = #tpu.pipeline_mode<synchronous>, transform_indices = @transform_1, window_bounds = array<i64: 32, 10>}, {pipeline_mode = #tpu.pipeline_mode<synchronous>, transform_indices = @transform_2, window_bounds = array<i64: 1, 10>}, {transform_indices = @transform_3, window_bounds = array<i64: 2, 10>}]} {
    %c0 = arith.constant 0 : index
    %c0_0 = arith.constant 0 : index
    %0 = vector.load %arg1[%c0, %c0_0] : memref<2x32xf32, #tpu.memory_space<vmem>>, vector<2x32xf32>
    %c0_1 = arith.constant 0 : index
    %c0_2 = arith.constant 0 : index
    %1 = vector.load %arg2[%c0_1, %c0_2] : memref<32x10xf32, #tpu.memory_space<vmem>>, vector<32x10xf32>
    %cst = arith.constant dense<0.000000e+00> : vector<2x10xf32>
    %2 = tpu.matmul %0, %1, %cst {dimension_numbers = #tpu.dot_dimension_numbers<[1], [0], [0], [1], [0, 0, 1, 1], [], []>} : vector<2x32xf32>, vector<32x10xf32>, vector<2x10xf32> -> vector<2x10xf32>
    %c0_3 = arith.constant 0 : index
    %c0_4 = arith.constant 0 : index
    %3 = vector.load %arg3[%c0_3, %c0_4] : memref<1x10xf32, #tpu.memory_space<vmem>>, vector<1x10xf32>
    %4 = vector.broadcast %3 : vector<1x10xf32> to vector<2x10xf32>
    %5 = arith.addf %2, %4 : vector<2x10xf32>
    %c0_5 = arith.constant 0 : index
    %c0_6 = arith.constant 0 : index
    %6 = vector.load %arg4[%c0_5, %c0_6] : memref<2x10xf32, #tpu.memory_space<vmem>>, vector<2x10xf32>
    tpu.vector_store %arg4[%c0_5, %c0_6], %5 {strides = array<i32>} : memref<2x10xf32, #tpu.memory_space<vmem>>, vector<2x10xf32>,
    return
  }
  func.func @transform_0(%arg0: i32) -> (i32, i32) {
    %c0_i32 = arith.constant 0 : i32
    %c0_i32_0 = arith.constant 0 : i32
    return %arg0, %c0_i32 : i32, i32
  }
  func.func @transform_1(%arg0: i32) -> (i32, i32) {
    %c0_i32 = arith.constant 0 : i32
    %c0_i32_0 = arith.constant 0 : i32
    %c0_i32_1 = arith.constant 0 : i32
    return %c0_i32, %c0_i32_0 : i32, i32
  }
  func.func @transform_2(%arg0: i32) -> (i32, i32) {
    %c0_i32 = arith.constant 0 : i32
    %c0_i32_0 = arith.constant 0 : i32
    %c0_i32_1 = arith.constant 0 : i32
    return %c0_i32, %c0_i32_0 : i32, i32
  }
  func.func @transform_3(%arg0: i32) -> (i32, i32) {
    %c0_i32 = arith.constant 0 : i32
    %c0_i32_0 = arith.constant 0 : i32
    return %arg0, %c0_i32 : i32, i32
  }
}

</mosaic_0001>

<llo_original>
// kernel: ssmlp_forward.26
$region0: #{ssmlp_forward.26}
  #allocation0 [shape = 'u32[]', space=smem, size = 0x4, offset = 0x4, fixed_abs, tag = 'smem constant byte address 0x4 - core index']
  #allocation1 [shape = 'u32[72,128]{1,0:T(1,128)}', space=vmem, size = 0x9000, scoped, tag = 'internal scratch']
  %s0 = inlined_call_operand.vmem [shape: f32[1024,3], index: 0, kind: input, shape index: {}]
  %s1 = inlined_call_operand.vmem [shape: f32[3,16], index: 1, kind: input, shape index: {}]
  %s2 = inlined_call_operand.vmem [shape: f32[1,16], index: 2, kind: input, shape index: {}]
  %s3 = inlined_call_operand.vmem [shape: f32[1024,16], index: 3, kind: output, shape index: {}]
  %s4 = sld [smem:[#allocation0]]
  $region45: #{ssmlp_forward.26} parent=0
    _
  %s6 = ssub.s32 1, %s4
  %s7 = scalar_select 0, %s6, %s4
  loop: start=0, step=1, limit=4
  $region2: #{ssmlp_forward.26} parent=0 // loop_pre_header
    _
  $region3: #{ssmlp_forward.26} parent=0 // loop_header
    %s9 = sphi 0, %s13
    %p10 = scmp.ge.s32.totalorder %s9, 4
    %s19 = sphi 0, %s21
    %s22 = sphi 0, %s19
    %s23 = sphi 0, %s22
    %s39 = sphi 0, %s23
    %s43 = sphi 0, %s43
    %s45 = sphi 0, %s43
    %s46 = sphi 0, %s45
    %s60 = sphi 0, %s46
    %s64 = sphi 0, %s64
    %s66 = sphi 0, %s64
    %s67 = sphi 0, %s66
    %s81 = sphi 0, %s67
    %s87 = sphi 0, %s89
    %s90 = sphi 0, %s87
    %s91 = sphi 0, %s90
    %s107 = sphi 0, %s91
  $region4: #{ssmlp_forward.26} parent=0 // loop_header_branch
    %12 = sbr.rel (%p10) target = $region8
  $region5: #{ssmlp_forward.26} parent=0 // loop_body
    %s14 = ssub.s32 %s9, 1
    %s15 = ssub.s32 %s9, 2
    %s16 = sadd.s32 %s9, 1
    %s17 = ssub.s32 %s9, %s16
    %p18 = scmp.eq.s32.totalorder %s17, 0
    %s20 = sadd.s32 %s19, 1
    %s21 = scalar_select %p18, %s19, %s20
    %p24 = pneg %p18
    %p25 = scmp.eq.s32.totalorder %s9, 1
    %p26 = por %p24, %p25
    %p27 = scmp.ne.s32.totalorder %s19, %s22
    %p28 = scmp.eq.s32.totalorder %s9, 0
    %p29 = por %p27, %p28
    %p30 = scmp.ne.s32.totalorder %s19, %s22
    %p31 = scmp.eq.s32.totalorder %s14, 1
    %p32 = por %p30, %p31
    %p33 = scmp.ne.s32.totalorder %s22, %s23
    %p34 = scmp.eq.s32.totalorder %s14, 0
    %p35 = por %p33, %p34
    %p36 = scmp.ne.s32.totalorder %s22, %s23
    %p37 = scmp.eq.s32.totalorder %s15, 1
    %p38 = por %p36, %p37
    %p40 = scmp.ne.s32.totalorder %s23, %s39
    %p41 = scmp.eq.s32.totalorder %s15, 0
    %p42 = por %p40, %p41
    %s44 = sadd.s32 %s43, 1
    %p47 = scmp.eq.s32.totalorder %s9, 1
    %p48 = scmp.ne.s32.totalorder %s43, %s45
    %p49 = scmp.eq.s32.totalorder %s9, 0
    %p50 = por %p48, %p49
    %p51 = scmp.ne.s32.totalorder %s43, %s45
    %p52 = scmp.eq.s32.totalorder %s14, 1
    %p53 = por %p51, %p52
    %p54 = scmp.ne.s32.totalorder %s45, %s46
    %p55 = scmp.eq.s32.totalorder %s14, 0
    %p56 = por %p54, %p55
    %p57 = scmp.ne.s32.totalorder %s45, %s46
    %p58 = scmp.eq.s32.totalorder %s15, 1
    %p59 = por %p57, %p58
    %p61 = scmp.ne.s32.totalorder %s46, %s60
    %p62 = scmp.eq.s32.totalorder %s15, 0
    %p63 = por %p61, %p62
    %s65 = sadd.s32 %s64, 1
    %p68 = scmp.eq.s32.totalorder %s9, 1
    %p69 = scmp.ne.s32.totalorder %s64, %s66
    %p70 = scmp.eq.s32.totalorder %s9, 0
    %p71 = por %p69, %p70
    %p72 = scmp.ne.s32.totalorder %s64, %s66
    %p73 = scmp.eq.s32.totalorder %s14, 1
    %p74 = por %p72, %p73
    %p75 = scmp.ne.s32.totalorder %s66, %s67
    %p76 = scmp.eq.s32.totalorder %s14, 0
    %p77 = por %p75, %p76
    %p78 = scmp.ne.s32.totalorder %s66, %s67
    %p79 = scmp.eq.s32.totalorder %s15, 1
    %p80 = por %p78, %p79
    %p82 = scmp.ne.s32.totalorder %s67, %s81
    %p83 = scmp.eq.s32.totalorder %s15, 0
    %p84 = por %p82, %p83
    %s85 = ssub.s32 %s9, %s16
    %p86 = scmp.eq.s32.totalorder %s85, 0
    %s88 = sadd.s32 %s87, 1
    %s89 = scalar_select %p86, %s87, %s88
    %p92 = pneg %p86
    %p93 = scmp.eq.s32.totalorder %s9, 1
    %p94 = por %p92, %p93
    %p95 = scmp.ne.s32.totalorder %s87, %s90
    %p96 = scmp.eq.s32.totalorder %s9, 0
    %p97 = por %p95, %p96
    %p98 = scmp.ne.s32.totalorder %s87, %s90
    %p99 = scmp.eq.s32.totalorder %s14, 1
    %p100 = por %p98, %p99
    %p101 = scmp.ne.s32.totalorder %s90, %s91
    %p102 = scmp.eq.s32.totalorder %s14, 0
    %p103 = por %p101, %p102
    %p104 = scmp.ne.s32.totalorder %s90, %s91
    %p105 = scmp.eq.s32.totalorder %s15, 1
    %p106 = por %p104, %p105
    %p108 = scmp.ne.s32.totalorder %s91, %s107
    %p109 = scmp.eq.s32.totalorder %s15, 0
    %p110 = por %p108, %p109
    %p111 = scmp.le.s32.totalorder 1, %s9
    %p112 = scmp.lt.s32.totalorder %s9, 3
    %p113 = pnand %p111, %p112
    %p114 = pneg %p113
    // Predicated region
    $region9: #{ssmlp_forward.26} parent=5 // pred_check
      _
    $region10: #{ssmlp_forward.26} parent=5 // pred_check_branch
      %116 = sbr.rel (%p113) target = $region12
    $region11: #{ssmlp_forward.26} parent=5 // pred_region
      %s117 = ssub.s32 %s9, 1
      // Predicated region
      $region13: #{ssmlp_forward.26} parent=11 // pred_check
        %p118 = pneg %p56
      $region14: #{ssmlp_forward.26} parent=11 // pred_check_branch
        %120 = sbr.rel (%p118) target = $region16
      $region15: #{ssmlp_forward.26} parent=11 // pred_region
        _
      $region16: #{ssmlp_forward.26} parent=11 // pred_fallthru
        _
      // Predicated region
      $region17: #{ssmlp_forward.26} parent=11 // pred_check
        %p121 = pneg %p77
      $region18: #{ssmlp_forward.26} parent=11 // pred_check_branch
        %123 = sbr.rel (%p121) target = $region20
      $region19: #{ssmlp_forward.26} parent=11 // pred_region
        _
      $region20: #{ssmlp_forward.26} parent=11 // pred_fallthru
        _
    $region12: #{ssmlp_forward.26} parent=5 // pred_fallthru
      _
    %p124 = scmp.lt.s32.totalorder %s9, 2
    // Predicated region
    $region21: #{ssmlp_forward.26} parent=5 // pred_check
      %p125 = pneg %p124
    $region22: #{ssmlp_forward.26} parent=5 // pred_check_branch
      %127 = sbr.rel (%p125) target = $region24
    $region23: #{ssmlp_forward.26} parent=5 // pred_region
      // Predicated region
      $region25: #{ssmlp_forward.26} parent=23 // pred_check
        %p128 = pneg %p29
      $region26: #{ssmlp_forward.26} parent=23 // pred_check_branch
        %130 = sbr.rel (%p128) target = $region28
      $region27: #{ssmlp_forward.26} parent=23 // pred_region
        %s131 = smul.u32 64, %s9
        %p132 = scmp.lt.s32.totalorder %s131, 127
        %s133 = scalar_select %p132, %s131, 127
        %s134 = smul.addr %s133, 8
        %s135 = scalar_lea.vmem %s0, %s134
        %s136 = smul.u32 64, %s9
      $region28: #{ssmlp_forward.26} parent=23 // pred_fallthru
        _
    $region24: #{ssmlp_forward.26} parent=5 // pred_fallthru
      _
    %p137 = scmp.le.s32.totalorder 1, %s9
    %p138 = scmp.lt.s32.totalorder %s9, 3
    %p139 = pnand %p137, %p138
    %p140 = pneg %p139
    // Predicated region
    $region29: #{ssmlp_forward.26} parent=5 // pred_check
      _
    $region30: #{ssmlp_forward.26} parent=5 // pred_check_branch
      %142 = sbr.rel (%p139) target = $region32
    $region31: #{ssmlp_forward.26} parent=5 // pred_region
      %s143 = ssub.s32 %s9, 1
      %s144 = smul.u32 64, %s14
      %p145 = scmp.lt.s32.totalorder %s144, 127
      %s146 = scalar_select %p145, %s144, 127
      %s147 = smul.addr %s146, 8
      %s148 = scalar_lea.vmem %s0, %s147
      %p149 = pneg %p35
      %p150 = pneg %p32
      %p151 = pneg %p56
      %p152 = pneg %p53
      %p153 = pneg %p77
      %p154 = pneg %p74
      %p155 = pneg %p103
      %p156 = pneg %p100
      %s157 = smul.u32 64, %s14
      %p158 = scmp.lt.s32.totalorder %s157, 127
      %s159 = scalar_select %p158, %s157, 127
      %s160 = smul.addr %s159, 8
      %s161 = scalar_lea.vmem %s3, %s160
      %s162 = smul.u32 64, %s14
      %p163 = scmp.lt.s32.totalorder %s162, 127
      %s164 = scalar_select %p163, %s162, 127
      %s165 = smul.addr %s164, 8
      %s166 = scalar_lea.vmem %s0, %s165
      %s167 = smul.u32 64, %s14
      %s168 = smul.u32 64, %s14
      %p169 = scmp.lt.s32.totalorder %s168, 127
      %s170 = scalar_select %p169, %s168, 127
      %s171 = smul.addr %s170, 8
      %s172 = scalar_lea.vmem %s3, %s171
      %s173 = smul.u32 64, %s14
      %v174 = vld [vmem:[%s166] sm:$0xff]
      %v175 = vld [vmem:[%s166 + $0x8] sm:$0xff]
      %v176 = vld [vmem:[%s166 + $0x10] sm:$0xff]
      %v177 = vld [vmem:[%s166 + $0x18] sm:$0xff]
      %v178 = vld [vmem:[%s166 + $0x20] sm:$0xff]
      %v179 = vld [vmem:[%s166 + $0x28] sm:$0xff]
      %v180 = vld [vmem:[%s166 + $0x30] sm:$0xff]
      %v181 = vld [vmem:[%s166 + $0x38] sm:$0xff]
      %v182 = vld [vmem:[%s166 + $0x40] sm:$0xff]
      %v183 = vld [vmem:[%s166 + $0x48] sm:$0xff]
      %v184 = vld [vmem:[%s166 + $0x50] sm:$0xff]
      %v185 = vld [vmem:[%s166 + $0x58] sm:$0xff]
      %v186 = vld [vmem:[%s166 + $0x60] sm:$0xff]
      %v187 = vld [vmem:[%s166 + $0x68] sm:$0xff]
      %v188 = vld [vmem:[%s166 + $0x70] sm:$0xff]
      %v189 = vld [vmem:[%s166 + $0x78] sm:$0xff]
      %v190 = vld [vmem:[%s166 + $0x80] sm:$0xff]
      %v191 = vld [vmem:[%s166 + $0x88] sm:$0xff]
      %v192 = vld [vmem:[%s166 + $0x90] sm:$0xff]
      %v193 = vld [vmem:[%s166 + $0x98] sm:$0xff]
      %v194 = vld [vmem:[%s166 + $0xa0] sm:$0xff]
      %v195 = vld [vmem:[%s166 + $0xa8] sm:$0xff]
      %v196 = vld [vmem:[%s166 + $0xb0] sm:$0xff]
      %v197 = vld [vmem:[%s166 + $0xb8] sm:$0xff]
      %v198 = vld [vmem:[%s166 + $0xc0] sm:$0xff]
      %v199 = vld [vmem:[%s166 + $0xc8] sm:$0xff]
      %v200 = vld [vmem:[%s166 + $0xd0] sm:$0xff]
      %v201 = vld [vmem:[%s166 + $0xd8] sm:$0xff]
      %v202 = vld [vmem:[%s166 + $0xe0] sm:$0xff]
      %v203 = vld [vmem:[%s166 + $0xe8] sm:$0xff]
      %v204 = vld [vmem:[%s166 + $0xf0] sm:$0xff]
      %v205 = vld [vmem:[%s166 + $0xf8] sm:$0xff]
      %v206 = vld [vmem:[%s166 + $0x100] sm:$0xff]
      %v207 = vld [vmem:[%s166 + $0x108] sm:$0xff]
      %v208 = vld [vmem:[%s166 + $0x110] sm:$0xff]
      %v209 = vld [vmem:[%s166 + $0x118] sm:$0xff]
      %v210 = vld [vmem:[%s166 + $0x120] sm:$0xff]
      %v211 = vld [vmem:[%s166 + $0x128] sm:$0xff]
      %v212 = vld [vmem:[%s166 + $0x130] sm:$0xff]
      %v213 = vld [vmem:[%s166 + $0x138] sm:$0xff]
      %v214 = vld [vmem:[%s166 + $0x140] sm:$0xff]
      %v215 = vld [vmem:[%s166 + $0x148] sm:$0xff]
      %v216 = vld [vmem:[%s166 + $0x150] sm:$0xff]
      %v217 = vld [vmem:[%s166 + $0x158] sm:$0xff]
      %v218 = vld [vmem:[%s166 + $0x160] sm:$0xff]
      %v219 = vld [vmem:[%s166 + $0x168] sm:$0xff]
      %v220 = vld [vmem:[%s166 + $0x170] sm:$0xff]
      %v221 = vld [vmem:[%s166 + $0x178] sm:$0xff]
      %v222 = vld [vmem:[%s166 + $0x180] sm:$0xff]
      %v223 = vld [vmem:[%s166 + $0x188] sm:$0xff]
      %v224 = vld [vmem:[%s166 + $0x190] sm:$0xff]
      %v225 = vld [vmem:[%s166 + $0x198] sm:$0xff]
      %v226 = vld [vmem:[%s166 + $0x1a0] sm:$0xff]
      %v227 = vld [vmem:[%s166 + $0x1a8] sm:$0xff]
      %v228 = vld [vmem:[%s166 + $0x1b0] sm:$0xff]
      %v229 = vld [vmem:[%s166 + $0x1b8] sm:$0xff]
      %v230 = vld [vmem:[%s166 + $0x1c0] sm:$0xff]
      %v231 = vld [vmem:[%s166 + $0x1c8] sm:$0xff]
      %v232 = vld [vmem:[%s166 + $0x1d0] sm:$0xff]
      %v233 = vld [vmem:[%s166 + $0x1d8] sm:$0xff]
      %v234 = vld [vmem:[%s166 + $0x1e0] sm:$0xff]
      %v235 = vld [vmem:[%s166 + $0x1e8] sm:$0xff]
      %v236 = vld [vmem:[%s166 + $0x1f0] sm:$0xff]
      %v237 = vld [vmem:[%s166 + $0x1f8] sm:$0xff]
      %v238 = vld [vmem:[%s1] sm:$0x7]
      %v239 = vld [vmem:[%s2] sm:$0x1]
      %v241 = vperm.slane %v239, 0
      %vm243 = vcmask 23552
      %v245 = vsel %vm243, %v174, 0
      %v248 = vsel %vm243, %v175, 0
      %v251 = vsel %vm243, %v176, 0
      %v254 = vsel %vm243, %v177, 0
      %v257 = vsel %vm243, %v178, 0
      %v260 = vsel %vm243, %v179, 0
      %v263 = vsel %vm243, %v180, 0
      %v266 = vsel %vm243, %v181, 0
      %v269 = vsel %vm243, %v182, 0
      %v272 = vsel %vm243, %v183, 0
      %v275 = vsel %vm243, %v184, 0
      %v278 = vsel %vm243, %v185, 0
      %v281 = vsel %vm243, %v186, 0
      %v284 = vsel %vm243, %v187, 0
      %v287 = vsel %vm243, %v188, 0
      %v290 = vsel %vm243, %v189, 0
      %v293 = vsel %vm243, %v190, 0
      %v296 = vsel %vm243, %v191, 0
      %v299 = vsel %vm243, %v192, 0
      %v302 = vsel %vm243, %v193, 0
      %v305 = vsel %vm243, %v194, 0
      %v308 = vsel %vm243, %v195, 0
      %v311 = vsel %vm243, %v196, 0
      %v314 = vsel %vm243, %v197, 0
      %v317 = vsel %vm243, %v198, 0
      %v320 = vsel %vm243, %v199, 0
      %v323 = vsel %vm243, %v200, 0
      %v326 = vsel %vm243, %v201, 0
      %v329 = vsel %vm243, %v202, 0
      %v332 = vsel %vm243, %v203, 0
      %v335 = vsel %vm243, %v204, 0
      %v338 = vsel %vm243, %v205, 0
      %v341 = vsel %vm243, %v206, 0
      %v344 = vsel %vm243, %v207, 0
      %v347 = vsel %vm243, %v208, 0
      %v350 = vsel %vm243, %v209, 0
      %v353 = vsel %vm243, %v210, 0
      %v356 = vsel %vm243, %v211, 0
      %v359 = vsel %vm243, %v212, 0
      %v362 = vsel %vm243, %v213, 0
      %v365 = vsel %vm243, %v214, 0
      %v368 = vsel %vm243, %v215, 0
      %v371 = vsel %vm243, %v216, 0
      %v374 = vsel %vm243, %v217, 0
      %v377 = vsel %vm243, %v218, 0
      %v380 = vsel %vm243, %v219, 0
      %v383 = vsel %vm243, %v220, 0
      %v386 = vsel %vm243, %v221, 0
      %v389 = vsel %vm243, %v222, 0
      %v392 = vsel %vm243, %v223, 0
      %v395 = vsel %vm243, %v224, 0
      %v398 = vsel %vm243, %v225, 0
      %v401 = vsel %vm243, %v226, 0
      %v404 = vsel %vm243, %v227, 0
      %v407 = vsel %vm243, %v228, 0
      %v410 = vsel %vm243, %v229, 0
      %v413 = vsel %vm243, %v230, 0
      %v416 = vsel %vm243, %v231, 0
      %v419 = vsel %vm243, %v232, 0
      %v422 = vsel %vm243, %v233, 0
      %v425 = vsel %vm243, %v234, 0
      %v428 = vsel %vm243, %v235, 0
      %v431 = vsel %vm243, %v236, 0
      %v434 = vsel %vm243, %v237, 0
      %vm436 = vcmask 1042432
      %v438 = vsel %vm436, %v238, 0
      %440 = vmatpush.msra.mxu0 0.0
      %441 = vmatpush.msra.mxu0 0.0
      %442 = vmatpush.msra.mxu0 0.0
      %443 = vmatpush.msra.mxu0 0.0
      %444 = vmatpush.msra.mxu0 0.0
      %445 = vmatpush.msra.mxu0 0.0
      %446 = vmatpush.msra.mxu0 0.0
      %447 = vmatpush.msra.mxu0 0.0
      %448 = vmatpush.msra.mxu0 0.0
      %449 = vmatpush.msra.mxu0 0.0
      %450 = vmatpush.msra.mxu0 0.0
      %451 = vmatpush.msra.mxu0 0.0
      %452 = vmatpush.msra.mxu0 0.0
      %453 = vmatpush.msra.mxu0 0.0
      %454 = vmatpush.msra.mxu0 0.0
      %455 = vmatpush.msra.mxu0 %v438
      %456 = vmatmul.f32.gmra.mxu0 %v245
      %v457 = vpop.f32.mrf.mxu0
      %v458 = vadd.f32 %v241, %v457
      %459 = vmatmul.f32.gmra.mxu0 %v248
      %v460 = vpop.f32.mrf.mxu0
      %v461 = vadd.f32 %v241, %v460
      %462 = vmatmul.f32.gmra.mxu0 %v251
      %v463 = vpop.f32.mrf.mxu0
      %v464 = vadd.f32 %v241, %v463
      %465 = vmatmul.f32.gmra.mxu0 %v254
      %v466 = vpop.f32.mrf.mxu0
      %v467 = vadd.f32 %v241, %v466
      %468 = vmatmul.f32.gmra.mxu0 %v257
      %v469 = vpop.f32.mrf.mxu0
      %v470 = vadd.f32 %v241, %v469
      %471 = vmatmul.f32.gmra.mxu0 %v260
      %v472 = vpop.f32.mrf.mxu0
      %v473 = vadd.f32 %v241, %v472
      %474 = vmatmul.f32.gmra.mxu0 %v263
      %v475 = vpop.f32.mrf.mxu0
      %v476 = vadd.f32 %v241, %v475
      %477 = vmatmul.f32.gmra.mxu0 %v266
      %v478 = vpop.f32.mrf.mxu0
      %v479 = vadd.f32 %v241, %v478
      %480 = vmatmul.f32.gmra.mxu0 %v269
      %v481 = vpop.f32.mrf.mxu0
      %v482 = vadd.f32 %v241, %v481
      %483 = vmatmul.f32.gmra.mxu0 %v272
      %v484 = vpop.f32.mrf.mxu0
      %v485 = vadd.f32 %v241, %v484
      %486 = vmatmul.f32.gmra.mxu0 %v275
      %v487 = vpop.f32.mrf.mxu0
      %v488 = vadd.f32 %v241, %v487
      %489 = vmatmul.f32.gmra.mxu0 %v278
      %v490 = vpop.f32.mrf.mxu0
      %v491 = vadd.f32 %v241, %v490
      %492 = vmatmul.f32.gmra.mxu0 %v281
      %v493 = vpop.f32.mrf.mxu0
      %v494 = vadd.f32 %v241, %v493
      %495 = vmatmul.f32.gmra.mxu0 %v284
      %v496 = vpop.f32.mrf.mxu0
      %v497 = vadd.f32 %v241, %v496
      %498 = vmatmul.f32.gmra.mxu0 %v287
      %v499 = vpop.f32.mrf.mxu0
      %v500 = vadd.f32 %v241, %v499
      %501 = vmatmul.f32.gmra.mxu0 %v290
      %v502 = vpop.f32.mrf.mxu0
      %v503 = vadd.f32 %v241, %v502
      %504 = vmatmul.f32.gmra.mxu0 %v293
      %v505 = vpop.f32.mrf.mxu0
      %v506 = vadd.f32 %v241, %v505
      %507 = vmatmul.f32.gmra.mxu0 %v296
      %v508 = vpop.f32.mrf.mxu0
      %v509 = vadd.f32 %v241, %v508
      %510 = vmatmul.f32.gmra.mxu0 %v299
      %v511 = vpop.f32.mrf.mxu0
      %v512 = vadd.f32 %v241, %v511
      %513 = vmatmul.f32.gmra.mxu0 %v302
      %v514 = vpop.f32.mrf.mxu0
      %v515 = vadd.f32 %v241, %v514
      %516 = vmatmul.f32.gmra.mxu0 %v305
      %v517 = vpop.f32.mrf.mxu0
      %v518 = vadd.f32 %v241, %v517
      %519 = vmatmul.f32.gmra.mxu0 %v308
      %v520 = vpop.f32.mrf.mxu0
      %v521 = vadd.f32 %v241, %v520
      %522 = vmatmul.f32.gmra.mxu0 %v311
      %v523 = vpop.f32.mrf.mxu0
      %v524 = vadd.f32 %v241, %v523
      %525 = vmatmul.f32.gmra.mxu0 %v314
      %v526 = vpop.f32.mrf.mxu0
      %v527 = vadd.f32 %v241, %v526
      %528 = vmatmul.f32.gmra.mxu0 %v317
      %v529 = vpop.f32.mrf.mxu0
      %v530 = vadd.f32 %v241, %v529
      %531 = vmatmul.f32.gmra.mxu0 %v320
      %v532 = vpop.f32.mrf.mxu0
      %v533 = vadd.f32 %v241, %v532
      %534 = vmatmul.f32.gmra.mxu0 %v323
      %v535 = vpop.f32.mrf.mxu0
      %v536 = vadd.f32 %v241, %v535
      %537 = vmatmul.f32.gmra.mxu0 %v326
      %v538 = vpop.f32.mrf.mxu0
      %v539 = vadd.f32 %v241, %v538
      %540 = vmatmul.f32.gmra.mxu0 %v329
      %v541 = vpop.f32.mrf.mxu0
      %v542 = vadd.f32 %v241, %v541
      %543 = vmatmul.f32.gmra.mxu0 %v332
      %v544 = vpop.f32.mrf.mxu0
      %v545 = vadd.f32 %v241, %v544
      %546 = vmatmul.f32.gmra.mxu0 %v335
      %v547 = vpop.f32.mrf.mxu0
      %v548 = vadd.f32 %v241, %v547
      %549 = vmatmul.f32.gmra.mxu0 %v338
      %v550 = vpop.f32.mrf.mxu0
      %v551 = vadd.f32 %v241, %v550
      %552 = vmatmul.f32.gmra.mxu0 %v341
      %v553 = vpop.f32.mrf.mxu0
      %v554 = vadd.f32 %v241, %v553
      %555 = vmatmul.f32.gmra.mxu0 %v344
      %v556 = vpop.f32.mrf.mxu0
      %v557 = vadd.f32 %v241, %v556
      %558 = vmatmul.f32.gmra.mxu0 %v347
      %v559 = vpop.f32.mrf.mxu0
      %v560 = vadd.f32 %v241, %v559
      %561 = vmatmul.f32.gmra.mxu0 %v350
      %v562 = vpop.f32.mrf.mxu0
      %v563 = vadd.f32 %v241, %v562
      %564 = vmatmul.f32.gmra.mxu0 %v353
      %v565 = vpop.f32.mrf.mxu0
      %v566 = vadd.f32 %v241, %v565
      %567 = vmatmul.f32.gmra.mxu0 %v356
      %v568 = vpop.f32.mrf.mxu0
      %v569 = vadd.f32 %v241, %v568
      %570 = vmatmul.f32.gmra.mxu0 %v359
      %v571 = vpop.f32.mrf.mxu0
      %v572 = vadd.f32 %v241, %v571
      %573 = vmatmul.f32.gmra.mxu0 %v362
      %v574 = vpop.f32.mrf.mxu0
      %v575 = vadd.f32 %v241, %v574
      %576 = vmatmul.f32.gmra.mxu0 %v365
      %v577 = vpop.f32.mrf.mxu0
      %v578 = vadd.f32 %v241, %v577
      %579 = vmatmul.f32.gmra.mxu0 %v368
      %v580 = vpop.f32.mrf.mxu0
      %v581 = vadd.f32 %v241, %v580
      %582 = vmatmul.f32.gmra.mxu0 %v371
      %v583 = vpop.f32.mrf.mxu0
      %v584 = vadd.f32 %v241, %v583
      %585 = vmatmul.f32.gmra.mxu0 %v374
      %v586 = vpop.f32.mrf.mxu0
      %v587 = vadd.f32 %v241, %v586
      %588 = vmatmul.f32.gmra.mxu0 %v377
      %v589 = vpop.f32.mrf.mxu0
      %v590 = vadd.f32 %v241, %v589
      %591 = vmatmul.f32.gmra.mxu0 %v380
      %v592 = vpop.f32.mrf.mxu0
      %v593 = vadd.f32 %v241, %v592
      %594 = vmatmul.f32.gmra.mxu0 %v383
      %v595 = vpop.f32.mrf.mxu0
      %v596 = vadd.f32 %v241, %v595
      %597 = vmatmul.f32.gmra.mxu0 %v386
      %v598 = vpop.f32.mrf.mxu0
      %v599 = vadd.f32 %v241, %v598
      %600 = vmatmul.f32.gmra.mxu0 %v389
      %v601 = vpop.f32.mrf.mxu0
      %v602 = vadd.f32 %v241, %v601
      %603 = vmatmul.f32.gmra.mxu0 %v392
      %v604 = vpop.f32.mrf.mxu0
      %v605 = vadd.f32 %v241, %v604
      %606 = vmatmul.f32.gmra.mxu0 %v395
      %v607 = vpop.f32.mrf.mxu0
      %v608 = vadd.f32 %v241, %v607
      %609 = vmatmul.f32.gmra.mxu0 %v398
      %v610 = vpop.f32.mrf.mxu0
      %v611 = vadd.f32 %v241, %v610
      %612 = vmatmul.f32.gmra.mxu0 %v401
      %v613 = vpop.f32.mrf.mxu0
      %v614 = vadd.f32 %v241, %v613
      %615 = vmatmul.f32.gmra.mxu0 %v404
      %v616 = vpop.f32.mrf.mxu0
      %v617 = vadd.f32 %v241, %v616
      %618 = vmatmul.f32.gmra.mxu0 %v407
      %v619 = vpop.f32.mrf.mxu0
      %v620 = vadd.f32 %v241, %v619
      %621 = vmatmul.f32.gmra.mxu0 %v410
      %v622 = vpop.f32.mrf.mxu0
      %v623 = vadd.f32 %v241, %v622
      %624 = vmatmul.f32.gmra.mxu0 %v413
      %v625 = vpop.f32.mrf.mxu0
      %v626 = vadd.f32 %v241, %v625
      %627 = vmatmul.f32.gmra.mxu0 %v416
      %v628 = vpop.f32.mrf.mxu0
      %v629 = vadd.f32 %v241, %v628
      %630 = vmatmul.f32.gmra.mxu0 %v419
      %v631 = vpop.f32.mrf.mxu0
      %v632 = vadd.f32 %v241, %v631
      %633 = vmatmul.f32.gmra.mxu0 %v422
      %v634 = vpop.f32.mrf.mxu0
      %v635 = vadd.f32 %v241, %v634
      %636 = vmatmul.f32.gmra.mxu0 %v425
      %v637 = vpop.f32.mrf.mxu0
      %v638 = vadd.f32 %v241, %v637
      %639 = vmatmul.f32.gmra.mxu0 %v428
      %v640 = vpop.f32.mrf.mxu0
      %v641 = vadd.f32 %v241, %v640
      %642 = vmatmul.f32.gmra.mxu0 %v431
      %v643 = vpop.f32.mrf.mxu0
      %v644 = vadd.f32 %v241, %v643
      %645 = vmatmul.f32.gmra.mxu0 %v434
      %v646 = vpop.f32.mrf.mxu0
      %v647 = vadd.f32 %v241, %v646
      %648 = vdwg.mxu0
      %v649 = vmul.f32 %v458, 0.5
      %v650 = vmul.f32 %v461, 0.5
      %v651 = vmul.f32 %v464, 0.5
      %v652 = vmul.f32 %v467, 0.5
      %v653 = vmul.f32 %v470, 0.5
      %v654 = vmul.f32 %v473, 0.5
      %v655 = vmul.f32 %v476, 0.5
      %v656 = vmul.f32 %v479, 0.5
      %v657 = vmul.f32 %v482, 0.5
      %v658 = vmul.f32 %v485, 0.5
      %v659 = vmul.f32 %v488, 0.5
      %v660 = vmul.f32 %v491, 0.5
      %v661 = vmul.f32 %v494, 0.5
      %v662 = vmul.f32 %v497, 0.5
      %v663 = vmul.f32 %v500, 0.5
      %v664 = vmul.f32 %v503, 0.5
      %v665 = vmul.f32 %v506, 0.5
      %v666 = vmul.f32 %v509, 0.5
      %v667 = vmul.f32 %v512, 0.5
      %v668 = vmul.f32 %v515, 0.5
      %v669 = vmul.f32 %v518, 0.5
      %v670 = vmul.f32 %v521, 0.5
      %v671 = vmul.f32 %v524, 0.5
      %v672 = vmul.f32 %v527, 0.5
      %v673 = vmul.f32 %v530, 0.5
      %v674 = vmul.f32 %v533, 0.5
      %v675 = vmul.f32 %v536, 0.5
      %v676 = vmul.f32 %v539, 0.5
      %v677 = vmul.f32 %v542, 0.5
      %v678 = vmul.f32 %v545, 0.5
      %v679 = vmul.f32 %v548, 0.5
      %v680 = vmul.f32 %v551, 0.5
      %v681 = vmul.f32 %v554, 0.5
      %v682 = vmul.f32 %v557, 0.5
      %v683 = vmul.f32 %v560, 0.5
      %v684 = vmul.f32 %v563, 0.5
      %v685 = vmul.f32 %v566, 0.5
      %v686 = vmul.f32 %v569, 0.5
      %v687 = vmul.f32 %v572, 0.5
      %v688 = vmul.f32 %v575, 0.5
      %v689 = vmul.f32 %v578, 0.5
      %v690 = vmul.f32 %v581, 0.5
      %v691 = vmul.f32 %v584, 0.5
      %v692 = vmul.f32 %v587, 0.5
      %v693 = vmul.f32 %v590, 0.5
      %v694 = vmul.f32 %v593, 0.5
      %v695 = vmul.f32 %v596, 0.5
      %v696 = vmul.f32 %v599, 0.5
      %v697 = vmul.f32 %v602, 0.5
      %v698 = vmul.f32 %v605, 0.5
      %v699 = vmul.f32 %v608, 0.5
      %v700 = vmul.f32 %v611, 0.5
      %v701 = vmul.f32 %v614, 0.5
      %v702 = vmul.f32 %v617, 0.5
      %v703 = vmul.f32 %v620, 0.5
      %v704 = vmul.f32 %v623, 0.5
      %v705 = vmul.f32 %v626, 0.5
      %v706 = vmul.f32 %v629, 0.5
      %v707 = vmul.f32 %v632, 0.5
      %v708 = vmul.f32 %v635, 0.5
      %v709 = vmul.f32 %v638, 0.5
      %v710 = vmul.f32 %v641, 0.5
      %v711 = vmul.f32 %v644, 0.5
      %v712 = vmul.f32 %v647, 0.5
      %v713 = vmul.f32 %v458, 0.044715
      %v714 = vmul.f32 %v461, 0.044715
      %v715 = vmul.f32 %v464, 0.044715
      %v716 = vmul.f32 %v467, 0.044715
      %v717 = vmul.f32 %v470, 0.044715
      %v718 = vmul.f32 %v473, 0.044715
      %v719 = vmul.f32 %v476, 0.044715
      %v720 = vmul.f32 %v479, 0.044715
      %v721 = vmul.f32 %v482, 0.044715
      %v722 = vmul.f32 %v485, 0.044715
      %v723 = vmul.f32 %v488, 0.044715
      %v724 = vmul.f32 %v491, 0.044715
      %v725 = vmul.f32 %v494, 0.044715
      %v726 = vmul.f32 %v497, 0.044715
      %v727 = vmul.f32 %v500, 0.044715
      %v728 = vmul.f32 %v503, 0.044715
      %v729 = vmul.f32 %v506, 0.044715
      %v730 = vmul.f32 %v509, 0.044715
      %v731 = vmul.f32 %v512, 0.044715
      %v732 = vmul.f32 %v515, 0.044715
      %v733 = vmul.f32 %v518, 0.044715
      %v734 = vmul.f32 %v521, 0.044715
      %v735 = vmul.f32 %v524, 0.044715
      %v736 = vmul.f32 %v527, 0.044715
      %v737 = vmul.f32 %v530, 0.044715
      %v738 = vmul.f32 %v533, 0.044715
      %v739 = vmul.f32 %v536, 0.044715
      %v740 = vmul.f32 %v539, 0.044715
      %v741 = vmul.f32 %v542, 0.044715
      %v742 = vmul.f32 %v545, 0.044715
      %v743 = vmul.f32 %v548, 0.044715
      %v744 = vmul.f32 %v551, 0.044715
      %v745 = vmul.f32 %v554, 0.044715
      %v746 = vmul.f32 %v557, 0.044715
      %v747 = vmul.f32 %v560, 0.044715
      %v748 = vmul.f32 %v563, 0.044715
      %v749 = vmul.f32 %v566, 0.044715
      %v750 = vmul.f32 %v569, 0.044715
      %v751 = vmul.f32 %v572, 0.044715
      %v752 = vmul.f32 %v575, 0.044715
      %v753 = vmul.f32 %v578, 0.044715
      %v754 = vmul.f32 %v581, 0.044715
      %v755 = vmul.f32 %v584, 0.044715
      %v756 = vmul.f32 %v587, 0.044715
      %v757 = vmul.f32 %v590, 0.044715
      %v758 = vmul.f32 %v593, 0.044715
      %v759 = vmul.f32 %v596, 0.044715
      %v760 = vmul.f32 %v599, 0.044715
      %v761 = vmul.f32 %v602, 0.044715
      %v762 = vmul.f32 %v605, 0.044715
      %v763 = vmul.f32 %v608, 0.044715
      %v764 = vmul.f32 %v611, 0.044715
      %v765 = vmul.f32 %v614, 0.044715
      %v766 = vmul.f32 %v617, 0.044715
      %v767 = vmul.f32 %v620, 0.044715
      %v768 = vmul.f32 %v623, 0.044715
      %v769 = vmul.f32 %v626, 0.044715
      %v770 = vmul.f32 %v629, 0.044715
      %v771 = vmul.f32 %v632, 0.044715
      %v772 = vmul.f32 %v635, 0.044715
      %v773 = vmul.f32 %v638, 0.044715
      %v774 = vmul.f32 %v641, 0.044715
      %v775 = vmul.f32 %v644, 0.044715
      %v776 = vmul.f32 %v647, 0.044715
      %v777 = vmul.f32 %v713, %v458
      %v778 = vmul.f32 %v714, %v461
      %v779 = vmul.f32 %v715, %v464
      %v780 = vmul.f32 %v716, %v467
      %v781 = vmul.f32 %v717, %v470
      %v782 = vmul.f32 %v718, %v473
      %v783 = vmul.f32 %v719, %v476
      %v784 = vmul.f32 %v720, %v479
      %v785 = vmul.f32 %v721, %v482
      %v786 = vmul.f32 %v722, %v485
      %v787 = vmul.f32 %v723, %v488
      %v788 = vmul.f32 %v724, %v491
      %v789 = vmul.f32 %v725, %v494
      %v790 = vmul.f32 %v726, %v497
      %v791 = vmul.f32 %v727, %v500
      %v792 = vmul.f32 %v728, %v503
      %v793 = vmul.f32 %v729, %v506
      %v794 = vmul.f32 %v730, %v509
      %v795 = vmul.f32 %v731, %v512
      %v796 = vmul.f32 %v732, %v515
      %v797 = vmul.f32 %v733, %v518
      %v798 = vmul.f32 %v734, %v521
      %v799 = vmul.f32 %v735, %v524
      %v800 = vmul.f32 %v736, %v527
      %v801 = vmul.f32 %v737, %v530
      %v802 = vmul.f32 %v738, %v533
      %v803 = vmul.f32 %v739, %v536
      %v804 = vmul.f32 %v740, %v539
      %v805 = vmul.f32 %v741, %v542
      %v806 = vmul.f32 %v742, %v545
      %v807 = vmul.f32 %v743, %v548
      %v808 = vmul.f32 %v744, %v551
      %v809 = vmul.f32 %v745, %v554
      %v810 = vmul.f32 %v746, %v557
      %v811 = vmul.f32 %v747, %v560
      %v812 = vmul.f32 %v748, %v563
      %v813 = vmul.f32 %v749, %v566
      %v814 = vmul.f32 %v750, %v569
      %v815 = vmul.f32 %v751, %v572
      %v816 = vmul.f32 %v752, %v575
      %v817 = vmul.f32 %v753, %v578
      %v818 = vmul.f32 %v754, %v581
      %v819 = vmul.f32 %v755, %v584
      %v820 = vmul.f32 %v756, %v587
      %v821 = vmul.f32 %v757, %v590
      %v822 = vmul.f32 %v758, %v593
      %v823 = vmul.f32 %v759, %v596
      %v824 = vmul.f32 %v760, %v599
      %v825 = vmul.f32 %v761, %v602
      %v826 = vmul.f32 %v762, %v605
      %v827 = vmul.f32 %v763, %v608
      %v828 = vmul.f32 %v764, %v611
      %v829 = vmul.f32 %v765, %v614
      %v830 = vmul.f32 %v766, %v617
      %v831 = vmul.f32 %v767, %v620
      %v832 = vmul.f32 %v768, %v623
      %v833 = vmul.f32 %v769, %v626
      %v834 = vmul.f32 %v770, %v629
      %v835 = vmul.f32 %v771, %v632
      %v836 = vmul.f32 %v772, %v635
      %v837 = vmul.f32 %v773, %v638
      %v838 = vmul.f32 %v774, %v641
      %v839 = vmul.f32 %v775, %v644
      %v840 = vmul.f32 %v776, %v647
      %v841 = vmul.f32 %v777, %v458
      %v842 = vmul.f32 %v778, %v461
      %v843 = vmul.f32 %v779, %v464
      %v844 = vmul.f32 %v780, %v467
      %v845 = vmul.f32 %v781, %v470
      %v846 = vmul.f32 %v782, %v473
      %v847 = vmul.f32 %v783, %v476
      %v848 = vmul.f32 %v784, %v479
      %v849 = vmul.f32 %v785, %v482
      %v850 = vmul.f32 %v786, %v485
      %v851 = vmul.f32 %v787, %v488
      %v852 = vmul.f32 %v788, %v491
      %v853 = vmul.f32 %v789, %v494
      %v854 = vmul.f32 %v790, %v497
      %v855 = vmul.f32 %v791, %v500
      %v856 = vmul.f32 %v792, %v503
      %v857 = vmul.f32 %v793, %v506
      %v858 = vmul.f32 %v794, %v509
      %v859 = vmul.f32 %v795, %v512
      %v860 = vmul.f32 %v796, %v515
      %v861 = vmul.f32 %v797, %v518
      %v862 = vmul.f32 %v798, %v521
      %v863 = vmul.f32 %v799, %v524
      %v864 = vmul.f32 %v800, %v527
      %v865 = vmul.f32 %v801, %v530
      %v866 = vmul.f32 %v802, %v533
      %v867 = vmul.f32 %v803, %v536
      %v868 = vmul.f32 %v804, %v539
      %v869 = vmul.f32 %v805, %v542
      %v870 = vmul.f32 %v806, %v545
      %v871 = vmul.f32 %v807, %v548
      %v872 = vmul.f32 %v808, %v551
      %v873 = vmul.f32 %v809, %v554
      %v874 = vmul.f32 %v810, %v557
      %v875 = vmul.f32 %v811, %v560
      %v876 = vmul.f32 %v812, %v563
      %v877 = vmul.f32 %v813, %v566
      %v878 = vmul.f32 %v814, %v569
      %v879 = vmul.f32 %v815, %v572
      %v880 = vmul.f32 %v816, %v575
      %v881 = vmul.f32 %v817, %v578
      %v882 = vmul.f32 %v818, %v581
      %v883 = vmul.f32 %v819, %v584
      %v884 = vmul.f32 %v820, %v587
      %v885 = vmul.f32 %v821, %v590
      %v886 = vmul.f32 %v822, %v593
      %v887 = vmul.f32 %v823, %v596
      %v888 = vmul.f32 %v824, %v599
      %v889 = vmul.f32 %v825, %v602
      %v890 = vmul.f32 %v826, %v605
      %v891 = vmul.f32 %v827, %v608
      %v892 = vmul.f32 %v828, %v611
      %v893 = vmul.f32 %v829, %v614
      %v894 = vmul.f32 %v830, %v617
      %v895 = vmul.f32 %v831, %v620
      %v896 = vmul.f32 %v832, %v623
      %v897 = vmul.f32 %v833, %v626
      %v898 = vmul.f32 %v834, %v629
      %v899 = vmul.f32 %v835, %v632
      %v900 = vmul.f32 %v836, %v635
      %v901 = vmul.f32 %v837, %v638
      %v902 = vmul.f32 %v838, %v641
      %v903 = vmul.f32 %v839, %v644
      %v904 = vmul.f32 %v840, %v647
      %v905 = vadd.f32 %v458, %v841
      %v906 = vadd.f32 %v461, %v842
      %v907 = vadd.f32 %v464, %v843
      %v908 = vadd.f32 %v467, %v844
      %v909 = vadd.f32 %v470, %v845
      %v910 = vadd.f32 %v473, %v846
      %v911 = vadd.f32 %v476, %v847
      %v912 = vadd.f32 %v479, %v848
      %v913 = vadd.f32 %v482, %v849
      %v914 = vadd.f32 %v485, %v850
      %v915 = vadd.f32 %v488, %v851
      %v916 = vadd.f32 %v491, %v852
      %v917 = vadd.f32 %v494, %v853
      %v918 = vadd.f32 %v497, %v854
      %v919 = vadd.f32 %v500, %v855
      %v920 = vadd.f32 %v503, %v856
      %v921 = vadd.f32 %v506, %v857
      %v922 = vadd.f32 %v509, %v858
      %v923 = vadd.f32 %v512, %v859
      %v924 = vadd.f32 %v515, %v860
      %v925 = vadd.f32 %v518, %v861
      %v926 = vadd.f32 %v521, %v862
      %v927 = vadd.f32 %v524, %v863
      %v928 = vadd.f32 %v527, %v864
      %v929 = vadd.f32 %v530, %v865
      %v930 = vadd.f32 %v533, %v866
      %v931 = vadd.f32 %v536, %v867
      %v932 = vadd.f32 %v539, %v868
      %v933 = vadd.f32 %v542, %v869
      %v934 = vadd.f32 %v545, %v870
      %v935 = vadd.f32 %v548, %v871
      %v936 = vadd.f32 %v551, %v872
      %v937 = vadd.f32 %v554, %v873
      %v938 = vadd.f32 %v557, %v874
      %v939 = vadd.f32 %v560, %v875
      %v940 = vadd.f32 %v563, %v876
      %v941 = vadd.f32 %v566, %v877
      %v942 = vadd.f32 %v569, %v878
      %v943 = vadd.f32 %v572, %v879
      %v944 = vadd.f32 %v575, %v880
      %v945 = vadd.f32 %v578, %v881
      %v946 = vadd.f32 %v581, %v882
      %v947 = vadd.f32 %v584, %v883
      %v948 = vadd.f32 %v587, %v884
      %v949 = vadd.f32 %v590, %v885
      %v950 = vadd.f32 %v593, %v886
      %v951 = vadd.f32 %v596, %v887
      %v952 = vadd.f32 %v599, %v888
      %v953 = vadd.f32 %v602, %v889
      %v954 = vadd.f32 %v605, %v890
      %v955 = vadd.f32 %v608, %v891
      %v956 = vadd.f32 %v611, %v892
      %v957 = vadd.f32 %v614, %v893
      %v958 = vadd.f32 %v617, %v894
      %v959 = vadd.f32 %v620, %v895
      %v960 = vadd.f32 %v623, %v896
      %v961 = vadd.f32 %v626, %v897
      %v962 = vadd.f32 %v629, %v898
      %v963 = vadd.f32 %v632, %v899
      %v964 = vadd.f32 %v635, %v900
      %v965 = vadd.f32 %v638, %v901
      %v966 = vadd.f32 %v641, %v902
      %v967 = vadd.f32 %v644, %v903
      %v968 = vadd.f32 %v647, %v904
      %v969 = vmul.f32 %v905, 0.7978846
      %v970 = vmul.f32 %v906, 0.7978846
      %v971 = vmul.f32 %v907, 0.7978846
      %v972 = vmul.f32 %v908, 0.7978846
      %v973 = vmul.f32 %v909, 0.7978846
      %v974 = vmul.f32 %v910, 0.7978846
      %v975 = vmul.f32 %v911, 0.7978846
      %v976 = vmul.f32 %v912, 0.7978846
      %v977 = vmul.f32 %v913, 0.7978846
      %v978 = vmul.f32 %v914, 0.7978846
      %v979 = vmul.f32 %v915, 0.7978846
      %v980 = vmul.f32 %v916, 0.7978846
      %v981 = vmul.f32 %v917, 0.7978846
      %v982 = vmul.f32 %v918, 0.7978846
      %v983 = vmul.f32 %v919, 0.7978846
      %v984 = vmul.f32 %v920, 0.7978846
      %v985 = vmul.f32 %v921, 0.7978846
      %v986 = vmul.f32 %v922, 0.7978846
      %v987 = vmul.f32 %v923, 0.7978846
      %v988 = vmul.f32 %v924, 0.7978846
      %v989 = vmul.f32 %v925, 0.7978846
      %v990 = vmul.f32 %v926, 0.7978846
      %v991 = vmul.f32 %v927, 0.7978846
      %v992 = vmul.f32 %v928, 0.7978846
      %v993 = vmul.f32 %v929, 0.7978846
      %v994 = vmul.f32 %v930, 0.7978846
      %v995 = vmul.f32 %v931, 0.7978846
      %v996 = vmul.f32 %v932, 0.7978846
      %v997 = vmul.f32 %v933, 0.7978846
      %v998 = vmul.f32 %v934, 0.7978846
      %v999 = vmul.f32 %v935, 0.7978846
      %v1000 = vmul.f32 %v936, 0.7978846
      %v1001 = vmul.f32 %v937, 0.7978846
      %v1002 = vmul.f32 %v938, 0.7978846
      %v1003 = vmul.f32 %v939, 0.7978846
      %v1004 = vmul.f32 %v940, 0.7978846
      %v1005 = vmul.f32 %v941, 0.7978846
      %v1006 = vmul.f32 %v942, 0.7978846
      %v1007 = vmul.f32 %v943, 0.7978846
      %v1008 = vmul.f32 %v944, 0.7978846
      %v1009 = vmul.f32 %v945, 0.7978846
      %v1010 = vmul.f32 %v946, 0.7978846
      %v1011 = vmul.f32 %v947, 0.7978846
      %v1012 = vmul.f32 %v948, 0.7978846
      %v1013 = vmul.f32 %v949, 0.7978846
      %v1014 = vmul.f32 %v950, 0.7978846
      %v1015 = vmul.f32 %v951, 0.7978846
      %v1016 = vmul.f32 %v952, 0.7978846
      %v1017 = vmul.f32 %v953, 0.7978846
      %v1018 = vmul.f32 %v954, 0.7978846
      %v1019 = vmul.f32 %v955, 0.7978846
      %v1020 = vmul.f32 %v956, 0.7978846
      %v1021 = vmul.f32 %v957, 0.7978846
      %v1022 = vmul.f32 %v958, 0.7978846
      %v1023 = vmul.f32 %v959, 0.7978846
      %v1024 = vmul.f32 %v960, 0.7978846
      %v1025 = vmul.f32 %v961, 0.7978846
      %v1026 = vmul.f32 %v962, 0.7978846
      %v1027 = vmul.f32 %v963, 0.7978846
      %v1028 = vmul.f32 %v964, 0.7978846
      %v1029 = vmul.f32 %v965, 0.7978846
      %v1030 = vmul.f32 %v966, 0.7978846
      %v1031 = vmul.f32 %v967, 0.7978846
      %v1032 = vmul.f32 %v968, 0.7978846
      %v1033 = vtanh.pop %v969
      %v1034 = vtanh.pop %v970
      %v1035 = vtanh.pop %v971
      %v1036 = vtanh.pop %v972
      %v1037 = vtanh.pop %v973
      %v1038 = vtanh.pop %v974
      %v1039 = vtanh.pop %v975
      %v1040 = vtanh.pop %v976
      %v1041 = vtanh.pop %v977
      %v1042 = vtanh.pop %v978
      %v1043 = vtanh.pop %v979
      %v1044 = vtanh.pop %v980
      %v1045 = vtanh.pop %v981
      %v1046 = vtanh.pop %v982
      %v1047 = vtanh.pop %v983
      %v1048 = vtanh.pop %v984
      %v1049 = vtanh.pop %v985
      %v1050 = vtanh.pop %v986
      %v1051 = vtanh.pop %v987
      %v1052 = vtanh.pop %v988
      %v1053 = vtanh.pop %v989
      %v1054 = vtanh.pop %v990
      %v1055 = vtanh.pop %v991
      %v1056 = vtanh.pop %v992
      %v1057 = vtanh.pop %v993
      %v1058 = vtanh.pop %v994
      %v1059 = vtanh.pop %v995
      %v1060 = vtanh.pop %v996
      %v1061 = vtanh.pop %v997
      %v1062 = vtanh.pop %v998
      %v1063 = vtanh.pop %v999
      %v1064 = vtanh.pop %v1000
      %v1065 = vtanh.pop %v1001
      %v1066 = vtanh.pop %v1002
      %v1067 = vtanh.pop %v1003
      %v1068 = vtanh.pop %v1004
      %v1069 = vtanh.pop %v1005
      %v1070 = vtanh.pop %v1006
      %v1071 = vtanh.pop %v1007
      %v1072 = vtanh.pop %v1008
      %v1073 = vtanh.pop %v1009
      %v1074 = vtanh.pop %v1010
      %v1075 = vtanh.pop %v1011
      %v1076 = vtanh.pop %v1012
      %v1077 = vtanh.pop %v1013
      %v1078 = vtanh.pop %v1014
      %v1079 = vtanh.pop %v1015
      %v1080 = vtanh.pop %v1016
      %v1081 = vtanh.pop %v1017
      %v1082 = vtanh.pop %v1018
      %v1083 = vtanh.pop %v1019
      %v1084 = vtanh.pop %v1020
      %v1085 = vtanh.pop %v1021
      %v1086 = vtanh.pop %v1022
      %v1087 = vtanh.pop %v1023
      %v1088 = vtanh.pop %v1024
      %v1089 = vtanh.pop %v1025
      %v1090 = vtanh.pop %v1026
      %v1091 = vtanh.pop %v1027
      %v1092 = vtanh.pop %v1028
      %v1093 = vtanh.pop %v1029
      %v1094 = vtanh.pop %v1030
      %v1095 = vtanh.pop %v1031
      %v1096 = vtanh.pop %v1032
      %v1097 = vadd.f32 %v1033, 1.0
      %v1098 = vadd.f32 %v1034, 1.0
      %v1099 = vadd.f32 %v1035, 1.0
      %v1100 = vadd.f32 %v1036, 1.0
      %v1101 = vadd.f32 %v1037, 1.0
      %v1102 = vadd.f32 %v1038, 1.0
      %v1103 = vadd.f32 %v1039, 1.0
      %v1104 = vadd.f32 %v1040, 1.0
      %v1105 = vadd.f32 %v1041, 1.0
      %v1106 = vadd.f32 %v1042, 1.0
      %v1107 = vadd.f32 %v1043, 1.0
      %v1108 = vadd.f32 %v1044, 1.0
      %v1109 = vadd.f32 %v1045, 1.0
      %v1110 = vadd.f32 %v1046, 1.0
      %v1111 = vadd.f32 %v1047, 1.0
      %v1112 = vadd.f32 %v1048, 1.0
      %v1113 = vadd.f32 %v1049, 1.0
      %v1114 = vadd.f32 %v1050, 1.0
      %v1115 = vadd.f32 %v1051, 1.0
      %v1116 = vadd.f32 %v1052, 1.0
      %v1117 = vadd.f32 %v1053, 1.0
      %v1118 = vadd.f32 %v1054, 1.0
      %v1119 = vadd.f32 %v1055, 1.0
      %v1120 = vadd.f32 %v1056, 1.0
      %v1121 = vadd.f32 %v1057, 1.0
      %v1122 = vadd.f32 %v1058, 1.0
      %v1123 = vadd.f32 %v1059, 1.0
      %v1124 = vadd.f32 %v1060, 1.0
      %v1125 = vadd.f32 %v1061, 1.0
      %v1126 = vadd.f32 %v1062, 1.0
      %v1127 = vadd.f32 %v1063, 1.0
      %v1128 = vadd.f32 %v1064, 1.0
      %v1129 = vadd.f32 %v1065, 1.0
      %v1130 = vadd.f32 %v1066, 1.0
      %v1131 = vadd.f32 %v1067, 1.0
      %v1132 = vadd.f32 %v1068, 1.0
      %v1133 = vadd.f32 %v1069, 1.0
      %v1134 = vadd.f32 %v1070, 1.0
      %v1135 = vadd.f32 %v1071, 1.0
      %v1136 = vadd.f32 %v1072, 1.0
      %v1137 = vadd.f32 %v1073, 1.0
      %v1138 = vadd.f32 %v1074, 1.0
      %v1139 = vadd.f32 %v1075, 1.0
      %v1140 = vadd.f32 %v1076, 1.0
      %v1141 = vadd.f32 %v1077, 1.0
      %v1142 = vadd.f32 %v1078, 1.0
      %v1143 = vadd.f32 %v1079, 1.0
      %v1144 = vadd.f32 %v1080, 1.0
      %v1145 = vadd.f32 %v1081, 1.0
      %v1146 = vadd.f32 %v1082, 1.0
      %v1147 = vadd.f32 %v1083, 1.0
      %v1148 = vadd.f32 %v1084, 1.0
      %v1149 = vadd.f32 %v1085, 1.0
      %v1150 = vadd.f32 %v1086, 1.0
      %v1151 = vadd.f32 %v1087, 1.0
      %v1152 = vadd.f32 %v1088, 1.0
      %v1153 = vadd.f32 %v1089, 1.0
      %v1154 = vadd.f32 %v1090, 1.0
      %v1155 = vadd.f32 %v1091, 1.0
      %v1156 = vadd.f32 %v1092, 1.0
      %v1157 = vadd.f32 %v1093, 1.0
      %v1158 = vadd.f32 %v1094, 1.0
      %v1159 = vadd.f32 %v1095, 1.0
      %v1160 = vadd.f32 %v1096, 1.0
      %v1161 = vmul.f32 %v649, %v1097
      %v1162 = vmul.f32 %v650, %v1098
      %v1163 = vmul.f32 %v651, %v1099
      %v1164 = vmul.f32 %v652, %v1100
      %v1165 = vmul.f32 %v653, %v1101
      %v1166 = vmul.f32 %v654, %v1102
      %v1167 = vmul.f32 %v655, %v1103
      %v1168 = vmul.f32 %v656, %v1104
      %v1169 = vmul.f32 %v657, %v1105
      %v1170 = vmul.f32 %v658, %v1106
      %v1171 = vmul.f32 %v659, %v1107
      %v1172 = vmul.f32 %v660, %v1108
      %v1173 = vmul.f32 %v661, %v1109
      %v1174 = vmul.f32 %v662, %v1110
      %v1175 = vmul.f32 %v663, %v1111
      %v1176 = vmul.f32 %v664, %v1112
      %v1177 = vmul.f32 %v665, %v1113
      %v1178 = vmul.f32 %v666, %v1114
      %v1179 = vmul.f32 %v667, %v1115
      %v1180 = vmul.f32 %v668, %v1116
      %v1181 = vmul.f32 %v669, %v1117
      %v1182 = vmul.f32 %v670, %v1118
      %v1183 = vmul.f32 %v671, %v1119
      %v1184 = vmul.f32 %v672, %v1120
      %v1185 = vmul.f32 %v673, %v1121
      %v1186 = vmul.f32 %v674, %v1122
      %v1187 = vmul.f32 %v675, %v1123
      %v1188 = vmul.f32 %v676, %v1124
      %v1189 = vmul.f32 %v677, %v1125
      %v1190 = vmul.f32 %v678, %v1126
      %v1191 = vmul.f32 %v679, %v1127
      %v1192 = vmul.f32 %v680, %v1128
      %v1193 = vmul.f32 %v681, %v1129
      %v1194 = vmul.f32 %v682, %v1130
      %v1195 = vmul.f32 %v683, %v1131
      %v1196 = vmul.f32 %v684, %v1132
      %v1197 = vmul.f32 %v685, %v1133
      %v1198 = vmul.f32 %v686, %v1134
      %v1199 = vmul.f32 %v687, %v1135
      %v1200 = vmul.f32 %v688, %v1136
      %v1201 = vmul.f32 %v689, %v1137
      %v1202 = vmul.f32 %v690, %v1138
      %v1203 = vmul.f32 %v691, %v1139
      %v1204 = vmul.f32 %v692, %v1140
      %v1205 = vmul.f32 %v693, %v1141
      %v1206 = vmul.f32 %v694, %v1142
      %v1207 = vmul.f32 %v695, %v1143
      %v1208 = vmul.f32 %v696, %v1144
      %v1209 = vmul.f32 %v697, %v1145
      %v1210 = vmul.f32 %v698, %v1146
      %v1211 = vmul.f32 %v699, %v1147
      %v1212 = vmul.f32 %v700, %v1148
      %v1213 = vmul.f32 %v701, %v1149
      %v1214 = vmul.f32 %v702, %v1150
      %v1215 = vmul.f32 %v703, %v1151
      %v1216 = vmul.f32 %v704, %v1152
      %v1217 = vmul.f32 %v705, %v1153
      %v1218 = vmul.f32 %v706, %v1154
      %v1219 = vmul.f32 %v707, %v1155
      %v1220 = vmul.f32 %v708, %v1156
      %v1221 = vmul.f32 %v709, %v1157
      %v1222 = vmul.f32 %v710, %v1158
      %v1223 = vmul.f32 %v711, %v1159
      %v1224 = vmul.f32 %v712, %v1160
      %vm1225 = vcmask 130048
      %1226 = vst.msk [vmem:[%s172] sm:$0xff] %vm1225, %v1161
      %1227 = vst.msk [vmem:[%s172 + $0x8] sm:$0xff] %vm1225, %v1162
      %1228 = vst.msk [vmem:[%s172 + $0x10] sm:$0xff] %vm1225, %v1163
      %1229 = vst.msk [vmem:[%s172 + $0x18] sm:$0xff] %vm1225, %v1164
      %1230 = vst.msk [vmem:[%s172 + $0x20] sm:$0xff] %vm1225, %v1165
      %1231 = vst.msk [vmem:[%s172 + $0x28] sm:$0xff] %vm1225, %v1166
      %1232 = vst.msk [vmem:[%s172 + $0x30] sm:$0xff] %vm1225, %v1167
      %1233 = vst.msk [vmem:[%s172 + $0x38] sm:$0xff] %vm1225, %v1168
      %1234 = vst.msk [vmem:[%s172 + $0x40] sm:$0xff] %vm1225, %v1169
      %1235 = vst.msk [vmem:[%s172 + $0x48] sm:$0xff] %vm1225, %v1170
      %1236 = vst.msk [vmem:[%s172 + $0x50] sm:$0xff] %vm1225, %v1171
      %1237 = vst.msk [vmem:[%s172 + $0x58] sm:$0xff] %vm1225, %v1172
      %1238 = vst.msk [vmem:[%s172 + $0x60] sm:$0xff] %vm1225, %v1173
      %1239 = vst.msk [vmem:[%s172 + $0x68] sm:$0xff] %vm1225, %v1174
      %1240 = vst.msk [vmem:[%s172 + $0x70] sm:$0xff] %vm1225, %v1175
      %1241 = vst.msk [vmem:[%s172 + $0x78] sm:$0xff] %vm1225, %v1176
      %1242 = vst.msk [vmem:[%s172 + $0x80] sm:$0xff] %vm1225, %v1177
      %1243 = vst.msk [vmem:[%s172 + $0x88] sm:$0xff] %vm1225, %v1178
      %1244 = vst.msk [vmem:[%s172 + $0x90] sm:$0xff] %vm1225, %v1179
      %1245 = vst.msk [vmem:[%s172 + $0x98] sm:$0xff] %vm1225, %v1180
      %1246 = vst.msk [vmem:[%s172 + $0xa0] sm:$0xff] %vm1225, %v1181
      %1247 = vst.msk [vmem:[%s172 + $0xa8] sm:$0xff] %vm1225, %v1182
      %1248 = vst.msk [vmem:[%s172 + $0xb0] sm:$0xff] %vm1225, %v1183
      %1249 = vst.msk [vmem:[%s172 + $0xb8] sm:$0xff] %vm1225, %v1184
      %1250 = vst.msk [vmem:[%s172 + $0xc0] sm:$0xff] %vm1225, %v1185
      %1251 = vst.msk [vmem:[%s172 + $0xc8] sm:$0xff] %vm1225, %v1186
      %1252 = vst.msk [vmem:[%s172 + $0xd0] sm:$0xff] %vm1225, %v1187
      %1253 = vst.msk [vmem:[%s172 + $0xd8] sm:$0xff] %vm1225, %v1188
      %1254 = vst.msk [vmem:[%s172 + $0xe0] sm:$0xff] %vm1225, %v1189
      %1255 = vst.msk [vmem:[%s172 + $0xe8] sm:$0xff] %vm1225, %v1190
      %1256 = vst.msk [vmem:[%s172 + $0xf0] sm:$0xff] %vm1225, %v1191
      %1257 = vst.msk [vmem:[%s172 + $0xf8] sm:$0xff] %vm1225, %v1192
      %1258 = vst.msk [vmem:[%s172 + $0x100] sm:$0xff] %vm1225, %v1193
      %1259 = vst.msk [vmem:[%s172 + $0x108] sm:$0xff] %vm1225, %v1194
      %1260 = vst.msk [vmem:[%s172 + $0x110] sm:$0xff] %vm1225, %v1195
      %1261 = vst.msk [vmem:[%s172 + $0x118] sm:$0xff] %vm1225, %v1196
      %1262 = vst.msk [vmem:[%s172 + $0x120] sm:$0xff] %vm1225, %v1197
      %1263 = vst.msk [vmem:[%s172 + $0x128] sm:$0xff] %vm1225, %v1198
      %1264 = vst.msk [vmem:[%s172 + $0x130] sm:$0xff] %vm1225, %v1199
      %1265 = vst.msk [vmem:[%s172 + $0x138] sm:$0xff] %vm1225, %v1200
      %1266 = vst.msk [vmem:[%s172 + $0x140] sm:$0xff] %vm1225, %v1201
      %1267 = vst.msk [vmem:[%s172 + $0x148] sm:$0xff] %vm1225, %v1202
      %1268 = vst.msk [vmem:[%s172 + $0x150] sm:$0xff] %vm1225, %v1203
      %1269 = vst.msk [vmem:[%s172 + $0x158] sm:$0xff] %vm1225, %v1204
      %1270 = vst.msk [vmem:[%s172 + $0x160] sm:$0xff] %vm1225, %v1205
      %1271 = vst.msk [vmem:[%s172 + $0x168] sm:$0xff] %vm1225, %v1206
      %1272 = vst.msk [vmem:[%s172 + $0x170] sm:$0xff] %vm1225, %v1207
      %1273 = vst.msk [vmem:[%s172 + $0x178] sm:$0xff] %vm1225, %v1208
      %1274 = vst.msk [vmem:[%s172 + $0x180] sm:$0xff] %vm1225, %v1209
      %1275 = vst.msk [vmem:[%s172 + $0x188] sm:$0xff] %vm1225, %v1210
      %1276 = vst.msk [vmem:[%s172 + $0x190] sm:$0xff] %vm1225, %v1211
      %1277 = vst.msk [vmem:[%s172 + $0x198] sm:$0xff] %vm1225, %v1212
      %1278 = vst.msk [vmem:[%s172 + $0x1a0] sm:$0xff] %vm1225, %v1213
      %1279 = vst.msk [vmem:[%s172 + $0x1a8] sm:$0xff] %vm1225, %v1214
      %1280 = vst.msk [vmem:[%s172 + $0x1b0] sm:$0xff] %vm1225, %v1215
      %1281 = vst.msk [vmem:[%s172 + $0x1b8] sm:$0xff] %vm1225, %v1216
      %1282 = vst.msk [vmem:[%s172 + $0x1c0] sm:$0xff] %vm1225, %v1217
      %1283 = vst.msk [vmem:[%s172 + $0x1c8] sm:$0xff] %vm1225, %v1218
      %1284 = vst.msk [vmem:[%s172 + $0x1d0] sm:$0xff] %vm1225, %v1219
      %1285 = vst.msk [vmem:[%s172 + $0x1d8] sm:$0xff] %vm1225, %v1220
      %1286 = vst.msk [vmem:[%s172 + $0x1e0] sm:$0xff] %vm1225, %v1221
      %1287 = vst.msk [vmem:[%s172 + $0x1e8] sm:$0xff] %vm1225, %v1222
      %1288 = vst.msk [vmem:[%s172 + $0x1f0] sm:$0xff] %vm1225, %v1223
      %1289 = vst.msk [vmem:[%s172 + $0x1f8] sm:$0xff] %vm1225, %v1224
      %s1290 = smul.u32 64, %s14
      %p1291 = scmp.lt.s32.totalorder %s1290, 127
      %s1292 = scalar_select %p1291, %s1290, 127
      %s1293 = smul.addr %s1292, 8
      %s1294 = scalar_lea.vmem %s3, %s1293
      // Predicated region
      $region33: #{ssmlp_forward.26} parent=31 // pred_check
        %p1295 = pneg %p100
      $region34: #{ssmlp_forward.26} parent=31 // pred_check_branch
        %1297 = sbr.rel (%p1295) target = $region36
      $region35: #{ssmlp_forward.26} parent=31 // pred_region
        %s1298 = smul.u32 64, %s14
      $region36: #{ssmlp_forward.26} parent=31 // pred_fallthru
        _
    $region32: #{ssmlp_forward.26} parent=5 // pred_fallthru
      _
    %p1299 = scmp.le.s32.totalorder 2, %s9
    // Predicated region
    $region37: #{ssmlp_forward.26} parent=5 // pred_check
      %p1300 = pneg %p1299
    $region38: #{ssmlp_forward.26} parent=5 // pred_check_branch
      %1302 = sbr.rel (%p1300) target = $region40
    $region39: #{ssmlp_forward.26} parent=5 // pred_region
      %s1303 = ssub.s32 %s9, 2
      // Predicated region
      $region41: #{ssmlp_forward.26} parent=39 // pred_check
        %p1304 = pneg %p106
      $region42: #{ssmlp_forward.26} parent=39 // pred_check_branch
        %1306 = sbr.rel (%p1304) target = $region44
      $region43: #{ssmlp_forward.26} parent=39 // pred_region
        %s1307 = smul.u32 64, %s15
        %p1308 = scmp.lt.s32.totalorder %s1307, 127
        %s1309 = scalar_select %p1308, %s1307, 127
        %s1310 = smul.addr %s1309, 8
        %s1311 = scalar_lea.vmem %s3, %s1310
      $region44: #{ssmlp_forward.26} parent=39 // pred_fallthru
        _
    $region40: #{ssmlp_forward.26} parent=5 // pred_fallthru
      _
  $region6: #{ssmlp_forward.26} parent=0 // loop_footer
    %s13 = sadd.s32 1, %s9
  $region7: #{ssmlp_forward.26} parent=0 // loop_footer_branch
    %8 = sbr.rel target = $region3
  $region8: #{ssmlp_forward.26} parent=0 // loop_exit
    _

// kernel: ssmlp_forward.27
$region0: #{ssmlp_forward.27}
  #allocation0 [shape = 'u32[]', space=smem, size = 0x4, offset = 0x4, fixed_abs, tag = 'smem constant byte address 0x4 - core index']
  #allocation1 [shape = 'u32[72,128]{1,0:T(1,128)}', space=vmem, size = 0x9000, scoped, tag = 'internal scratch']
  %s0 = inlined_call_operand.vmem [shape: f32[1024,144], index: 0, kind: input, shape index: {}]
  %s1 = inlined_call_operand.vmem [shape: f32[144,32], index: 1, kind: input, shape index: {}]
  %s2 = inlined_call_operand.vmem [shape: f32[1,32], index: 2, kind: input, shape index: {}]
  %s3 = inlined_call_operand.vmem [shape: f32[1024,32], index: 3, kind: output, shape index: {}]
  %s4 = sld [smem:[#allocation0]]
  $region45: #{ssmlp_forward.27} parent=0
    _
  %s6 = ssub.s32 1, %s4
  %s7 = scalar_select 0, %s6, %s4
  loop: start=0, step=1, limit=4
  $region2: #{ssmlp_forward.27} parent=0 // loop_pre_header
    _
  $region3: #{ssmlp_forward.27} parent=0 // loop_header
    %s9 = sphi 0, %s13
    %p10 = scmp.ge.s32.totalorder %s9, 4
    %s19 = sphi 0, %s21
    %s22 = sphi 0, %s19
    %s23 = sphi 0, %s22
    %s39 = sphi 0, %s23
    %s43 = sphi 0, %s43
    %s45 = sphi 0, %s43
    %s46 = sphi 0, %s45
    %s60 = sphi 0, %s46
    %s64 = sphi 0, %s64
    %s66 = sphi 0, %s64
    %s67 = sphi 0, %s66
    %s81 = sphi 0, %s67
    %s87 = sphi 0, %s89
    %s90 = sphi 0, %s87
    %s91 = sphi 0, %s90
    %s107 = sphi 0, %s91
  $region4: #{ssmlp_forward.27} parent=0 // loop_header_branch
    %12 = sbr.rel (%p10) target = $region8
  $region5: #{ssmlp_forward.27} parent=0 // loop_body
    %s14 = ssub.s32 %s9, 1
    %s15 = ssub.s32 %s9, 2
    %s16 = sadd.s32 %s9, 1
    %s17 = ssub.s32 %s9, %s16
    %p18 = scmp.eq.s32.totalorder %s17, 0
    %s20 = sadd.s32 %s19, 1
    %s21 = scalar_select %p18, %s19, %s20
    %p24 = pneg %p18
    %p25 = scmp.eq.s32.totalorder %s9, 1
    %p26 = por %p24, %p25
    %p27 = scmp.ne.s32.totalorder %s19, %s22
    %p28 = scmp.eq.s32.totalorder %s9, 0
    %p29 = por %p27, %p28
    %p30 = scmp.ne.s32.totalorder %s19, %s22
    %p31 = scmp.eq.s32.totalorder %s14, 1
    %p32 = por %p30, %p31
    %p33 = scmp.ne.s32.totalorder %s22, %s23
    %p34 = scmp.eq.s32.totalorder %s14, 0
    %p35 = por %p33, %p34
    %p36 = scmp.ne.s32.totalorder %s22, %s23
    %p37 = scmp.eq.s32.totalorder %s15, 1
    %p38 = por %p36, %p37
    %p40 = scmp.ne.s32.totalorder %s23, %s39
    %p41 = scmp.eq.s32.totalorder %s15, 0
    %p42 = por %p40, %p41
    %s44 = sadd.s32 %s43, 1
    %p47 = scmp.eq.s32.totalorder %s9, 1
    %p48 = scmp.ne.s32.totalorder %s43, %s45
    %p49 = scmp.eq.s32.totalorder %s9, 0
    %p50 = por %p48, %p49
    %p51 = scmp.ne.s32.totalorder %s43, %s45
    %p52 = scmp.eq.s32.totalorder %s14, 1
    %p53 = por %p51, %p52
    %p54 = scmp.ne.s32.totalorder %s45, %s46
    %p55 = scmp.eq.s32.totalorder %s14, 0
    %p56 = por %p54, %p55
    %p57 = scmp.ne.s32.totalorder %s45, %s46
    %p58 = scmp.eq.s32.totalorder %s15, 1
    %p59 = por %p57, %p58
    %p61 = scmp.ne.s32.totalorder %s46, %s60
    %p62 = scmp.eq.s32.totalorder %s15, 0
    %p63 = por %p61, %p62
    %s65 = sadd.s32 %s64, 1
    %p68 = scmp.eq.s32.totalorder %s9, 1
    %p69 = scmp.ne.s32.totalorder %s64, %s66
    %p70 = scmp.eq.s32.totalorder %s9, 0
    %p71 = por %p69, %p70
    %p72 = scmp.ne.s32.totalorder %s64, %s66
    %p73 = scmp.eq.s32.totalorder %s14, 1
    %p74 = por %p72, %p73
    %p75 = scmp.ne.s32.totalorder %s66, %s67
    %p76 = scmp.eq.s32.totalorder %s14, 0
    %p77 = por %p75, %p76
    %p78 = scmp.ne.s32.totalorder %s66, %s67
    %p79 = scmp.eq.s32.totalorder %s15, 1
    %p80 = por %p78, %p79
    %p82 = scmp.ne.s32.totalorder %s67, %s81
    %p83 = scmp.eq.s32.totalorder %s15, 0
    %p84 = por %p82, %p83
    %s85 = ssub.s32 %s9, %s16
    %p86 = scmp.eq.s32.totalorder %s85, 0
    %s88 = sadd.s32 %s87, 1
    %s89 = scalar_select %p86, %s87, %s88
    %p92 = pneg %p86
    %p93 = scmp.eq.s32.totalorder %s9, 1
    %p94 = por %p92, %p93
    %p95 = scmp.ne.s32.totalorder %s87, %s90
    %p96 = scmp.eq.s32.totalorder %s9, 0
    %p97 = por %p95, %p96
    %p98 = scmp.ne.s32.totalorder %s87, %s90
    %p99 = scmp.eq.s32.totalorder %s14, 1
    %p100 = por %p98, %p99
    %p101 = scmp.ne.s32.totalorder %s90, %s91
    %p102 = scmp.eq.s32.totalorder %s14, 0
    %p103 = por %p101, %p102
    %p104 = scmp.ne.s32.totalorder %s90, %s91
    %p105 = scmp.eq.s32.totalorder %s15, 1
    %p106 = por %p104, %p105
    %p108 = scmp.ne.s32.totalorder %s91, %s107
    %p109 = scmp.eq.s32.totalorder %s15, 0
    %p110 = por %p108, %p109
    %p111 = scmp.le.s32.totalorder 1, %s9
    %p112 = scmp.lt.s32.totalorder %s9, 3
    %p113 = pnand %p111, %p112
    %p114 = pneg %p113
    // Predicated region
    $region9: #{ssmlp_forward.27} parent=5 // pred_check
      _
    $region10: #{ssmlp_forward.27} parent=5 // pred_check_branch
      %116 = sbr.rel (%p113) target = $region12
    $region11: #{ssmlp_forward.27} parent=5 // pred_region
      %s117 = ssub.s32 %s9, 1
      // Predicated region
      $region13: #{ssmlp_forward.27} parent=11 // pred_check
        %p118 = pneg %p56
      $region14: #{ssmlp_forward.27} parent=11 // pred_check_branch
        %120 = sbr.rel (%p118) target = $region16
      $region15: #{ssmlp_forward.27} parent=11 // pred_region
        _
      $region16: #{ssmlp_forward.27} parent=11 // pred_fallthru
        _
      // Predicated region
      $region17: #{ssmlp_forward.27} parent=11 // pred_check
        %p121 = pneg %p77
      $region18: #{ssmlp_forward.27} parent=11 // pred_check_branch
        %123 = sbr.rel (%p121) target = $region20
      $region19: #{ssmlp_forward.27} parent=11 // pred_region
        _
      $region20: #{ssmlp_forward.27} parent=11 // pred_fallthru
        _
    $region12: #{ssmlp_forward.27} parent=5 // pred_fallthru
      _
    %p124 = scmp.lt.s32.totalorder %s9, 2
    // Predicated region
    $region21: #{ssmlp_forward.27} parent=5 // pred_check
      %p125 = pneg %p124
    $region22: #{ssmlp_forward.27} parent=5 // pred_check_branch
      %127 = sbr.rel (%p125) target = $region24
    $region23: #{ssmlp_forward.27} parent=5 // pred_region
      // Predicated region
      $region25: #{ssmlp_forward.27} parent=23 // pred_check
        %p128 = pneg %p29
      $region26: #{ssmlp_forward.27} parent=23 // pred_check_branch
        %130 = sbr.rel (%p128) target = $region28
      $region27: #{ssmlp_forward.27} parent=23 // pred_region
        %s131 = smul.u32 64, %s9
        %p132 = scmp.lt.s32.totalorder %s131, 127
        %s133 = scalar_select %p132, %s131, 127
        %s134 = smul.addr %s133, 2
        %s135 = smul.addr %s134, 8
        %s136 = scalar_lea.vmem %s0, %s135
        %s137 = smul.u32 64, %s9
      $region28: #{ssmlp_forward.27} parent=23 // pred_fallthru
        _
    $region24: #{ssmlp_forward.27} parent=5 // pred_fallthru
      _
    %p138 = scmp.le.s32.totalorder 1, %s9
    %p139 = scmp.lt.s32.totalorder %s9, 3
    %p140 = pnand %p138, %p139
    %p141 = pneg %p140
    // Predicated region
    $region29: #{ssmlp_forward.27} parent=5 // pred_check
      _
    $region30: #{ssmlp_forward.27} parent=5 // pred_check_branch
      %143 = sbr.rel (%p140) target = $region32
    $region31: #{ssmlp_forward.27} parent=5 // pred_region
      %s144 = ssub.s32 %s9, 1
      %s145 = smul.u32 64, %s14
      %p146 = scmp.lt.s32.totalorder %s145, 127
      %s147 = scalar_select %p146, %s145, 127
      %s148 = smul.addr %s147, 2
      %s149 = smul.addr %s148, 8
      %s150 = scalar_lea.vmem %s0, %s149
      %p151 = pneg %p35
      %p152 = pneg %p32
      %p153 = pneg %p56
      %p154 = pneg %p53
      %p155 = pneg %p77
      %p156 = pneg %p74
      %p157 = pneg %p103
      %p158 = pneg %p100
      %s159 = smul.u32 64, %s14
      %p160 = scmp.lt.s32.totalorder %s159, 127
      %s161 = scalar_select %p160, %s159, 127
      %s162 = smul.addr %s161, 8
      %s163 = scalar_lea.vmem %s3, %s162
      %s164 = smul.u32 64, %s14
      %p165 = scmp.lt.s32.totalorder %s164, 127
      %s166 = scalar_select %p165, %s164, 127
      %s167 = smul.addr %s166, 2
      %s168 = smul.addr %s167, 8
      %s169 = scalar_lea.vmem %s0, %s168
      %s170 = smul.u32 64, %s14
      %s171 = smul.u32 64, %s14
      %p172 = scmp.lt.s32.totalorder %s171, 127
      %s173 = scalar_select %p172, %s171, 127
      %s174 = smul.addr %s173, 8
      %s175 = scalar_lea.vmem %s3, %s174
      %s176 = smul.u32 64, %s14
      %v177 = vld [vmem:[%s169] sm:$0xff]
      %v178 = vld [vmem:[%s169 + $0x8] sm:$0xff]
      %v179 = vld [vmem:[%s169 + $0x10] sm:$0xff]
      %v180 = vld [vmem:[%s169 + $0x18] sm:$0xff]
      %v181 = vld [vmem:[%s169 + $0x20] sm:$0xff]
      %v182 = vld [vmem:[%s169 + $0x28] sm:$0xff]
      %v183 = vld [vmem:[%s169 + $0x30] sm:$0xff]
      %v184 = vld [vmem:[%s169 + $0x38] sm:$0xff]
      %v185 = vld [vmem:[%s169 + $0x40] sm:$0xff]
      %v186 = vld [vmem:[%s169 + $0x48] sm:$0xff]
      %v187 = vld [vmem:[%s169 + $0x50] sm:$0xff]
      %v188 = vld [vmem:[%s169 + $0x58] sm:$0xff]
      %v189 = vld [vmem:[%s169 + $0x60] sm:$0xff]
      %v190 = vld [vmem:[%s169 + $0x68] sm:$0xff]
      %v191 = vld [vmem:[%s169 + $0x70] sm:$0xff]
      %v192 = vld [vmem:[%s169 + $0x78] sm:$0xff]
      %v193 = vld [vmem:[%s169 + $0x80] sm:$0xff]
      %v194 = vld [vmem:[%s169 + $0x88] sm:$0xff]
      %v195 = vld [vmem:[%s169 + $0x90] sm:$0xff]
      %v196 = vld [vmem:[%s169 + $0x98] sm:$0xff]
      %v197 = vld [vmem:[%s169 + $0xa0] sm:$0xff]
      %v198 = vld [vmem:[%s169 + $0xa8] sm:$0xff]
      %v199 = vld [vmem:[%s169 + $0xb0] sm:$0xff]
      %v200 = vld [vmem:[%s169 + $0xb8] sm:$0xff]
      %v201 = vld [vmem:[%s169 + $0xc0] sm:$0xff]
      %v202 = vld [vmem:[%s169 + $0xc8] sm:$0xff]
      %v203 = vld [vmem:[%s169 + $0xd0] sm:$0xff]
      %v204 = vld [vmem:[%s169 + $0xd8] sm:$0xff]
      %v205 = vld [vmem:[%s169 + $0xe0] sm:$0xff]
      %v206 = vld [vmem:[%s169 + $0xe8] sm:$0xff]
      %v207 = vld [vmem:[%s169 + $0xf0] sm:$0xff]
      %v208 = vld [vmem:[%s169 + $0xf8] sm:$0xff]
      %v209 = vld [vmem:[%s169 + $0x100] sm:$0xff]
      %v210 = vld [vmem:[%s169 + $0x108] sm:$0xff]
      %v211 = vld [vmem:[%s169 + $0x110] sm:$0xff]
      %v212 = vld [vmem:[%s169 + $0x118] sm:$0xff]
      %v213 = vld [vmem:[%s169 + $0x120] sm:$0xff]
      %v214 = vld [vmem:[%s169 + $0x128] sm:$0xff]
      %v215 = vld [vmem:[%s169 + $0x130] sm:$0xff]
      %v216 = vld [vmem:[%s169 + $0x138] sm:$0xff]
      %v217 = vld [vmem:[%s169 + $0x140] sm:$0xff]
      %v218 = vld [vmem:[%s169 + $0x148] sm:$0xff]
      %v219 = vld [vmem:[%s169 + $0x150] sm:$0xff]
      %v220 = vld [vmem:[%s169 + $0x158] sm:$0xff]
      %v221 = vld [vmem:[%s169 + $0x160] sm:$0xff]
      %v222 = vld [vmem:[%s169 + $0x168] sm:$0xff]
      %v223 = vld [vmem:[%s169 + $0x170] sm:$0xff]
      %v224 = vld [vmem:[%s169 + $0x178] sm:$0xff]
      %v225 = vld [vmem:[%s169 + $0x180] sm:$0xff]
      %v226 = vld [vmem:[%s169 + $0x188] sm:$0xff]
      %v227 = vld [vmem:[%s169 + $0x190] sm:$0xff]
      %v228 = vld [vmem:[%s169 + $0x198] sm:$0xff]
      %v229 = vld [vmem:[%s169 + $0x1a0] sm:$0xff]
      %v230 = vld [vmem:[%s169 + $0x1a8] sm:$0xff]
      %v231 = vld [vmem:[%s169 + $0x1b0] sm:$0xff]
      %v232 = vld [vmem:[%s169 + $0x1b8] sm:$0xff]
      %v233 = vld [vmem:[%s169 + $0x1c0] sm:$0xff]
      %v234 = vld [vmem:[%s169 + $0x1c8] sm:$0xff]
      %v235 = vld [vmem:[%s169 + $0x1d0] sm:$0xff]
      %v236 = vld [vmem:[%s169 + $0x1d8] sm:$0xff]
      %v237 = vld [vmem:[%s169 + $0x1e0] sm:$0xff]
      %v238 = vld [vmem:[%s169 + $0x1e8] sm:$0xff]
      %v239 = vld [vmem:[%s169 + $0x1f0] sm:$0xff]
      %v240 = vld [vmem:[%s169 + $0x1f8] sm:$0xff]
      %v241 = vld [vmem:[%s169 + $0x200] sm:$0xff]
      %v242 = vld [vmem:[%s169 + $0x208] sm:$0xff]
      %v243 = vld [vmem:[%s169 + $0x210] sm:$0xff]
      %v244 = vld [vmem:[%s169 + $0x218] sm:$0xff]
      %v245 = vld [vmem:[%s169 + $0x220] sm:$0xff]
      %v246 = vld [vmem:[%s169 + $0x228] sm:$0xff]
      %v247 = vld [vmem:[%s169 + $0x230] sm:$0xff]
      %v248 = vld [vmem:[%s169 + $0x238] sm:$0xff]
      %v249 = vld [vmem:[%s169 + $0x240] sm:$0xff]
      %v250 = vld [vmem:[%s169 + $0x248] sm:$0xff]
      %v251 = vld [vmem:[%s169 + $0x250] sm:$0xff]
      %v252 = vld [vmem:[%s169 + $0x258] sm:$0xff]
      %v253 = vld [vmem:[%s169 + $0x260] sm:$0xff]
      %v254 = vld [vmem:[%s169 + $0x268] sm:$0xff]
      %v255 = vld [vmem:[%s169 + $0x270] sm:$0xff]
      %v256 = vld [vmem:[%s169 + $0x278] sm:$0xff]
      %v257 = vld [vmem:[%s169 + $0x280] sm:$0xff]
      %v258 = vld [vmem:[%s169 + $0x288] sm:$0xff]
      %v259 = vld [vmem:[%s169 + $0x290] sm:$0xff]
      %v260 = vld [vmem:[%s169 + $0x298] sm:$0xff]
      %v261 = vld [vmem:[%s169 + $0x2a0] sm:$0xff]
      %v262 = vld [vmem:[%s169 + $0x2a8] sm:$0xff]
      %v263 = vld [vmem:[%s169 + $0x2b0] sm:$0xff]
      %v264 = vld [vmem:[%s169 + $0x2b8] sm:$0xff]
      %v265 = vld [vmem:[%s169 + $0x2c0] sm:$0xff]
      %v266 = vld [vmem:[%s169 + $0x2c8] sm:$0xff]
      %v267 = vld [vmem:[%s169 + $0x2d0] sm:$0xff]
      %v268 = vld [vmem:[%s169 + $0x2d8] sm:$0xff]
      %v269 = vld [vmem:[%s169 + $0x2e0] sm:$0xff]
      %v270 = vld [vmem:[%s169 + $0x2e8] sm:$0xff]
      %v271 = vld [vmem:[%s169 + $0x2f0] sm:$0xff]
      %v272 = vld [vmem:[%s169 + $0x2f8] sm:$0xff]
      %v273 = vld [vmem:[%s169 + $0x300] sm:$0xff]
      %v274 = vld [vmem:[%s169 + $0x308] sm:$0xff]
      %v275 = vld [vmem:[%s169 + $0x310] sm:$0xff]
      %v276 = vld [vmem:[%s169 + $0x318] sm:$0xff]
      %v277 = vld [vmem:[%s169 + $0x320] sm:$0xff]
      %v278 = vld [vmem:[%s169 + $0x328] sm:$0xff]
      %v279 = vld [vmem:[%s169 + $0x330] sm:$0xff]
      %v280 = vld [vmem:[%s169 + $0x338] sm:$0xff]
      %v281 = vld [vmem:[%s169 + $0x340] sm:$0xff]
      %v282 = vld [vmem:[%s169 + $0x348] sm:$0xff]
      %v283 = vld [vmem:[%s169 + $0x350] sm:$0xff]
      %v284 = vld [vmem:[%s169 + $0x358] sm:$0xff]
      %v285 = vld [vmem:[%s169 + $0x360] sm:$0xff]
      %v286 = vld [vmem:[%s169 + $0x368] sm:$0xff]
      %v287 = vld [vmem:[%s169 + $0x370] sm:$0xff]
      %v288 = vld [vmem:[%s169 + $0x378] sm:$0xff]
      %v289 = vld [vmem:[%s169 + $0x380] sm:$0xff]
      %v290 = vld [vmem:[%s169 + $0x388] sm:$0xff]
      %v291 = vld [vmem:[%s169 + $0x390] sm:$0xff]
      %v292 = vld [vmem:[%s169 + $0x398] sm:$0xff]
      %v293 = vld [vmem:[%s169 + $0x3a0] sm:$0xff]
      %v294 = vld [vmem:[%s169 + $0x3a8] sm:$0xff]
      %v295 = vld [vmem:[%s169 + $0x3b0] sm:$0xff]
      %v296 = vld [vmem:[%s169 + $0x3b8] sm:$0xff]
      %v297 = vld [vmem:[%s169 + $0x3c0] sm:$0xff]
      %v298 = vld [vmem:[%s169 + $0x3c8] sm:$0xff]
      %v299 = vld [vmem:[%s169 + $0x3d0] sm:$0xff]
      %v300 = vld [vmem:[%s169 + $0x3d8] sm:$0xff]
      %v301 = vld [vmem:[%s169 + $0x3e0] sm:$0xff]
      %v302 = vld [vmem:[%s169 + $0x3e8] sm:$0xff]
      %v303 = vld [vmem:[%s169 + $0x3f0] sm:$0xff]
      %v304 = vld [vmem:[%s169 + $0x3f8] sm:$0xff]
      %v305 = vld [vmem:[%s1] sm:$0xff]
      %v306 = vld [vmem:[%s1 + $0x8] sm:$0xff]
      %v307 = vld [vmem:[%s1 + $0x10] sm:$0xff]
      %v308 = vld [vmem:[%s1 + $0x18] sm:$0xff]
      %v309 = vld [vmem:[%s1 + $0x20] sm:$0xff]
      %v310 = vld [vmem:[%s1 + $0x28] sm:$0xff]
      %v311 = vld [vmem:[%s1 + $0x30] sm:$0xff]
      %v312 = vld [vmem:[%s1 + $0x38] sm:$0xff]
      %v313 = vld [vmem:[%s1 + $0x40] sm:$0xff]
      %v314 = vld [vmem:[%s1 + $0x48] sm:$0xff]
      %v315 = vld [vmem:[%s1 + $0x50] sm:$0xff]
      %v316 = vld [vmem:[%s1 + $0x58] sm:$0xff]
      %v317 = vld [vmem:[%s1 + $0x60] sm:$0xff]
      %v318 = vld [vmem:[%s1 + $0x68] sm:$0xff]
      %v319 = vld [vmem:[%s1 + $0x70] sm:$0xff]
      %v320 = vld [vmem:[%s1 + $0x78] sm:$0xff]
      %v321 = vld [vmem:[%s1 + $0x80] sm:$0xff]
      %v322 = vld [vmem:[%s1 + $0x88] sm:$0xff]
      %v323 = vld [vmem:[%s2] sm:$0x1]
      %v325 = vperm.slane %v323, 0
      %vm327 = vcmask 130048
      %v329 = vsel %vm327, %v178, 0
      %v332 = vsel %vm327, %v180, 0
      %v335 = vsel %vm327, %v182, 0
      %v338 = vsel %vm327, %v184, 0
      %v341 = vsel %vm327, %v186, 0
      %v344 = vsel %vm327, %v188, 0
      %v347 = vsel %vm327, %v190, 0
      %v350 = vsel %vm327, %v192, 0
      %v353 = vsel %vm327, %v194, 0
      %v356 = vsel %vm327, %v196, 0
      %v359 = vsel %vm327, %v198, 0
      %v362 = vsel %vm327, %v200, 0
      %v365 = vsel %vm327, %v202, 0
      %v368 = vsel %vm327, %v204, 0
      %v371 = vsel %vm327, %v206, 0
      %v374 = vsel %vm327, %v208, 0
      %v377 = vsel %vm327, %v210, 0
      %v380 = vsel %vm327, %v212, 0
      %v383 = vsel %vm327, %v214, 0
      %v386 = vsel %vm327, %v216, 0
      %v389 = vsel %vm327, %v218, 0
      %v392 = vsel %vm327, %v220, 0
      %v395 = vsel %vm327, %v222, 0
      %v398 = vsel %vm327, %v224, 0
      %v401 = vsel %vm327, %v226, 0
      %v404 = vsel %vm327, %v228, 0
      %v407 = vsel %vm327, %v230, 0
      %v410 = vsel %vm327, %v232, 0
      %v413 = vsel %vm327, %v234, 0
      %v416 = vsel %vm327, %v236, 0
      %v419 = vsel %vm327, %v238, 0
      %v422 = vsel %vm327, %v240, 0
      %v425 = vsel %vm327, %v242, 0
      %v428 = vsel %vm327, %v244, 0
      %v431 = vsel %vm327, %v246, 0
      %v434 = vsel %vm327, %v248, 0
      %v437 = vsel %vm327, %v250, 0
      %v440 = vsel %vm327, %v252, 0
      %v443 = vsel %vm327, %v254, 0
      %v446 = vsel %vm327, %v256, 0
      %v449 = vsel %vm327, %v258, 0
      %v452 = vsel %vm327, %v260, 0
      %v455 = vsel %vm327, %v262, 0
      %v458 = vsel %vm327, %v264, 0
      %v461 = vsel %vm327, %v266, 0
      %v464 = vsel %vm327, %v268, 0
      %v467 = vsel %vm327, %v270, 0
      %v470 = vsel %vm327, %v272, 0
      %v473 = vsel %vm327, %v274, 0
      %v476 = vsel %vm327, %v276, 0
      %v479 = vsel %vm327, %v278, 0
      %v482 = vsel %vm327, %v280, 0
      %v485 = vsel %vm327, %v282, 0
      %v488 = vsel %vm327, %v284, 0
      %v491 = vsel %vm327, %v286, 0
      %v494 = vsel %vm327, %v288, 0
      %v497 = vsel %vm327, %v290, 0
      %v500 = vsel %vm327, %v292, 0
      %v503 = vsel %vm327, %v294, 0
      %v506 = vsel %vm327, %v296, 0
      %v509 = vsel %vm327, %v298, 0
      %v512 = vsel %vm327, %v300, 0
      %v515 = vsel %vm327, %v302, 0
      %v518 = vsel %vm327, %v304, 0
      %520 = vmatpush.msra.mxu0 %v320
      %521 = vmatpush.msra.mxu0 %v319
      %522 = vmatpush.msra.mxu0 %v318
      %523 = vmatpush.msra.mxu0 %v317
      %524 = vmatpush.msra.mxu0 %v316
      %525 = vmatpush.msra.mxu0 %v315
      %526 = vmatpush.msra.mxu0 %v314
      %527 = vmatpush.msra.mxu0 %v313
      %528 = vmatpush.msra.mxu0 %v312
      %529 = vmatpush.msra.mxu0 %v311
      %530 = vmatpush.msra.mxu0 %v310
      %531 = vmatpush.msra.mxu0 %v309
      %532 = vmatpush.msra.mxu0 %v308
      %533 = vmatpush.msra.mxu0 %v307
      %534 = vmatpush.msra.mxu0 %v306
      %535 = vmatpush.msra.mxu0 %v305
      %536 = vmatmul.f32.gmra.mxu0 %v177
      %v537 = vpop.f32.mrf.mxu0
      %v538 = vadd.f32 %v325, %v537
      %539 = vmatmul.f32.gmra.mxu0 %v179
      %v540 = vpop.f32.mrf.mxu0
      %v541 = vadd.f32 %v325, %v540
      %542 = vmatmul.f32.gmra.mxu0 %v181
      %v543 = vpop.f32.mrf.mxu0
      %v544 = vadd.f32 %v325, %v543
      %545 = vmatmul.f32.gmra.mxu0 %v183
      %v546 = vpop.f32.mrf.mxu0
      %v547 = vadd.f32 %v325, %v546
      %548 = vmatmul.f32.gmra.mxu0 %v185
      %v549 = vpop.f32.mrf.mxu0
      %v550 = vadd.f32 %v325, %v549
      %551 = vmatmul.f32.gmra.mxu0 %v187
      %v552 = vpop.f32.mrf.mxu0
      %v553 = vadd.f32 %v325, %v552
      %554 = vmatmul.f32.gmra.mxu0 %v189
      %v555 = vpop.f32.mrf.mxu0
      %v556 = vadd.f32 %v325, %v555
      %557 = vmatmul.f32.gmra.mxu0 %v191
      %v558 = vpop.f32.mrf.mxu0
      %v559 = vadd.f32 %v325, %v558
      %560 = vmatmul.f32.gmra.mxu0 %v193
      %v561 = vpop.f32.mrf.mxu0
      %v562 = vadd.f32 %v325, %v561
      %563 = vmatmul.f32.gmra.mxu0 %v195
      %v564 = vpop.f32.mrf.mxu0
      %v565 = vadd.f32 %v325, %v564
      %566 = vmatmul.f32.gmra.mxu0 %v197
      %v567 = vpop.f32.mrf.mxu0
      %v568 = vadd.f32 %v325, %v567
      %569 = vmatmul.f32.gmra.mxu0 %v199
      %v570 = vpop.f32.mrf.mxu0
      %v571 = vadd.f32 %v325, %v570
      %572 = vmatmul.f32.gmra.mxu0 %v201
      %v573 = vpop.f32.mrf.mxu0
      %v574 = vadd.f32 %v325, %v573
      %575 = vmatmul.f32.gmra.mxu0 %v203
      %v576 = vpop.f32.mrf.mxu0
      %v577 = vadd.f32 %v325, %v576
      %578 = vmatmul.f32.gmra.mxu0 %v205
      %v579 = vpop.f32.mrf.mxu0
      %v580 = vadd.f32 %v325, %v579
      %581 = vmatmul.f32.gmra.mxu0 %v207
      %v582 = vpop.f32.mrf.mxu0
      %v583 = vadd.f32 %v325, %v582
      %584 = vmatmul.f32.gmra.mxu0 %v209
      %v585 = vpop.f32.mrf.mxu0
      %v586 = vadd.f32 %v325, %v585
      %587 = vmatmul.f32.gmra.mxu0 %v211
      %v588 = vpop.f32.mrf.mxu0
      %v589 = vadd.f32 %v325, %v588
      %590 = vmatmul.f32.gmra.mxu0 %v213
      %v591 = vpop.f32.mrf.mxu0
      %v592 = vadd.f32 %v325, %v591
      %593 = vmatmul.f32.gmra.mxu0 %v215
      %v594 = vpop.f32.mrf.mxu0
      %v595 = vadd.f32 %v325, %v594
      %596 = vmatmul.f32.gmra.mxu0 %v217
      %v597 = vpop.f32.mrf.mxu0
      %v598 = vadd.f32 %v325, %v597
      %599 = vmatmul.f32.gmra.mxu0 %v219
      %v600 = vpop.f32.mrf.mxu0
      %v601 = vadd.f32 %v325, %v600
      %602 = vmatmul.f32.gmra.mxu0 %v221
      %v603 = vpop.f32.mrf.mxu0
      %v604 = vadd.f32 %v325, %v603
      %605 = vmatmul.f32.gmra.mxu0 %v223
      %v606 = vpop.f32.mrf.mxu0
      %v607 = vadd.f32 %v325, %v606
      %608 = vmatmul.f32.gmra.mxu0 %v225
      %v609 = vpop.f32.mrf.mxu0
      %v610 = vadd.f32 %v325, %v609
      %611 = vmatmul.f32.gmra.mxu0 %v227
      %v612 = vpop.f32.mrf.mxu0
      %v613 = vadd.f32 %v325, %v612
      %614 = vmatmul.f32.gmra.mxu0 %v229
      %v615 = vpop.f32.mrf.mxu0
      %v616 = vadd.f32 %v325, %v615
      %617 = vmatmul.f32.gmra.mxu0 %v231
      %v618 = vpop.f32.mrf.mxu0
      %v619 = vadd.f32 %v325, %v618
      %620 = vmatmul.f32.gmra.mxu0 %v233
      %v621 = vpop.f32.mrf.mxu0
      %v622 = vadd.f32 %v325, %v621
      %623 = vmatmul.f32.gmra.mxu0 %v235
      %v624 = vpop.f32.mrf.mxu0
      %v625 = vadd.f32 %v325, %v624
      %626 = vmatmul.f32.gmra.mxu0 %v237
      %v627 = vpop.f32.mrf.mxu0
      %v628 = vadd.f32 %v325, %v627
      %629 = vmatmul.f32.gmra.mxu0 %v239
      %v630 = vpop.f32.mrf.mxu0
      %v631 = vadd.f32 %v325, %v630
      %632 = vmatmul.f32.gmra.mxu0 %v241
      %v633 = vpop.f32.mrf.mxu0
      %v634 = vadd.f32 %v325, %v633
      %635 = vmatmul.f32.gmra.mxu0 %v243
      %v636 = vpop.f32.mrf.mxu0
      %v637 = vadd.f32 %v325, %v636
      %638 = vmatmul.f32.gmra.mxu0 %v245
      %v639 = vpop.f32.mrf.mxu0
      %v640 = vadd.f32 %v325, %v639
      %641 = vmatmul.f32.gmra.mxu0 %v247
      %v642 = vpop.f32.mrf.mxu0
      %v643 = vadd.f32 %v325, %v642
      %644 = vmatmul.f32.gmra.mxu0 %v249
      %v645 = vpop.f32.mrf.mxu0
      %v646 = vadd.f32 %v325, %v645
      %647 = vmatmul.f32.gmra.mxu0 %v251
      %v648 = vpop.f32.mrf.mxu0
      %v649 = vadd.f32 %v325, %v648
      %650 = vmatmul.f32.gmra.mxu0 %v253
      %v651 = vpop.f32.mrf.mxu0
      %v652 = vadd.f32 %v325, %v651
      %653 = vmatmul.f32.gmra.mxu0 %v255
      %v654 = vpop.f32.mrf.mxu0
      %v655 = vadd.f32 %v325, %v654
      %656 = vmatmul.f32.gmra.mxu0 %v257
      %v657 = vpop.f32.mrf.mxu0
      %v658 = vadd.f32 %v325, %v657
      %659 = vmatmul.f32.gmra.mxu0 %v259
      %v660 = vpop.f32.mrf.mxu0
      %v661 = vadd.f32 %v325, %v660
      %662 = vmatmul.f32.gmra.mxu0 %v261
      %v663 = vpop.f32.mrf.mxu0
      %v664 = vadd.f32 %v325, %v663
      %665 = vmatmul.f32.gmra.mxu0 %v263
      %v666 = vpop.f32.mrf.mxu0
      %v667 = vadd.f32 %v325, %v666
      %668 = vmatmul.f32.gmra.mxu0 %v265
      %v669 = vpop.f32.mrf.mxu0
      %v670 = vadd.f32 %v325, %v669
      %671 = vmatmul.f32.gmra.mxu0 %v267
      %v672 = vpop.f32.mrf.mxu0
      %v673 = vadd.f32 %v325, %v672
      %674 = vmatmul.f32.gmra.mxu0 %v269
      %v675 = vpop.f32.mrf.mxu0
      %v676 = vadd.f32 %v325, %v675
      %677 = vmatmul.f32.gmra.mxu0 %v271
      %v678 = vpop.f32.mrf.mxu0
      %v679 = vadd.f32 %v325, %v678
      %680 = vmatmul.f32.gmra.mxu0 %v273
      %v681 = vpop.f32.mrf.mxu0
      %v682 = vadd.f32 %v325, %v681
      %683 = vmatmul.f32.gmra.mxu0 %v275
      %v684 = vpop.f32.mrf.mxu0
      %v685 = vadd.f32 %v325, %v684
      %686 = vmatmul.f32.gmra.mxu0 %v277
      %v687 = vpop.f32.mrf.mxu0
      %v688 = vadd.f32 %v325, %v687
      %689 = vmatmul.f32.gmra.mxu0 %v279
      %v690 = vpop.f32.mrf.mxu0
      %v691 = vadd.f32 %v325, %v690
      %692 = vmatmul.f32.gmra.mxu0 %v281
      %v693 = vpop.f32.mrf.mxu0
      %v694 = vadd.f32 %v325, %v693
      %695 = vmatmul.f32.gmra.mxu0 %v283
      %v696 = vpop.f32.mrf.mxu0
      %v697 = vadd.f32 %v325, %v696
      %698 = vmatmul.f32.gmra.mxu0 %v285
      %v699 = vpop.f32.mrf.mxu0
      %v700 = vadd.f32 %v325, %v699
      %701 = vmatmul.f32.gmra.mxu0 %v287
      %v702 = vpop.f32.mrf.mxu0
      %v703 = vadd.f32 %v325, %v702
      %704 = vmatmul.f32.gmra.mxu0 %v289
      %v705 = vpop.f32.mrf.mxu0
      %v706 = vadd.f32 %v325, %v705
      %707 = vmatmul.f32.gmra.mxu0 %v291
      %v708 = vpop.f32.mrf.mxu0
      %v709 = vadd.f32 %v325, %v708
      %710 = vmatmul.f32.gmra.mxu0 %v293
      %v711 = vpop.f32.mrf.mxu0
      %v712 = vadd.f32 %v325, %v711
      %713 = vmatmul.f32.gmra.mxu0 %v295
      %v714 = vpop.f32.mrf.mxu0
      %v715 = vadd.f32 %v325, %v714
      %716 = vmatmul.f32.gmra.mxu0 %v297
      %v717 = vpop.f32.mrf.mxu0
      %v718 = vadd.f32 %v325, %v717
      %719 = vmatmul.f32.gmra.mxu0 %v299
      %v720 = vpop.f32.mrf.mxu0
      %v721 = vadd.f32 %v325, %v720
      %722 = vmatmul.f32.gmra.mxu0 %v301
      %v723 = vpop.f32.mrf.mxu0
      %v724 = vadd.f32 %v325, %v723
      %725 = vmatmul.f32.gmra.mxu0 %v303
      %v726 = vpop.f32.mrf.mxu0
      %v727 = vadd.f32 %v325, %v726
      %728 = vdwg.mxu0
      %729 = vmatpush.msra.mxu0 0.0
      %730 = vmatpush.msra.mxu0 0.0
      %731 = vmatpush.msra.mxu0 0.0
      %732 = vmatpush.msra.mxu0 0.0
      %733 = vmatpush.msra.mxu0 0.0
      %734 = vmatpush.msra.mxu0 0.0
      %735 = vmatpush.msra.mxu0 0.0
      %736 = vmatpush.msra.mxu0 0.0
      %737 = vmatpush.msra.mxu0 0.0
      %738 = vmatpush.msra.mxu0 0.0
      %739 = vmatpush.msra.mxu0 0.0
      %740 = vmatpush.msra.mxu0 0.0
      %741 = vmatpush.msra.mxu0 0.0
      %742 = vmatpush.msra.mxu0 0.0
      %743 = vmatpush.msra.mxu0 %v322
      %744 = vmatpush.msra.mxu0 %v321
      %745 = vmatmul.f32.gmra.mxu0 %v329
      %v746 = vpop.f32.mrf.mxu0
      %v747 = vadd.f32 %v538, %v746
      %748 = vmatmul.f32.gmra.mxu0 %v332
      %v749 = vpop.f32.mrf.mxu0
      %v750 = vadd.f32 %v541, %v749
      %751 = vmatmul.f32.gmra.mxu0 %v335
      %v752 = vpop.f32.mrf.mxu0
      %v753 = vadd.f32 %v544, %v752
      %754 = vmatmul.f32.gmra.mxu0 %v338
      %v755 = vpop.f32.mrf.mxu0
      %v756 = vadd.f32 %v547, %v755
      %757 = vmatmul.f32.gmra.mxu0 %v341
      %v758 = vpop.f32.mrf.mxu0
      %v759 = vadd.f32 %v550, %v758
      %760 = vmatmul.f32.gmra.mxu0 %v344
      %v761 = vpop.f32.mrf.mxu0
      %v762 = vadd.f32 %v553, %v761
      %763 = vmatmul.f32.gmra.mxu0 %v347
      %v764 = vpop.f32.mrf.mxu0
      %v765 = vadd.f32 %v556, %v764
      %766 = vmatmul.f32.gmra.mxu0 %v350
      %v767 = vpop.f32.mrf.mxu0
      %v768 = vadd.f32 %v559, %v767
      %769 = vmatmul.f32.gmra.mxu0 %v353
      %v770 = vpop.f32.mrf.mxu0
      %v771 = vadd.f32 %v562, %v770
      %772 = vmatmul.f32.gmra.mxu0 %v356
      %v773 = vpop.f32.mrf.mxu0
      %v774 = vadd.f32 %v565, %v773
      %775 = vmatmul.f32.gmra.mxu0 %v359
      %v776 = vpop.f32.mrf.mxu0
      %v777 = vadd.f32 %v568, %v776
      %778 = vmatmul.f32.gmra.mxu0 %v362
      %v779 = vpop.f32.mrf.mxu0
      %v780 = vadd.f32 %v571, %v779
      %781 = vmatmul.f32.gmra.mxu0 %v365
      %v782 = vpop.f32.mrf.mxu0
      %v783 = vadd.f32 %v574, %v782
      %784 = vmatmul.f32.gmra.mxu0 %v368
      %v785 = vpop.f32.mrf.mxu0
      %v786 = vadd.f32 %v577, %v785
      %787 = vmatmul.f32.gmra.mxu0 %v371
      %v788 = vpop.f32.mrf.mxu0
      %v789 = vadd.f32 %v580, %v788
      %790 = vmatmul.f32.gmra.mxu0 %v374
      %v791 = vpop.f32.mrf.mxu0
      %v792 = vadd.f32 %v583, %v791
      %793 = vmatmul.f32.gmra.mxu0 %v377
      %v794 = vpop.f32.mrf.mxu0
      %v795 = vadd.f32 %v586, %v794
      %796 = vmatmul.f32.gmra.mxu0 %v380
      %v797 = vpop.f32.mrf.mxu0
      %v798 = vadd.f32 %v589, %v797
      %799 = vmatmul.f32.gmra.mxu0 %v383
      %v800 = vpop.f32.mrf.mxu0
      %v801 = vadd.f32 %v592, %v800
      %802 = vmatmul.f32.gmra.mxu0 %v386
      %v803 = vpop.f32.mrf.mxu0
      %v804 = vadd.f32 %v595, %v803
      %805 = vmatmul.f32.gmra.mxu0 %v389
      %v806 = vpop.f32.mrf.mxu0
      %v807 = vadd.f32 %v598, %v806
      %808 = vmatmul.f32.gmra.mxu0 %v392
      %v809 = vpop.f32.mrf.mxu0
      %v810 = vadd.f32 %v601, %v809
      %811 = vmatmul.f32.gmra.mxu0 %v395
      %v812 = vpop.f32.mrf.mxu0
      %v813 = vadd.f32 %v604, %v812
      %814 = vmatmul.f32.gmra.mxu0 %v398
      %v815 = vpop.f32.mrf.mxu0
      %v816 = vadd.f32 %v607, %v815
      %817 = vmatmul.f32.gmra.mxu0 %v401
      %v818 = vpop.f32.mrf.mxu0
      %v819 = vadd.f32 %v610, %v818
      %820 = vmatmul.f32.gmra.mxu0 %v404
      %v821 = vpop.f32.mrf.mxu0
      %v822 = vadd.f32 %v613, %v821
      %823 = vmatmul.f32.gmra.mxu0 %v407
      %v824 = vpop.f32.mrf.mxu0
      %v825 = vadd.f32 %v616, %v824
      %826 = vmatmul.f32.gmra.mxu0 %v410
      %v827 = vpop.f32.mrf.mxu0
      %v828 = vadd.f32 %v619, %v827
      %829 = vmatmul.f32.gmra.mxu0 %v413
      %v830 = vpop.f32.mrf.mxu0
      %v831 = vadd.f32 %v622, %v830
      %832 = vmatmul.f32.gmra.mxu0 %v416
      %v833 = vpop.f32.mrf.mxu0
      %v834 = vadd.f32 %v625, %v833
      %835 = vmatmul.f32.gmra.mxu0 %v419
      %v836 = vpop.f32.mrf.mxu0
      %v837 = vadd.f32 %v628, %v836
      %838 = vmatmul.f32.gmra.mxu0 %v422
      %v839 = vpop.f32.mrf.mxu0
      %v840 = vadd.f32 %v631, %v839
      %841 = vmatmul.f32.gmra.mxu0 %v425
      %v842 = vpop.f32.mrf.mxu0
      %v843 = vadd.f32 %v634, %v842
      %844 = vmatmul.f32.gmra.mxu0 %v428
      %v845 = vpop.f32.mrf.mxu0
      %v846 = vadd.f32 %v637, %v845
      %847 = vmatmul.f32.gmra.mxu0 %v431
      %v848 = vpop.f32.mrf.mxu0
      %v849 = vadd.f32 %v640, %v848
      %850 = vmatmul.f32.gmra.mxu0 %v434
      %v851 = vpop.f32.mrf.mxu0
      %v852 = vadd.f32 %v643, %v851
      %853 = vmatmul.f32.gmra.mxu0 %v437
      %v854 = vpop.f32.mrf.mxu0
      %v855 = vadd.f32 %v646, %v854
      %856 = vmatmul.f32.gmra.mxu0 %v440
      %v857 = vpop.f32.mrf.mxu0
      %v858 = vadd.f32 %v649, %v857
      %859 = vmatmul.f32.gmra.mxu0 %v443
      %v860 = vpop.f32.mrf.mxu0
      %v861 = vadd.f32 %v652, %v860
      %862 = vmatmul.f32.gmra.mxu0 %v446
      %v863 = vpop.f32.mrf.mxu0
      %v864 = vadd.f32 %v655, %v863
      %865 = vmatmul.f32.gmra.mxu0 %v449
      %v866 = vpop.f32.mrf.mxu0
      %v867 = vadd.f32 %v658, %v866
      %868 = vmatmul.f32.gmra.mxu0 %v452
      %v869 = vpop.f32.mrf.mxu0
      %v870 = vadd.f32 %v661, %v869
      %871 = vmatmul.f32.gmra.mxu0 %v455
      %v872 = vpop.f32.mrf.mxu0
      %v873 = vadd.f32 %v664, %v872
      %874 = vmatmul.f32.gmra.mxu0 %v458
      %v875 = vpop.f32.mrf.mxu0
      %v876 = vadd.f32 %v667, %v875
      %877 = vmatmul.f32.gmra.mxu0 %v461
      %v878 = vpop.f32.mrf.mxu0
      %v879 = vadd.f32 %v670, %v878
      %880 = vmatmul.f32.gmra.mxu0 %v464
      %v881 = vpop.f32.mrf.mxu0
      %v882 = vadd.f32 %v673, %v881
      %883 = vmatmul.f32.gmra.mxu0 %v467
      %v884 = vpop.f32.mrf.mxu0
      %v885 = vadd.f32 %v676, %v884
      %886 = vmatmul.f32.gmra.mxu0 %v470
      %v887 = vpop.f32.mrf.mxu0
      %v888 = vadd.f32 %v679, %v887
      %889 = vmatmul.f32.gmra.mxu0 %v473
      %v890 = vpop.f32.mrf.mxu0
      %v891 = vadd.f32 %v682, %v890
      %892 = vmatmul.f32.gmra.mxu0 %v476
      %v893 = vpop.f32.mrf.mxu0
      %v894 = vadd.f32 %v685, %v893
      %895 = vmatmul.f32.gmra.mxu0 %v479
      %v896 = vpop.f32.mrf.mxu0
      %v897 = vadd.f32 %v688, %v896
      %898 = vmatmul.f32.gmra.mxu0 %v482
      %v899 = vpop.f32.mrf.mxu0
      %v900 = vadd.f32 %v691, %v899
      %901 = vmatmul.f32.gmra.mxu0 %v485
      %v902 = vpop.f32.mrf.mxu0
      %v903 = vadd.f32 %v694, %v902
      %904 = vmatmul.f32.gmra.mxu0 %v488
      %v905 = vpop.f32.mrf.mxu0
      %v906 = vadd.f32 %v697, %v905
      %907 = vmatmul.f32.gmra.mxu0 %v491
      %v908 = vpop.f32.mrf.mxu0
      %v909 = vadd.f32 %v700, %v908
      %910 = vmatmul.f32.gmra.mxu0 %v494
      %v911 = vpop.f32.mrf.mxu0
      %v912 = vadd.f32 %v703, %v911
      %913 = vmatmul.f32.gmra.mxu0 %v497
      %v914 = vpop.f32.mrf.mxu0
      %v915 = vadd.f32 %v706, %v914
      %916 = vmatmul.f32.gmra.mxu0 %v500
      %v917 = vpop.f32.mrf.mxu0
      %v918 = vadd.f32 %v709, %v917
      %919 = vmatmul.f32.gmra.mxu0 %v503
      %v920 = vpop.f32.mrf.mxu0
      %v921 = vadd.f32 %v712, %v920
      %922 = vmatmul.f32.gmra.mxu0 %v506
      %v923 = vpop.f32.mrf.mxu0
      %v924 = vadd.f32 %v715, %v923
      %925 = vmatmul.f32.gmra.mxu0 %v509
      %v926 = vpop.f32.mrf.mxu0
      %v927 = vadd.f32 %v718, %v926
      %928 = vmatmul.f32.gmra.mxu0 %v512
      %v929 = vpop.f32.mrf.mxu0
      %v930 = vadd.f32 %v721, %v929
      %931 = vmatmul.f32.gmra.mxu0 %v515
      %v932 = vpop.f32.mrf.mxu0
      %v933 = vadd.f32 %v724, %v932
      %934 = vmatmul.f32.gmra.mxu0 %v518
      %v935 = vpop.f32.mrf.mxu0
      %v936 = vadd.f32 %v727, %v935
      %937 = vdwg.mxu0
      %vm938 = vcmask 261120
      %939 = vst.msk [vmem:[%s175] sm:$0xff] %vm938, %v747
      %940 = vst.msk [vmem:[%s175 + $0x8] sm:$0xff] %vm938, %v750
      %941 = vst.msk [vmem:[%s175 + $0x10] sm:$0xff] %vm938, %v753
      %942 = vst.msk [vmem:[%s175 + $0x18] sm:$0xff] %vm938, %v756
      %943 = vst.msk [vmem:[%s175 + $0x20] sm:$0xff] %vm938, %v759
      %944 = vst.msk [vmem:[%s175 + $0x28] sm:$0xff] %vm938, %v762
      %945 = vst.msk [vmem:[%s175 + $0x30] sm:$0xff] %vm938, %v765
      %946 = vst.msk [vmem:[%s175 + $0x38] sm:$0xff] %vm938, %v768
      %947 = vst.msk [vmem:[%s175 + $0x40] sm:$0xff] %vm938, %v771
      %948 = vst.msk [vmem:[%s175 + $0x48] sm:$0xff] %vm938, %v774
      %949 = vst.msk [vmem:[%s175 + $0x50] sm:$0xff] %vm938, %v777
      %950 = vst.msk [vmem:[%s175 + $0x58] sm:$0xff] %vm938, %v780
      %951 = vst.msk [vmem:[%s175 + $0x60] sm:$0xff] %vm938, %v783
      %952 = vst.msk [vmem:[%s175 + $0x68] sm:$0xff] %vm938, %v786
      %953 = vst.msk [vmem:[%s175 + $0x70] sm:$0xff] %vm938, %v789
      %954 = vst.msk [vmem:[%s175 + $0x78] sm:$0xff] %vm938, %v792
      %955 = vst.msk [vmem:[%s175 + $0x80] sm:$0xff] %vm938, %v795
      %956 = vst.msk [vmem:[%s175 + $0x88] sm:$0xff] %vm938, %v798
      %957 = vst.msk [vmem:[%s175 + $0x90] sm:$0xff] %vm938, %v801
      %958 = vst.msk [vmem:[%s175 + $0x98] sm:$0xff] %vm938, %v804
      %959 = vst.msk [vmem:[%s175 + $0xa0] sm:$0xff] %vm938, %v807
      %960 = vst.msk [vmem:[%s175 + $0xa8] sm:$0xff] %vm938, %v810
      %961 = vst.msk [vmem:[%s175 + $0xb0] sm:$0xff] %vm938, %v813
      %962 = vst.msk [vmem:[%s175 + $0xb8] sm:$0xff] %vm938, %v816
      %963 = vst.msk [vmem:[%s175 + $0xc0] sm:$0xff] %vm938, %v819
      %964 = vst.msk [vmem:[%s175 + $0xc8] sm:$0xff] %vm938, %v822
      %965 = vst.msk [vmem:[%s175 + $0xd0] sm:$0xff] %vm938, %v825
      %966 = vst.msk [vmem:[%s175 + $0xd8] sm:$0xff] %vm938, %v828
      %967 = vst.msk [vmem:[%s175 + $0xe0] sm:$0xff] %vm938, %v831
      %968 = vst.msk [vmem:[%s175 + $0xe8] sm:$0xff] %vm938, %v834
      %969 = vst.msk [vmem:[%s175 + $0xf0] sm:$0xff] %vm938, %v837
      %970 = vst.msk [vmem:[%s175 + $0xf8] sm:$0xff] %vm938, %v840
      %971 = vst.msk [vmem:[%s175 + $0x100] sm:$0xff] %vm938, %v843
      %972 = vst.msk [vmem:[%s175 + $0x108] sm:$0xff] %vm938, %v846
      %973 = vst.msk [vmem:[%s175 + $0x110] sm:$0xff] %vm938, %v849
      %974 = vst.msk [vmem:[%s175 + $0x118] sm:$0xff] %vm938, %v852
      %975 = vst.msk [vmem:[%s175 + $0x120] sm:$0xff] %vm938, %v855
      %976 = vst.msk [vmem:[%s175 + $0x128] sm:$0xff] %vm938, %v858
      %977 = vst.msk [vmem:[%s175 + $0x130] sm:$0xff] %vm938, %v861
      %978 = vst.msk [vmem:[%s175 + $0x138] sm:$0xff] %vm938, %v864
      %979 = vst.msk [vmem:[%s175 + $0x140] sm:$0xff] %vm938, %v867
      %980 = vst.msk [vmem:[%s175 + $0x148] sm:$0xff] %vm938, %v870
      %981 = vst.msk [vmem:[%s175 + $0x150] sm:$0xff] %vm938, %v873
      %982 = vst.msk [vmem:[%s175 + $0x158] sm:$0xff] %vm938, %v876
      %983 = vst.msk [vmem:[%s175 + $0x160] sm:$0xff] %vm938, %v879
      %984 = vst.msk [vmem:[%s175 + $0x168] sm:$0xff] %vm938, %v882
      %985 = vst.msk [vmem:[%s175 + $0x170] sm:$0xff] %vm938, %v885
      %986 = vst.msk [vmem:[%s175 + $0x178] sm:$0xff] %vm938, %v888
      %987 = vst.msk [vmem:[%s175 + $0x180] sm:$0xff] %vm938, %v891
      %988 = vst.msk [vmem:[%s175 + $0x188] sm:$0xff] %vm938, %v894
      %989 = vst.msk [vmem:[%s175 + $0x190] sm:$0xff] %vm938, %v897
      %990 = vst.msk [vmem:[%s175 + $0x198] sm:$0xff] %vm938, %v900
      %991 = vst.msk [vmem:[%s175 + $0x1a0] sm:$0xff] %vm938, %v903
      %992 = vst.msk [vmem:[%s175 + $0x1a8] sm:$0xff] %vm938, %v906
      %993 = vst.msk [vmem:[%s175 + $0x1b0] sm:$0xff] %vm938, %v909
      %994 = vst.msk [vmem:[%s175 + $0x1b8] sm:$0xff] %vm938, %v912
      %995 = vst.msk [vmem:[%s175 + $0x1c0] sm:$0xff] %vm938, %v915
      %996 = vst.msk [vmem:[%s175 + $0x1c8] sm:$0xff] %vm938, %v918
      %997 = vst.msk [vmem:[%s175 + $0x1d0] sm:$0xff] %vm938, %v921
      %998 = vst.msk [vmem:[%s175 + $0x1d8] sm:$0xff] %vm938, %v924
      %999 = vst.msk [vmem:[%s175 + $0x1e0] sm:$0xff] %vm938, %v927
      %1000 = vst.msk [vmem:[%s175 + $0x1e8] sm:$0xff] %vm938, %v930
      %1001 = vst.msk [vmem:[%s175 + $0x1f0] sm:$0xff] %vm938, %v933
      %1002 = vst.msk [vmem:[%s175 + $0x1f8] sm:$0xff] %vm938, %v936
      %s1003 = smul.u32 64, %s14
      %p1004 = scmp.lt.s32.totalorder %s1003, 127
      %s1005 = scalar_select %p1004, %s1003, 127
      %s1006 = smul.addr %s1005, 8
      %s1007 = scalar_lea.vmem %s3, %s1006
      // Predicated region
      $region33: #{ssmlp_forward.27} parent=31 // pred_check
        %p1008 = pneg %p100
      $region34: #{ssmlp_forward.27} parent=31 // pred_check_branch
        %1010 = sbr.rel (%p1008) target = $region36
      $region35: #{ssmlp_forward.27} parent=31 // pred_region
        %s1011 = smul.u32 64, %s14
      $region36: #{ssmlp_forward.27} parent=31 // pred_fallthru
        _
    $region32: #{ssmlp_forward.27} parent=5 // pred_fallthru
      _
    %p1012 = scmp.le.s32.totalorder 2, %s9
    // Predicated region
    $region37: #{ssmlp_forward.27} parent=5 // pred_check
      %p1013 = pneg %p1012
    $region38: #{ssmlp_forward.27} parent=5 // pred_check_branch
      %1015 = sbr.rel (%p1013) target = $region40
    $region39: #{ssmlp_forward.27} parent=5 // pred_region
      %s1016 = ssub.s32 %s9, 2
      // Predicated region
      $region41: #{ssmlp_forward.27} parent=39 // pred_check
        %p1017 = pneg %p106
      $region42: #{ssmlp_forward.27} parent=39 // pred_check_branch
        %1019 = sbr.rel (%p1017) target = $region44
      $region43: #{ssmlp_forward.27} parent=39 // pred_region
        %s1020 = smul.u32 64, %s15
        %p1021 = scmp.lt.s32.totalorder %s1020, 127
        %s1022 = scalar_select %p1021, %s1020, 127
        %s1023 = smul.addr %s1022, 8
        %s1024 = scalar_lea.vmem %s3, %s1023
      $region44: #{ssmlp_forward.27} parent=39 // pred_fallthru
        _
    $region40: #{ssmlp_forward.27} parent=5 // pred_fallthru
      _
  $region6: #{ssmlp_forward.27} parent=0 // loop_footer
    %s13 = sadd.s32 1, %s9
  $region7: #{ssmlp_forward.27} parent=0 // loop_footer_branch
    %8 = sbr.rel target = $region3
  $region8: #{ssmlp_forward.27} parent=0 // loop_exit
    _

// kernel: ssmlp_forward.28
$region0: #{ssmlp_forward.28}
  #allocation0 [shape = 'u32[]', space=smem, size = 0x4, offset = 0x4, fixed_abs, tag = 'smem constant byte address 0x4 - core index']
  #allocation1 [shape = 'u32[72,128]{1,0:T(1,128)}', space=vmem, size = 0x9000, scoped, tag = 'internal scratch']
  %s0 = inlined_call_operand.vmem [shape: f32[1024,32], index: 0, kind: input, shape index: {}]
  %s1 = inlined_call_operand.vmem [shape: f32[1,32], index: 1, kind: input, shape index: {}]
  %s2 = inlined_call_operand.vmem [shape: f32[1,32], index: 2, kind: input, shape index: {}]
  %s3 = inlined_call_operand.vmem [shape: f32[1024,32], index: 3, kind: output, shape index: {}]
  %s4 = sld [smem:[#allocation0]]
  $region45: #{ssmlp_forward.28} parent=0
    _
  %s6 = ssub.s32 1, %s4
  %s7 = scalar_select 0, %s6, %s4
  loop: start=0, step=1, limit=4
  $region2: #{ssmlp_forward.28} parent=0 // loop_pre_header
    _
  $region3: #{ssmlp_forward.28} parent=0 // loop_header
    %s9 = sphi 0, %s13
    %p10 = scmp.ge.s32.totalorder %s9, 4
    %s19 = sphi 0, %s21
    %s22 = sphi 0, %s19
    %s23 = sphi 0, %s22
    %s39 = sphi 0, %s23
    %s43 = sphi 0, %s43
    %s45 = sphi 0, %s43
    %s46 = sphi 0, %s45
    %s60 = sphi 0, %s46
    %s64 = sphi 0, %s64
    %s66 = sphi 0, %s64
    %s67 = sphi 0, %s66
    %s81 = sphi 0, %s67
    %s87 = sphi 0, %s89
    %s90 = sphi 0, %s87
    %s91 = sphi 0, %s90
    %s107 = sphi 0, %s91
  $region4: #{ssmlp_forward.28} parent=0 // loop_header_branch
    %12 = sbr.rel (%p10) target = $region8
  $region5: #{ssmlp_forward.28} parent=0 // loop_body
    %s14 = ssub.s32 %s9, 1
    %s15 = ssub.s32 %s9, 2
    %s16 = sadd.s32 %s9, 1
    %s17 = ssub.s32 %s9, %s16
    %p18 = scmp.eq.s32.totalorder %s17, 0
    %s20 = sadd.s32 %s19, 1
    %s21 = scalar_select %p18, %s19, %s20
    %p24 = pneg %p18
    %p25 = scmp.eq.s32.totalorder %s9, 1
    %p26 = por %p24, %p25
    %p27 = scmp.ne.s32.totalorder %s19, %s22
    %p28 = scmp.eq.s32.totalorder %s9, 0
    %p29 = por %p27, %p28
    %p30 = scmp.ne.s32.totalorder %s19, %s22
    %p31 = scmp.eq.s32.totalorder %s14, 1
    %p32 = por %p30, %p31
    %p33 = scmp.ne.s32.totalorder %s22, %s23
    %p34 = scmp.eq.s32.totalorder %s14, 0
    %p35 = por %p33, %p34
    %p36 = scmp.ne.s32.totalorder %s22, %s23
    %p37 = scmp.eq.s32.totalorder %s15, 1
    %p38 = por %p36, %p37
    %p40 = scmp.ne.s32.totalorder %s23, %s39
    %p41 = scmp.eq.s32.totalorder %s15, 0
    %p42 = por %p40, %p41
    %s44 = sadd.s32 %s43, 1
    %p47 = scmp.eq.s32.totalorder %s9, 1
    %p48 = scmp.ne.s32.totalorder %s43, %s45
    %p49 = scmp.eq.s32.totalorder %s9, 0
    %p50 = por %p48, %p49
    %p51 = scmp.ne.s32.totalorder %s43, %s45
    %p52 = scmp.eq.s32.totalorder %s14, 1
    %p53 = por %p51, %p52
    %p54 = scmp.ne.s32.totalorder %s45, %s46
    %p55 = scmp.eq.s32.totalorder %s14, 0
    %p56 = por %p54, %p55
    %p57 = scmp.ne.s32.totalorder %s45, %s46
    %p58 = scmp.eq.s32.totalorder %s15, 1
    %p59 = por %p57, %p58
    %p61 = scmp.ne.s32.totalorder %s46, %s60
    %p62 = scmp.eq.s32.totalorder %s15, 0
    %p63 = por %p61, %p62
    %s65 = sadd.s32 %s64, 1
    %p68 = scmp.eq.s32.totalorder %s9, 1
    %p69 = scmp.ne.s32.totalorder %s64, %s66
    %p70 = scmp.eq.s32.totalorder %s9, 0
    %p71 = por %p69, %p70
    %p72 = scmp.ne.s32.totalorder %s64, %s66
    %p73 = scmp.eq.s32.totalorder %s14, 1
    %p74 = por %p72, %p73
    %p75 = scmp.ne.s32.totalorder %s66, %s67
    %p76 = scmp.eq.s32.totalorder %s14, 0
    %p77 = por %p75, %p76
    %p78 = scmp.ne.s32.totalorder %s66, %s67
    %p79 = scmp.eq.s32.totalorder %s15, 1
    %p80 = por %p78, %p79
    %p82 = scmp.ne.s32.totalorder %s67, %s81
    %p83 = scmp.eq.s32.totalorder %s15, 0
    %p84 = por %p82, %p83
    %s85 = ssub.s32 %s9, %s16
    %p86 = scmp.eq.s32.totalorder %s85, 0
    %s88 = sadd.s32 %s87, 1
    %s89 = scalar_select %p86, %s87, %s88
    %p92 = pneg %p86
    %p93 = scmp.eq.s32.totalorder %s9, 1
    %p94 = por %p92, %p93
    %p95 = scmp.ne.s32.totalorder %s87, %s90
    %p96 = scmp.eq.s32.totalorder %s9, 0
    %p97 = por %p95, %p96
    %p98 = scmp.ne.s32.totalorder %s87, %s90
    %p99 = scmp.eq.s32.totalorder %s14, 1
    %p100 = por %p98, %p99
    %p101 = scmp.ne.s32.totalorder %s90, %s91
    %p102 = scmp.eq.s32.totalorder %s14, 0
    %p103 = por %p101, %p102
    %p104 = scmp.ne.s32.totalorder %s90, %s91
    %p105 = scmp.eq.s32.totalorder %s15, 1
    %p106 = por %p104, %p105
    %p108 = scmp.ne.s32.totalorder %s91, %s107
    %p109 = scmp.eq.s32.totalorder %s15, 0
    %p110 = por %p108, %p109
    %p111 = scmp.le.s32.totalorder 1, %s9
    %p112 = scmp.lt.s32.totalorder %s9, 3
    %p113 = pnand %p111, %p112
    %p114 = pneg %p113
    // Predicated region
    $region9: #{ssmlp_forward.28} parent=5 // pred_check
      _
    $region10: #{ssmlp_forward.28} parent=5 // pred_check_branch
      %116 = sbr.rel (%p113) target = $region12
    $region11: #{ssmlp_forward.28} parent=5 // pred_region
      %s117 = ssub.s32 %s9, 1
      // Predicated region
      $region13: #{ssmlp_forward.28} parent=11 // pred_check
        %p118 = pneg %p56
      $region14: #{ssmlp_forward.28} parent=11 // pred_check_branch
        %120 = sbr.rel (%p118) target = $region16
      $region15: #{ssmlp_forward.28} parent=11 // pred_region
        _
      $region16: #{ssmlp_forward.28} parent=11 // pred_fallthru
        _
      // Predicated region
      $region17: #{ssmlp_forward.28} parent=11 // pred_check
        %p121 = pneg %p77
      $region18: #{ssmlp_forward.28} parent=11 // pred_check_branch
        %123 = sbr.rel (%p121) target = $region20
      $region19: #{ssmlp_forward.28} parent=11 // pred_region
        _
      $region20: #{ssmlp_forward.28} parent=11 // pred_fallthru
        _
    $region12: #{ssmlp_forward.28} parent=5 // pred_fallthru
      _
    %p124 = scmp.lt.s32.totalorder %s9, 2
    // Predicated region
    $region21: #{ssmlp_forward.28} parent=5 // pred_check
      %p125 = pneg %p124
    $region22: #{ssmlp_forward.28} parent=5 // pred_check_branch
      %127 = sbr.rel (%p125) target = $region24
    $region23: #{ssmlp_forward.28} parent=5 // pred_region
      // Predicated region
      $region25: #{ssmlp_forward.28} parent=23 // pred_check
        %p128 = pneg %p29
      $region26: #{ssmlp_forward.28} parent=23 // pred_check_branch
        %130 = sbr.rel (%p128) target = $region28
      $region27: #{ssmlp_forward.28} parent=23 // pred_region
        %s131 = smul.u32 64, %s9
        %p132 = scmp.lt.s32.totalorder %s131, 127
        %s133 = scalar_select %p132, %s131, 127
        %s134 = smul.addr %s133, 8
        %s135 = scalar_lea.vmem %s0, %s134
        %s136 = smul.u32 64, %s9
      $region28: #{ssmlp_forward.28} parent=23 // pred_fallthru
        _
    $region24: #{ssmlp_forward.28} parent=5 // pred_fallthru
      _
    %p137 = scmp.le.s32.totalorder 1, %s9
    %p138 = scmp.lt.s32.totalorder %s9, 3
    %p139 = pnand %p137, %p138
    %p140 = pneg %p139
    // Predicated region
    $region29: #{ssmlp_forward.28} parent=5 // pred_check
      _
    $region30: #{ssmlp_forward.28} parent=5 // pred_check_branch
      %142 = sbr.rel (%p139) target = $region32
    $region31: #{ssmlp_forward.28} parent=5 // pred_region
      %s143 = ssub.s32 %s9, 1
      %s144 = smul.u32 64, %s14
      %p145 = scmp.lt.s32.totalorder %s144, 127
      %s146 = scalar_select %p145, %s144, 127
      %s147 = smul.addr %s146, 8
      %s148 = scalar_lea.vmem %s0, %s147
      %p149 = pneg %p35
      %p150 = pneg %p32
      %p151 = pneg %p56
      %p152 = pneg %p53
      %p153 = pneg %p77
      %p154 = pneg %p74
      %p155 = pneg %p103
      %p156 = pneg %p100
      %s157 = smul.u32 64, %s14
      %p158 = scmp.lt.s32.totalorder %s157, 127
      %s159 = scalar_select %p158, %s157, 127
      %s160 = smul.addr %s159, 8
      %s161 = scalar_lea.vmem %s3, %s160
      %s162 = smul.u32 64, %s14
      %p163 = scmp.lt.s32.totalorder %s162, 127
      %s164 = scalar_select %p163, %s162, 127
      %s165 = smul.addr %s164, 8
      %s166 = scalar_lea.vmem %s0, %s165
      %s167 = smul.u32 64, %s14
      %s168 = smul.u32 64, %s14
      %p169 = scmp.lt.s32.totalorder %s168, 127
      %s170 = scalar_select %p169, %s168, 127
      %s171 = smul.addr %s170, 8
      %s172 = scalar_lea.vmem %s3, %s171
      %s173 = smul.u32 64, %s14
      %v174 = vld [vmem:[%s166] sm:$0xff]
      %v175 = vld [vmem:[%s166 + $0x8] sm:$0xff]
      %v176 = vld [vmem:[%s166 + $0x10] sm:$0xff]
      %v177 = vld [vmem:[%s166 + $0x18] sm:$0xff]
      %v178 = vld [vmem:[%s166 + $0x20] sm:$0xff]
      %v179 = vld [vmem:[%s166 + $0x28] sm:$0xff]
      %v180 = vld [vmem:[%s166 + $0x30] sm:$0xff]
      %v181 = vld [vmem:[%s166 + $0x38] sm:$0xff]
      %v182 = vld [vmem:[%s166 + $0x40] sm:$0xff]
      %v183 = vld [vmem:[%s166 + $0x48] sm:$0xff]
      %v184 = vld [vmem:[%s166 + $0x50] sm:$0xff]
      %v185 = vld [vmem:[%s166 + $0x58] sm:$0xff]
      %v186 = vld [vmem:[%s166 + $0x60] sm:$0xff]
      %v187 = vld [vmem:[%s166 + $0x68] sm:$0xff]
      %v188 = vld [vmem:[%s166 + $0x70] sm:$0xff]
      %v189 = vld [vmem:[%s166 + $0x78] sm:$0xff]
      %v190 = vld [vmem:[%s166 + $0x80] sm:$0xff]
      %v191 = vld [vmem:[%s166 + $0x88] sm:$0xff]
      %v192 = vld [vmem:[%s166 + $0x90] sm:$0xff]
      %v193 = vld [vmem:[%s166 + $0x98] sm:$0xff]
      %v194 = vld [vmem:[%s166 + $0xa0] sm:$0xff]
      %v195 = vld [vmem:[%s166 + $0xa8] sm:$0xff]
      %v196 = vld [vmem:[%s166 + $0xb0] sm:$0xff]
      %v197 = vld [vmem:[%s166 + $0xb8] sm:$0xff]
      %v198 = vld [vmem:[%s166 + $0xc0] sm:$0xff]
      %v199 = vld [vmem:[%s166 + $0xc8] sm:$0xff]
      %v200 = vld [vmem:[%s166 + $0xd0] sm:$0xff]
      %v201 = vld [vmem:[%s166 + $0xd8] sm:$0xff]
      %v202 = vld [vmem:[%s166 + $0xe0] sm:$0xff]
      %v203 = vld [vmem:[%s166 + $0xe8] sm:$0xff]
      %v204 = vld [vmem:[%s166 + $0xf0] sm:$0xff]
      %v205 = vld [vmem:[%s166 + $0xf8] sm:$0xff]
      %v206 = vld [vmem:[%s166 + $0x100] sm:$0xff]
      %v207 = vld [vmem:[%s166 + $0x108] sm:$0xff]
      %v208 = vld [vmem:[%s166 + $0x110] sm:$0xff]
      %v209 = vld [vmem:[%s166 + $0x118] sm:$0xff]
      %v210 = vld [vmem:[%s166 + $0x120] sm:$0xff]
      %v211 = vld [vmem:[%s166 + $0x128] sm:$0xff]
      %v212 = vld [vmem:[%s166 + $0x130] sm:$0xff]
      %v213 = vld [vmem:[%s166 + $0x138] sm:$0xff]
      %v214 = vld [vmem:[%s166 + $0x140] sm:$0xff]
      %v215 = vld [vmem:[%s166 + $0x148] sm:$0xff]
      %v216 = vld [vmem:[%s166 + $0x150] sm:$0xff]
      %v217 = vld [vmem:[%s166 + $0x158] sm:$0xff]
      %v218 = vld [vmem:[%s166 + $0x160] sm:$0xff]
      %v219 = vld [vmem:[%s166 + $0x168] sm:$0xff]
      %v220 = vld [vmem:[%s166 + $0x170] sm:$0xff]
      %v221 = vld [vmem:[%s166 + $0x178] sm:$0xff]
      %v222 = vld [vmem:[%s166 + $0x180] sm:$0xff]
      %v223 = vld [vmem:[%s166 + $0x188] sm:$0xff]
      %v224 = vld [vmem:[%s166 + $0x190] sm:$0xff]
      %v225 = vld [vmem:[%s166 + $0x198] sm:$0xff]
      %v226 = vld [vmem:[%s166 + $0x1a0] sm:$0xff]
      %v227 = vld [vmem:[%s166 + $0x1a8] sm:$0xff]
      %v228 = vld [vmem:[%s166 + $0x1b0] sm:$0xff]
      %v229 = vld [vmem:[%s166 + $0x1b8] sm:$0xff]
      %v230 = vld [vmem:[%s166 + $0x1c0] sm:$0xff]
      %v231 = vld [vmem:[%s166 + $0x1c8] sm:$0xff]
      %v232 = vld [vmem:[%s166 + $0x1d0] sm:$0xff]
      %v233 = vld [vmem:[%s166 + $0x1d8] sm:$0xff]
      %v234 = vld [vmem:[%s166 + $0x1e0] sm:$0xff]
      %v235 = vld [vmem:[%s166 + $0x1e8] sm:$0xff]
      %v236 = vld [vmem:[%s166 + $0x1f0] sm:$0xff]
      %v237 = vld [vmem:[%s166 + $0x1f8] sm:$0xff]
      %vm238 = vcmask 261120
      %v239 = vsel %vm238, %v174, 0.0
      %240 = vadd.xlane.f32.xlu0 %v239
      %v241 = vpop.xlane.xlu0 %240
      %v242 = vsel %vm238, %v175, 0.0
      %243 = vadd.xlane.f32.xlu0 %v242
      %v244 = vpop.xlane.xlu0 %243
      %v245 = vsel %vm238, %v176, 0.0
      %246 = vadd.xlane.f32.xlu0 %v245
      %v247 = vpop.xlane.xlu0 %246
      %v248 = vsel %vm238, %v177, 0.0
      %249 = vadd.xlane.f32.xlu0 %v248
      %v250 = vpop.xlane.xlu0 %249
      %v251 = vsel %vm238, %v178, 0.0
      %252 = vadd.xlane.f32.xlu0 %v251
      %v253 = vpop.xlane.xlu0 %252
      %v254 = vsel %vm238, %v179, 0.0
      %255 = vadd.xlane.f32.xlu0 %v254
      %v256 = vpop.xlane.xlu0 %255
      %v257 = vsel %vm238, %v180, 0.0
      %258 = vadd.xlane.f32.xlu0 %v257
      %v259 = vpop.xlane.xlu0 %258
      %v260 = vsel %vm238, %v181, 0.0
      %261 = vadd.xlane.f32.xlu0 %v260
      %v262 = vpop.xlane.xlu0 %261
      %v263 = vsel %vm238, %v182, 0.0
      %264 = vadd.xlane.f32.xlu0 %v263
      %v265 = vpop.xlane.xlu0 %264
      %v266 = vsel %vm238, %v183, 0.0
      %267 = vadd.xlane.f32.xlu0 %v266
      %v268 = vpop.xlane.xlu0 %267
      %v269 = vsel %vm238, %v184, 0.0
      %270 = vadd.xlane.f32.xlu0 %v269
      %v271 = vpop.xlane.xlu0 %270
      %v272 = vsel %vm238, %v185, 0.0
      %273 = vadd.xlane.f32.xlu0 %v272
      %v274 = vpop.xlane.xlu0 %273
      %v275 = vsel %vm238, %v186, 0.0
      %276 = vadd.xlane.f32.xlu0 %v275
      %v277 = vpop.xlane.xlu0 %276
      %v278 = vsel %vm238, %v187, 0.0
      %279 = vadd.xlane.f32.xlu0 %v278
      %v280 = vpop.xlane.xlu0 %279
      %v281 = vsel %vm238, %v188, 0.0
      %282 = vadd.xlane.f32.xlu0 %v281
      %v283 = vpop.xlane.xlu0 %282
      %v284 = vsel %vm238, %v189, 0.0
      %285 = vadd.xlane.f32.xlu0 %v284
      %v286 = vpop.xlane.xlu0 %285
      %v287 = vsel %vm238, %v190, 0.0
      %288 = vadd.xlane.f32.xlu0 %v287
      %v289 = vpop.xlane.xlu0 %288
      %v290 = vsel %vm238, %v191, 0.0
      %291 = vadd.xlane.f32.xlu0 %v290
      %v292 = vpop.xlane.xlu0 %291
      %v293 = vsel %vm238, %v192, 0.0
      %294 = vadd.xlane.f32.xlu0 %v293
      %v295 = vpop.xlane.xlu0 %294
      %v296 = vsel %vm238, %v193, 0.0
      %297 = vadd.xlane.f32.xlu0 %v296
      %v298 = vpop.xlane.xlu0 %297
      %v299 = vsel %vm238, %v194, 0.0
      %300 = vadd.xlane.f32.xlu0 %v299
      %v301 = vpop.xlane.xlu0 %300
      %v302 = vsel %vm238, %v195, 0.0
      %303 = vadd.xlane.f32.xlu0 %v302
      %v304 = vpop.xlane.xlu0 %303
      %v305 = vsel %vm238, %v196, 0.0
      %306 = vadd.xlane.f32.xlu0 %v305
      %v307 = vpop.xlane.xlu0 %306
      %v308 = vsel %vm238, %v197, 0.0
      %309 = vadd.xlane.f32.xlu0 %v308
      %v310 = vpop.xlane.xlu0 %309
      %v311 = vsel %vm238, %v198, 0.0
      %312 = vadd.xlane.f32.xlu0 %v311
      %v313 = vpop.xlane.xlu0 %312
      %v314 = vsel %vm238, %v199, 0.0
      %315 = vadd.xlane.f32.xlu0 %v314
      %v316 = vpop.xlane.xlu0 %315
      %v317 = vsel %vm238, %v200, 0.0
      %318 = vadd.xlane.f32.xlu0 %v317
      %v319 = vpop.xlane.xlu0 %318
      %v320 = vsel %vm238, %v201, 0.0
      %321 = vadd.xlane.f32.xlu0 %v320
      %v322 = vpop.xlane.xlu0 %321
      %v323 = vsel %vm238, %v202, 0.0
      %324 = vadd.xlane.f32.xlu0 %v323
      %v325 = vpop.xlane.xlu0 %324
      %v326 = vsel %vm238, %v203, 0.0
      %327 = vadd.xlane.f32.xlu0 %v326
      %v328 = vpop.xlane.xlu0 %327
      %v329 = vsel %vm238, %v204, 0.0
      %330 = vadd.xlane.f32.xlu0 %v329
      %v331 = vpop.xlane.xlu0 %330
      %v332 = vsel %vm238, %v205, 0.0
      %333 = vadd.xlane.f32.xlu0 %v332
      %v334 = vpop.xlane.xlu0 %333
      %v335 = vsel %vm238, %v206, 0.0
      %336 = vadd.xlane.f32.xlu0 %v335
      %v337 = vpop.xlane.xlu0 %336
      %v338 = vsel %vm238, %v207, 0.0
      %339 = vadd.xlane.f32.xlu0 %v338
      %v340 = vpop.xlane.xlu0 %339
      %v341 = vsel %vm238, %v208, 0.0
      %342 = vadd.xlane.f32.xlu0 %v341
      %v343 = vpop.xlane.xlu0 %342
      %v344 = vsel %vm238, %v209, 0.0
      %345 = vadd.xlane.f32.xlu0 %v344
      %v346 = vpop.xlane.xlu0 %345
      %v347 = vsel %vm238, %v210, 0.0
      %348 = vadd.xlane.f32.xlu0 %v347
      %v349 = vpop.xlane.xlu0 %348
      %v350 = vsel %vm238, %v211, 0.0
      %351 = vadd.xlane.f32.xlu0 %v350
      %v352 = vpop.xlane.xlu0 %351
      %v353 = vsel %vm238, %v212, 0.0
      %354 = vadd.xlane.f32.xlu0 %v353
      %v355 = vpop.xlane.xlu0 %354
      %v356 = vsel %vm238, %v213, 0.0
      %357 = vadd.xlane.f32.xlu0 %v356
      %v358 = vpop.xlane.xlu0 %357
      %v359 = vsel %vm238, %v214, 0.0
      %360 = vadd.xlane.f32.xlu0 %v359
      %v361 = vpop.xlane.xlu0 %360
      %v362 = vsel %vm238, %v215, 0.0
      %363 = vadd.xlane.f32.xlu0 %v362
      %v364 = vpop.xlane.xlu0 %363
      %v365 = vsel %vm238, %v216, 0.0
      %366 = vadd.xlane.f32.xlu0 %v365
      %v367 = vpop.xlane.xlu0 %366
      %v368 = vsel %vm238, %v217, 0.0
      %369 = vadd.xlane.f32.xlu0 %v368
      %v370 = vpop.xlane.xlu0 %369
      %v371 = vsel %vm238, %v218, 0.0
      %372 = vadd.xlane.f32.xlu0 %v371
      %v373 = vpop.xlane.xlu0 %372
      %v374 = vsel %vm238, %v219, 0.0
      %375 = vadd.xlane.f32.xlu0 %v374
      %v376 = vpop.xlane.xlu0 %375
      %v377 = vsel %vm238, %v220, 0.0
      %378 = vadd.xlane.f32.xlu0 %v377
      %v379 = vpop.xlane.xlu0 %378
      %v380 = vsel %vm238, %v221, 0.0
      %381 = vadd.xlane.f32.xlu0 %v380
      %v382 = vpop.xlane.xlu0 %381
      %v383 = vsel %vm238, %v222, 0.0
      %384 = vadd.xlane.f32.xlu0 %v383
      %v385 = vpop.xlane.xlu0 %384
      %v386 = vsel %vm238, %v223, 0.0
      %387 = vadd.xlane.f32.xlu0 %v386
      %v388 = vpop.xlane.xlu0 %387
      %v389 = vsel %vm238, %v224, 0.0
      %390 = vadd.xlane.f32.xlu0 %v389
      %v391 = vpop.xlane.xlu0 %390
      %v392 = vsel %vm238, %v225, 0.0
      %393 = vadd.xlane.f32.xlu0 %v392
      %v394 = vpop.xlane.xlu0 %393
      %v395 = vsel %vm238, %v226, 0.0
      %396 = vadd.xlane.f32.xlu0 %v395
      %v397 = vpop.xlane.xlu0 %396
      %v398 = vsel %vm238, %v227, 0.0
      %399 = vadd.xlane.f32.xlu0 %v398
      %v400 = vpop.xlane.xlu0 %399
      %v401 = vsel %vm238, %v228, 0.0
      %402 = vadd.xlane.f32.xlu0 %v401
      %v403 = vpop.xlane.xlu0 %402
      %v404 = vsel %vm238, %v229, 0.0
      %405 = vadd.xlane.f32.xlu0 %v404
      %v406 = vpop.xlane.xlu0 %405
      %v407 = vsel %vm238, %v230, 0.0
      %408 = vadd.xlane.f32.xlu0 %v407
      %v409 = vpop.xlane.xlu0 %408
      %v410 = vsel %vm238, %v231, 0.0
      %411 = vadd.xlane.f32.xlu0 %v410
      %v412 = vpop.xlane.xlu0 %411
      %v413 = vsel %vm238, %v232, 0.0
      %414 = vadd.xlane.f32.xlu0 %v413
      %v415 = vpop.xlane.xlu0 %414
      %v416 = vsel %vm238, %v233, 0.0
      %417 = vadd.xlane.f32.xlu0 %v416
      %v418 = vpop.xlane.xlu0 %417
      %v419 = vsel %vm238, %v234, 0.0
      %420 = vadd.xlane.f32.xlu0 %v419
      %v421 = vpop.xlane.xlu0 %420
      %v422 = vsel %vm238, %v235, 0.0
      %423 = vadd.xlane.f32.xlu0 %v422
      %v424 = vpop.xlane.xlu0 %423
      %v425 = vsel %vm238, %v236, 0.0
      %426 = vadd.xlane.f32.xlu0 %v425
      %v427 = vpop.xlane.xlu0 %426
      %v428 = vsel %vm238, %v237, 0.0
      %429 = vadd.xlane.f32.xlu0 %v428
      %v430 = vpop.xlane.xlu0 %429
      %v431 = vrcp.pop 32.0
      %v432 = vmul.f32 32.0, %v431
      %v433 = vsub.f32 1.0, %v432
      %v434 = vmul.f32 %v431, %v433
      %v435 = vadd.f32 %v431, %v434
      %vm436 = vweird.f32 %v431
      %v437 = vsel %vm436, %v431, %v435
      %v438 = vmul.f32 %v241, %v437
      %v439 = vmul.f32 %v244, %v437
      %v440 = vmul.f32 %v247, %v437
      %v441 = vmul.f32 %v250, %v437
      %v442 = vmul.f32 %v253, %v437
      %v443 = vmul.f32 %v256, %v437
      %v444 = vmul.f32 %v259, %v437
      %v445 = vmul.f32 %v262, %v437
      %v446 = vmul.f32 %v265, %v437
      %v447 = vmul.f32 %v268, %v437
      %v448 = vmul.f32 %v271, %v437
      %v449 = vmul.f32 %v274, %v437
      %v450 = vmul.f32 %v277, %v437
      %v451 = vmul.f32 %v280, %v437
      %v452 = vmul.f32 %v283, %v437
      %v453 = vmul.f32 %v286, %v437
      %v454 = vmul.f32 %v289, %v437
      %v455 = vmul.f32 %v292, %v437
      %v456 = vmul.f32 %v295, %v437
      %v457 = vmul.f32 %v298, %v437
      %v458 = vmul.f32 %v301, %v437
      %v459 = vmul.f32 %v304, %v437
      %v460 = vmul.f32 %v307, %v437
      %v461 = vmul.f32 %v310, %v437
      %v462 = vmul.f32 %v313, %v437
      %v463 = vmul.f32 %v316, %v437
      %v464 = vmul.f32 %v319, %v437
      %v465 = vmul.f32 %v322, %v437
      %v466 = vmul.f32 %v325, %v437
      %v467 = vmul.f32 %v328, %v437
      %v468 = vmul.f32 %v331, %v437
      %v469 = vmul.f32 %v334, %v437
      %v470 = vmul.f32 %v337, %v437
      %v471 = vmul.f32 %v340, %v437
      %v472 = vmul.f32 %v343, %v437
      %v473 = vmul.f32 %v346, %v437
      %v474 = vmul.f32 %v349, %v437
      %v475 = vmul.f32 %v352, %v437
      %v476 = vmul.f32 %v355, %v437
      %v477 = vmul.f32 %v358, %v437
      %v478 = vmul.f32 %v361, %v437
      %v479 = vmul.f32 %v364, %v437
      %v480 = vmul.f32 %v367, %v437
      %v481 = vmul.f32 %v370, %v437
      %v482 = vmul.f32 %v373, %v437
      %v483 = vmul.f32 %v376, %v437
      %v484 = vmul.f32 %v379, %v437
      %v485 = vmul.f32 %v382, %v437
      %v486 = vmul.f32 %v385, %v437
      %v487 = vmul.f32 %v388, %v437
      %v488 = vmul.f32 %v391, %v437
      %v489 = vmul.f32 %v394, %v437
      %v490 = vmul.f32 %v397, %v437
      %v491 = vmul.f32 %v400, %v437
      %v492 = vmul.f32 %v403, %v437
      %v493 = vmul.f32 %v406, %v437
      %v494 = vmul.f32 %v409, %v437
      %v495 = vmul.f32 %v412, %v437
      %v496 = vmul.f32 %v415, %v437
      %v497 = vmul.f32 %v418, %v437
      %v498 = vmul.f32 %v421, %v437
      %v499 = vmul.f32 %v424, %v437
      %v500 = vmul.f32 %v427, %v437
      %v501 = vmul.f32 %v430, %v437
      %v502 = vmul.f32 %v174, %v174
      %v503 = vmul.f32 %v175, %v175
      %v504 = vmul.f32 %v176, %v176
      %v505 = vmul.f32 %v177, %v177
      %v506 = vmul.f32 %v178, %v178
      %v507 = vmul.f32 %v179, %v179
      %v508 = vmul.f32 %v180, %v180
      %v509 = vmul.f32 %v181, %v181
      %v510 = vmul.f32 %v182, %v182
      %v511 = vmul.f32 %v183, %v183
      %v512 = vmul.f32 %v184, %v184
      %v513 = vmul.f32 %v185, %v185
      %v514 = vmul.f32 %v186, %v186
      %v515 = vmul.f32 %v187, %v187
      %v516 = vmul.f32 %v188, %v188
      %v517 = vmul.f32 %v189, %v189
      %v518 = vmul.f32 %v190, %v190
      %v519 = vmul.f32 %v191, %v191
      %v520 = vmul.f32 %v192, %v192
      %v521 = vmul.f32 %v193, %v193
      %v522 = vmul.f32 %v194, %v194
      %v523 = vmul.f32 %v195, %v195
      %v524 = vmul.f32 %v196, %v196
      %v525 = vmul.f32 %v197, %v197
      %v526 = vmul.f32 %v198, %v198
      %v527 = vmul.f32 %v199, %v199
      %v528 = vmul.f32 %v200, %v200
      %v529 = vmul.f32 %v201, %v201
      %v530 = vmul.f32 %v202, %v202
      %v531 = vmul.f32 %v203, %v203
      %v532 = vmul.f32 %v204, %v204
      %v533 = vmul.f32 %v205, %v205
      %v534 = vmul.f32 %v206, %v206
      %v535 = vmul.f32 %v207, %v207
      %v536 = vmul.f32 %v208, %v208
      %v537 = vmul.f32 %v209, %v209
      %v538 = vmul.f32 %v210, %v210
      %v539 = vmul.f32 %v211, %v211
      %v540 = vmul.f32 %v212, %v212
      %v541 = vmul.f32 %v213, %v213
      %v542 = vmul.f32 %v214, %v214
      %v543 = vmul.f32 %v215, %v215
      %v544 = vmul.f32 %v216, %v216
      %v545 = vmul.f32 %v217, %v217
      %v546 = vmul.f32 %v218, %v218
      %v547 = vmul.f32 %v219, %v219
      %v548 = vmul.f32 %v220, %v220
      %v549 = vmul.f32 %v221, %v221
      %v550 = vmul.f32 %v222, %v222
      %v551 = vmul.f32 %v223, %v223
      %v552 = vmul.f32 %v224, %v224
      %v553 = vmul.f32 %v225, %v225
      %v554 = vmul.f32 %v226, %v226
      %v555 = vmul.f32 %v227, %v227
      %v556 = vmul.f32 %v228, %v228
      %v557 = vmul.f32 %v229, %v229
      %v558 = vmul.f32 %v230, %v230
      %v559 = vmul.f32 %v231, %v231
      %v560 = vmul.f32 %v232, %v232
      %v561 = vmul.f32 %v233, %v233
      %v562 = vmul.f32 %v234, %v234
      %v563 = vmul.f32 %v235, %v235
      %v564 = vmul.f32 %v236, %v236
      %v565 = vmul.f32 %v237, %v237
      %v566 = vsel %vm238, %v502, 0.0
      %567 = vadd.xlane.f32.xlu0 %v566
      %v568 = vpop.xlane.xlu0 %567
      %v569 = vsel %vm238, %v503, 0.0
      %570 = vadd.xlane.f32.xlu0 %v569
      %v571 = vpop.xlane.xlu0 %570
      %v572 = vsel %vm238, %v504, 0.0
      %573 = vadd.xlane.f32.xlu0 %v572
      %v574 = vpop.xlane.xlu0 %573
      %v575 = vsel %vm238, %v505, 0.0
      %576 = vadd.xlane.f32.xlu0 %v575
      %v577 = vpop.xlane.xlu0 %576
      %v578 = vsel %vm238, %v506, 0.0
      %579 = vadd.xlane.f32.xlu0 %v578
      %v580 = vpop.xlane.xlu0 %579
      %v581 = vsel %vm238, %v507, 0.0
      %582 = vadd.xlane.f32.xlu0 %v581
      %v583 = vpop.xlane.xlu0 %582
      %v584 = vsel %vm238, %v508, 0.0
      %585 = vadd.xlane.f32.xlu0 %v584
      %v586 = vpop.xlane.xlu0 %585
      %v587 = vsel %vm238, %v509, 0.0
      %588 = vadd.xlane.f32.xlu0 %v587
      %v589 = vpop.xlane.xlu0 %588
      %v590 = vsel %vm238, %v510, 0.0
      %591 = vadd.xlane.f32.xlu0 %v590
      %v592 = vpop.xlane.xlu0 %591
      %v593 = vsel %vm238, %v511, 0.0
      %594 = vadd.xlane.f32.xlu0 %v593
      %v595 = vpop.xlane.xlu0 %594
      %v596 = vsel %vm238, %v512, 0.0
      %597 = vadd.xlane.f32.xlu0 %v596
      %v598 = vpop.xlane.xlu0 %597
      %v599 = vsel %vm238, %v513, 0.0
      %600 = vadd.xlane.f32.xlu0 %v599
      %v601 = vpop.xlane.xlu0 %600
      %v602 = vsel %vm238, %v514, 0.0
      %603 = vadd.xlane.f32.xlu0 %v602
      %v604 = vpop.xlane.xlu0 %603
      %v605 = vsel %vm238, %v515, 0.0
      %606 = vadd.xlane.f32.xlu0 %v605
      %v607 = vpop.xlane.xlu0 %606
      %v608 = vsel %vm238, %v516, 0.0
      %609 = vadd.xlane.f32.xlu0 %v608
      %v610 = vpop.xlane.xlu0 %609
      %v611 = vsel %vm238, %v517, 0.0
      %612 = vadd.xlane.f32.xlu0 %v611
      %v613 = vpop.xlane.xlu0 %612
      %v614 = vsel %vm238, %v518, 0.0
      %615 = vadd.xlane.f32.xlu0 %v614
      %v616 = vpop.xlane.xlu0 %615
      %v617 = vsel %vm238, %v519, 0.0
      %618 = vadd.xlane.f32.xlu0 %v617
      %v619 = vpop.xlane.xlu0 %618
      %v620 = vsel %vm238, %v520, 0.0
      %621 = vadd.xlane.f32.xlu0 %v620
      %v622 = vpop.xlane.xlu0 %621
      %v623 = vsel %vm238, %v521, 0.0
      %624 = vadd.xlane.f32.xlu0 %v623
      %v625 = vpop.xlane.xlu0 %624
      %v626 = vsel %vm238, %v522, 0.0
      %627 = vadd.xlane.f32.xlu0 %v626
      %v628 = vpop.xlane.xlu0 %627
      %v629 = vsel %vm238, %v523, 0.0
      %630 = vadd.xlane.f32.xlu0 %v629
      %v631 = vpop.xlane.xlu0 %630
      %v632 = vsel %vm238, %v524, 0.0
      %633 = vadd.xlane.f32.xlu0 %v632
      %v634 = vpop.xlane.xlu0 %633
      %v635 = vsel %vm238, %v525, 0.0
      %636 = vadd.xlane.f32.xlu0 %v635
      %v637 = vpop.xlane.xlu0 %636
      %v638 = vsel %vm238, %v526, 0.0
      %639 = vadd.xlane.f32.xlu0 %v638
      %v640 = vpop.xlane.xlu0 %639
      %v641 = vsel %vm238, %v527, 0.0
      %642 = vadd.xlane.f32.xlu0 %v641
      %v643 = vpop.xlane.xlu0 %642
      %v644 = vsel %vm238, %v528, 0.0
      %645 = vadd.xlane.f32.xlu0 %v644
      %v646 = vpop.xlane.xlu0 %645
      %v647 = vsel %vm238, %v529, 0.0
      %648 = vadd.xlane.f32.xlu0 %v647
      %v649 = vpop.xlane.xlu0 %648
      %v650 = vsel %vm238, %v530, 0.0
      %651 = vadd.xlane.f32.xlu0 %v650
      %v652 = vpop.xlane.xlu0 %651
      %v653 = vsel %vm238, %v531, 0.0
      %654 = vadd.xlane.f32.xlu0 %v653
      %v655 = vpop.xlane.xlu0 %654
      %v656 = vsel %vm238, %v532, 0.0
      %657 = vadd.xlane.f32.xlu0 %v656
      %v658 = vpop.xlane.xlu0 %657
      %v659 = vsel %vm238, %v533, 0.0
      %660 = vadd.xlane.f32.xlu0 %v659
      %v661 = vpop.xlane.xlu0 %660
      %v662 = vsel %vm238, %v534, 0.0
      %663 = vadd.xlane.f32.xlu0 %v662
      %v664 = vpop.xlane.xlu0 %663
      %v665 = vsel %vm238, %v535, 0.0
      %666 = vadd.xlane.f32.xlu0 %v665
      %v667 = vpop.xlane.xlu0 %666
      %v668 = vsel %vm238, %v536, 0.0
      %669 = vadd.xlane.f32.xlu0 %v668
      %v670 = vpop.xlane.xlu0 %669
      %v671 = vsel %vm238, %v537, 0.0
      %672 = vadd.xlane.f32.xlu0 %v671
      %v673 = vpop.xlane.xlu0 %672
      %v674 = vsel %vm238, %v538, 0.0
      %675 = vadd.xlane.f32.xlu0 %v674
      %v676 = vpop.xlane.xlu0 %675
      %v677 = vsel %vm238, %v539, 0.0
      %678 = vadd.xlane.f32.xlu0 %v677
      %v679 = vpop.xlane.xlu0 %678
      %v680 = vsel %vm238, %v540, 0.0
      %681 = vadd.xlane.f32.xlu0 %v680
      %v682 = vpop.xlane.xlu0 %681
      %v683 = vsel %vm238, %v541, 0.0
      %684 = vadd.xlane.f32.xlu0 %v683
      %v685 = vpop.xlane.xlu0 %684
      %v686 = vsel %vm238, %v542, 0.0
      %687 = vadd.xlane.f32.xlu0 %v686
      %v688 = vpop.xlane.xlu0 %687
      %v689 = vsel %vm238, %v543, 0.0
      %690 = vadd.xlane.f32.xlu0 %v689
      %v691 = vpop.xlane.xlu0 %690
      %v692 = vsel %vm238, %v544, 0.0
      %693 = vadd.xlane.f32.xlu0 %v692
      %v694 = vpop.xlane.xlu0 %693
      %v695 = vsel %vm238, %v545, 0.0
      %696 = vadd.xlane.f32.xlu0 %v695
      %v697 = vpop.xlane.xlu0 %696
      %v698 = vsel %vm238, %v546, 0.0
      %699 = vadd.xlane.f32.xlu0 %v698
      %v700 = vpop.xlane.xlu0 %699
      %v701 = vsel %vm238, %v547, 0.0
      %702 = vadd.xlane.f32.xlu0 %v701
      %v703 = vpop.xlane.xlu0 %702
      %v704 = vsel %vm238, %v548, 0.0
      %705 = vadd.xlane.f32.xlu0 %v704
      %v706 = vpop.xlane.xlu0 %705
      %v707 = vsel %vm238, %v549, 0.0
      %708 = vadd.xlane.f32.xlu0 %v707
      %v709 = vpop.xlane.xlu0 %708
      %v710 = vsel %vm238, %v550, 0.0
      %711 = vadd.xlane.f32.xlu0 %v710
      %v712 = vpop.xlane.xlu0 %711
      %v713 = vsel %vm238, %v551, 0.0
      %714 = vadd.xlane.f32.xlu0 %v713
      %v715 = vpop.xlane.xlu0 %714
      %v716 = vsel %vm238, %v552, 0.0
      %717 = vadd.xlane.f32.xlu0 %v716
      %v718 = vpop.xlane.xlu0 %717
      %v719 = vsel %vm238, %v553, 0.0
      %720 = vadd.xlane.f32.xlu0 %v719
      %v721 = vpop.xlane.xlu0 %720
      %v722 = vsel %vm238, %v554, 0.0
      %723 = vadd.xlane.f32.xlu0 %v722
      %v724 = vpop.xlane.xlu0 %723
      %v725 = vsel %vm238, %v555, 0.0
      %726 = vadd.xlane.f32.xlu0 %v725
      %v727 = vpop.xlane.xlu0 %726
      %v728 = vsel %vm238, %v556, 0.0
      %729 = vadd.xlane.f32.xlu0 %v728
      %v730 = vpop.xlane.xlu0 %729
      %v731 = vsel %vm238, %v557, 0.0
      %732 = vadd.xlane.f32.xlu0 %v731
      %v733 = vpop.xlane.xlu0 %732
      %v734 = vsel %vm238, %v558, 0.0
      %735 = vadd.xlane.f32.xlu0 %v734
      %v736 = vpop.xlane.xlu0 %735
      %v737 = vsel %vm238, %v559, 0.0
      %738 = vadd.xlane.f32.xlu0 %v737
      %v739 = vpop.xlane.xlu0 %738
      %v740 = vsel %vm238, %v560, 0.0
      %741 = vadd.xlane.f32.xlu0 %v740
      %v742 = vpop.xlane.xlu0 %741
      %v743 = vsel %vm238, %v561, 0.0
      %744 = vadd.xlane.f32.xlu0 %v743
      %v745 = vpop.xlane.xlu0 %744
      %v746 = vsel %vm238, %v562, 0.0
      %747 = vadd.xlane.f32.xlu0 %v746
      %v748 = vpop.xlane.xlu0 %747
      %v749 = vsel %vm238, %v563, 0.0
      %750 = vadd.xlane.f32.xlu0 %v749
      %v751 = vpop.xlane.xlu0 %750
      %v752 = vsel %vm238, %v564, 0.0
      %753 = vadd.xlane.f32.xlu0 %v752
      %v754 = vpop.xlane.xlu0 %753
      %v755 = vsel %vm238, %v565, 0.0
      %756 = vadd.xlane.f32.xlu0 %v755
      %v757 = vpop.xlane.xlu0 %756
      %v758 = vmul.f32 %v568, %v437
      %v759 = vmul.f32 %v571, %v437
      %v760 = vmul.f32 %v574, %v437
      %v761 = vmul.f32 %v577, %v437
      %v762 = vmul.f32 %v580, %v437
      %v763 = vmul.f32 %v583, %v437
      %v764 = vmul.f32 %v586, %v437
      %v765 = vmul.f32 %v589, %v437
      %v766 = vmul.f32 %v592, %v437
      %v767 = vmul.f32 %v595, %v437
      %v768 = vmul.f32 %v598, %v437
      %v769 = vmul.f32 %v601, %v437
      %v770 = vmul.f32 %v604, %v437
      %v771 = vmul.f32 %v607, %v437
      %v772 = vmul.f32 %v610, %v437
      %v773 = vmul.f32 %v613, %v437
      %v774 = vmul.f32 %v616, %v437
      %v775 = vmul.f32 %v619, %v437
      %v776 = vmul.f32 %v622, %v437
      %v777 = vmul.f32 %v625, %v437
      %v778 = vmul.f32 %v628, %v437
      %v779 = vmul.f32 %v631, %v437
      %v780 = vmul.f32 %v634, %v437
      %v781 = vmul.f32 %v637, %v437
      %v782 = vmul.f32 %v640, %v437
      %v783 = vmul.f32 %v643, %v437
      %v784 = vmul.f32 %v646, %v437
      %v785 = vmul.f32 %v649, %v437
      %v786 = vmul.f32 %v652, %v437
      %v787 = vmul.f32 %v655, %v437
      %v788 = vmul.f32 %v658, %v437
      %v789 = vmul.f32 %v661, %v437
      %v790 = vmul.f32 %v664, %v437
      %v791 = vmul.f32 %v667, %v437
      %v792 = vmul.f32 %v670, %v437
      %v793 = vmul.f32 %v673, %v437
      %v794 = vmul.f32 %v676, %v437
      %v795 = vmul.f32 %v679, %v437
      %v796 = vmul.f32 %v682, %v437
      %v797 = vmul.f32 %v685, %v437
      %v798 = vmul.f32 %v688, %v437
      %v799 = vmul.f32 %v691, %v437
      %v800 = vmul.f32 %v694, %v437
      %v801 = vmul.f32 %v697, %v437
      %v802 = vmul.f32 %v700, %v437
      %v803 = vmul.f32 %v703, %v437
      %v804 = vmul.f32 %v706, %v437
      %v805 = vmul.f32 %v709, %v437
      %v806 = vmul.f32 %v712, %v437
      %v807 = vmul.f32 %v715, %v437
      %v808 = vmul.f32 %v718, %v437
      %v809 = vmul.f32 %v721, %v437
      %v810 = vmul.f32 %v724, %v437
      %v811 = vmul.f32 %v727, %v437
      %v812 = vmul.f32 %v730, %v437
      %v813 = vmul.f32 %v733, %v437
      %v814 = vmul.f32 %v736, %v437
      %v815 = vmul.f32 %v739, %v437
      %v816 = vmul.f32 %v742, %v437
      %v817 = vmul.f32 %v745, %v437
      %v818 = vmul.f32 %v748, %v437
      %v819 = vmul.f32 %v751, %v437
      %v820 = vmul.f32 %v754, %v437
      %v821 = vmul.f32 %v757, %v437
      %v822 = vmul.f32 %v438, %v438
      %v823 = vmul.f32 %v439, %v439
      %v824 = vmul.f32 %v440, %v440
      %v825 = vmul.f32 %v441, %v441
      %v826 = vmul.f32 %v442, %v442
      %v827 = vmul.f32 %v443, %v443
      %v828 = vmul.f32 %v444, %v444
      %v829 = vmul.f32 %v445, %v445
      %v830 = vmul.f32 %v446, %v446
      %v831 = vmul.f32 %v447, %v447
      %v832 = vmul.f32 %v448, %v448
      %v833 = vmul.f32 %v449, %v449
      %v834 = vmul.f32 %v450, %v450
      %v835 = vmul.f32 %v451, %v451
      %v836 = vmul.f32 %v452, %v452
      %v837 = vmul.f32 %v453, %v453
      %v838 = vmul.f32 %v454, %v454
      %v839 = vmul.f32 %v455, %v455
      %v840 = vmul.f32 %v456, %v456
      %v841 = vmul.f32 %v457, %v457
      %v842 = vmul.f32 %v458, %v458
      %v843 = vmul.f32 %v459, %v459
      %v844 = vmul.f32 %v460, %v460
      %v845 = vmul.f32 %v461, %v461
      %v846 = vmul.f32 %v462, %v462
      %v847 = vmul.f32 %v463, %v463
      %v848 = vmul.f32 %v464, %v464
      %v849 = vmul.f32 %v465, %v465
      %v850 = vmul.f32 %v466, %v466
      %v851 = vmul.f32 %v467, %v467
      %v852 = vmul.f32 %v468, %v468
      %v853 = vmul.f32 %v469, %v469
      %v854 = vmul.f32 %v470, %v470
      %v855 = vmul.f32 %v471, %v471
      %v856 = vmul.f32 %v472, %v472
      %v857 = vmul.f32 %v473, %v473
      %v858 = vmul.f32 %v474, %v474
      %v859 = vmul.f32 %v475, %v475
      %v860 = vmul.f32 %v476, %v476
      %v861 = vmul.f32 %v477, %v477
      %v862 = vmul.f32 %v478, %v478
      %v863 = vmul.f32 %v479, %v479
      %v864 = vmul.f32 %v480, %v480
      %v865 = vmul.f32 %v481, %v481
      %v866 = vmul.f32 %v482, %v482
      %v867 = vmul.f32 %v483, %v483
      %v868 = vmul.f32 %v484, %v484
      %v869 = vmul.f32 %v485, %v485
      %v870 = vmul.f32 %v486, %v486
      %v871 = vmul.f32 %v487, %v487
      %v872 = vmul.f32 %v488, %v488
      %v873 = vmul.f32 %v489, %v489
      %v874 = vmul.f32 %v490, %v490
      %v875 = vmul.f32 %v491, %v491
      %v876 = vmul.f32 %v492, %v492
      %v877 = vmul.f32 %v493, %v493
      %v878 = vmul.f32 %v494, %v494
      %v879 = vmul.f32 %v495, %v495
      %v880 = vmul.f32 %v496, %v496
      %v881 = vmul.f32 %v497, %v497
      %v882 = vmul.f32 %v498, %v498
      %v883 = vmul.f32 %v499, %v499
      %v884 = vmul.f32 %v500, %v500
      %v885 = vmul.f32 %v501, %v501
      %v886 = vsub.f32 %v758, %v822
      %v887 = vsub.f32 %v759, %v823
      %v888 = vsub.f32 %v760, %v824
      %v889 = vsub.f32 %v761, %v825
      %v890 = vsub.f32 %v762, %v826
      %v891 = vsub.f32 %v763, %v827
      %v892 = vsub.f32 %v764, %v828
      %v893 = vsub.f32 %v765, %v829
      %v894 = vsub.f32 %v766, %v830
      %v895 = vsub.f32 %v767, %v831
      %v896 = vsub.f32 %v768, %v832
      %v897 = vsub.f32 %v769, %v833
      %v898 = vsub.f32 %v770, %v834
      %v899 = vsub.f32 %v771, %v835
      %v900 = vsub.f32 %v772, %v836
      %v901 = vsub.f32 %v773, %v837
      %v902 = vsub.f32 %v774, %v838
      %v903 = vsub.f32 %v775, %v839
      %v904 = vsub.f32 %v776, %v840
      %v905 = vsub.f32 %v777, %v841
      %v906 = vsub.f32 %v778, %v842
      %v907 = vsub.f32 %v779, %v843
      %v908 = vsub.f32 %v780, %v844
      %v909 = vsub.f32 %v781, %v845
      %v910 = vsub.f32 %v782, %v846
      %v911 = vsub.f32 %v783, %v847
      %v912 = vsub.f32 %v784, %v848
      %v913 = vsub.f32 %v785, %v849
      %v914 = vsub.f32 %v786, %v850
      %v915 = vsub.f32 %v787, %v851
      %v916 = vsub.f32 %v788, %v852
      %v917 = vsub.f32 %v789, %v853
      %v918 = vsub.f32 %v790, %v854
      %v919 = vsub.f32 %v791, %v855
      %v920 = vsub.f32 %v792, %v856
      %v921 = vsub.f32 %v793, %v857
      %v922 = vsub.f32 %v794, %v858
      %v923 = vsub.f32 %v795, %v859
      %v924 = vsub.f32 %v796, %v860
      %v925 = vsub.f32 %v797, %v861
      %v926 = vsub.f32 %v798, %v862
      %v927 = vsub.f32 %v799, %v863
      %v928 = vsub.f32 %v800, %v864
      %v929 = vsub.f32 %v801, %v865
      %v930 = vsub.f32 %v802, %v866
      %v931 = vsub.f32 %v803, %v867
      %v932 = vsub.f32 %v804, %v868
      %v933 = vsub.f32 %v805, %v869
      %v934 = vsub.f32 %v806, %v870
      %v935 = vsub.f32 %v807, %v871
      %v936 = vsub.f32 %v808, %v872
      %v937 = vsub.f32 %v809, %v873
      %v938 = vsub.f32 %v810, %v874
      %v939 = vsub.f32 %v811, %v875
      %v940 = vsub.f32 %v812, %v876
      %v941 = vsub.f32 %v813, %v877
      %v942 = vsub.f32 %v814, %v878
      %v943 = vsub.f32 %v815, %v879
      %v944 = vsub.f32 %v816, %v880
      %v945 = vsub.f32 %v817, %v881
      %v946 = vsub.f32 %v818, %v882
      %v947 = vsub.f32 %v819, %v883
      %v948 = vsub.f32 %v820, %v884
      %v949 = vsub.f32 %v821, %v885
      %v950 = vmax.f32 %v886, 0.0
      %v951 = vmax.f32 %v887, 0.0
      %v952 = vmax.f32 %v888, 0.0
      %v953 = vmax.f32 %v889, 0.0
      %v954 = vmax.f32 %v890, 0.0
      %v955 = vmax.f32 %v891, 0.0
      %v956 = vmax.f32 %v892, 0.0
      %v957 = vmax.f32 %v893, 0.0
      %v958 = vmax.f32 %v894, 0.0
      %v959 = vmax.f32 %v895, 0.0
      %v960 = vmax.f32 %v896, 0.0
      %v961 = vmax.f32 %v897, 0.0
      %v962 = vmax.f32 %v898, 0.0
      %v963 = vmax.f32 %v899, 0.0
      %v964 = vmax.f32 %v900, 0.0
      %v965 = vmax.f32 %v901, 0.0
      %v966 = vmax.f32 %v902, 0.0
      %v967 = vmax.f32 %v903, 0.0
      %v968 = vmax.f32 %v904, 0.0
      %v969 = vmax.f32 %v905, 0.0
      %v970 = vmax.f32 %v906, 0.0
      %v971 = vmax.f32 %v907, 0.0
      %v972 = vmax.f32 %v908, 0.0
      %v973 = vmax.f32 %v909, 0.0
      %v974 = vmax.f32 %v910, 0.0
      %v975 = vmax.f32 %v911, 0.0
      %v976 = vmax.f32 %v912, 0.0
      %v977 = vmax.f32 %v913, 0.0
      %v978 = vmax.f32 %v914, 0.0
      %v979 = vmax.f32 %v915, 0.0
      %v980 = vmax.f32 %v916, 0.0
      %v981 = vmax.f32 %v917, 0.0
      %v982 = vmax.f32 %v918, 0.0
      %v983 = vmax.f32 %v919, 0.0
      %v984 = vmax.f32 %v920, 0.0
      %v985 = vmax.f32 %v921, 0.0
      %v986 = vmax.f32 %v922, 0.0
      %v987 = vmax.f32 %v923, 0.0
      %v988 = vmax.f32 %v924, 0.0
      %v989 = vmax.f32 %v925, 0.0
      %v990 = vmax.f32 %v926, 0.0
      %v991 = vmax.f32 %v927, 0.0
      %v992 = vmax.f32 %v928, 0.0
      %v993 = vmax.f32 %v929, 0.0
      %v994 = vmax.f32 %v930, 0.0
      %v995 = vmax.f32 %v931, 0.0
      %v996 = vmax.f32 %v932, 0.0
      %v997 = vmax.f32 %v933, 0.0
      %v998 = vmax.f32 %v934, 0.0
      %v999 = vmax.f32 %v935, 0.0
      %v1000 = vmax.f32 %v936, 0.0
      %v1001 = vmax.f32 %v937, 0.0
      %v1002 = vmax.f32 %v938, 0.0
      %v1003 = vmax.f32 %v939, 0.0
      %v1004 = vmax.f32 %v940, 0.0
      %v1005 = vmax.f32 %v941, 0.0
      %v1006 = vmax.f32 %v942, 0.0
      %v1007 = vmax.f32 %v943, 0.0
      %v1008 = vmax.f32 %v944, 0.0
      %v1009 = vmax.f32 %v945, 0.0
      %v1010 = vmax.f32 %v946, 0.0
      %v1011 = vmax.f32 %v947, 0.0
      %v1012 = vmax.f32 %v948, 0.0
      %v1013 = vmax.f32 %v949, 0.0
      %v1014 = vsub.f32 %v174, %v438
      %v1015 = vsub.f32 %v175, %v439
      %v1016 = vsub.f32 %v176, %v440
      %v1017 = vsub.f32 %v177, %v441
      %v1018 = vsub.f32 %v178, %v442
      %v1019 = vsub.f32 %v179, %v443
      %v1020 = vsub.f32 %v180, %v444
      %v1021 = vsub.f32 %v181, %v445
      %v1022 = vsub.f32 %v182, %v446
      %v1023 = vsub.f32 %v183, %v447
      %v1024 = vsub.f32 %v184, %v448
      %v1025 = vsub.f32 %v185, %v449
      %v1026 = vsub.f32 %v186, %v450
      %v1027 = vsub.f32 %v187, %v451
      %v1028 = vsub.f32 %v188, %v452
      %v1029 = vsub.f32 %v189, %v453
      %v1030 = vsub.f32 %v190, %v454
      %v1031 = vsub.f32 %v191, %v455
      %v1032 = vsub.f32 %v192, %v456
      %v1033 = vsub.f32 %v193, %v457
      %v1034 = vsub.f32 %v194, %v458
      %v1035 = vsub.f32 %v195, %v459
      %v1036 = vsub.f32 %v196, %v460
      %v1037 = vsub.f32 %v197, %v461
      %v1038 = vsub.f32 %v198, %v462
      %v1039 = vsub.f32 %v199, %v463
      %v1040 = vsub.f32 %v200, %v464
      %v1041 = vsub.f32 %v201, %v465
      %v1042 = vsub.f32 %v202, %v466
      %v1043 = vsub.f32 %v203, %v467
      %v1044 = vsub.f32 %v204, %v468
      %v1045 = vsub.f32 %v205, %v469
      %v1046 = vsub.f32 %v206, %v470
      %v1047 = vsub.f32 %v207, %v471
      %v1048 = vsub.f32 %v208, %v472
      %v1049 = vsub.f32 %v209, %v473
      %v1050 = vsub.f32 %v210, %v474
      %v1051 = vsub.f32 %v211, %v475
      %v1052 = vsub.f32 %v212, %v476
      %v1053 = vsub.f32 %v213, %v477
      %v1054 = vsub.f32 %v214, %v478
      %v1055 = vsub.f32 %v215, %v479
      %v1056 = vsub.f32 %v216, %v480
      %v1057 = vsub.f32 %v217, %v481
      %v1058 = vsub.f32 %v218, %v482
      %v1059 = vsub.f32 %v219, %v483
      %v1060 = vsub.f32 %v220, %v484
      %v1061 = vsub.f32 %v221, %v485
      %v1062 = vsub.f32 %v222, %v486
      %v1063 = vsub.f32 %v223, %v487
      %v1064 = vsub.f32 %v224, %v488
      %v1065 = vsub.f32 %v225, %v489
      %v1066 = vsub.f32 %v226, %v490
      %v1067 = vsub.f32 %v227, %v491
      %v1068 = vsub.f32 %v228, %v492
      %v1069 = vsub.f32 %v229, %v493
      %v1070 = vsub.f32 %v230, %v494
      %v1071 = vsub.f32 %v231, %v495
      %v1072 = vsub.f32 %v232, %v496
      %v1073 = vsub.f32 %v233, %v497
      %v1074 = vsub.f32 %v234, %v498
      %v1075 = vsub.f32 %v235, %v499
      %v1076 = vsub.f32 %v236, %v500
      %v1077 = vsub.f32 %v237, %v501
      %v1078 = vadd.f32 %v950, 1e-05
      %v1079 = vadd.f32 %v951, 1e-05
      %v1080 = vadd.f32 %v952, 1e-05
      %v1081 = vadd.f32 %v953, 1e-05
      %v1082 = vadd.f32 %v954, 1e-05
      %v1083 = vadd.f32 %v955, 1e-05
      %v1084 = vadd.f32 %v956, 1e-05
      %v1085 = vadd.f32 %v957, 1e-05
      %v1086 = vadd.f32 %v958, 1e-05
      %v1087 = vadd.f32 %v959, 1e-05
      %v1088 = vadd.f32 %v960, 1e-05
      %v1089 = vadd.f32 %v961, 1e-05
      %v1090 = vadd.f32 %v962, 1e-05
      %v1091 = vadd.f32 %v963, 1e-05
      %v1092 = vadd.f32 %v964, 1e-05
      %v1093 = vadd.f32 %v965, 1e-05
      %v1094 = vadd.f32 %v966, 1e-05
      %v1095 = vadd.f32 %v967, 1e-05
      %v1096 = vadd.f32 %v968, 1e-05
      %v1097 = vadd.f32 %v969, 1e-05
      %v1098 = vadd.f32 %v970, 1e-05
      %v1099 = vadd.f32 %v971, 1e-05
      %v1100 = vadd.f32 %v972, 1e-05
      %v1101 = vadd.f32 %v973, 1e-05
      %v1102 = vadd.f32 %v974, 1e-05
      %v1103 = vadd.f32 %v975, 1e-05
      %v1104 = vadd.f32 %v976, 1e-05
      %v1105 = vadd.f32 %v977, 1e-05
      %v1106 = vadd.f32 %v978, 1e-05
      %v1107 = vadd.f32 %v979, 1e-05
      %v1108 = vadd.f32 %v980, 1e-05
      %v1109 = vadd.f32 %v981, 1e-05
      %v1110 = vadd.f32 %v982, 1e-05
      %v1111 = vadd.f32 %v983, 1e-05
      %v1112 = vadd.f32 %v984, 1e-05
      %v1113 = vadd.f32 %v985, 1e-05
      %v1114 = vadd.f32 %v986, 1e-05
      %v1115 = vadd.f32 %v987, 1e-05
      %v1116 = vadd.f32 %v988, 1e-05
      %v1117 = vadd.f32 %v989, 1e-05
      %v1118 = vadd.f32 %v990, 1e-05
      %v1119 = vadd.f32 %v991, 1e-05
      %v1120 = vadd.f32 %v992, 1e-05
      %v1121 = vadd.f32 %v993, 1e-05
      %v1122 = vadd.f32 %v994, 1e-05
      %v1123 = vadd.f32 %v995, 1e-05
      %v1124 = vadd.f32 %v996, 1e-05
      %v1125 = vadd.f32 %v997, 1e-05
      %v1126 = vadd.f32 %v998, 1e-05
      %v1127 = vadd.f32 %v999, 1e-05
      %v1128 = vadd.f32 %v1000, 1e-05
      %v1129 = vadd.f32 %v1001, 1e-05
      %v1130 = vadd.f32 %v1002, 1e-05
      %v1131 = vadd.f32 %v1003, 1e-05
      %v1132 = vadd.f32 %v1004, 1e-05
      %v1133 = vadd.f32 %v1005, 1e-05
      %v1134 = vadd.f32 %v1006, 1e-05
      %v1135 = vadd.f32 %v1007, 1e-05
      %v1136 = vadd.f32 %v1008, 1e-05
      %v1137 = vadd.f32 %v1009, 1e-05
      %v1138 = vadd.f32 %v1010, 1e-05
      %v1139 = vadd.f32 %v1011, 1e-05
      %v1140 = vadd.f32 %v1012, 1e-05
      %v1141 = vadd.f32 %v1013, 1e-05
      %v1142 = vrsqrt.pop %v1078
      %v1143 = vmul.f32 %v1142, %v1078
      %v1144 = vmul.f32 %v1143, %v1142
      %v1145 = vmul.f32 0.5, %v1144
      %v1146 = vsub.f32 1.5, %v1145
      %v1147 = vmul.f32 %v1142, %v1146
      %vm1148 = vweird.f32 %v1078
      %vm1149 = vweird.f32 %v1142
      %vm1150 = vmor %vm1148, %vm1149
      %v1151 = vsel %vm1150, %v1142, %v1147
      %v1152 = vrsqrt.pop %v1079
      %v1153 = vmul.f32 %v1152, %v1079
      %v1154 = vmul.f32 %v1153, %v1152
      %v1155 = vmul.f32 0.5, %v1154
      %v1156 = vsub.f32 1.5, %v1155
      %v1157 = vmul.f32 %v1152, %v1156
      %vm1158 = vweird.f32 %v1079
      %vm1159 = vweird.f32 %v1152
      %vm1160 = vmor %vm1158, %vm1159
      %v1161 = vsel %vm1160, %v1152, %v1157
      %v1162 = vrsqrt.pop %v1080
      %v1163 = vmul.f32 %v1162, %v1080
      %v1164 = vmul.f32 %v1163, %v1162
      %v1165 = vmul.f32 0.5, %v1164
      %v1166 = vsub.f32 1.5, %v1165
      %v1167 = vmul.f32 %v1162, %v1166
      %vm1168 = vweird.f32 %v1080
      %vm1169 = vweird.f32 %v1162
      %vm1170 = vmor %vm1168, %vm1169
      %v1171 = vsel %vm1170, %v1162, %v1167
      %v1172 = vrsqrt.pop %v1081
      %v1173 = vmul.f32 %v1172, %v1081
      %v1174 = vmul.f32 %v1173, %v1172
      %v1175 = vmul.f32 0.5, %v1174
      %v1176 = vsub.f32 1.5, %v1175
      %v1177 = vmul.f32 %v1172, %v1176
      %vm1178 = vweird.f32 %v1081
      %vm1179 = vweird.f32 %v1172
      %vm1180 = vmor %vm1178, %vm1179
      %v1181 = vsel %vm1180, %v1172, %v1177
      %v1182 = vrsqrt.pop %v1082
      %v1183 = vmul.f32 %v1182, %v1082
      %v1184 = vmul.f32 %v1183, %v1182
      %v1185 = vmul.f32 0.5, %v1184
      %v1186 = vsub.f32 1.5, %v1185
      %v1187 = vmul.f32 %v1182, %v1186
      %vm1188 = vweird.f32 %v1082
      %vm1189 = vweird.f32 %v1182
      %vm1190 = vmor %vm1188, %vm1189
      %v1191 = vsel %vm1190, %v1182, %v1187
      %v1192 = vrsqrt.pop %v1083
      %v1193 = vmul.f32 %v1192, %v1083
      %v1194 = vmul.f32 %v1193, %v1192
      %v1195 = vmul.f32 0.5, %v1194
      %v1196 = vsub.f32 1.5, %v1195
      %v1197 = vmul.f32 %v1192, %v1196
      %vm1198 = vweird.f32 %v1083
      %vm1199 = vweird.f32 %v1192
      %vm1200 = vmor %vm1198, %vm1199
      %v1201 = vsel %vm1200, %v1192, %v1197
      %v1202 = vrsqrt.pop %v1084
      %v1203 = vmul.f32 %v1202, %v1084
      %v1204 = vmul.f32 %v1203, %v1202
      %v1205 = vmul.f32 0.5, %v1204
      %v1206 = vsub.f32 1.5, %v1205
      %v1207 = vmul.f32 %v1202, %v1206
      %vm1208 = vweird.f32 %v1084
      %vm1209 = vweird.f32 %v1202
      %vm1210 = vmor %vm1208, %vm1209
      %v1211 = vsel %vm1210, %v1202, %v1207
      %v1212 = vrsqrt.pop %v1085
      %v1213 = vmul.f32 %v1212, %v1085
      %v1214 = vmul.f32 %v1213, %v1212
      %v1215 = vmul.f32 0.5, %v1214
      %v1216 = vsub.f32 1.5, %v1215
      %v1217 = vmul.f32 %v1212, %v1216
      %vm1218 = vweird.f32 %v1085
      %vm1219 = vweird.f32 %v1212
      %vm1220 = vmor %vm1218, %vm1219
      %v1221 = vsel %vm1220, %v1212, %v1217
      %v1222 = vrsqrt.pop %v1086
      %v1223 = vmul.f32 %v1222, %v1086
      %v1224 = vmul.f32 %v1223, %v1222
      %v1225 = vmul.f32 0.5, %v1224
      %v1226 = vsub.f32 1.5, %v1225
      %v1227 = vmul.f32 %v1222, %v1226
      %vm1228 = vweird.f32 %v1086
      %vm1229 = vweird.f32 %v1222
      %vm1230 = vmor %vm1228, %vm1229
      %v1231 = vsel %vm1230, %v1222, %v1227
      %v1232 = vrsqrt.pop %v1087
      %v1233 = vmul.f32 %v1232, %v1087
      %v1234 = vmul.f32 %v1233, %v1232
      %v1235 = vmul.f32 0.5, %v1234
      %v1236 = vsub.f32 1.5, %v1235
      %v1237 = vmul.f32 %v1232, %v1236
      %vm1238 = vweird.f32 %v1087
      %vm1239 = vweird.f32 %v1232
      %vm1240 = vmor %vm1238, %vm1239
      %v1241 = vsel %vm1240, %v1232, %v1237
      %v1242 = vrsqrt.pop %v1088
      %v1243 = vmul.f32 %v1242, %v1088
      %v1244 = vmul.f32 %v1243, %v1242
      %v1245 = vmul.f32 0.5, %v1244
      %v1246 = vsub.f32 1.5, %v1245
      %v1247 = vmul.f32 %v1242, %v1246
      %vm1248 = vweird.f32 %v1088
      %vm1249 = vweird.f32 %v1242
      %vm1250 = vmor %vm1248, %vm1249
      %v1251 = vsel %vm1250, %v1242, %v1247
      %v1252 = vrsqrt.pop %v1089
      %v1253 = vmul.f32 %v1252, %v1089
      %v1254 = vmul.f32 %v1253, %v1252
      %v1255 = vmul.f32 0.5, %v1254
      %v1256 = vsub.f32 1.5, %v1255
      %v1257 = vmul.f32 %v1252, %v1256
      %vm1258 = vweird.f32 %v1089
      %vm1259 = vweird.f32 %v1252
      %vm1260 = vmor %vm1258, %vm1259
      %v1261 = vsel %vm1260, %v1252, %v1257
      %v1262 = vrsqrt.pop %v1090
      %v1263 = vmul.f32 %v1262, %v1090
      %v1264 = vmul.f32 %v1263, %v1262
      %v1265 = vmul.f32 0.5, %v1264
      %v1266 = vsub.f32 1.5, %v1265
      %v1267 = vmul.f32 %v1262, %v1266
      %vm1268 = vweird.f32 %v1090
      %vm1269 = vweird.f32 %v1262
      %vm1270 = vmor %vm1268, %vm1269
      %v1271 = vsel %vm1270, %v1262, %v1267
      %v1272 = vrsqrt.pop %v1091
      %v1273 = vmul.f32 %v1272, %v1091
      %v1274 = vmul.f32 %v1273, %v1272
      %v1275 = vmul.f32 0.5, %v1274
      %v1276 = vsub.f32 1.5, %v1275
      %v1277 = vmul.f32 %v1272, %v1276
      %vm1278 = vweird.f32 %v1091
      %vm1279 = vweird.f32 %v1272
      %vm1280 = vmor %vm1278, %vm1279
      %v1281 = vsel %vm1280, %v1272, %v1277
      %v1282 = vrsqrt.pop %v1092
      %v1283 = vmul.f32 %v1282, %v1092
      %v1284 = vmul.f32 %v1283, %v1282
      %v1285 = vmul.f32 0.5, %v1284
      %v1286 = vsub.f32 1.5, %v1285
      %v1287 = vmul.f32 %v1282, %v1286
      %vm1288 = vweird.f32 %v1092
      %vm1289 = vweird.f32 %v1282
      %vm1290 = vmor %vm1288, %vm1289
      %v1291 = vsel %vm1290, %v1282, %v1287
      %v1292 = vrsqrt.pop %v1093
      %v1293 = vmul.f32 %v1292, %v1093
      %v1294 = vmul.f32 %v1293, %v1292
      %v1295 = vmul.f32 0.5, %v1294
      %v1296 = vsub.f32 1.5, %v1295
      %v1297 = vmul.f32 %v1292, %v1296
      %vm1298 = vweird.f32 %v1093
      %vm1299 = vweird.f32 %v1292
      %vm1300 = vmor %vm1298, %vm1299
      %v1301 = vsel %vm1300, %v1292, %v1297
      %v1302 = vrsqrt.pop %v1094
      %v1303 = vmul.f32 %v1302, %v1094
      %v1304 = vmul.f32 %v1303, %v1302
      %v1305 = vmul.f32 0.5, %v1304
      %v1306 = vsub.f32 1.5, %v1305
      %v1307 = vmul.f32 %v1302, %v1306
      %vm1308 = vweird.f32 %v1094
      %vm1309 = vweird.f32 %v1302
      %vm1310 = vmor %vm1308, %vm1309
      %v1311 = vsel %vm1310, %v1302, %v1307
      %v1312 = vrsqrt.pop %v1095
      %v1313 = vmul.f32 %v1312, %v1095
      %v1314 = vmul.f32 %v1313, %v1312
      %v1315 = vmul.f32 0.5, %v1314
      %v1316 = vsub.f32 1.5, %v1315
      %v1317 = vmul.f32 %v1312, %v1316
      %vm1318 = vweird.f32 %v1095
      %vm1319 = vweird.f32 %v1312
      %vm1320 = vmor %vm1318, %vm1319
      %v1321 = vsel %vm1320, %v1312, %v1317
      %v1322 = vrsqrt.pop %v1096
      %v1323 = vmul.f32 %v1322, %v1096
      %v1324 = vmul.f32 %v1323, %v1322
      %v1325 = vmul.f32 0.5, %v1324
      %v1326 = vsub.f32 1.5, %v1325
      %v1327 = vmul.f32 %v1322, %v1326
      %vm1328 = vweird.f32 %v1096
      %vm1329 = vweird.f32 %v1322
      %vm1330 = vmor %vm1328, %vm1329
      %v1331 = vsel %vm1330, %v1322, %v1327
      %v1332 = vrsqrt.pop %v1097
      %v1333 = vmul.f32 %v1332, %v1097
      %v1334 = vmul.f32 %v1333, %v1332
      %v1335 = vmul.f32 0.5, %v1334
      %v1336 = vsub.f32 1.5, %v1335
      %v1337 = vmul.f32 %v1332, %v1336
      %vm1338 = vweird.f32 %v1097
      %vm1339 = vweird.f32 %v1332
      %vm1340 = vmor %vm1338, %vm1339
      %v1341 = vsel %vm1340, %v1332, %v1337
      %v1342 = vrsqrt.pop %v1098
      %v1343 = vmul.f32 %v1342, %v1098
      %v1344 = vmul.f32 %v1343, %v1342
      %v1345 = vmul.f32 0.5, %v1344
      %v1346 = vsub.f32 1.5, %v1345
      %v1347 = vmul.f32 %v1342, %v1346
      %vm1348 = vweird.f32 %v1098
      %vm1349 = vweird.f32 %v1342
      %vm1350 = vmor %vm1348, %vm1349
      %v1351 = vsel %vm1350, %v1342, %v1347
      %v1352 = vrsqrt.pop %v1099
      %v1353 = vmul.f32 %v1352, %v1099
      %v1354 = vmul.f32 %v1353, %v1352
      %v1355 = vmul.f32 0.5, %v1354
      %v1356 = vsub.f32 1.5, %v1355
      %v1357 = vmul.f32 %v1352, %v1356
      %vm1358 = vweird.f32 %v1099
      %vm1359 = vweird.f32 %v1352
      %vm1360 = vmor %vm1358, %vm1359
      %v1361 = vsel %vm1360, %v1352, %v1357
      %v1362 = vrsqrt.pop %v1100
      %v1363 = vmul.f32 %v1362, %v1100
      %v1364 = vmul.f32 %v1363, %v1362
      %v1365 = vmul.f32 0.5, %v1364
      %v1366 = vsub.f32 1.5, %v1365
      %v1367 = vmul.f32 %v1362, %v1366
      %vm1368 = vweird.f32 %v1100
      %vm1369 = vweird.f32 %v1362
      %vm1370 = vmor %vm1368, %vm1369
      %v1371 = vsel %vm1370, %v1362, %v1367
      %v1372 = vrsqrt.pop %v1101
      %v1373 = vmul.f32 %v1372, %v1101
      %v1374 = vmul.f32 %v1373, %v1372
      %v1375 = vmul.f32 0.5, %v1374
      %v1376 = vsub.f32 1.5, %v1375
      %v1377 = vmul.f32 %v1372, %v1376
      %vm1378 = vweird.f32 %v1101
      %vm1379 = vweird.f32 %v1372
      %vm1380 = vmor %vm1378, %vm1379
      %v1381 = vsel %vm1380, %v1372, %v1377
      %v1382 = vrsqrt.pop %v1102
      %v1383 = vmul.f32 %v1382, %v1102
      %v1384 = vmul.f32 %v1383, %v1382
      %v1385 = vmul.f32 0.5, %v1384
      %v1386 = vsub.f32 1.5, %v1385
      %v1387 = vmul.f32 %v1382, %v1386
      %vm1388 = vweird.f32 %v1102
      %vm1389 = vweird.f32 %v1382
      %vm1390 = vmor %vm1388, %vm1389
      %v1391 = vsel %vm1390, %v1382, %v1387
      %v1392 = vrsqrt.pop %v1103
      %v1393 = vmul.f32 %v1392, %v1103
      %v1394 = vmul.f32 %v1393, %v1392
      %v1395 = vmul.f32 0.5, %v1394
      %v1396 = vsub.f32 1.5, %v1395
      %v1397 = vmul.f32 %v1392, %v1396
      %vm1398 = vweird.f32 %v1103
      %vm1399 = vweird.f32 %v1392
      %vm1400 = vmor %vm1398, %vm1399
      %v1401 = vsel %vm1400, %v1392, %v1397
      %v1402 = vrsqrt.pop %v1104
      %v1403 = vmul.f32 %v1402, %v1104
      %v1404 = vmul.f32 %v1403, %v1402
      %v1405 = vmul.f32 0.5, %v1404
      %v1406 = vsub.f32 1.5, %v1405
      %v1407 = vmul.f32 %v1402, %v1406
      %vm1408 = vweird.f32 %v1104
      %vm1409 = vweird.f32 %v1402
      %vm1410 = vmor %vm1408, %vm1409
      %v1411 = vsel %vm1410, %v1402, %v1407
      %v1412 = vrsqrt.pop %v1105
      %v1413 = vmul.f32 %v1412, %v1105
      %v1414 = vmul.f32 %v1413, %v1412
      %v1415 = vmul.f32 0.5, %v1414
      %v1416 = vsub.f32 1.5, %v1415
      %v1417 = vmul.f32 %v1412, %v1416
      %vm1418 = vweird.f32 %v1105
      %vm1419 = vweird.f32 %v1412
      %vm1420 = vmor %vm1418, %vm1419
      %v1421 = vsel %vm1420, %v1412, %v1417
      %v1422 = vrsqrt.pop %v1106
      %v1423 = vmul.f32 %v1422, %v1106
      %v1424 = vmul.f32 %v1423, %v1422
      %v1425 = vmul.f32 0.5, %v1424
      %v1426 = vsub.f32 1.5, %v1425
      %v1427 = vmul.f32 %v1422, %v1426
      %vm1428 = vweird.f32 %v1106
      %vm1429 = vweird.f32 %v1422
      %vm1430 = vmor %vm1428, %vm1429
      %v1431 = vsel %vm1430, %v1422, %v1427
      %v1432 = vrsqrt.pop %v1107
      %v1433 = vmul.f32 %v1432, %v1107
      %v1434 = vmul.f32 %v1433, %v1432
      %v1435 = vmul.f32 0.5, %v1434
      %v1436 = vsub.f32 1.5, %v1435
      %v1437 = vmul.f32 %v1432, %v1436
      %vm1438 = vweird.f32 %v1107
      %vm1439 = vweird.f32 %v1432
      %vm1440 = vmor %vm1438, %vm1439
      %v1441 = vsel %vm1440, %v1432, %v1437
      %v1442 = vrsqrt.pop %v1108
      %v1443 = vmul.f32 %v1442, %v1108
      %v1444 = vmul.f32 %v1443, %v1442
      %v1445 = vmul.f32 0.5, %v1444
      %v1446 = vsub.f32 1.5, %v1445
      %v1447 = vmul.f32 %v1442, %v1446
      %vm1448 = vweird.f32 %v1108
      %vm1449 = vweird.f32 %v1442
      %vm1450 = vmor %vm1448, %vm1449
      %v1451 = vsel %vm1450, %v1442, %v1447
      %v1452 = vrsqrt.pop %v1109
      %v1453 = vmul.f32 %v1452, %v1109
      %v1454 = vmul.f32 %v1453, %v1452
      %v1455 = vmul.f32 0.5, %v1454
      %v1456 = vsub.f32 1.5, %v1455
      %v1457 = vmul.f32 %v1452, %v1456
      %vm1458 = vweird.f32 %v1109
      %vm1459 = vweird.f32 %v1452
      %vm1460 = vmor %vm1458, %vm1459
      %v1461 = vsel %vm1460, %v1452, %v1457
      %v1462 = vrsqrt.pop %v1110
      %v1463 = vmul.f32 %v1462, %v1110
      %v1464 = vmul.f32 %v1463, %v1462
      %v1465 = vmul.f32 0.5, %v1464
      %v1466 = vsub.f32 1.5, %v1465
      %v1467 = vmul.f32 %v1462, %v1466
      %vm1468 = vweird.f32 %v1110
      %vm1469 = vweird.f32 %v1462
      %vm1470 = vmor %vm1468, %vm1469
      %v1471 = vsel %vm1470, %v1462, %v1467
      %v1472 = vrsqrt.pop %v1111
      %v1473 = vmul.f32 %v1472, %v1111
      %v1474 = vmul.f32 %v1473, %v1472
      %v1475 = vmul.f32 0.5, %v1474
      %v1476 = vsub.f32 1.5, %v1475
      %v1477 = vmul.f32 %v1472, %v1476
      %vm1478 = vweird.f32 %v1111
      %vm1479 = vweird.f32 %v1472
      %vm1480 = vmor %vm1478, %vm1479
      %v1481 = vsel %vm1480, %v1472, %v1477
      %v1482 = vrsqrt.pop %v1112
      %v1483 = vmul.f32 %v1482, %v1112
      %v1484 = vmul.f32 %v1483, %v1482
      %v1485 = vmul.f32 0.5, %v1484
      %v1486 = vsub.f32 1.5, %v1485
      %v1487 = vmul.f32 %v1482, %v1486
      %vm1488 = vweird.f32 %v1112
      %vm1489 = vweird.f32 %v1482
      %vm1490 = vmor %vm1488, %vm1489
      %v1491 = vsel %vm1490, %v1482, %v1487
      %v1492 = vrsqrt.pop %v1113
      %v1493 = vmul.f32 %v1492, %v1113
      %v1494 = vmul.f32 %v1493, %v1492
      %v1495 = vmul.f32 0.5, %v1494
      %v1496 = vsub.f32 1.5, %v1495
      %v1497 = vmul.f32 %v1492, %v1496
      %vm1498 = vweird.f32 %v1113
      %vm1499 = vweird.f32 %v1492
      %vm1500 = vmor %vm1498, %vm1499
      %v1501 = vsel %vm1500, %v1492, %v1497
      %v1502 = vrsqrt.pop %v1114
      %v1503 = vmul.f32 %v1502, %v1114
      %v1504 = vmul.f32 %v1503, %v1502
      %v1505 = vmul.f32 0.5, %v1504
      %v1506 = vsub.f32 1.5, %v1505
      %v1507 = vmul.f32 %v1502, %v1506
      %vm1508 = vweird.f32 %v1114
      %vm1509 = vweird.f32 %v1502
      %vm1510 = vmor %vm1508, %vm1509
      %v1511 = vsel %vm1510, %v1502, %v1507
      %v1512 = vrsqrt.pop %v1115
      %v1513 = vmul.f32 %v1512, %v1115
      %v1514 = vmul.f32 %v1513, %v1512
      %v1515 = vmul.f32 0.5, %v1514
      %v1516 = vsub.f32 1.5, %v1515
      %v1517 = vmul.f32 %v1512, %v1516
      %vm1518 = vweird.f32 %v1115
      %vm1519 = vweird.f32 %v1512
      %vm1520 = vmor %vm1518, %vm1519
      %v1521 = vsel %vm1520, %v1512, %v1517
      %v1522 = vrsqrt.pop %v1116
      %v1523 = vmul.f32 %v1522, %v1116
      %v1524 = vmul.f32 %v1523, %v1522
      %v1525 = vmul.f32 0.5, %v1524
      %v1526 = vsub.f32 1.5, %v1525
      %v1527 = vmul.f32 %v1522, %v1526
      %vm1528 = vweird.f32 %v1116
      %vm1529 = vweird.f32 %v1522
      %vm1530 = vmor %vm1528, %vm1529
      %v1531 = vsel %vm1530, %v1522, %v1527
      %v1532 = vrsqrt.pop %v1117
      %v1533 = vmul.f32 %v1532, %v1117
      %v1534 = vmul.f32 %v1533, %v1532
      %v1535 = vmul.f32 0.5, %v1534
      %v1536 = vsub.f32 1.5, %v1535
      %v1537 = vmul.f32 %v1532, %v1536
      %vm1538 = vweird.f32 %v1117
      %vm1539 = vweird.f32 %v1532
      %vm1540 = vmor %vm1538, %vm1539
      %v1541 = vsel %vm1540, %v1532, %v1537
      %v1542 = vrsqrt.pop %v1118
      %v1543 = vmul.f32 %v1542, %v1118
      %v1544 = vmul.f32 %v1543, %v1542
      %v1545 = vmul.f32 0.5, %v1544
      %v1546 = vsub.f32 1.5, %v1545
      %v1547 = vmul.f32 %v1542, %v1546
      %vm1548 = vweird.f32 %v1118
      %vm1549 = vweird.f32 %v1542
      %vm1550 = vmor %vm1548, %vm1549
      %v1551 = vsel %vm1550, %v1542, %v1547
      %v1552 = vrsqrt.pop %v1119
      %v1553 = vmul.f32 %v1552, %v1119
      %v1554 = vmul.f32 %v1553, %v1552
      %v1555 = vmul.f32 0.5, %v1554
      %v1556 = vsub.f32 1.5, %v1555
      %v1557 = vmul.f32 %v1552, %v1556
      %vm1558 = vweird.f32 %v1119
      %vm1559 = vweird.f32 %v1552
      %vm1560 = vmor %vm1558, %vm1559
      %v1561 = vsel %vm1560, %v1552, %v1557
      %v1562 = vrsqrt.pop %v1120
      %v1563 = vmul.f32 %v1562, %v1120
      %v1564 = vmul.f32 %v1563, %v1562
      %v1565 = vmul.f32 0.5, %v1564
      %v1566 = vsub.f32 1.5, %v1565
      %v1567 = vmul.f32 %v1562, %v1566
      %vm1568 = vweird.f32 %v1120
      %vm1569 = vweird.f32 %v1562
      %vm1570 = vmor %vm1568, %vm1569
      %v1571 = vsel %vm1570, %v1562, %v1567
      %v1572 = vrsqrt.pop %v1121
      %v1573 = vmul.f32 %v1572, %v1121
      %v1574 = vmul.f32 %v1573, %v1572
      %v1575 = vmul.f32 0.5, %v1574
      %v1576 = vsub.f32 1.5, %v1575
      %v1577 = vmul.f32 %v1572, %v1576
      %vm1578 = vweird.f32 %v1121
      %vm1579 = vweird.f32 %v1572
      %vm1580 = vmor %vm1578, %vm1579
      %v1581 = vsel %vm1580, %v1572, %v1577
      %v1582 = vrsqrt.pop %v1122
      %v1583 = vmul.f32 %v1582, %v1122
      %v1584 = vmul.f32 %v1583, %v1582
      %v1585 = vmul.f32 0.5, %v1584
      %v1586 = vsub.f32 1.5, %v1585
      %v1587 = vmul.f32 %v1582, %v1586
      %vm1588 = vweird.f32 %v1122
      %vm1589 = vweird.f32 %v1582
      %vm1590 = vmor %vm1588, %vm1589
      %v1591 = vsel %vm1590, %v1582, %v1587
      %v1592 = vrsqrt.pop %v1123
      %v1593 = vmul.f32 %v1592, %v1123
      %v1594 = vmul.f32 %v1593, %v1592
      %v1595 = vmul.f32 0.5, %v1594
      %v1596 = vsub.f32 1.5, %v1595
      %v1597 = vmul.f32 %v1592, %v1596
      %vm1598 = vweird.f32 %v1123
      %vm1599 = vweird.f32 %v1592
      %vm1600 = vmor %vm1598, %vm1599
      %v1601 = vsel %vm1600, %v1592, %v1597
      %v1602 = vrsqrt.pop %v1124
      %v1603 = vmul.f32 %v1602, %v1124
      %v1604 = vmul.f32 %v1603, %v1602
      %v1605 = vmul.f32 0.5, %v1604
      %v1606 = vsub.f32 1.5, %v1605
      %v1607 = vmul.f32 %v1602, %v1606
      %vm1608 = vweird.f32 %v1124
      %vm1609 = vweird.f32 %v1602
      %vm1610 = vmor %vm1608, %vm1609
      %v1611 = vsel %vm1610, %v1602, %v1607
      %v1612 = vrsqrt.pop %v1125
      %v1613 = vmul.f32 %v1612, %v1125
      %v1614 = vmul.f32 %v1613, %v1612
      %v1615 = vmul.f32 0.5, %v1614
      %v1616 = vsub.f32 1.5, %v1615
      %v1617 = vmul.f32 %v1612, %v1616
      %vm1618 = vweird.f32 %v1125
      %vm1619 = vweird.f32 %v1612
      %vm1620 = vmor %vm1618, %vm1619
      %v1621 = vsel %vm1620, %v1612, %v1617
      %v1622 = vrsqrt.pop %v1126
      %v1623 = vmul.f32 %v1622, %v1126
      %v1624 = vmul.f32 %v1623, %v1622
      %v1625 = vmul.f32 0.5, %v1624
      %v1626 = vsub.f32 1.5, %v1625
      %v1627 = vmul.f32 %v1622, %v1626
      %vm1628 = vweird.f32 %v1126
      %vm1629 = vweird.f32 %v1622
      %vm1630 = vmor %vm1628, %vm1629
      %v1631 = vsel %vm1630, %v1622, %v1627
      %v1632 = vrsqrt.pop %v1127
      %v1633 = vmul.f32 %v1632, %v1127
      %v1634 = vmul.f32 %v1633, %v1632
      %v1635 = vmul.f32 0.5, %v1634
      %v1636 = vsub.f32 1.5, %v1635
      %v1637 = vmul.f32 %v1632, %v1636
      %vm1638 = vweird.f32 %v1127
      %vm1639 = vweird.f32 %v1632
      %vm1640 = vmor %vm1638, %vm1639
      %v1641 = vsel %vm1640, %v1632, %v1637
      %v1642 = vrsqrt.pop %v1128
      %v1643 = vmul.f32 %v1642, %v1128
      %v1644 = vmul.f32 %v1643, %v1642
      %v1645 = vmul.f32 0.5, %v1644
      %v1646 = vsub.f32 1.5, %v1645
      %v1647 = vmul.f32 %v1642, %v1646
      %vm1648 = vweird.f32 %v1128
      %vm1649 = vweird.f32 %v1642
      %vm1650 = vmor %vm1648, %vm1649
      %v1651 = vsel %vm1650, %v1642, %v1647
      %v1652 = vrsqrt.pop %v1129
      %v1653 = vmul.f32 %v1652, %v1129
      %v1654 = vmul.f32 %v1653, %v1652
      %v1655 = vmul.f32 0.5, %v1654
      %v1656 = vsub.f32 1.5, %v1655
      %v1657 = vmul.f32 %v1652, %v1656
      %vm1658 = vweird.f32 %v1129
      %vm1659 = vweird.f32 %v1652
      %vm1660 = vmor %vm1658, %vm1659
      %v1661 = vsel %vm1660, %v1652, %v1657
      %v1662 = vrsqrt.pop %v1130
      %v1663 = vmul.f32 %v1662, %v1130
      %v1664 = vmul.f32 %v1663, %v1662
      %v1665 = vmul.f32 0.5, %v1664
      %v1666 = vsub.f32 1.5, %v1665
      %v1667 = vmul.f32 %v1662, %v1666
      %vm1668 = vweird.f32 %v1130
      %vm1669 = vweird.f32 %v1662
      %vm1670 = vmor %vm1668, %vm1669
      %v1671 = vsel %vm1670, %v1662, %v1667
      %v1672 = vrsqrt.pop %v1131
      %v1673 = vmul.f32 %v1672, %v1131
      %v1674 = vmul.f32 %v1673, %v1672
      %v1675 = vmul.f32 0.5, %v1674
      %v1676 = vsub.f32 1.5, %v1675
      %v1677 = vmul.f32 %v1672, %v1676
      %vm1678 = vweird.f32 %v1131
      %vm1679 = vweird.f32 %v1672
      %vm1680 = vmor %vm1678, %vm1679
      %v1681 = vsel %vm1680, %v1672, %v1677
      %v1682 = vrsqrt.pop %v1132
      %v1683 = vmul.f32 %v1682, %v1132
      %v1684 = vmul.f32 %v1683, %v1682
      %v1685 = vmul.f32 0.5, %v1684
      %v1686 = vsub.f32 1.5, %v1685
      %v1687 = vmul.f32 %v1682, %v1686
      %vm1688 = vweird.f32 %v1132
      %vm1689 = vweird.f32 %v1682
      %vm1690 = vmor %vm1688, %vm1689
      %v1691 = vsel %vm1690, %v1682, %v1687
      %v1692 = vrsqrt.pop %v1133
      %v1693 = vmul.f32 %v1692, %v1133
      %v1694 = vmul.f32 %v1693, %v1692
      %v1695 = vmul.f32 0.5, %v1694
      %v1696 = vsub.f32 1.5, %v1695
      %v1697 = vmul.f32 %v1692, %v1696
      %vm1698 = vweird.f32 %v1133
      %vm1699 = vweird.f32 %v1692
      %vm1700 = vmor %vm1698, %vm1699
      %v1701 = vsel %vm1700, %v1692, %v1697
      %v1702 = vrsqrt.pop %v1134
      %v1703 = vmul.f32 %v1702, %v1134
      %v1704 = vmul.f32 %v1703, %v1702
      %v1705 = vmul.f32 0.5, %v1704
      %v1706 = vsub.f32 1.5, %v1705
      %v1707 = vmul.f32 %v1702, %v1706
      %vm1708 = vweird.f32 %v1134
      %vm1709 = vweird.f32 %v1702
      %vm1710 = vmor %vm1708, %vm1709
      %v1711 = vsel %vm1710, %v1702, %v1707
      %v1712 = vrsqrt.pop %v1135
      %v1713 = vmul.f32 %v1712, %v1135
      %v1714 = vmul.f32 %v1713, %v1712
      %v1715 = vmul.f32 0.5, %v1714
      %v1716 = vsub.f32 1.5, %v1715
      %v1717 = vmul.f32 %v1712, %v1716
      %vm1718 = vweird.f32 %v1135
      %vm1719 = vweird.f32 %v1712
      %vm1720 = vmor %vm1718, %vm1719
      %v1721 = vsel %vm1720, %v1712, %v1717
      %v1722 = vrsqrt.pop %v1136
      %v1723 = vmul.f32 %v1722, %v1136
      %v1724 = vmul.f32 %v1723, %v1722
      %v1725 = vmul.f32 0.5, %v1724
      %v1726 = vsub.f32 1.5, %v1725
      %v1727 = vmul.f32 %v1722, %v1726
      %vm1728 = vweird.f32 %v1136
      %vm1729 = vweird.f32 %v1722
      %vm1730 = vmor %vm1728, %vm1729
      %v1731 = vsel %vm1730, %v1722, %v1727
      %v1732 = vrsqrt.pop %v1137
      %v1733 = vmul.f32 %v1732, %v1137
      %v1734 = vmul.f32 %v1733, %v1732
      %v1735 = vmul.f32 0.5, %v1734
      %v1736 = vsub.f32 1.5, %v1735
      %v1737 = vmul.f32 %v1732, %v1736
      %vm1738 = vweird.f32 %v1137
      %vm1739 = vweird.f32 %v1732
      %vm1740 = vmor %vm1738, %vm1739
      %v1741 = vsel %vm1740, %v1732, %v1737
      %v1742 = vrsqrt.pop %v1138
      %v1743 = vmul.f32 %v1742, %v1138
      %v1744 = vmul.f32 %v1743, %v1742
      %v1745 = vmul.f32 0.5, %v1744
      %v1746 = vsub.f32 1.5, %v1745
      %v1747 = vmul.f32 %v1742, %v1746
      %vm1748 = vweird.f32 %v1138
      %vm1749 = vweird.f32 %v1742
      %vm1750 = vmor %vm1748, %vm1749
      %v1751 = vsel %vm1750, %v1742, %v1747
      %v1752 = vrsqrt.pop %v1139
      %v1753 = vmul.f32 %v1752, %v1139
      %v1754 = vmul.f32 %v1753, %v1752
      %v1755 = vmul.f32 0.5, %v1754
      %v1756 = vsub.f32 1.5, %v1755
      %v1757 = vmul.f32 %v1752, %v1756
      %vm1758 = vweird.f32 %v1139
      %vm1759 = vweird.f32 %v1752
      %vm1760 = vmor %vm1758, %vm1759
      %v1761 = vsel %vm1760, %v1752, %v1757
      %v1762 = vrsqrt.pop %v1140
      %v1763 = vmul.f32 %v1762, %v1140
      %v1764 = vmul.f32 %v1763, %v1762
      %v1765 = vmul.f32 0.5, %v1764
      %v1766 = vsub.f32 1.5, %v1765
      %v1767 = vmul.f32 %v1762, %v1766
      %vm1768 = vweird.f32 %v1140
      %vm1769 = vweird.f32 %v1762
      %vm1770 = vmor %vm1768, %vm1769
      %v1771 = vsel %vm1770, %v1762, %v1767
      %v1772 = vrsqrt.pop %v1141
      %v1773 = vmul.f32 %v1772, %v1141
      %v1774 = vmul.f32 %v1773, %v1772
      %v1775 = vmul.f32 0.5, %v1774
      %v1776 = vsub.f32 1.5, %v1775
      %v1777 = vmul.f32 %v1772, %v1776
      %vm1778 = vweird.f32 %v1141
      %vm1779 = vweird.f32 %v1772
      %vm1780 = vmor %vm1778, %vm1779
      %v1781 = vsel %vm1780, %v1772, %v1777
      %v1782 = vmul.f32 %v1014, %v1151
      %v1783 = vmul.f32 %v1015, %v1161
      %v1784 = vmul.f32 %v1016, %v1171
      %v1785 = vmul.f32 %v1017, %v1181
      %v1786 = vmul.f32 %v1018, %v1191
      %v1787 = vmul.f32 %v1019, %v1201
      %v1788 = vmul.f32 %v1020, %v1211
      %v1789 = vmul.f32 %v1021, %v1221
      %v1790 = vmul.f32 %v1022, %v1231
      %v1791 = vmul.f32 %v1023, %v1241
      %v1792 = vmul.f32 %v1024, %v1251
      %v1793 = vmul.f32 %v1025, %v1261
      %v1794 = vmul.f32 %v1026, %v1271
      %v1795 = vmul.f32 %v1027, %v1281
      %v1796 = vmul.f32 %v1028, %v1291
      %v1797 = vmul.f32 %v1029, %v1301
      %v1798 = vmul.f32 %v1030, %v1311
      %v1799 = vmul.f32 %v1031, %v1321
      %v1800 = vmul.f32 %v1032, %v1331
      %v1801 = vmul.f32 %v1033, %v1341
      %v1802 = vmul.f32 %v1034, %v1351
      %v1803 = vmul.f32 %v1035, %v1361
      %v1804 = vmul.f32 %v1036, %v1371
      %v1805 = vmul.f32 %v1037, %v1381
      %v1806 = vmul.f32 %v1038, %v1391
      %v1807 = vmul.f32 %v1039, %v1401
      %v1808 = vmul.f32 %v1040, %v1411
      %v1809 = vmul.f32 %v1041, %v1421
      %v1810 = vmul.f32 %v1042, %v1431
      %v1811 = vmul.f32 %v1043, %v1441
      %v1812 = vmul.f32 %v1044, %v1451
      %v1813 = vmul.f32 %v1045, %v1461
      %v1814 = vmul.f32 %v1046, %v1471
      %v1815 = vmul.f32 %v1047, %v1481
      %v1816 = vmul.f32 %v1048, %v1491
      %v1817 = vmul.f32 %v1049, %v1501
      %v1818 = vmul.f32 %v1050, %v1511
      %v1819 = vmul.f32 %v1051, %v1521
      %v1820 = vmul.f32 %v1052, %v1531
      %v1821 = vmul.f32 %v1053, %v1541
      %v1822 = vmul.f32 %v1054, %v1551
      %v1823 = vmul.f32 %v1055, %v1561
      %v1824 = vmul.f32 %v1056, %v1571
      %v1825 = vmul.f32 %v1057, %v1581
      %v1826 = vmul.f32 %v1058, %v1591
      %v1827 = vmul.f32 %v1059, %v1601
      %v1828 = vmul.f32 %v1060, %v1611
      %v1829 = vmul.f32 %v1061, %v1621
      %v1830 = vmul.f32 %v1062, %v1631
      %v1831 = vmul.f32 %v1063, %v1641
      %v1832 = vmul.f32 %v1064, %v1651
      %v1833 = vmul.f32 %v1065, %v1661
      %v1834 = vmul.f32 %v1066, %v1671
      %v1835 = vmul.f32 %v1067, %v1681
      %v1836 = vmul.f32 %v1068, %v1691
      %v1837 = vmul.f32 %v1069, %v1701
      %v1838 = vmul.f32 %v1070, %v1711
      %v1839 = vmul.f32 %v1071, %v1721
      %v1840 = vmul.f32 %v1072, %v1731
      %v1841 = vmul.f32 %v1073, %v1741
      %v1842 = vmul.f32 %v1074, %v1751
      %v1843 = vmul.f32 %v1075, %v1761
      %v1844 = vmul.f32 %v1076, %v1771
      %v1845 = vmul.f32 %v1077, %v1781
      %v1846 = vld [vmem:[%s1] sm:$0x1]
      %v1848 = vperm.slane %v1846, 0
      %v1850 = vmul.f32 %v1782, %v1848
      %v1851 = vmul.f32 %v1783, %v1848
      %v1852 = vmul.f32 %v1784, %v1848
      %v1853 = vmul.f32 %v1785, %v1848
      %v1854 = vmul.f32 %v1786, %v1848
      %v1855 = vmul.f32 %v1787, %v1848
      %v1856 = vmul.f32 %v1788, %v1848
      %v1857 = vmul.f32 %v1789, %v1848
      %v1858 = vmul.f32 %v1790, %v1848
      %v1859 = vmul.f32 %v1791, %v1848
      %v1860 = vmul.f32 %v1792, %v1848
      %v1861 = vmul.f32 %v1793, %v1848
      %v1862 = vmul.f32 %v1794, %v1848
      %v1863 = vmul.f32 %v1795, %v1848
      %v1864 = vmul.f32 %v1796, %v1848
      %v1865 = vmul.f32 %v1797, %v1848
      %v1866 = vmul.f32 %v1798, %v1848
      %v1867 = vmul.f32 %v1799, %v1848
      %v1868 = vmul.f32 %v1800, %v1848
      %v1869 = vmul.f32 %v1801, %v1848
      %v1870 = vmul.f32 %v1802, %v1848
      %v1871 = vmul.f32 %v1803, %v1848
      %v1872 = vmul.f32 %v1804, %v1848
      %v1873 = vmul.f32 %v1805, %v1848
      %v1874 = vmul.f32 %v1806, %v1848
      %v1875 = vmul.f32 %v1807, %v1848
      %v1876 = vmul.f32 %v1808, %v1848
      %v1877 = vmul.f32 %v1809, %v1848
      %v1878 = vmul.f32 %v1810, %v1848
      %v1879 = vmul.f32 %v1811, %v1848
      %v1880 = vmul.f32 %v1812, %v1848
      %v1881 = vmul.f32 %v1813, %v1848
      %v1882 = vmul.f32 %v1814, %v1848
      %v1883 = vmul.f32 %v1815, %v1848
      %v1884 = vmul.f32 %v1816, %v1848
      %v1885 = vmul.f32 %v1817, %v1848
      %v1886 = vmul.f32 %v1818, %v1848
      %v1887 = vmul.f32 %v1819, %v1848
      %v1888 = vmul.f32 %v1820, %v1848
      %v1889 = vmul.f32 %v1821, %v1848
      %v1890 = vmul.f32 %v1822, %v1848
      %v1891 = vmul.f32 %v1823, %v1848
      %v1892 = vmul.f32 %v1824, %v1848
      %v1893 = vmul.f32 %v1825, %v1848
      %v1894 = vmul.f32 %v1826, %v1848
      %v1895 = vmul.f32 %v1827, %v1848
      %v1896 = vmul.f32 %v1828, %v1848
      %v1897 = vmul.f32 %v1829, %v1848
      %v1898 = vmul.f32 %v1830, %v1848
      %v1899 = vmul.f32 %v1831, %v1848
      %v1900 = vmul.f32 %v1832, %v1848
      %v1901 = vmul.f32 %v1833, %v1848
      %v1902 = vmul.f32 %v1834, %v1848
      %v1903 = vmul.f32 %v1835, %v1848
      %v1904 = vmul.f32 %v1836, %v1848
      %v1905 = vmul.f32 %v1837, %v1848
      %v1906 = vmul.f32 %v1838, %v1848
      %v1907 = vmul.f32 %v1839, %v1848
      %v1908 = vmul.f32 %v1840, %v1848
      %v1909 = vmul.f32 %v1841, %v1848
      %v1910 = vmul.f32 %v1842, %v1848
      %v1911 = vmul.f32 %v1843, %v1848
      %v1912 = vmul.f32 %v1844, %v1848
      %v1913 = vmul.f32 %v1845, %v1848
      %v1914 = vld [vmem:[%s2] sm:$0x1]
      %v1916 = vperm.slane %v1914, 0
      %v1918 = vadd.f32 %v1850, %v1916
      %v1919 = vadd.f32 %v1851, %v1916
      %v1920 = vadd.f32 %v1852, %v1916
      %v1921 = vadd.f32 %v1853, %v1916
      %v1922 = vadd.f32 %v1854, %v1916
      %v1923 = vadd.f32 %v1855, %v1916
      %v1924 = vadd.f32 %v1856, %v1916
      %v1925 = vadd.f32 %v1857, %v1916
      %v1926 = vadd.f32 %v1858, %v1916
      %v1927 = vadd.f32 %v1859, %v1916
      %v1928 = vadd.f32 %v1860, %v1916
      %v1929 = vadd.f32 %v1861, %v1916
      %v1930 = vadd.f32 %v1862, %v1916
      %v1931 = vadd.f32 %v1863, %v1916
      %v1932 = vadd.f32 %v1864, %v1916
      %v1933 = vadd.f32 %v1865, %v1916
      %v1934 = vadd.f32 %v1866, %v1916
      %v1935 = vadd.f32 %v1867, %v1916
      %v1936 = vadd.f32 %v1868, %v1916
      %v1937 = vadd.f32 %v1869, %v1916
      %v1938 = vadd.f32 %v1870, %v1916
      %v1939 = vadd.f32 %v1871, %v1916
      %v1940 = vadd.f32 %v1872, %v1916
      %v1941 = vadd.f32 %v1873, %v1916
      %v1942 = vadd.f32 %v1874, %v1916
      %v1943 = vadd.f32 %v1875, %v1916
      %v1944 = vadd.f32 %v1876, %v1916
      %v1945 = vadd.f32 %v1877, %v1916
      %v1946 = vadd.f32 %v1878, %v1916
      %v1947 = vadd.f32 %v1879, %v1916
      %v1948 = vadd.f32 %v1880, %v1916
      %v1949 = vadd.f32 %v1881, %v1916
      %v1950 = vadd.f32 %v1882, %v1916
      %v1951 = vadd.f32 %v1883, %v1916
      %v1952 = vadd.f32 %v1884, %v1916
      %v1953 = vadd.f32 %v1885, %v1916
      %v1954 = vadd.f32 %v1886, %v1916
      %v1955 = vadd.f32 %v1887, %v1916
      %v1956 = vadd.f32 %v1888, %v1916
      %v1957 = vadd.f32 %v1889, %v1916
      %v1958 = vadd.f32 %v1890, %v1916
      %v1959 = vadd.f32 %v1891, %v1916
      %v1960 = vadd.f32 %v1892, %v1916
      %v1961 = vadd.f32 %v1893, %v1916
      %v1962 = vadd.f32 %v1894, %v1916
      %v1963 = vadd.f32 %v1895, %v1916
      %v1964 = vadd.f32 %v1896, %v1916
      %v1965 = vadd.f32 %v1897, %v1916
      %v1966 = vadd.f32 %v1898, %v1916
      %v1967 = vadd.f32 %v1899, %v1916
      %v1968 = vadd.f32 %v1900, %v1916
      %v1969 = vadd.f32 %v1901, %v1916
      %v1970 = vadd.f32 %v1902, %v1916
      %v1971 = vadd.f32 %v1903, %v1916
      %v1972 = vadd.f32 %v1904, %v1916
      %v1973 = vadd.f32 %v1905, %v1916
      %v1974 = vadd.f32 %v1906, %v1916
      %v1975 = vadd.f32 %v1907, %v1916
      %v1976 = vadd.f32 %v1908, %v1916
      %v1977 = vadd.f32 %v1909, %v1916
      %v1978 = vadd.f32 %v1910, %v1916
      %v1979 = vadd.f32 %v1911, %v1916
      %v1980 = vadd.f32 %v1912, %v1916
      %v1981 = vadd.f32 %v1913, %v1916
      %1982 = vst.msk [vmem:[%s172] sm:$0xff] %vm238, %v1918
      %1983 = vst.msk [vmem:[%s172 + $0x8] sm:$0xff] %vm238, %v1919
      %1984 = vst.msk [vmem:[%s172 + $0x10] sm:$0xff] %vm238, %v1920
      %1985 = vst.msk [vmem:[%s172 + $0x18] sm:$0xff] %vm238, %v1921
      %1986 = vst.msk [vmem:[%s172 + $0x20] sm:$0xff] %vm238, %v1922
      %1987 = vst.msk [vmem:[%s172 + $0x28] sm:$0xff] %vm238, %v1923
      %1988 = vst.msk [vmem:[%s172 + $0x30] sm:$0xff] %vm238, %v1924
      %1989 = vst.msk [vmem:[%s172 + $0x38] sm:$0xff] %vm238, %v1925
      %1990 = vst.msk [vmem:[%s172 + $0x40] sm:$0xff] %vm238, %v1926
      %1991 = vst.msk [vmem:[%s172 + $0x48] sm:$0xff] %vm238, %v1927
      %1992 = vst.msk [vmem:[%s172 + $0x50] sm:$0xff] %vm238, %v1928
      %1993 = vst.msk [vmem:[%s172 + $0x58] sm:$0xff] %vm238, %v1929
      %1994 = vst.msk [vmem:[%s172 + $0x60] sm:$0xff] %vm238, %v1930
      %1995 = vst.msk [vmem:[%s172 + $0x68] sm:$0xff] %vm238, %v1931
      %1996 = vst.msk [vmem:[%s172 + $0x70] sm:$0xff] %vm238, %v1932
      %1997 = vst.msk [vmem:[%s172 + $0x78] sm:$0xff] %vm238, %v1933
      %1998 = vst.msk [vmem:[%s172 + $0x80] sm:$0xff] %vm238, %v1934
      %1999 = vst.msk [vmem:[%s172 + $0x88] sm:$0xff] %vm238, %v1935
      %2000 = vst.msk [vmem:[%s172 + $0x90] sm:$0xff] %vm238, %v1936
      %2001 = vst.msk [vmem:[%s172 + $0x98] sm:$0xff] %vm238, %v1937
      %2002 = vst.msk [vmem:[%s172 + $0xa0] sm:$0xff] %vm238, %v1938
      %2003 = vst.msk [vmem:[%s172 + $0xa8] sm:$0xff] %vm238, %v1939
      %2004 = vst.msk [vmem:[%s172 + $0xb0] sm:$0xff] %vm238, %v1940
      %2005 = vst.msk [vmem:[%s172 + $0xb8] sm:$0xff] %vm238, %v1941
      %2006 = vst.msk [vmem:[%s172 + $0xc0] sm:$0xff] %vm238, %v1942
      %2007 = vst.msk [vmem:[%s172 + $0xc8] sm:$0xff] %vm238, %v1943
      %2008 = vst.msk [vmem:[%s172 + $0xd0] sm:$0xff] %vm238, %v1944
      %2009 = vst.msk [vmem:[%s172 + $0xd8] sm:$0xff] %vm238, %v1945
      %2010 = vst.msk [vmem:[%s172 + $0xe0] sm:$0xff] %vm238, %v1946
      %2011 = vst.msk [vmem:[%s172 + $0xe8] sm:$0xff] %vm238, %v1947
      %2012 = vst.msk [vmem:[%s172 + $0xf0] sm:$0xff] %vm238, %v1948
      %2013 = vst.msk [vmem:[%s172 + $0xf8] sm:$0xff] %vm238, %v1949
      %2014 = vst.msk [vmem:[%s172 + $0x100] sm:$0xff] %vm238, %v1950
      %2015 = vst.msk [vmem:[%s172 + $0x108] sm:$0xff] %vm238, %v1951
      %2016 = vst.msk [vmem:[%s172 + $0x110] sm:$0xff] %vm238, %v1952
      %2017 = vst.msk [vmem:[%s172 + $0x118] sm:$0xff] %vm238, %v1953
      %2018 = vst.msk [vmem:[%s172 + $0x120] sm:$0xff] %vm238, %v1954
      %2019 = vst.msk [vmem:[%s172 + $0x128] sm:$0xff] %vm238, %v1955
      %2020 = vst.msk [vmem:[%s172 + $0x130] sm:$0xff] %vm238, %v1956
      %2021 = vst.msk [vmem:[%s172 + $0x138] sm:$0xff] %vm238, %v1957
      %2022 = vst.msk [vmem:[%s172 + $0x140] sm:$0xff] %vm238, %v1958
      %2023 = vst.msk [vmem:[%s172 + $0x148] sm:$0xff] %vm238, %v1959
      %2024 = vst.msk [vmem:[%s172 + $0x150] sm:$0xff] %vm238, %v1960
      %2025 = vst.msk [vmem:[%s172 + $0x158] sm:$0xff] %vm238, %v1961
      %2026 = vst.msk [vmem:[%s172 + $0x160] sm:$0xff] %vm238, %v1962
      %2027 = vst.msk [vmem:[%s172 + $0x168] sm:$0xff] %vm238, %v1963
      %2028 = vst.msk [vmem:[%s172 + $0x170] sm:$0xff] %vm238, %v1964
      %2029 = vst.msk [vmem:[%s172 + $0x178] sm:$0xff] %vm238, %v1965
      %2030 = vst.msk [vmem:[%s172 + $0x180] sm:$0xff] %vm238, %v1966
      %2031 = vst.msk [vmem:[%s172 + $0x188] sm:$0xff] %vm238, %v1967
      %2032 = vst.msk [vmem:[%s172 + $0x190] sm:$0xff] %vm238, %v1968
      %2033 = vst.msk [vmem:[%s172 + $0x198] sm:$0xff] %vm238, %v1969
      %2034 = vst.msk [vmem:[%s172 + $0x1a0] sm:$0xff] %vm238, %v1970
      %2035 = vst.msk [vmem:[%s172 + $0x1a8] sm:$0xff] %vm238, %v1971
      %2036 = vst.msk [vmem:[%s172 + $0x1b0] sm:$0xff] %vm238, %v1972
      %2037 = vst.msk [vmem:[%s172 + $0x1b8] sm:$0xff] %vm238, %v1973
      %2038 = vst.msk [vmem:[%s172 + $0x1c0] sm:$0xff] %vm238, %v1974
      %2039 = vst.msk [vmem:[%s172 + $0x1c8] sm:$0xff] %vm238, %v1975
      %2040 = vst.msk [vmem:[%s172 + $0x1d0] sm:$0xff] %vm238, %v1976
      %2041 = vst.msk [vmem:[%s172 + $0x1d8] sm:$0xff] %vm238, %v1977
      %2042 = vst.msk [vmem:[%s172 + $0x1e0] sm:$0xff] %vm238, %v1978
      %2043 = vst.msk [vmem:[%s172 + $0x1e8] sm:$0xff] %vm238, %v1979
      %2044 = vst.msk [vmem:[%s172 + $0x1f0] sm:$0xff] %vm238, %v1980
      %2045 = vst.msk [vmem:[%s172 + $0x1f8] sm:$0xff] %vm238, %v1981
      %s2046 = smul.u32 64, %s14
      %p2047 = scmp.lt.s32.totalorder %s2046, 127
      %s2048 = scalar_select %p2047, %s2046, 127
      %s2049 = smul.addr %s2048, 8
      %s2050 = scalar_lea.vmem %s3, %s2049
      // Predicated region
      $region33: #{ssmlp_forward.28} parent=31 // pred_check
        %p2051 = pneg %p100
      $region34: #{ssmlp_forward.28} parent=31 // pred_check_branch
        %2053 = sbr.rel (%p2051) target = $region36
      $region35: #{ssmlp_forward.28} parent=31 // pred_region
        %s2054 = smul.u32 64, %s14
      $region36: #{ssmlp_forward.28} parent=31 // pred_fallthru
        _
    $region32: #{ssmlp_forward.28} parent=5 // pred_fallthru
      _
    %p2055 = scmp.le.s32.totalorder 2, %s9
    // Predicated region
    $region37: #{ssmlp_forward.28} parent=5 // pred_check
      %p2056 = pneg %p2055
    $region38: #{ssmlp_forward.28} parent=5 // pred_check_branch
      %2058 = sbr.rel (%p2056) target = $region40
    $region39: #{ssmlp_forward.28} parent=5 // pred_region
      %s2059 = ssub.s32 %s9, 2
      // Predicated region
      $region41: #{ssmlp_forward.28} parent=39 // pred_check
        %p2060 = pneg %p106
      $region42: #{ssmlp_forward.28} parent=39 // pred_check_branch
        %2062 = sbr.rel (%p2060) target = $region44
      $region43: #{ssmlp_forward.28} parent=39 // pred_region
        %s2063 = smul.u32 64, %s15
        %p2064 = scmp.lt.s32.totalorder %s2063, 127
        %s2065 = scalar_select %p2064, %s2063, 127
        %s2066 = smul.addr %s2065, 8
        %s2067 = scalar_lea.vmem %s3, %s2066
      $region44: #{ssmlp_forward.28} parent=39 // pred_fallthru
        _
    $region40: #{ssmlp_forward.28} parent=5 // pred_fallthru
      _
  $region6: #{ssmlp_forward.28} parent=0 // loop_footer
    %s13 = sadd.s32 1, %s9
  $region7: #{ssmlp_forward.28} parent=0 // loop_footer_branch
    %8 = sbr.rel target = $region3
  $region8: #{ssmlp_forward.28} parent=0 // loop_exit
    _

// kernel: ssmlp_forward.29
$region0: #{ssmlp_forward.29}
  #allocation0 [shape = 'u32[]', space=smem, size = 0x4, offset = 0x4, fixed_abs, tag = 'smem constant byte address 0x4 - core index']
  #allocation1 [shape = 'u32[72,128]{1,0:T(1,128)}', space=vmem, size = 0x9000, scoped, tag = 'internal scratch']
  %s0 = inlined_call_operand.vmem [shape: f32[1024,32], index: 0, kind: input, shape index: {}]
  %s1 = inlined_call_operand.vmem [shape: f32[32,32], index: 1, kind: input, shape index: {}]
  %s2 = inlined_call_operand.vmem [shape: f32[1,32], index: 2, kind: input, shape index: {}]
  %s3 = inlined_call_operand.vmem [shape: f32[1024,32], index: 3, kind: output, shape index: {}]
  %s4 = sld [smem:[#allocation0]]
  $region45: #{ssmlp_forward.29} parent=0
    _
  %s6 = ssub.s32 1, %s4
  %s7 = scalar_select 0, %s6, %s4
  loop: start=0, step=1, limit=4
  $region2: #{ssmlp_forward.29} parent=0 // loop_pre_header
    _
  $region3: #{ssmlp_forward.29} parent=0 // loop_header
    %s9 = sphi 0, %s13
    %p10 = scmp.ge.s32.totalorder %s9, 4
    %s19 = sphi 0, %s21
    %s22 = sphi 0, %s19
    %s23 = sphi 0, %s22
    %s39 = sphi 0, %s23
    %s43 = sphi 0, %s43
    %s45 = sphi 0, %s43
    %s46 = sphi 0, %s45
    %s60 = sphi 0, %s46
    %s64 = sphi 0, %s64
    %s66 = sphi 0, %s64
    %s67 = sphi 0, %s66
    %s81 = sphi 0, %s67
    %s87 = sphi 0, %s89
    %s90 = sphi 0, %s87
    %s91 = sphi 0, %s90
    %s107 = sphi 0, %s91
  $region4: #{ssmlp_forward.29} parent=0 // loop_header_branch
    %12 = sbr.rel (%p10) target = $region8
  $region5: #{ssmlp_forward.29} parent=0 // loop_body
    %s14 = ssub.s32 %s9, 1
    %s15 = ssub.s32 %s9, 2
    %s16 = sadd.s32 %s9, 1
    %s17 = ssub.s32 %s9, %s16
    %p18 = scmp.eq.s32.totalorder %s17, 0
    %s20 = sadd.s32 %s19, 1
    %s21 = scalar_select %p18, %s19, %s20
    %p24 = pneg %p18
    %p25 = scmp.eq.s32.totalorder %s9, 1
    %p26 = por %p24, %p25
    %p27 = scmp.ne.s32.totalorder %s19, %s22
    %p28 = scmp.eq.s32.totalorder %s9, 0
    %p29 = por %p27, %p28
    %p30 = scmp.ne.s32.totalorder %s19, %s22
    %p31 = scmp.eq.s32.totalorder %s14, 1
    %p32 = por %p30, %p31
    %p33 = scmp.ne.s32.totalorder %s22, %s23
    %p34 = scmp.eq.s32.totalorder %s14, 0
    %p35 = por %p33, %p34
    %p36 = scmp.ne.s32.totalorder %s22, %s23
    %p37 = scmp.eq.s32.totalorder %s15, 1
    %p38 = por %p36, %p37
    %p40 = scmp.ne.s32.totalorder %s23, %s39
    %p41 = scmp.eq.s32.totalorder %s15, 0
    %p42 = por %p40, %p41
    %s44 = sadd.s32 %s43, 1
    %p47 = scmp.eq.s32.totalorder %s9, 1
    %p48 = scmp.ne.s32.totalorder %s43, %s45
    %p49 = scmp.eq.s32.totalorder %s9, 0
    %p50 = por %p48, %p49
    %p51 = scmp.ne.s32.totalorder %s43, %s45
    %p52 = scmp.eq.s32.totalorder %s14, 1
    %p53 = por %p51, %p52
    %p54 = scmp.ne.s32.totalorder %s45, %s46
    %p55 = scmp.eq.s32.totalorder %s14, 0
    %p56 = por %p54, %p55
    %p57 = scmp.ne.s32.totalorder %s45, %s46
    %p58 = scmp.eq.s32.totalorder %s15, 1
    %p59 = por %p57, %p58
    %p61 = scmp.ne.s32.totalorder %s46, %s60
    %p62 = scmp.eq.s32.totalorder %s15, 0
    %p63 = por %p61, %p62
    %s65 = sadd.s32 %s64, 1
    %p68 = scmp.eq.s32.totalorder %s9, 1
    %p69 = scmp.ne.s32.totalorder %s64, %s66
    %p70 = scmp.eq.s32.totalorder %s9, 0
    %p71 = por %p69, %p70
    %p72 = scmp.ne.s32.totalorder %s64, %s66
    %p73 = scmp.eq.s32.totalorder %s14, 1
    %p74 = por %p72, %p73
    %p75 = scmp.ne.s32.totalorder %s66, %s67
    %p76 = scmp.eq.s32.totalorder %s14, 0
    %p77 = por %p75, %p76
    %p78 = scmp.ne.s32.totalorder %s66, %s67
    %p79 = scmp.eq.s32.totalorder %s15, 1
    %p80 = por %p78, %p79
    %p82 = scmp.ne.s32.totalorder %s67, %s81
    %p83 = scmp.eq.s32.totalorder %s15, 0
    %p84 = por %p82, %p83
    %s85 = ssub.s32 %s9, %s16
    %p86 = scmp.eq.s32.totalorder %s85, 0
    %s88 = sadd.s32 %s87, 1
    %s89 = scalar_select %p86, %s87, %s88
    %p92 = pneg %p86
    %p93 = scmp.eq.s32.totalorder %s9, 1
    %p94 = por %p92, %p93
    %p95 = scmp.ne.s32.totalorder %s87, %s90
    %p96 = scmp.eq.s32.totalorder %s9, 0
    %p97 = por %p95, %p96
    %p98 = scmp.ne.s32.totalorder %s87, %s90
    %p99 = scmp.eq.s32.totalorder %s14, 1
    %p100 = por %p98, %p99
    %p101 = scmp.ne.s32.totalorder %s90, %s91
    %p102 = scmp.eq.s32.totalorder %s14, 0
    %p103 = por %p101, %p102
    %p104 = scmp.ne.s32.totalorder %s90, %s91
    %p105 = scmp.eq.s32.totalorder %s15, 1
    %p106 = por %p104, %p105
    %p108 = scmp.ne.s32.totalorder %s91, %s107
    %p109 = scmp.eq.s32.totalorder %s15, 0
    %p110 = por %p108, %p109
    %p111 = scmp.le.s32.totalorder 1, %s9
    %p112 = scmp.lt.s32.totalorder %s9, 3
    %p113 = pnand %p111, %p112
    %p114 = pneg %p113
    // Predicated region
    $region9: #{ssmlp_forward.29} parent=5 // pred_check
      _
    $region10: #{ssmlp_forward.29} parent=5 // pred_check_branch
      %116 = sbr.rel (%p113) target = $region12
    $region11: #{ssmlp_forward.29} parent=5 // pred_region
      %s117 = ssub.s32 %s9, 1
      // Predicated region
      $region13: #{ssmlp_forward.29} parent=11 // pred_check
        %p118 = pneg %p56
      $region14: #{ssmlp_forward.29} parent=11 // pred_check_branch
        %120 = sbr.rel (%p118) target = $region16
      $region15: #{ssmlp_forward.29} parent=11 // pred_region
        _
      $region16: #{ssmlp_forward.29} parent=11 // pred_fallthru
        _
      // Predicated region
      $region17: #{ssmlp_forward.29} parent=11 // pred_check
        %p121 = pneg %p77
      $region18: #{ssmlp_forward.29} parent=11 // pred_check_branch
        %123 = sbr.rel (%p121) target = $region20
      $region19: #{ssmlp_forward.29} parent=11 // pred_region
        _
      $region20: #{ssmlp_forward.29} parent=11 // pred_fallthru
        _
    $region12: #{ssmlp_forward.29} parent=5 // pred_fallthru
      _
    %p124 = scmp.lt.s32.totalorder %s9, 2
    // Predicated region
    $region21: #{ssmlp_forward.29} parent=5 // pred_check
      %p125 = pneg %p124
    $region22: #{ssmlp_forward.29} parent=5 // pred_check_branch
      %127 = sbr.rel (%p125) target = $region24
    $region23: #{ssmlp_forward.29} parent=5 // pred_region
      // Predicated region
      $region25: #{ssmlp_forward.29} parent=23 // pred_check
        %p128 = pneg %p29
      $region26: #{ssmlp_forward.29} parent=23 // pred_check_branch
        %130 = sbr.rel (%p128) target = $region28
      $region27: #{ssmlp_forward.29} parent=23 // pred_region
        %s131 = smul.u32 64, %s9
        %p132 = scmp.lt.s32.totalorder %s131, 127
        %s133 = scalar_select %p132, %s131, 127
        %s134 = smul.addr %s133, 8
        %s135 = scalar_lea.vmem %s0, %s134
        %s136 = smul.u32 64, %s9
      $region28: #{ssmlp_forward.29} parent=23 // pred_fallthru
        _
    $region24: #{ssmlp_forward.29} parent=5 // pred_fallthru
      _
    %p137 = scmp.le.s32.totalorder 1, %s9
    %p138 = scmp.lt.s32.totalorder %s9, 3
    %p139 = pnand %p137, %p138
    %p140 = pneg %p139
    // Predicated region
    $region29: #{ssmlp_forward.29} parent=5 // pred_check
      _
    $region30: #{ssmlp_forward.29} parent=5 // pred_check_branch
      %142 = sbr.rel (%p139) target = $region32
    $region31: #{ssmlp_forward.29} parent=5 // pred_region
      %s143 = ssub.s32 %s9, 1
      %s144 = smul.u32 64, %s14
      %p145 = scmp.lt.s32.totalorder %s144, 127
      %s146 = scalar_select %p145, %s144, 127
      %s147 = smul.addr %s146, 8
      %s148 = scalar_lea.vmem %s0, %s147
      %p149 = pneg %p35
      %p150 = pneg %p32
      %p151 = pneg %p56
      %p152 = pneg %p53
      %p153 = pneg %p77
      %p154 = pneg %p74
      %p155 = pneg %p103
      %p156 = pneg %p100
      %s157 = smul.u32 64, %s14
      %p158 = scmp.lt.s32.totalorder %s157, 127
      %s159 = scalar_select %p158, %s157, 127
      %s160 = smul.addr %s159, 8
      %s161 = scalar_lea.vmem %s3, %s160
      %s162 = smul.u32 64, %s14
      %p163 = scmp.lt.s32.totalorder %s162, 127
      %s164 = scalar_select %p163, %s162, 127
      %s165 = smul.addr %s164, 8
      %s166 = scalar_lea.vmem %s0, %s165
      %s167 = smul.u32 64, %s14
      %s168 = smul.u32 64, %s14
      %p169 = scmp.lt.s32.totalorder %s168, 127
      %s170 = scalar_select %p169, %s168, 127
      %s171 = smul.addr %s170, 8
      %s172 = scalar_lea.vmem %s3, %s171
      %s173 = smul.u32 64, %s14
      %v174 = vld [vmem:[%s166] sm:$0xff]
      %v175 = vld [vmem:[%s166 + $0x8] sm:$0xff]
      %v176 = vld [vmem:[%s166 + $0x10] sm:$0xff]
      %v177 = vld [vmem:[%s166 + $0x18] sm:$0xff]
      %v178 = vld [vmem:[%s166 + $0x20] sm:$0xff]
      %v179 = vld [vmem:[%s166 + $0x28] sm:$0xff]
      %v180 = vld [vmem:[%s166 + $0x30] sm:$0xff]
      %v181 = vld [vmem:[%s166 + $0x38] sm:$0xff]
      %v182 = vld [vmem:[%s166 + $0x40] sm:$0xff]
      %v183 = vld [vmem:[%s166 + $0x48] sm:$0xff]
      %v184 = vld [vmem:[%s166 + $0x50] sm:$0xff]
      %v185 = vld [vmem:[%s166 + $0x58] sm:$0xff]
      %v186 = vld [vmem:[%s166 + $0x60] sm:$0xff]
      %v187 = vld [vmem:[%s166 + $0x68] sm:$0xff]
      %v188 = vld [vmem:[%s166 + $0x70] sm:$0xff]
      %v189 = vld [vmem:[%s166 + $0x78] sm:$0xff]
      %v190 = vld [vmem:[%s166 + $0x80] sm:$0xff]
      %v191 = vld [vmem:[%s166 + $0x88] sm:$0xff]
      %v192 = vld [vmem:[%s166 + $0x90] sm:$0xff]
      %v193 = vld [vmem:[%s166 + $0x98] sm:$0xff]
      %v194 = vld [vmem:[%s166 + $0xa0] sm:$0xff]
      %v195 = vld [vmem:[%s166 + $0xa8] sm:$0xff]
      %v196 = vld [vmem:[%s166 + $0xb0] sm:$0xff]
      %v197 = vld [vmem:[%s166 + $0xb8] sm:$0xff]
      %v198 = vld [vmem:[%s166 + $0xc0] sm:$0xff]
      %v199 = vld [vmem:[%s166 + $0xc8] sm:$0xff]
      %v200 = vld [vmem:[%s166 + $0xd0] sm:$0xff]
      %v201 = vld [vmem:[%s166 + $0xd8] sm:$0xff]
      %v202 = vld [vmem:[%s166 + $0xe0] sm:$0xff]
      %v203 = vld [vmem:[%s166 + $0xe8] sm:$0xff]
      %v204 = vld [vmem:[%s166 + $0xf0] sm:$0xff]
      %v205 = vld [vmem:[%s166 + $0xf8] sm:$0xff]
      %v206 = vld [vmem:[%s166 + $0x100] sm:$0xff]
      %v207 = vld [vmem:[%s166 + $0x108] sm:$0xff]
      %v208 = vld [vmem:[%s166 + $0x110] sm:$0xff]
      %v209 = vld [vmem:[%s166 + $0x118] sm:$0xff]
      %v210 = vld [vmem:[%s166 + $0x120] sm:$0xff]
      %v211 = vld [vmem:[%s166 + $0x128] sm:$0xff]
      %v212 = vld [vmem:[%s166 + $0x130] sm:$0xff]
      %v213 = vld [vmem:[%s166 + $0x138] sm:$0xff]
      %v214 = vld [vmem:[%s166 + $0x140] sm:$0xff]
      %v215 = vld [vmem:[%s166 + $0x148] sm:$0xff]
      %v216 = vld [vmem:[%s166 + $0x150] sm:$0xff]
      %v217 = vld [vmem:[%s166 + $0x158] sm:$0xff]
      %v218 = vld [vmem:[%s166 + $0x160] sm:$0xff]
      %v219 = vld [vmem:[%s166 + $0x168] sm:$0xff]
      %v220 = vld [vmem:[%s166 + $0x170] sm:$0xff]
      %v221 = vld [vmem:[%s166 + $0x178] sm:$0xff]
      %v222 = vld [vmem:[%s166 + $0x180] sm:$0xff]
      %v223 = vld [vmem:[%s166 + $0x188] sm:$0xff]
      %v224 = vld [vmem:[%s166 + $0x190] sm:$0xff]
      %v225 = vld [vmem:[%s166 + $0x198] sm:$0xff]
      %v226 = vld [vmem:[%s166 + $0x1a0] sm:$0xff]
      %v227 = vld [vmem:[%s166 + $0x1a8] sm:$0xff]
      %v228 = vld [vmem:[%s166 + $0x1b0] sm:$0xff]
      %v229 = vld [vmem:[%s166 + $0x1b8] sm:$0xff]
      %v230 = vld [vmem:[%s166 + $0x1c0] sm:$0xff]
      %v231 = vld [vmem:[%s166 + $0x1c8] sm:$0xff]
      %v232 = vld [vmem:[%s166 + $0x1d0] sm:$0xff]
      %v233 = vld [vmem:[%s166 + $0x1d8] sm:$0xff]
      %v234 = vld [vmem:[%s166 + $0x1e0] sm:$0xff]
      %v235 = vld [vmem:[%s166 + $0x1e8] sm:$0xff]
      %v236 = vld [vmem:[%s166 + $0x1f0] sm:$0xff]
      %v237 = vld [vmem:[%s166 + $0x1f8] sm:$0xff]
      %v238 = vld [vmem:[%s1] sm:$0xff]
      %v239 = vld [vmem:[%s1 + $0x8] sm:$0xff]
      %v240 = vld [vmem:[%s1 + $0x10] sm:$0xff]
      %v241 = vld [vmem:[%s1 + $0x18] sm:$0xff]
      %v242 = vld [vmem:[%s2] sm:$0x1]
      %v244 = vperm.slane %v242, 0
      %vm246 = vcmask 261120
      %v248 = vsel %vm246, %v174, 0
      %v251 = vsel %vm246, %v175, 0
      %v254 = vsel %vm246, %v176, 0
      %v257 = vsel %vm246, %v177, 0
      %v260 = vsel %vm246, %v178, 0
      %v263 = vsel %vm246, %v179, 0
      %v266 = vsel %vm246, %v180, 0
      %v269 = vsel %vm246, %v181, 0
      %v272 = vsel %vm246, %v182, 0
      %v275 = vsel %vm246, %v183, 0
      %v278 = vsel %vm246, %v184, 0
      %v281 = vsel %vm246, %v185, 0
      %v284 = vsel %vm246, %v186, 0
      %v287 = vsel %vm246, %v187, 0
      %v290 = vsel %vm246, %v188, 0
      %v293 = vsel %vm246, %v189, 0
      %v296 = vsel %vm246, %v190, 0
      %v299 = vsel %vm246, %v191, 0
      %v302 = vsel %vm246, %v192, 0
      %v305 = vsel %vm246, %v193, 0
      %v308 = vsel %vm246, %v194, 0
      %v311 = vsel %vm246, %v195, 0
      %v314 = vsel %vm246, %v196, 0
      %v317 = vsel %vm246, %v197, 0
      %v320 = vsel %vm246, %v198, 0
      %v323 = vsel %vm246, %v199, 0
      %v326 = vsel %vm246, %v200, 0
      %v329 = vsel %vm246, %v201, 0
      %v332 = vsel %vm246, %v202, 0
      %v335 = vsel %vm246, %v203, 0
      %v338 = vsel %vm246, %v204, 0
      %v341 = vsel %vm246, %v205, 0
      %v344 = vsel %vm246, %v206, 0
      %v347 = vsel %vm246, %v207, 0
      %v350 = vsel %vm246, %v208, 0
      %v353 = vsel %vm246, %v209, 0
      %v356 = vsel %vm246, %v210, 0
      %v359 = vsel %vm246, %v211, 0
      %v362 = vsel %vm246, %v212, 0
      %v365 = vsel %vm246, %v213, 0
      %v368 = vsel %vm246, %v214, 0
      %v371 = vsel %vm246, %v215, 0
      %v374 = vsel %vm246, %v216, 0
      %v377 = vsel %vm246, %v217, 0
      %v380 = vsel %vm246, %v218, 0
      %v383 = vsel %vm246, %v219, 0
      %v386 = vsel %vm246, %v220, 0
      %v389 = vsel %vm246, %v221, 0
      %v392 = vsel %vm246, %v222, 0
      %v395 = vsel %vm246, %v223, 0
      %v398 = vsel %vm246, %v224, 0
      %v401 = vsel %vm246, %v225, 0
      %v404 = vsel %vm246, %v226, 0
      %v407 = vsel %vm246, %v227, 0
      %v410 = vsel %vm246, %v228, 0
      %v413 = vsel %vm246, %v229, 0
      %v416 = vsel %vm246, %v230, 0
      %v419 = vsel %vm246, %v231, 0
      %v422 = vsel %vm246, %v232, 0
      %v425 = vsel %vm246, %v233, 0
      %v428 = vsel %vm246, %v234, 0
      %v431 = vsel %vm246, %v235, 0
      %v434 = vsel %vm246, %v236, 0
      %v437 = vsel %vm246, %v237, 0
      %439 = vmatpush.msra.mxu0 0.0
      %440 = vmatpush.msra.mxu0 0.0
      %441 = vmatpush.msra.mxu0 0.0
      %442 = vmatpush.msra.mxu0 0.0
      %443 = vmatpush.msra.mxu0 0.0
      %444 = vmatpush.msra.mxu0 0.0
      %445 = vmatpush.msra.mxu0 0.0
      %446 = vmatpush.msra.mxu0 0.0
      %447 = vmatpush.msra.mxu0 0.0
      %448 = vmatpush.msra.mxu0 0.0
      %449 = vmatpush.msra.mxu0 0.0
      %450 = vmatpush.msra.mxu0 0.0
      %451 = vmatpush.msra.mxu0 %v241
      %452 = vmatpush.msra.mxu0 %v240
      %453 = vmatpush.msra.mxu0 %v239
      %454 = vmatpush.msra.mxu0 %v238
      %455 = vmatmul.f32.gmra.mxu0 %v248
      %v456 = vpop.f32.mrf.mxu0
      %v457 = vadd.f32 %v244, %v456
      %458 = vmatmul.f32.gmra.mxu0 %v251
      %v459 = vpop.f32.mrf.mxu0
      %v460 = vadd.f32 %v244, %v459
      %461 = vmatmul.f32.gmra.mxu0 %v254
      %v462 = vpop.f32.mrf.mxu0
      %v463 = vadd.f32 %v244, %v462
      %464 = vmatmul.f32.gmra.mxu0 %v257
      %v465 = vpop.f32.mrf.mxu0
      %v466 = vadd.f32 %v244, %v465
      %467 = vmatmul.f32.gmra.mxu0 %v260
      %v468 = vpop.f32.mrf.mxu0
      %v469 = vadd.f32 %v244, %v468
      %470 = vmatmul.f32.gmra.mxu0 %v263
      %v471 = vpop.f32.mrf.mxu0
      %v472 = vadd.f32 %v244, %v471
      %473 = vmatmul.f32.gmra.mxu0 %v266
      %v474 = vpop.f32.mrf.mxu0
      %v475 = vadd.f32 %v244, %v474
      %476 = vmatmul.f32.gmra.mxu0 %v269
      %v477 = vpop.f32.mrf.mxu0
      %v478 = vadd.f32 %v244, %v477
      %479 = vmatmul.f32.gmra.mxu0 %v272
      %v480 = vpop.f32.mrf.mxu0
      %v481 = vadd.f32 %v244, %v480
      %482 = vmatmul.f32.gmra.mxu0 %v275
      %v483 = vpop.f32.mrf.mxu0
      %v484 = vadd.f32 %v244, %v483
      %485 = vmatmul.f32.gmra.mxu0 %v278
      %v486 = vpop.f32.mrf.mxu0
      %v487 = vadd.f32 %v244, %v486
      %488 = vmatmul.f32.gmra.mxu0 %v281
      %v489 = vpop.f32.mrf.mxu0
      %v490 = vadd.f32 %v244, %v489
      %491 = vmatmul.f32.gmra.mxu0 %v284
      %v492 = vpop.f32.mrf.mxu0
      %v493 = vadd.f32 %v244, %v492
      %494 = vmatmul.f32.gmra.mxu0 %v287
      %v495 = vpop.f32.mrf.mxu0
      %v496 = vadd.f32 %v244, %v495
      %497 = vmatmul.f32.gmra.mxu0 %v290
      %v498 = vpop.f32.mrf.mxu0
      %v499 = vadd.f32 %v244, %v498
      %500 = vmatmul.f32.gmra.mxu0 %v293
      %v501 = vpop.f32.mrf.mxu0
      %v502 = vadd.f32 %v244, %v501
      %503 = vmatmul.f32.gmra.mxu0 %v296
      %v504 = vpop.f32.mrf.mxu0
      %v505 = vadd.f32 %v244, %v504
      %506 = vmatmul.f32.gmra.mxu0 %v299
      %v507 = vpop.f32.mrf.mxu0
      %v508 = vadd.f32 %v244, %v507
      %509 = vmatmul.f32.gmra.mxu0 %v302
      %v510 = vpop.f32.mrf.mxu0
      %v511 = vadd.f32 %v244, %v510
      %512 = vmatmul.f32.gmra.mxu0 %v305
      %v513 = vpop.f32.mrf.mxu0
      %v514 = vadd.f32 %v244, %v513
      %515 = vmatmul.f32.gmra.mxu0 %v308
      %v516 = vpop.f32.mrf.mxu0
      %v517 = vadd.f32 %v244, %v516
      %518 = vmatmul.f32.gmra.mxu0 %v311
      %v519 = vpop.f32.mrf.mxu0
      %v520 = vadd.f32 %v244, %v519
      %521 = vmatmul.f32.gmra.mxu0 %v314
      %v522 = vpop.f32.mrf.mxu0
      %v523 = vadd.f32 %v244, %v522
      %524 = vmatmul.f32.gmra.mxu0 %v317
      %v525 = vpop.f32.mrf.mxu0
      %v526 = vadd.f32 %v244, %v525
      %527 = vmatmul.f32.gmra.mxu0 %v320
      %v528 = vpop.f32.mrf.mxu0
      %v529 = vadd.f32 %v244, %v528
      %530 = vmatmul.f32.gmra.mxu0 %v323
      %v531 = vpop.f32.mrf.mxu0
      %v532 = vadd.f32 %v244, %v531
      %533 = vmatmul.f32.gmra.mxu0 %v326
      %v534 = vpop.f32.mrf.mxu0
      %v535 = vadd.f32 %v244, %v534
      %536 = vmatmul.f32.gmra.mxu0 %v329
      %v537 = vpop.f32.mrf.mxu0
      %v538 = vadd.f32 %v244, %v537
      %539 = vmatmul.f32.gmra.mxu0 %v332
      %v540 = vpop.f32.mrf.mxu0
      %v541 = vadd.f32 %v244, %v540
      %542 = vmatmul.f32.gmra.mxu0 %v335
      %v543 = vpop.f32.mrf.mxu0
      %v544 = vadd.f32 %v244, %v543
      %545 = vmatmul.f32.gmra.mxu0 %v338
      %v546 = vpop.f32.mrf.mxu0
      %v547 = vadd.f32 %v244, %v546
      %548 = vmatmul.f32.gmra.mxu0 %v341
      %v549 = vpop.f32.mrf.mxu0
      %v550 = vadd.f32 %v244, %v549
      %551 = vmatmul.f32.gmra.mxu0 %v344
      %v552 = vpop.f32.mrf.mxu0
      %v553 = vadd.f32 %v244, %v552
      %554 = vmatmul.f32.gmra.mxu0 %v347
      %v555 = vpop.f32.mrf.mxu0
      %v556 = vadd.f32 %v244, %v555
      %557 = vmatmul.f32.gmra.mxu0 %v350
      %v558 = vpop.f32.mrf.mxu0
      %v559 = vadd.f32 %v244, %v558
      %560 = vmatmul.f32.gmra.mxu0 %v353
      %v561 = vpop.f32.mrf.mxu0
      %v562 = vadd.f32 %v244, %v561
      %563 = vmatmul.f32.gmra.mxu0 %v356
      %v564 = vpop.f32.mrf.mxu0
      %v565 = vadd.f32 %v244, %v564
      %566 = vmatmul.f32.gmra.mxu0 %v359
      %v567 = vpop.f32.mrf.mxu0
      %v568 = vadd.f32 %v244, %v567
      %569 = vmatmul.f32.gmra.mxu0 %v362
      %v570 = vpop.f32.mrf.mxu0
      %v571 = vadd.f32 %v244, %v570
      %572 = vmatmul.f32.gmra.mxu0 %v365
      %v573 = vpop.f32.mrf.mxu0
      %v574 = vadd.f32 %v244, %v573
      %575 = vmatmul.f32.gmra.mxu0 %v368
      %v576 = vpop.f32.mrf.mxu0
      %v577 = vadd.f32 %v244, %v576
      %578 = vmatmul.f32.gmra.mxu0 %v371
      %v579 = vpop.f32.mrf.mxu0
      %v580 = vadd.f32 %v244, %v579
      %581 = vmatmul.f32.gmra.mxu0 %v374
      %v582 = vpop.f32.mrf.mxu0
      %v583 = vadd.f32 %v244, %v582
      %584 = vmatmul.f32.gmra.mxu0 %v377
      %v585 = vpop.f32.mrf.mxu0
      %v586 = vadd.f32 %v244, %v585
      %587 = vmatmul.f32.gmra.mxu0 %v380
      %v588 = vpop.f32.mrf.mxu0
      %v589 = vadd.f32 %v244, %v588
      %590 = vmatmul.f32.gmra.mxu0 %v383
      %v591 = vpop.f32.mrf.mxu0
      %v592 = vadd.f32 %v244, %v591
      %593 = vmatmul.f32.gmra.mxu0 %v386
      %v594 = vpop.f32.mrf.mxu0
      %v595 = vadd.f32 %v244, %v594
      %596 = vmatmul.f32.gmra.mxu0 %v389
      %v597 = vpop.f32.mrf.mxu0
      %v598 = vadd.f32 %v244, %v597
      %599 = vmatmul.f32.gmra.mxu0 %v392
      %v600 = vpop.f32.mrf.mxu0
      %v601 = vadd.f32 %v244, %v600
      %602 = vmatmul.f32.gmra.mxu0 %v395
      %v603 = vpop.f32.mrf.mxu0
      %v604 = vadd.f32 %v244, %v603
      %605 = vmatmul.f32.gmra.mxu0 %v398
      %v606 = vpop.f32.mrf.mxu0
      %v607 = vadd.f32 %v244, %v606
      %608 = vmatmul.f32.gmra.mxu0 %v401
      %v609 = vpop.f32.mrf.mxu0
      %v610 = vadd.f32 %v244, %v609
      %611 = vmatmul.f32.gmra.mxu0 %v404
      %v612 = vpop.f32.mrf.mxu0
      %v613 = vadd.f32 %v244, %v612
      %614 = vmatmul.f32.gmra.mxu0 %v407
      %v615 = vpop.f32.mrf.mxu0
      %v616 = vadd.f32 %v244, %v615
      %617 = vmatmul.f32.gmra.mxu0 %v410
      %v618 = vpop.f32.mrf.mxu0
      %v619 = vadd.f32 %v244, %v618
      %620 = vmatmul.f32.gmra.mxu0 %v413
      %v621 = vpop.f32.mrf.mxu0
      %v622 = vadd.f32 %v244, %v621
      %623 = vmatmul.f32.gmra.mxu0 %v416
      %v624 = vpop.f32.mrf.mxu0
      %v625 = vadd.f32 %v244, %v624
      %626 = vmatmul.f32.gmra.mxu0 %v419
      %v627 = vpop.f32.mrf.mxu0
      %v628 = vadd.f32 %v244, %v627
      %629 = vmatmul.f32.gmra.mxu0 %v422
      %v630 = vpop.f32.mrf.mxu0
      %v631 = vadd.f32 %v244, %v630
      %632 = vmatmul.f32.gmra.mxu0 %v425
      %v633 = vpop.f32.mrf.mxu0
      %v634 = vadd.f32 %v244, %v633
      %635 = vmatmul.f32.gmra.mxu0 %v428
      %v636 = vpop.f32.mrf.mxu0
      %v637 = vadd.f32 %v244, %v636
      %638 = vmatmul.f32.gmra.mxu0 %v431
      %v639 = vpop.f32.mrf.mxu0
      %v640 = vadd.f32 %v244, %v639
      %641 = vmatmul.f32.gmra.mxu0 %v434
      %v642 = vpop.f32.mrf.mxu0
      %v643 = vadd.f32 %v244, %v642
      %644 = vmatmul.f32.gmra.mxu0 %v437
      %v645 = vpop.f32.mrf.mxu0
      %v646 = vadd.f32 %v244, %v645
      %647 = vdwg.mxu0
      %648 = vst.msk [vmem:[%s172] sm:$0xff] %vm246, %v457
      %649 = vst.msk [vmem:[%s172 + $0x8] sm:$0xff] %vm246, %v460
      %650 = vst.msk [vmem:[%s172 + $0x10] sm:$0xff] %vm246, %v463
      %651 = vst.msk [vmem:[%s172 + $0x18] sm:$0xff] %vm246, %v466
      %652 = vst.msk [vmem:[%s172 + $0x20] sm:$0xff] %vm246, %v469
      %653 = vst.msk [vmem:[%s172 + $0x28] sm:$0xff] %vm246, %v472
      %654 = vst.msk [vmem:[%s172 + $0x30] sm:$0xff] %vm246, %v475
      %655 = vst.msk [vmem:[%s172 + $0x38] sm:$0xff] %vm246, %v478
      %656 = vst.msk [vmem:[%s172 + $0x40] sm:$0xff] %vm246, %v481
      %657 = vst.msk [vmem:[%s172 + $0x48] sm:$0xff] %vm246, %v484
      %658 = vst.msk [vmem:[%s172 + $0x50] sm:$0xff] %vm246, %v487
      %659 = vst.msk [vmem:[%s172 + $0x58] sm:$0xff] %vm246, %v490
      %660 = vst.msk [vmem:[%s172 + $0x60] sm:$0xff] %vm246, %v493
      %661 = vst.msk [vmem:[%s172 + $0x68] sm:$0xff] %vm246, %v496
      %662 = vst.msk [vmem:[%s172 + $0x70] sm:$0xff] %vm246, %v499
      %663 = vst.msk [vmem:[%s172 + $0x78] sm:$0xff] %vm246, %v502
      %664 = vst.msk [vmem:[%s172 + $0x80] sm:$0xff] %vm246, %v505
      %665 = vst.msk [vmem:[%s172 + $0x88] sm:$0xff] %vm246, %v508
      %666 = vst.msk [vmem:[%s172 + $0x90] sm:$0xff] %vm246, %v511
      %667 = vst.msk [vmem:[%s172 + $0x98] sm:$0xff] %vm246, %v514
      %668 = vst.msk [vmem:[%s172 + $0xa0] sm:$0xff] %vm246, %v517
      %669 = vst.msk [vmem:[%s172 + $0xa8] sm:$0xff] %vm246, %v520
      %670 = vst.msk [vmem:[%s172 + $0xb0] sm:$0xff] %vm246, %v523
      %671 = vst.msk [vmem:[%s172 + $0xb8] sm:$0xff] %vm246, %v526
      %672 = vst.msk [vmem:[%s172 + $0xc0] sm:$0xff] %vm246, %v529
      %673 = vst.msk [vmem:[%s172 + $0xc8] sm:$0xff] %vm246, %v532
      %674 = vst.msk [vmem:[%s172 + $0xd0] sm:$0xff] %vm246, %v535
      %675 = vst.msk [vmem:[%s172 + $0xd8] sm:$0xff] %vm246, %v538
      %676 = vst.msk [vmem:[%s172 + $0xe0] sm:$0xff] %vm246, %v541
      %677 = vst.msk [vmem:[%s172 + $0xe8] sm:$0xff] %vm246, %v544
      %678 = vst.msk [vmem:[%s172 + $0xf0] sm:$0xff] %vm246, %v547
      %679 = vst.msk [vmem:[%s172 + $0xf8] sm:$0xff] %vm246, %v550
      %680 = vst.msk [vmem:[%s172 + $0x100] sm:$0xff] %vm246, %v553
      %681 = vst.msk [vmem:[%s172 + $0x108] sm:$0xff] %vm246, %v556
      %682 = vst.msk [vmem:[%s172 + $0x110] sm:$0xff] %vm246, %v559
      %683 = vst.msk [vmem:[%s172 + $0x118] sm:$0xff] %vm246, %v562
      %684 = vst.msk [vmem:[%s172 + $0x120] sm:$0xff] %vm246, %v565
      %685 = vst.msk [vmem:[%s172 + $0x128] sm:$0xff] %vm246, %v568
      %686 = vst.msk [vmem:[%s172 + $0x130] sm:$0xff] %vm246, %v571
      %687 = vst.msk [vmem:[%s172 + $0x138] sm:$0xff] %vm246, %v574
      %688 = vst.msk [vmem:[%s172 + $0x140] sm:$0xff] %vm246, %v577
      %689 = vst.msk [vmem:[%s172 + $0x148] sm:$0xff] %vm246, %v580
      %690 = vst.msk [vmem:[%s172 + $0x150] sm:$0xff] %vm246, %v583
      %691 = vst.msk [vmem:[%s172 + $0x158] sm:$0xff] %vm246, %v586
      %692 = vst.msk [vmem:[%s172 + $0x160] sm:$0xff] %vm246, %v589
      %693 = vst.msk [vmem:[%s172 + $0x168] sm:$0xff] %vm246, %v592
      %694 = vst.msk [vmem:[%s172 + $0x170] sm:$0xff] %vm246, %v595
      %695 = vst.msk [vmem:[%s172 + $0x178] sm:$0xff] %vm246, %v598
      %696 = vst.msk [vmem:[%s172 + $0x180] sm:$0xff] %vm246, %v601
      %697 = vst.msk [vmem:[%s172 + $0x188] sm:$0xff] %vm246, %v604
      %698 = vst.msk [vmem:[%s172 + $0x190] sm:$0xff] %vm246, %v607
      %699 = vst.msk [vmem:[%s172 + $0x198] sm:$0xff] %vm246, %v610
      %700 = vst.msk [vmem:[%s172 + $0x1a0] sm:$0xff] %vm246, %v613
      %701 = vst.msk [vmem:[%s172 + $0x1a8] sm:$0xff] %vm246, %v616
      %702 = vst.msk [vmem:[%s172 + $0x1b0] sm:$0xff] %vm246, %v619
      %703 = vst.msk [vmem:[%s172 + $0x1b8] sm:$0xff] %vm246, %v622
      %704 = vst.msk [vmem:[%s172 + $0x1c0] sm:$0xff] %vm246, %v625
      %705 = vst.msk [vmem:[%s172 + $0x1c8] sm:$0xff] %vm246, %v628
      %706 = vst.msk [vmem:[%s172 + $0x1d0] sm:$0xff] %vm246, %v631
      %707 = vst.msk [vmem:[%s172 + $0x1d8] sm:$0xff] %vm246, %v634
      %708 = vst.msk [vmem:[%s172 + $0x1e0] sm:$0xff] %vm246, %v637
      %709 = vst.msk [vmem:[%s172 + $0x1e8] sm:$0xff] %vm246, %v640
      %710 = vst.msk [vmem:[%s172 + $0x1f0] sm:$0xff] %vm246, %v643
      %711 = vst.msk [vmem:[%s172 + $0x1f8] sm:$0xff] %vm246, %v646
      %s712 = smul.u32 64, %s14
      %p713 = scmp.lt.s32.totalorder %s712, 127
      %s714 = scalar_select %p713, %s712, 127
      %s715 = smul.addr %s714, 8
      %s716 = scalar_lea.vmem %s3, %s715
      // Predicated region
      $region33: #{ssmlp_forward.29} parent=31 // pred_check
        %p717 = pneg %p100
      $region34: #{ssmlp_forward.29} parent=31 // pred_check_branch
        %719 = sbr.rel (%p717) target = $region36
      $region35: #{ssmlp_forward.29} parent=31 // pred_region
        %s720 = smul.u32 64, %s14
      $region36: #{ssmlp_forward.29} parent=31 // pred_fallthru
        _
    $region32: #{ssmlp_forward.29} parent=5 // pred_fallthru
      _
    %p721 = scmp.le.s32.totalorder 2, %s9
    // Predicated region
    $region37: #{ssmlp_forward.29} parent=5 // pred_check
      %p722 = pneg %p721
    $region38: #{ssmlp_forward.29} parent=5 // pred_check_branch
      %724 = sbr.rel (%p722) target = $region40
    $region39: #{ssmlp_forward.29} parent=5 // pred_region
      %s725 = ssub.s32 %s9, 2
      // Predicated region
      $region41: #{ssmlp_forward.29} parent=39 // pred_check
        %p726 = pneg %p106
      $region42: #{ssmlp_forward.29} parent=39 // pred_check_branch
        %728 = sbr.rel (%p726) target = $region44
      $region43: #{ssmlp_forward.29} parent=39 // pred_region
        %s729 = smul.u32 64, %s15
        %p730 = scmp.lt.s32.totalorder %s729, 127
        %s731 = scalar_select %p730, %s729, 127
        %s732 = smul.addr %s731, 8
        %s733 = scalar_lea.vmem %s3, %s732
      $region44: #{ssmlp_forward.29} parent=39 // pred_fallthru
        _
    $region40: #{ssmlp_forward.29} parent=5 // pred_fallthru
      _
  $region6: #{ssmlp_forward.29} parent=0 // loop_footer
    %s13 = sadd.s32 1, %s9
  $region7: #{ssmlp_forward.29} parent=0 // loop_footer_branch
    %8 = sbr.rel target = $region3
  $region8: #{ssmlp_forward.29} parent=0 // loop_exit
    _

// kernel: ssmlp_forward.30
$region0: #{ssmlp_forward.30}
  #allocation0 [shape = 'u32[]', space=smem, size = 0x4, offset = 0x4, fixed_abs, tag = 'smem constant byte address 0x4 - core index']
  #allocation1 [shape = 'u32[72,128]{1,0:T(1,128)}', space=vmem, size = 0x9000, scoped, tag = 'internal scratch']
  %s0 = inlined_call_operand.vmem [shape: f32[1024,32], index: 0, kind: input, shape index: {}]
  %s1 = inlined_call_operand.vmem [shape: f32[1024,32], index: 1, kind: input, shape index: {}]
  %s2 = inlined_call_operand.vmem [shape: f32[32,32], index: 2, kind: input, shape index: {}]
  %s3 = inlined_call_operand.vmem [shape: f32[1,32], index: 3, kind: input, shape index: {}]
  %s4 = inlined_call_operand.vmem [shape: f32[1024,32], index: 4, kind: output, shape index: {}]
  %s5 = sld [smem:[#allocation0]]
  $region49: #{ssmlp_forward.30} parent=0
    _
  %s7 = ssub.s32 1, %s5
  %s8 = scalar_select 0, %s7, %s5
  loop: start=0, step=1, limit=4
  $region2: #{ssmlp_forward.30} parent=0 // loop_pre_header
    _
  $region3: #{ssmlp_forward.30} parent=0 // loop_header
    %s10 = sphi 0, %s14
    %p11 = scmp.ge.s32.totalorder %s10, 4
    %s20 = sphi 0, %s22
    %s23 = sphi 0, %s20
    %s24 = sphi 0, %s23
    %s40 = sphi 0, %s24
    %s46 = sphi 0, %s48
    %s49 = sphi 0, %s46
    %s50 = sphi 0, %s49
    %s66 = sphi 0, %s50
    %s70 = sphi 0, %s70
    %s72 = sphi 0, %s70
    %s73 = sphi 0, %s72
    %s87 = sphi 0, %s73
    %s91 = sphi 0, %s91
    %s93 = sphi 0, %s91
    %s94 = sphi 0, %s93
    %s108 = sphi 0, %s94
    %s114 = sphi 0, %s116
    %s117 = sphi 0, %s114
    %s118 = sphi 0, %s117
    %s134 = sphi 0, %s118
  $region4: #{ssmlp_forward.30} parent=0 // loop_header_branch
    %13 = sbr.rel (%p11) target = $region8
  $region5: #{ssmlp_forward.30} parent=0 // loop_body
    %s15 = ssub.s32 %s10, 1
    %s16 = ssub.s32 %s10, 2
    %s17 = sadd.s32 %s10, 1
    %s18 = ssub.s32 %s10, %s17
    %p19 = scmp.eq.s32.totalorder %s18, 0
    %s21 = sadd.s32 %s20, 1
    %s22 = scalar_select %p19, %s20, %s21
    %p25 = pneg %p19
    %p26 = scmp.eq.s32.totalorder %s10, 1
    %p27 = por %p25, %p26
    %p28 = scmp.ne.s32.totalorder %s20, %s23
    %p29 = scmp.eq.s32.totalorder %s10, 0
    %p30 = por %p28, %p29
    %p31 = scmp.ne.s32.totalorder %s20, %s23
    %p32 = scmp.eq.s32.totalorder %s15, 1
    %p33 = por %p31, %p32
    %p34 = scmp.ne.s32.totalorder %s23, %s24
    %p35 = scmp.eq.s32.totalorder %s15, 0
    %p36 = por %p34, %p35
    %p37 = scmp.ne.s32.totalorder %s23, %s24
    %p38 = scmp.eq.s32.totalorder %s16, 1
    %p39 = por %p37, %p38
    %p41 = scmp.ne.s32.totalorder %s24, %s40
    %p42 = scmp.eq.s32.totalorder %s16, 0
    %p43 = por %p41, %p42
    %s44 = ssub.s32 %s10, %s17
    %p45 = scmp.eq.s32.totalorder %s44, 0
    %s47 = sadd.s32 %s46, 1
    %s48 = scalar_select %p45, %s46, %s47
    %p51 = pneg %p45
    %p52 = scmp.eq.s32.totalorder %s10, 1
    %p53 = por %p51, %p52
    %p54 = scmp.ne.s32.totalorder %s46, %s49
    %p55 = scmp.eq.s32.totalorder %s10, 0
    %p56 = por %p54, %p55
    %p57 = scmp.ne.s32.totalorder %s46, %s49
    %p58 = scmp.eq.s32.totalorder %s15, 1
    %p59 = por %p57, %p58
    %p60 = scmp.ne.s32.totalorder %s49, %s50
    %p61 = scmp.eq.s32.totalorder %s15, 0
    %p62 = por %p60, %p61
    %p63 = scmp.ne.s32.totalorder %s49, %s50
    %p64 = scmp.eq.s32.totalorder %s16, 1
    %p65 = por %p63, %p64
    %p67 = scmp.ne.s32.totalorder %s50, %s66
    %p68 = scmp.eq.s32.totalorder %s16, 0
    %p69 = por %p67, %p68
    %s71 = sadd.s32 %s70, 1
    %p74 = scmp.eq.s32.totalorder %s10, 1
    %p75 = scmp.ne.s32.totalorder %s70, %s72
    %p76 = scmp.eq.s32.totalorder %s10, 0
    %p77 = por %p75, %p76
    %p78 = scmp.ne.s32.totalorder %s70, %s72
    %p79 = scmp.eq.s32.totalorder %s15, 1
    %p80 = por %p78, %p79
    %p81 = scmp.ne.s32.totalorder %s72, %s73
    %p82 = scmp.eq.s32.totalorder %s15, 0
    %p83 = por %p81, %p82
    %p84 = scmp.ne.s32.totalorder %s72, %s73
    %p85 = scmp.eq.s32.totalorder %s16, 1
    %p86 = por %p84, %p85
    %p88 = scmp.ne.s32.totalorder %s73, %s87
    %p89 = scmp.eq.s32.totalorder %s16, 0
    %p90 = por %p88, %p89
    %s92 = sadd.s32 %s91, 1
    %p95 = scmp.eq.s32.totalorder %s10, 1
    %p96 = scmp.ne.s32.totalorder %s91, %s93
    %p97 = scmp.eq.s32.totalorder %s10, 0
    %p98 = por %p96, %p97
    %p99 = scmp.ne.s32.totalorder %s91, %s93
    %p100 = scmp.eq.s32.totalorder %s15, 1
    %p101 = por %p99, %p100
    %p102 = scmp.ne.s32.totalorder %s93, %s94
    %p103 = scmp.eq.s32.totalorder %s15, 0
    %p104 = por %p102, %p103
    %p105 = scmp.ne.s32.totalorder %s93, %s94
    %p106 = scmp.eq.s32.totalorder %s16, 1
    %p107 = por %p105, %p106
    %p109 = scmp.ne.s32.totalorder %s94, %s108
    %p110 = scmp.eq.s32.totalorder %s16, 0
    %p111 = por %p109, %p110
    %s112 = ssub.s32 %s10, %s17
    %p113 = scmp.eq.s32.totalorder %s112, 0
    %s115 = sadd.s32 %s114, 1
    %s116 = scalar_select %p113, %s114, %s115
    %p119 = pneg %p113
    %p120 = scmp.eq.s32.totalorder %s10, 1
    %p121 = por %p119, %p120
    %p122 = scmp.ne.s32.totalorder %s114, %s117
    %p123 = scmp.eq.s32.totalorder %s10, 0
    %p124 = por %p122, %p123
    %p125 = scmp.ne.s32.totalorder %s114, %s117
    %p126 = scmp.eq.s32.totalorder %s15, 1
    %p127 = por %p125, %p126
    %p128 = scmp.ne.s32.totalorder %s117, %s118
    %p129 = scmp.eq.s32.totalorder %s15, 0
    %p130 = por %p128, %p129
    %p131 = scmp.ne.s32.totalorder %s117, %s118
    %p132 = scmp.eq.s32.totalorder %s16, 1
    %p133 = por %p131, %p132
    %p135 = scmp.ne.s32.totalorder %s118, %s134
    %p136 = scmp.eq.s32.totalorder %s16, 0
    %p137 = por %p135, %p136
    %p138 = scmp.le.s32.totalorder 1, %s10
    %p139 = scmp.lt.s32.totalorder %s10, 3
    %p140 = pnand %p138, %p139
    %p141 = pneg %p140
    // Predicated region
    $region9: #{ssmlp_forward.30} parent=5 // pred_check
      _
    $region10: #{ssmlp_forward.30} parent=5 // pred_check_branch
      %143 = sbr.rel (%p140) target = $region12
    $region11: #{ssmlp_forward.30} parent=5 // pred_region
      %s144 = ssub.s32 %s10, 1
      // Predicated region
      $region13: #{ssmlp_forward.30} parent=11 // pred_check
        %p145 = pneg %p83
      $region14: #{ssmlp_forward.30} parent=11 // pred_check_branch
        %147 = sbr.rel (%p145) target = $region16
      $region15: #{ssmlp_forward.30} parent=11 // pred_region
        _
      $region16: #{ssmlp_forward.30} parent=11 // pred_fallthru
        _
      // Predicated region
      $region17: #{ssmlp_forward.30} parent=11 // pred_check
        %p148 = pneg %p104
      $region18: #{ssmlp_forward.30} parent=11 // pred_check_branch
        %150 = sbr.rel (%p148) target = $region20
      $region19: #{ssmlp_forward.30} parent=11 // pred_region
        _
      $region20: #{ssmlp_forward.30} parent=11 // pred_fallthru
        _
    $region12: #{ssmlp_forward.30} parent=5 // pred_fallthru
      _
    %p151 = scmp.lt.s32.totalorder %s10, 2
    // Predicated region
    $region21: #{ssmlp_forward.30} parent=5 // pred_check
      %p152 = pneg %p151
    $region22: #{ssmlp_forward.30} parent=5 // pred_check_branch
      %154 = sbr.rel (%p152) target = $region24
    $region23: #{ssmlp_forward.30} parent=5 // pred_region
      // Predicated region
      $region25: #{ssmlp_forward.30} parent=23 // pred_check
        %p155 = pneg %p30
      $region26: #{ssmlp_forward.30} parent=23 // pred_check_branch
        %157 = sbr.rel (%p155) target = $region28
      $region27: #{ssmlp_forward.30} parent=23 // pred_region
        %s158 = smul.u32 64, %s10
        %p159 = scmp.lt.s32.totalorder %s158, 127
        %s160 = scalar_select %p159, %s158, 127
        %s161 = smul.addr %s160, 8
        %s162 = scalar_lea.vmem %s0, %s161
        %s163 = smul.u32 64, %s10
      $region28: #{ssmlp_forward.30} parent=23 // pred_fallthru
        _
      // Predicated region
      $region29: #{ssmlp_forward.30} parent=23 // pred_check
        %p164 = pneg %p56
      $region30: #{ssmlp_forward.30} parent=23 // pred_check_branch
        %166 = sbr.rel (%p164) target = $region32
      $region31: #{ssmlp_forward.30} parent=23 // pred_region
        %s167 = smul.u32 64, %s10
        %p168 = scmp.lt.s32.totalorder %s167, 127
        %s169 = scalar_select %p168, %s167, 127
        %s170 = smul.addr %s169, 8
        %s171 = scalar_lea.vmem %s1, %s170
        %s172 = smul.u32 64, %s10
      $region32: #{ssmlp_forward.30} parent=23 // pred_fallthru
        _
    $region24: #{ssmlp_forward.30} parent=5 // pred_fallthru
      _
    %p173 = scmp.le.s32.totalorder 1, %s10
    %p174 = scmp.lt.s32.totalorder %s10, 3
    %p175 = pnand %p173, %p174
    %p176 = pneg %p175
    // Predicated region
    $region33: #{ssmlp_forward.30} parent=5 // pred_check
      _
    $region34: #{ssmlp_forward.30} parent=5 // pred_check_branch
      %178 = sbr.rel (%p175) target = $region36
    $region35: #{ssmlp_forward.30} parent=5 // pred_region
      %s179 = ssub.s32 %s10, 1
      %s180 = smul.u32 64, %s15
      %p181 = scmp.lt.s32.totalorder %s180, 127
      %s182 = scalar_select %p181, %s180, 127
      %s183 = smul.addr %s182, 8
      %s184 = scalar_lea.vmem %s0, %s183
      %p185 = pneg %p36
      %p186 = pneg %p33
      %s187 = smul.u32 64, %s15
      %p188 = scmp.lt.s32.totalorder %s187, 127
      %s189 = scalar_select %p188, %s187, 127
      %s190 = smul.addr %s189, 8
      %s191 = scalar_lea.vmem %s1, %s190
      %p192 = pneg %p62
      %p193 = pneg %p59
      %p194 = pneg %p83
      %p195 = pneg %p80
      %p196 = pneg %p104
      %p197 = pneg %p101
      %p198 = pneg %p130
      %p199 = pneg %p127
      %s200 = smul.u32 64, %s15
      %p201 = scmp.lt.s32.totalorder %s200, 127
      %s202 = scalar_select %p201, %s200, 127
      %s203 = smul.addr %s202, 8
      %s204 = scalar_lea.vmem %s4, %s203
      %s205 = smul.u32 64, %s15
      %p206 = scmp.lt.s32.totalorder %s205, 127
      %s207 = scalar_select %p206, %s205, 127
      %s208 = smul.addr %s207, 8
      %s209 = scalar_lea.vmem %s0, %s208
      %s210 = smul.u32 64, %s15
      %s211 = smul.u32 64, %s15
      %p212 = scmp.lt.s32.totalorder %s211, 127
      %s213 = scalar_select %p212, %s211, 127
      %s214 = smul.addr %s213, 8
      %s215 = scalar_lea.vmem %s1, %s214
      %s216 = smul.u32 64, %s15
      %s217 = smul.u32 64, %s15
      %p218 = scmp.lt.s32.totalorder %s217, 127
      %s219 = scalar_select %p218, %s217, 127
      %s220 = smul.addr %s219, 8
      %s221 = scalar_lea.vmem %s4, %s220
      %s222 = smul.u32 64, %s15
      %v223 = vld [vmem:[%s209] sm:$0xff]
      %v224 = vld [vmem:[%s209 + $0x8] sm:$0xff]
      %v225 = vld [vmem:[%s209 + $0x10] sm:$0xff]
      %v226 = vld [vmem:[%s209 + $0x18] sm:$0xff]
      %v227 = vld [vmem:[%s209 + $0x20] sm:$0xff]
      %v228 = vld [vmem:[%s209 + $0x28] sm:$0xff]
      %v229 = vld [vmem:[%s209 + $0x30] sm:$0xff]
      %v230 = vld [vmem:[%s209 + $0x38] sm:$0xff]
      %v231 = vld [vmem:[%s209 + $0x40] sm:$0xff]
      %v232 = vld [vmem:[%s209 + $0x48] sm:$0xff]
      %v233 = vld [vmem:[%s209 + $0x50] sm:$0xff]
      %v234 = vld [vmem:[%s209 + $0x58] sm:$0xff]
      %v235 = vld [vmem:[%s209 + $0x60] sm:$0xff]
      %v236 = vld [vmem:[%s209 + $0x68] sm:$0xff]
      %v237 = vld [vmem:[%s209 + $0x70] sm:$0xff]
      %v238 = vld [vmem:[%s209 + $0x78] sm:$0xff]
      %v239 = vld [vmem:[%s209 + $0x80] sm:$0xff]
      %v240 = vld [vmem:[%s209 + $0x88] sm:$0xff]
      %v241 = vld [vmem:[%s209 + $0x90] sm:$0xff]
      %v242 = vld [vmem:[%s209 + $0x98] sm:$0xff]
      %v243 = vld [vmem:[%s209 + $0xa0] sm:$0xff]
      %v244 = vld [vmem:[%s209 + $0xa8] sm:$0xff]
      %v245 = vld [vmem:[%s209 + $0xb0] sm:$0xff]
      %v246 = vld [vmem:[%s209 + $0xb8] sm:$0xff]
      %v247 = vld [vmem:[%s209 + $0xc0] sm:$0xff]
      %v248 = vld [vmem:[%s209 + $0xc8] sm:$0xff]
      %v249 = vld [vmem:[%s209 + $0xd0] sm:$0xff]
      %v250 = vld [vmem:[%s209 + $0xd8] sm:$0xff]
      %v251 = vld [vmem:[%s209 + $0xe0] sm:$0xff]
      %v252 = vld [vmem:[%s209 + $0xe8] sm:$0xff]
      %v253 = vld [vmem:[%s209 + $0xf0] sm:$0xff]
      %v254 = vld [vmem:[%s209 + $0xf8] sm:$0xff]
      %v255 = vld [vmem:[%s209 + $0x100] sm:$0xff]
      %v256 = vld [vmem:[%s209 + $0x108] sm:$0xff]
      %v257 = vld [vmem:[%s209 + $0x110] sm:$0xff]
      %v258 = vld [vmem:[%s209 + $0x118] sm:$0xff]
      %v259 = vld [vmem:[%s209 + $0x120] sm:$0xff]
      %v260 = vld [vmem:[%s209 + $0x128] sm:$0xff]
      %v261 = vld [vmem:[%s209 + $0x130] sm:$0xff]
      %v262 = vld [vmem:[%s209 + $0x138] sm:$0xff]
      %v263 = vld [vmem:[%s209 + $0x140] sm:$0xff]
      %v264 = vld [vmem:[%s209 + $0x148] sm:$0xff]
      %v265 = vld [vmem:[%s209 + $0x150] sm:$0xff]
      %v266 = vld [vmem:[%s209 + $0x158] sm:$0xff]
      %v267 = vld [vmem:[%s209 + $0x160] sm:$0xff]
      %v268 = vld [vmem:[%s209 + $0x168] sm:$0xff]
      %v269 = vld [vmem:[%s209 + $0x170] sm:$0xff]
      %v270 = vld [vmem:[%s209 + $0x178] sm:$0xff]
      %v271 = vld [vmem:[%s209 + $0x180] sm:$0xff]
      %v272 = vld [vmem:[%s209 + $0x188] sm:$0xff]
      %v273 = vld [vmem:[%s209 + $0x190] sm:$0xff]
      %v274 = vld [vmem:[%s209 + $0x198] sm:$0xff]
      %v275 = vld [vmem:[%s209 + $0x1a0] sm:$0xff]
      %v276 = vld [vmem:[%s209 + $0x1a8] sm:$0xff]
      %v277 = vld [vmem:[%s209 + $0x1b0] sm:$0xff]
      %v278 = vld [vmem:[%s209 + $0x1b8] sm:$0xff]
      %v279 = vld [vmem:[%s209 + $0x1c0] sm:$0xff]
      %v280 = vld [vmem:[%s209 + $0x1c8] sm:$0xff]
      %v281 = vld [vmem:[%s209 + $0x1d0] sm:$0xff]
      %v282 = vld [vmem:[%s209 + $0x1d8] sm:$0xff]
      %v283 = vld [vmem:[%s209 + $0x1e0] sm:$0xff]
      %v284 = vld [vmem:[%s209 + $0x1e8] sm:$0xff]
      %v285 = vld [vmem:[%s209 + $0x1f0] sm:$0xff]
      %v286 = vld [vmem:[%s209 + $0x1f8] sm:$0xff]
      %v287 = vld [vmem:[%s2] sm:$0xff]
      %v288 = vld [vmem:[%s2 + $0x8] sm:$0xff]
      %v289 = vld [vmem:[%s2 + $0x10] sm:$0xff]
      %v290 = vld [vmem:[%s2 + $0x18] sm:$0xff]
      %vm291 = vcmask 261120
      %v293 = vsel %vm291, %v223, 0
      %v296 = vsel %vm291, %v224, 0
      %v299 = vsel %vm291, %v225, 0
      %v302 = vsel %vm291, %v226, 0
      %v305 = vsel %vm291, %v227, 0
      %v308 = vsel %vm291, %v228, 0
      %v311 = vsel %vm291, %v229, 0
      %v314 = vsel %vm291, %v230, 0
      %v317 = vsel %vm291, %v231, 0
      %v320 = vsel %vm291, %v232, 0
      %v323 = vsel %vm291, %v233, 0
      %v326 = vsel %vm291, %v234, 0
      %v329 = vsel %vm291, %v235, 0
      %v332 = vsel %vm291, %v236, 0
      %v335 = vsel %vm291, %v237, 0
      %v338 = vsel %vm291, %v238, 0
      %v341 = vsel %vm291, %v239, 0
      %v344 = vsel %vm291, %v240, 0
      %v347 = vsel %vm291, %v241, 0
      %v350 = vsel %vm291, %v242, 0
      %v353 = vsel %vm291, %v243, 0
      %v356 = vsel %vm291, %v244, 0
      %v359 = vsel %vm291, %v245, 0
      %v362 = vsel %vm291, %v246, 0
      %v365 = vsel %vm291, %v247, 0
      %v368 = vsel %vm291, %v248, 0
      %v371 = vsel %vm291, %v249, 0
      %v374 = vsel %vm291, %v250, 0
      %v377 = vsel %vm291, %v251, 0
      %v380 = vsel %vm291, %v252, 0
      %v383 = vsel %vm291, %v253, 0
      %v386 = vsel %vm291, %v254, 0
      %v389 = vsel %vm291, %v255, 0
      %v392 = vsel %vm291, %v256, 0
      %v395 = vsel %vm291, %v257, 0
      %v398 = vsel %vm291, %v258, 0
      %v401 = vsel %vm291, %v259, 0
      %v404 = vsel %vm291, %v260, 0
      %v407 = vsel %vm291, %v261, 0
      %v410 = vsel %vm291, %v262, 0
      %v413 = vsel %vm291, %v263, 0
      %v416 = vsel %vm291, %v264, 0
      %v419 = vsel %vm291, %v265, 0
      %v422 = vsel %vm291, %v266, 0
      %v425 = vsel %vm291, %v267, 0
      %v428 = vsel %vm291, %v268, 0
      %v431 = vsel %vm291, %v269, 0
      %v434 = vsel %vm291, %v270, 0
      %v437 = vsel %vm291, %v271, 0
      %v440 = vsel %vm291, %v272, 0
      %v443 = vsel %vm291, %v273, 0
      %v446 = vsel %vm291, %v274, 0
      %v449 = vsel %vm291, %v275, 0
      %v452 = vsel %vm291, %v276, 0
      %v455 = vsel %vm291, %v277, 0
      %v458 = vsel %vm291, %v278, 0
      %v461 = vsel %vm291, %v279, 0
      %v464 = vsel %vm291, %v280, 0
      %v467 = vsel %vm291, %v281, 0
      %v470 = vsel %vm291, %v282, 0
      %v473 = vsel %vm291, %v283, 0
      %v476 = vsel %vm291, %v284, 0
      %v479 = vsel %vm291, %v285, 0
      %v482 = vsel %vm291, %v286, 0
      %484 = vmatpush.msra.mxu0 0.0
      %485 = vmatpush.msra.mxu0 0.0
      %486 = vmatpush.msra.mxu0 0.0
      %487 = vmatpush.msra.mxu0 0.0
      %488 = vmatpush.msra.mxu0 0.0
      %489 = vmatpush.msra.mxu0 0.0
      %490 = vmatpush.msra.mxu0 0.0
      %491 = vmatpush.msra.mxu0 0.0
      %492 = vmatpush.msra.mxu0 0.0
      %493 = vmatpush.msra.mxu0 0.0
      %494 = vmatpush.msra.mxu0 0.0
      %495 = vmatpush.msra.mxu0 0.0
      %496 = vmatpush.msra.mxu0 %v290
      %497 = vmatpush.msra.mxu0 %v289
      %498 = vmatpush.msra.mxu0 %v288
      %499 = vmatpush.msra.mxu0 %v287
      %500 = vmatmul.f32.gmra.mxu0 %v293
      %v501 = vpop.f32.mrf.mxu0
      %v502 = vadd.f32 0.0, %v501
      %503 = vmatmul.f32.gmra.mxu0 %v296
      %v504 = vpop.f32.mrf.mxu0
      %v505 = vadd.f32 0.0, %v504
      %506 = vmatmul.f32.gmra.mxu0 %v299
      %v507 = vpop.f32.mrf.mxu0
      %v508 = vadd.f32 0.0, %v507
      %509 = vmatmul.f32.gmra.mxu0 %v302
      %v510 = vpop.f32.mrf.mxu0
      %v511 = vadd.f32 0.0, %v510
      %512 = vmatmul.f32.gmra.mxu0 %v305
      %v513 = vpop.f32.mrf.mxu0
      %v514 = vadd.f32 0.0, %v513
      %515 = vmatmul.f32.gmra.mxu0 %v308
      %v516 = vpop.f32.mrf.mxu0
      %v517 = vadd.f32 0.0, %v516
      %518 = vmatmul.f32.gmra.mxu0 %v311
      %v519 = vpop.f32.mrf.mxu0
      %v520 = vadd.f32 0.0, %v519
      %521 = vmatmul.f32.gmra.mxu0 %v314
      %v522 = vpop.f32.mrf.mxu0
      %v523 = vadd.f32 0.0, %v522
      %524 = vmatmul.f32.gmra.mxu0 %v317
      %v525 = vpop.f32.mrf.mxu0
      %v526 = vadd.f32 0.0, %v525
      %527 = vmatmul.f32.gmra.mxu0 %v320
      %v528 = vpop.f32.mrf.mxu0
      %v529 = vadd.f32 0.0, %v528
      %530 = vmatmul.f32.gmra.mxu0 %v323
      %v531 = vpop.f32.mrf.mxu0
      %v532 = vadd.f32 0.0, %v531
      %533 = vmatmul.f32.gmra.mxu0 %v326
      %v534 = vpop.f32.mrf.mxu0
      %v535 = vadd.f32 0.0, %v534
      %536 = vmatmul.f32.gmra.mxu0 %v329
      %v537 = vpop.f32.mrf.mxu0
      %v538 = vadd.f32 0.0, %v537
      %539 = vmatmul.f32.gmra.mxu0 %v332
      %v540 = vpop.f32.mrf.mxu0
      %v541 = vadd.f32 0.0, %v540
      %542 = vmatmul.f32.gmra.mxu0 %v335
      %v543 = vpop.f32.mrf.mxu0
      %v544 = vadd.f32 0.0, %v543
      %545 = vmatmul.f32.gmra.mxu0 %v338
      %v546 = vpop.f32.mrf.mxu0
      %v547 = vadd.f32 0.0, %v546
      %548 = vmatmul.f32.gmra.mxu0 %v341
      %v549 = vpop.f32.mrf.mxu0
      %v550 = vadd.f32 0.0, %v549
      %551 = vmatmul.f32.gmra.mxu0 %v344
      %v552 = vpop.f32.mrf.mxu0
      %v553 = vadd.f32 0.0, %v552
      %554 = vmatmul.f32.gmra.mxu0 %v347
      %v555 = vpop.f32.mrf.mxu0
      %v556 = vadd.f32 0.0, %v555
      %557 = vmatmul.f32.gmra.mxu0 %v350
      %v558 = vpop.f32.mrf.mxu0
      %v559 = vadd.f32 0.0, %v558
      %560 = vmatmul.f32.gmra.mxu0 %v353
      %v561 = vpop.f32.mrf.mxu0
      %v562 = vadd.f32 0.0, %v561
      %563 = vmatmul.f32.gmra.mxu0 %v356
      %v564 = vpop.f32.mrf.mxu0
      %v565 = vadd.f32 0.0, %v564
      %566 = vmatmul.f32.gmra.mxu0 %v359
      %v567 = vpop.f32.mrf.mxu0
      %v568 = vadd.f32 0.0, %v567
      %569 = vmatmul.f32.gmra.mxu0 %v362
      %v570 = vpop.f32.mrf.mxu0
      %v571 = vadd.f32 0.0, %v570
      %572 = vmatmul.f32.gmra.mxu0 %v365
      %v573 = vpop.f32.mrf.mxu0
      %v574 = vadd.f32 0.0, %v573
      %575 = vmatmul.f32.gmra.mxu0 %v368
      %v576 = vpop.f32.mrf.mxu0
      %v577 = vadd.f32 0.0, %v576
      %578 = vmatmul.f32.gmra.mxu0 %v371
      %v579 = vpop.f32.mrf.mxu0
      %v580 = vadd.f32 0.0, %v579
      %581 = vmatmul.f32.gmra.mxu0 %v374
      %v582 = vpop.f32.mrf.mxu0
      %v583 = vadd.f32 0.0, %v582
      %584 = vmatmul.f32.gmra.mxu0 %v377
      %v585 = vpop.f32.mrf.mxu0
      %v586 = vadd.f32 0.0, %v585
      %587 = vmatmul.f32.gmra.mxu0 %v380
      %v588 = vpop.f32.mrf.mxu0
      %v589 = vadd.f32 0.0, %v588
      %590 = vmatmul.f32.gmra.mxu0 %v383
      %v591 = vpop.f32.mrf.mxu0
      %v592 = vadd.f32 0.0, %v591
      %593 = vmatmul.f32.gmra.mxu0 %v386
      %v594 = vpop.f32.mrf.mxu0
      %v595 = vadd.f32 0.0, %v594
      %596 = vmatmul.f32.gmra.mxu0 %v389
      %v597 = vpop.f32.mrf.mxu0
      %v598 = vadd.f32 0.0, %v597
      %599 = vmatmul.f32.gmra.mxu0 %v392
      %v600 = vpop.f32.mrf.mxu0
      %v601 = vadd.f32 0.0, %v600
      %602 = vmatmul.f32.gmra.mxu0 %v395
      %v603 = vpop.f32.mrf.mxu0
      %v604 = vadd.f32 0.0, %v603
      %605 = vmatmul.f32.gmra.mxu0 %v398
      %v606 = vpop.f32.mrf.mxu0
      %v607 = vadd.f32 0.0, %v606
      %608 = vmatmul.f32.gmra.mxu0 %v401
      %v609 = vpop.f32.mrf.mxu0
      %v610 = vadd.f32 0.0, %v609
      %611 = vmatmul.f32.gmra.mxu0 %v404
      %v612 = vpop.f32.mrf.mxu0
      %v613 = vadd.f32 0.0, %v612
      %614 = vmatmul.f32.gmra.mxu0 %v407
      %v615 = vpop.f32.mrf.mxu0
      %v616 = vadd.f32 0.0, %v615
      %617 = vmatmul.f32.gmra.mxu0 %v410
      %v618 = vpop.f32.mrf.mxu0
      %v619 = vadd.f32 0.0, %v618
      %620 = vmatmul.f32.gmra.mxu0 %v413
      %v621 = vpop.f32.mrf.mxu0
      %v622 = vadd.f32 0.0, %v621
      %623 = vmatmul.f32.gmra.mxu0 %v416
      %v624 = vpop.f32.mrf.mxu0
      %v625 = vadd.f32 0.0, %v624
      %626 = vmatmul.f32.gmra.mxu0 %v419
      %v627 = vpop.f32.mrf.mxu0
      %v628 = vadd.f32 0.0, %v627
      %629 = vmatmul.f32.gmra.mxu0 %v422
      %v630 = vpop.f32.mrf.mxu0
      %v631 = vadd.f32 0.0, %v630
      %632 = vmatmul.f32.gmra.mxu0 %v425
      %v633 = vpop.f32.mrf.mxu0
      %v634 = vadd.f32 0.0, %v633
      %635 = vmatmul.f32.gmra.mxu0 %v428
      %v636 = vpop.f32.mrf.mxu0
      %v637 = vadd.f32 0.0, %v636
      %638 = vmatmul.f32.gmra.mxu0 %v431
      %v639 = vpop.f32.mrf.mxu0
      %v640 = vadd.f32 0.0, %v639
      %641 = vmatmul.f32.gmra.mxu0 %v434
      %v642 = vpop.f32.mrf.mxu0
      %v643 = vadd.f32 0.0, %v642
      %644 = vmatmul.f32.gmra.mxu0 %v437
      %v645 = vpop.f32.mrf.mxu0
      %v646 = vadd.f32 0.0, %v645
      %647 = vmatmul.f32.gmra.mxu0 %v440
      %v648 = vpop.f32.mrf.mxu0
      %v649 = vadd.f32 0.0, %v648
      %650 = vmatmul.f32.gmra.mxu0 %v443
      %v651 = vpop.f32.mrf.mxu0
      %v652 = vadd.f32 0.0, %v651
      %653 = vmatmul.f32.gmra.mxu0 %v446
      %v654 = vpop.f32.mrf.mxu0
      %v655 = vadd.f32 0.0, %v654
      %656 = vmatmul.f32.gmra.mxu0 %v449
      %v657 = vpop.f32.mrf.mxu0
      %v658 = vadd.f32 0.0, %v657
      %659 = vmatmul.f32.gmra.mxu0 %v452
      %v660 = vpop.f32.mrf.mxu0
      %v661 = vadd.f32 0.0, %v660
      %662 = vmatmul.f32.gmra.mxu0 %v455
      %v663 = vpop.f32.mrf.mxu0
      %v664 = vadd.f32 0.0, %v663
      %665 = vmatmul.f32.gmra.mxu0 %v458
      %v666 = vpop.f32.mrf.mxu0
      %v667 = vadd.f32 0.0, %v666
      %668 = vmatmul.f32.gmra.mxu0 %v461
      %v669 = vpop.f32.mrf.mxu0
      %v670 = vadd.f32 0.0, %v669
      %671 = vmatmul.f32.gmra.mxu0 %v464
      %v672 = vpop.f32.mrf.mxu0
      %v673 = vadd.f32 0.0, %v672
      %674 = vmatmul.f32.gmra.mxu0 %v467
      %v675 = vpop.f32.mrf.mxu0
      %v676 = vadd.f32 0.0, %v675
      %677 = vmatmul.f32.gmra.mxu0 %v470
      %v678 = vpop.f32.mrf.mxu0
      %v679 = vadd.f32 0.0, %v678
      %680 = vmatmul.f32.gmra.mxu0 %v473
      %v681 = vpop.f32.mrf.mxu0
      %v682 = vadd.f32 0.0, %v681
      %683 = vmatmul.f32.gmra.mxu0 %v476
      %v684 = vpop.f32.mrf.mxu0
      %v685 = vadd.f32 0.0, %v684
      %686 = vmatmul.f32.gmra.mxu0 %v479
      %v687 = vpop.f32.mrf.mxu0
      %v688 = vadd.f32 0.0, %v687
      %689 = vmatmul.f32.gmra.mxu0 %v482
      %v690 = vpop.f32.mrf.mxu0
      %v691 = vadd.f32 0.0, %v690
      %692 = vdwg.mxu0
      %v693 = vld [vmem:[%s215] sm:$0xff]
      %v694 = vld [vmem:[%s215 + $0x8] sm:$0xff]
      %v695 = vld [vmem:[%s215 + $0x10] sm:$0xff]
      %v696 = vld [vmem:[%s215 + $0x18] sm:$0xff]
      %v697 = vld [vmem:[%s215 + $0x20] sm:$0xff]
      %v698 = vld [vmem:[%s215 + $0x28] sm:$0xff]
      %v699 = vld [vmem:[%s215 + $0x30] sm:$0xff]
      %v700 = vld [vmem:[%s215 + $0x38] sm:$0xff]
      %v701 = vld [vmem:[%s215 + $0x40] sm:$0xff]
      %v702 = vld [vmem:[%s215 + $0x48] sm:$0xff]
      %v703 = vld [vmem:[%s215 + $0x50] sm:$0xff]
      %v704 = vld [vmem:[%s215 + $0x58] sm:$0xff]
      %v705 = vld [vmem:[%s215 + $0x60] sm:$0xff]
      %v706 = vld [vmem:[%s215 + $0x68] sm:$0xff]
      %v707 = vld [vmem:[%s215 + $0x70] sm:$0xff]
      %v708 = vld [vmem:[%s215 + $0x78] sm:$0xff]
      %v709 = vld [vmem:[%s215 + $0x80] sm:$0xff]
      %v710 = vld [vmem:[%s215 + $0x88] sm:$0xff]
      %v711 = vld [vmem:[%s215 + $0x90] sm:$0xff]
      %v712 = vld [vmem:[%s215 + $0x98] sm:$0xff]
      %v713 = vld [vmem:[%s215 + $0xa0] sm:$0xff]
      %v714 = vld [vmem:[%s215 + $0xa8] sm:$0xff]
      %v715 = vld [vmem:[%s215 + $0xb0] sm:$0xff]
      %v716 = vld [vmem:[%s215 + $0xb8] sm:$0xff]
      %v717 = vld [vmem:[%s215 + $0xc0] sm:$0xff]
      %v718 = vld [vmem:[%s215 + $0xc8] sm:$0xff]
      %v719 = vld [vmem:[%s215 + $0xd0] sm:$0xff]
      %v720 = vld [vmem:[%s215 + $0xd8] sm:$0xff]
      %v721 = vld [vmem:[%s215 + $0xe0] sm:$0xff]
      %v722 = vld [vmem:[%s215 + $0xe8] sm:$0xff]
      %v723 = vld [vmem:[%s215 + $0xf0] sm:$0xff]
      %v724 = vld [vmem:[%s215 + $0xf8] sm:$0xff]
      %v725 = vld [vmem:[%s215 + $0x100] sm:$0xff]
      %v726 = vld [vmem:[%s215 + $0x108] sm:$0xff]
      %v727 = vld [vmem:[%s215 + $0x110] sm:$0xff]
      %v728 = vld [vmem:[%s215 + $0x118] sm:$0xff]
      %v729 = vld [vmem:[%s215 + $0x120] sm:$0xff]
      %v730 = vld [vmem:[%s215 + $0x128] sm:$0xff]
      %v731 = vld [vmem:[%s215 + $0x130] sm:$0xff]
      %v732 = vld [vmem:[%s215 + $0x138] sm:$0xff]
      %v733 = vld [vmem:[%s215 + $0x140] sm:$0xff]
      %v734 = vld [vmem:[%s215 + $0x148] sm:$0xff]
      %v735 = vld [vmem:[%s215 + $0x150] sm:$0xff]
      %v736 = vld [vmem:[%s215 + $0x158] sm:$0xff]
      %v737 = vld [vmem:[%s215 + $0x160] sm:$0xff]
      %v738 = vld [vmem:[%s215 + $0x168] sm:$0xff]
      %v739 = vld [vmem:[%s215 + $0x170] sm:$0xff]
      %v740 = vld [vmem:[%s215 + $0x178] sm:$0xff]
      %v741 = vld [vmem:[%s215 + $0x180] sm:$0xff]
      %v742 = vld [vmem:[%s215 + $0x188] sm:$0xff]
      %v743 = vld [vmem:[%s215 + $0x190] sm:$0xff]
      %v744 = vld [vmem:[%s215 + $0x198] sm:$0xff]
      %v745 = vld [vmem:[%s215 + $0x1a0] sm:$0xff]
      %v746 = vld [vmem:[%s215 + $0x1a8] sm:$0xff]
      %v747 = vld [vmem:[%s215 + $0x1b0] sm:$0xff]
      %v748 = vld [vmem:[%s215 + $0x1b8] sm:$0xff]
      %v749 = vld [vmem:[%s215 + $0x1c0] sm:$0xff]
      %v750 = vld [vmem:[%s215 + $0x1c8] sm:$0xff]
      %v751 = vld [vmem:[%s215 + $0x1d0] sm:$0xff]
      %v752 = vld [vmem:[%s215 + $0x1d8] sm:$0xff]
      %v753 = vld [vmem:[%s215 + $0x1e0] sm:$0xff]
      %v754 = vld [vmem:[%s215 + $0x1e8] sm:$0xff]
      %v755 = vld [vmem:[%s215 + $0x1f0] sm:$0xff]
      %v756 = vld [vmem:[%s215 + $0x1f8] sm:$0xff]
      %v757 = vadd.f32 %v693, %v502
      %v758 = vadd.f32 %v694, %v505
      %v759 = vadd.f32 %v695, %v508
      %v760 = vadd.f32 %v696, %v511
      %v761 = vadd.f32 %v697, %v514
      %v762 = vadd.f32 %v698, %v517
      %v763 = vadd.f32 %v699, %v520
      %v764 = vadd.f32 %v700, %v523
      %v765 = vadd.f32 %v701, %v526
      %v766 = vadd.f32 %v702, %v529
      %v767 = vadd.f32 %v703, %v532
      %v768 = vadd.f32 %v704, %v535
      %v769 = vadd.f32 %v705, %v538
      %v770 = vadd.f32 %v706, %v541
      %v771 = vadd.f32 %v707, %v544
      %v772 = vadd.f32 %v708, %v547
      %v773 = vadd.f32 %v709, %v550
      %v774 = vadd.f32 %v710, %v553
      %v775 = vadd.f32 %v711, %v556
      %v776 = vadd.f32 %v712, %v559
      %v777 = vadd.f32 %v713, %v562
      %v778 = vadd.f32 %v714, %v565
      %v779 = vadd.f32 %v715, %v568
      %v780 = vadd.f32 %v716, %v571
      %v781 = vadd.f32 %v717, %v574
      %v782 = vadd.f32 %v718, %v577
      %v783 = vadd.f32 %v719, %v580
      %v784 = vadd.f32 %v720, %v583
      %v785 = vadd.f32 %v721, %v586
      %v786 = vadd.f32 %v722, %v589
      %v787 = vadd.f32 %v723, %v592
      %v788 = vadd.f32 %v724, %v595
      %v789 = vadd.f32 %v725, %v598
      %v790 = vadd.f32 %v726, %v601
      %v791 = vadd.f32 %v727, %v604
      %v792 = vadd.f32 %v728, %v607
      %v793 = vadd.f32 %v729, %v610
      %v794 = vadd.f32 %v730, %v613
      %v795 = vadd.f32 %v731, %v616
      %v796 = vadd.f32 %v732, %v619
      %v797 = vadd.f32 %v733, %v622
      %v798 = vadd.f32 %v734, %v625
      %v799 = vadd.f32 %v735, %v628
      %v800 = vadd.f32 %v736, %v631
      %v801 = vadd.f32 %v737, %v634
      %v802 = vadd.f32 %v738, %v637
      %v803 = vadd.f32 %v739, %v640
      %v804 = vadd.f32 %v740, %v643
      %v805 = vadd.f32 %v741, %v646
      %v806 = vadd.f32 %v742, %v649
      %v807 = vadd.f32 %v743, %v652
      %v808 = vadd.f32 %v744, %v655
      %v809 = vadd.f32 %v745, %v658
      %v810 = vadd.f32 %v746, %v661
      %v811 = vadd.f32 %v747, %v664
      %v812 = vadd.f32 %v748, %v667
      %v813 = vadd.f32 %v749, %v670
      %v814 = vadd.f32 %v750, %v673
      %v815 = vadd.f32 %v751, %v676
      %v816 = vadd.f32 %v752, %v679
      %v817 = vadd.f32 %v753, %v682
      %v818 = vadd.f32 %v754, %v685
      %v819 = vadd.f32 %v755, %v688
      %v820 = vadd.f32 %v756, %v691
      %v821 = vld [vmem:[%s3] sm:$0x1]
      %v823 = vperm.slane %v821, 0
      %v825 = vadd.f32 %v757, %v823
      %v826 = vadd.f32 %v758, %v823
      %v827 = vadd.f32 %v759, %v823
      %v828 = vadd.f32 %v760, %v823
      %v829 = vadd.f32 %v761, %v823
      %v830 = vadd.f32 %v762, %v823
      %v831 = vadd.f32 %v763, %v823
      %v832 = vadd.f32 %v764, %v823
      %v833 = vadd.f32 %v765, %v823
      %v834 = vadd.f32 %v766, %v823
      %v835 = vadd.f32 %v767, %v823
      %v836 = vadd.f32 %v768, %v823
      %v837 = vadd.f32 %v769, %v823
      %v838 = vadd.f32 %v770, %v823
      %v839 = vadd.f32 %v771, %v823
      %v840 = vadd.f32 %v772, %v823
      %v841 = vadd.f32 %v773, %v823
      %v842 = vadd.f32 %v774, %v823
      %v843 = vadd.f32 %v775, %v823
      %v844 = vadd.f32 %v776, %v823
      %v845 = vadd.f32 %v777, %v823
      %v846 = vadd.f32 %v778, %v823
      %v847 = vadd.f32 %v779, %v823
      %v848 = vadd.f32 %v780, %v823
      %v849 = vadd.f32 %v781, %v823
      %v850 = vadd.f32 %v782, %v823
      %v851 = vadd.f32 %v783, %v823
      %v852 = vadd.f32 %v784, %v823
      %v853 = vadd.f32 %v785, %v823
      %v854 = vadd.f32 %v786, %v823
      %v855 = vadd.f32 %v787, %v823
      %v856 = vadd.f32 %v788, %v823
      %v857 = vadd.f32 %v789, %v823
      %v858 = vadd.f32 %v790, %v823
      %v859 = vadd.f32 %v791, %v823
      %v860 = vadd.f32 %v792, %v823
      %v861 = vadd.f32 %v793, %v823
      %v862 = vadd.f32 %v794, %v823
      %v863 = vadd.f32 %v795, %v823
      %v864 = vadd.f32 %v796, %v823
      %v865 = vadd.f32 %v797, %v823
      %v866 = vadd.f32 %v798, %v823
      %v867 = vadd.f32 %v799, %v823
      %v868 = vadd.f32 %v800, %v823
      %v869 = vadd.f32 %v801, %v823
      %v870 = vadd.f32 %v802, %v823
      %v871 = vadd.f32 %v803, %v823
      %v872 = vadd.f32 %v804, %v823
      %v873 = vadd.f32 %v805, %v823
      %v874 = vadd.f32 %v806, %v823
      %v875 = vadd.f32 %v807, %v823
      %v876 = vadd.f32 %v808, %v823
      %v877 = vadd.f32 %v809, %v823
      %v878 = vadd.f32 %v810, %v823
      %v879 = vadd.f32 %v811, %v823
      %v880 = vadd.f32 %v812, %v823
      %v881 = vadd.f32 %v813, %v823
      %v882 = vadd.f32 %v814, %v823
      %v883 = vadd.f32 %v815, %v823
      %v884 = vadd.f32 %v816, %v823
      %v885 = vadd.f32 %v817, %v823
      %v886 = vadd.f32 %v818, %v823
      %v887 = vadd.f32 %v819, %v823
      %v888 = vadd.f32 %v820, %v823
      %889 = vst.msk [vmem:[%s221] sm:$0xff] %vm291, %v825
      %890 = vst.msk [vmem:[%s221 + $0x8] sm:$0xff] %vm291, %v826
      %891 = vst.msk [vmem:[%s221 + $0x10] sm:$0xff] %vm291, %v827
      %892 = vst.msk [vmem:[%s221 + $0x18] sm:$0xff] %vm291, %v828
      %893 = vst.msk [vmem:[%s221 + $0x20] sm:$0xff] %vm291, %v829
      %894 = vst.msk [vmem:[%s221 + $0x28] sm:$0xff] %vm291, %v830
      %895 = vst.msk [vmem:[%s221 + $0x30] sm:$0xff] %vm291, %v831
      %896 = vst.msk [vmem:[%s221 + $0x38] sm:$0xff] %vm291, %v832
      %897 = vst.msk [vmem:[%s221 + $0x40] sm:$0xff] %vm291, %v833
      %898 = vst.msk [vmem:[%s221 + $0x48] sm:$0xff] %vm291, %v834
      %899 = vst.msk [vmem:[%s221 + $0x50] sm:$0xff] %vm291, %v835
      %900 = vst.msk [vmem:[%s221 + $0x58] sm:$0xff] %vm291, %v836
      %901 = vst.msk [vmem:[%s221 + $0x60] sm:$0xff] %vm291, %v837
      %902 = vst.msk [vmem:[%s221 + $0x68] sm:$0xff] %vm291, %v838
      %903 = vst.msk [vmem:[%s221 + $0x70] sm:$0xff] %vm291, %v839
      %904 = vst.msk [vmem:[%s221 + $0x78] sm:$0xff] %vm291, %v840
      %905 = vst.msk [vmem:[%s221 + $0x80] sm:$0xff] %vm291, %v841
      %906 = vst.msk [vmem:[%s221 + $0x88] sm:$0xff] %vm291, %v842
      %907 = vst.msk [vmem:[%s221 + $0x90] sm:$0xff] %vm291, %v843
      %908 = vst.msk [vmem:[%s221 + $0x98] sm:$0xff] %vm291, %v844
      %909 = vst.msk [vmem:[%s221 + $0xa0] sm:$0xff] %vm291, %v845
      %910 = vst.msk [vmem:[%s221 + $0xa8] sm:$0xff] %vm291, %v846
      %911 = vst.msk [vmem:[%s221 + $0xb0] sm:$0xff] %vm291, %v847
      %912 = vst.msk [vmem:[%s221 + $0xb8] sm:$0xff] %vm291, %v848
      %913 = vst.msk [vmem:[%s221 + $0xc0] sm:$0xff] %vm291, %v849
      %914 = vst.msk [vmem:[%s221 + $0xc8] sm:$0xff] %vm291, %v850
      %915 = vst.msk [vmem:[%s221 + $0xd0] sm:$0xff] %vm291, %v851
      %916 = vst.msk [vmem:[%s221 + $0xd8] sm:$0xff] %vm291, %v852
      %917 = vst.msk [vmem:[%s221 + $0xe0] sm:$0xff] %vm291, %v853
      %918 = vst.msk [vmem:[%s221 + $0xe8] sm:$0xff] %vm291, %v854
      %919 = vst.msk [vmem:[%s221 + $0xf0] sm:$0xff] %vm291, %v855
      %920 = vst.msk [vmem:[%s221 + $0xf8] sm:$0xff] %vm291, %v856
      %921 = vst.msk [vmem:[%s221 + $0x100] sm:$0xff] %vm291, %v857
      %922 = vst.msk [vmem:[%s221 + $0x108] sm:$0xff] %vm291, %v858
      %923 = vst.msk [vmem:[%s221 + $0x110] sm:$0xff] %vm291, %v859
      %924 = vst.msk [vmem:[%s221 + $0x118] sm:$0xff] %vm291, %v860
      %925 = vst.msk [vmem:[%s221 + $0x120] sm:$0xff] %vm291, %v861
      %926 = vst.msk [vmem:[%s221 + $0x128] sm:$0xff] %vm291, %v862
      %927 = vst.msk [vmem:[%s221 + $0x130] sm:$0xff] %vm291, %v863
      %928 = vst.msk [vmem:[%s221 + $0x138] sm:$0xff] %vm291, %v864
      %929 = vst.msk [vmem:[%s221 + $0x140] sm:$0xff] %vm291, %v865
      %930 = vst.msk [vmem:[%s221 + $0x148] sm:$0xff] %vm291, %v866
      %931 = vst.msk [vmem:[%s221 + $0x150] sm:$0xff] %vm291, %v867
      %932 = vst.msk [vmem:[%s221 + $0x158] sm:$0xff] %vm291, %v868
      %933 = vst.msk [vmem:[%s221 + $0x160] sm:$0xff] %vm291, %v869
      %934 = vst.msk [vmem:[%s221 + $0x168] sm:$0xff] %vm291, %v870
      %935 = vst.msk [vmem:[%s221 + $0x170] sm:$0xff] %vm291, %v871
      %936 = vst.msk [vmem:[%s221 + $0x178] sm:$0xff] %vm291, %v872
      %937 = vst.msk [vmem:[%s221 + $0x180] sm:$0xff] %vm291, %v873
      %938 = vst.msk [vmem:[%s221 + $0x188] sm:$0xff] %vm291, %v874
      %939 = vst.msk [vmem:[%s221 + $0x190] sm:$0xff] %vm291, %v875
      %940 = vst.msk [vmem:[%s221 + $0x198] sm:$0xff] %vm291, %v876
      %941 = vst.msk [vmem:[%s221 + $0x1a0] sm:$0xff] %vm291, %v877
      %942 = vst.msk [vmem:[%s221 + $0x1a8] sm:$0xff] %vm291, %v878
      %943 = vst.msk [vmem:[%s221 + $0x1b0] sm:$0xff] %vm291, %v879
      %944 = vst.msk [vmem:[%s221 + $0x1b8] sm:$0xff] %vm291, %v880
      %945 = vst.msk [vmem:[%s221 + $0x1c0] sm:$0xff] %vm291, %v881
      %946 = vst.msk [vmem:[%s221 + $0x1c8] sm:$0xff] %vm291, %v882
      %947 = vst.msk [vmem:[%s221 + $0x1d0] sm:$0xff] %vm291, %v883
      %948 = vst.msk [vmem:[%s221 + $0x1d8] sm:$0xff] %vm291, %v884
      %949 = vst.msk [vmem:[%s221 + $0x1e0] sm:$0xff] %vm291, %v885
      %950 = vst.msk [vmem:[%s221 + $0x1e8] sm:$0xff] %vm291, %v886
      %951 = vst.msk [vmem:[%s221 + $0x1f0] sm:$0xff] %vm291, %v887
      %952 = vst.msk [vmem:[%s221 + $0x1f8] sm:$0xff] %vm291, %v888
      %s953 = smul.u32 64, %s15
      %p954 = scmp.lt.s32.totalorder %s953, 127
      %s955 = scalar_select %p954, %s953, 127
      %s956 = smul.addr %s955, 8
      %s957 = scalar_lea.vmem %s4, %s956
      // Predicated region
      $region37: #{ssmlp_forward.30} parent=35 // pred_check
        %p958 = pneg %p127
      $region38: #{ssmlp_forward.30} parent=35 // pred_check_branch
        %960 = sbr.rel (%p958) target = $region40
      $region39: #{ssmlp_forward.30} parent=35 // pred_region
        %s961 = smul.u32 64, %s15
      $region40: #{ssmlp_forward.30} parent=35 // pred_fallthru
        _
    $region36: #{ssmlp_forward.30} parent=5 // pred_fallthru
      _
    %p962 = scmp.le.s32.totalorder 2, %s10
    // Predicated region
    $region41: #{ssmlp_forward.30} parent=5 // pred_check
      %p963 = pneg %p962
    $region42: #{ssmlp_forward.30} parent=5 // pred_check_branch
      %965 = sbr.rel (%p963) target = $region44
    $region43: #{ssmlp_forward.30} parent=5 // pred_region
      %s966 = ssub.s32 %s10, 2
      // Predicated region
      $region45: #{ssmlp_forward.30} parent=43 // pred_check
        %p967 = pneg %p133
      $region46: #{ssmlp_forward.30} parent=43 // pred_check_branch
        %969 = sbr.rel (%p967) target = $region48
      $region47: #{ssmlp_forward.30} parent=43 // pred_region
        %s970 = smul.u32 64, %s16
        %p971 = scmp.lt.s32.totalorder %s970, 127
        %s972 = scalar_select %p971, %s970, 127
        %s973 = smul.addr %s972, 8
        %s974 = scalar_lea.vmem %s4, %s973
      $region48: #{ssmlp_forward.30} parent=43 // pred_fallthru
        _
    $region44: #{ssmlp_forward.30} parent=5 // pred_fallthru
      _
  $region6: #{ssmlp_forward.30} parent=0 // loop_footer
    %s14 = sadd.s32 1, %s10
  $region7: #{ssmlp_forward.30} parent=0 // loop_footer_branch
    %9 = sbr.rel target = $region3
  $region8: #{ssmlp_forward.30} parent=0 // loop_exit
    _

// kernel: ssmlp_forward.33
$region0: #{ssmlp_forward.33}
  #allocation0 [shape = 'u32[]', space=smem, size = 0x4, offset = 0x4, fixed_abs, tag = 'smem constant byte address 0x4 - core index']
  #allocation1 [shape = 'u32[72,128]{1,0:T(1,128)}', space=vmem, size = 0x9000, scoped, tag = 'internal scratch']
  %s0 = inlined_call_operand.vmem [shape: f32[2048,16], index: 0, kind: input, shape index: {}]
  %s1 = inlined_call_operand.vmem [shape: f32[16,16], index: 1, kind: input, shape index: {}]
  %s2 = inlined_call_operand.vmem [shape: f32[1,16], index: 2, kind: input, shape index: {}]
  %s3 = inlined_call_operand.vmem [shape: f32[2048,16], index: 3, kind: output, shape index: {}]
  %s4 = sld [smem:[#allocation0]]
  $region45: #{ssmlp_forward.33} parent=0
    _
  %s6 = ssub.s32 1, %s4
  %s7 = scalar_select 0, %s6, %s4
  loop: start=0, step=1, limit=6
  $region2: #{ssmlp_forward.33} parent=0 // loop_pre_header
    _
  $region3: #{ssmlp_forward.33} parent=0 // loop_header
    %s9 = sphi 0, %s13
    %p10 = scmp.ge.s32.totalorder %s9, 6
    %s19 = sphi 0, %s21
    %s22 = sphi 0, %s19
    %s23 = sphi 0, %s22
    %s39 = sphi 0, %s23
    %s43 = sphi 0, %s43
    %s45 = sphi 0, %s43
    %s46 = sphi 0, %s45
    %s60 = sphi 0, %s46
    %s64 = sphi 0, %s64
    %s66 = sphi 0, %s64
    %s67 = sphi 0, %s66
    %s81 = sphi 0, %s67
    %s87 = sphi 0, %s89
    %s90 = sphi 0, %s87
    %s91 = sphi 0, %s90
    %s107 = sphi 0, %s91
  $region4: #{ssmlp_forward.33} parent=0 // loop_header_branch
    %12 = sbr.rel (%p10) target = $region8
  $region5: #{ssmlp_forward.33} parent=0 // loop_body
    %s14 = ssub.s32 %s9, 1
    %s15 = ssub.s32 %s9, 2
    %s16 = sadd.s32 %s9, 1
    %s17 = ssub.s32 %s9, %s16
    %p18 = scmp.eq.s32.totalorder %s17, 0
    %s20 = sadd.s32 %s19, 1
    %s21 = scalar_select %p18, %s19, %s20
    %p24 = pneg %p18
    %p25 = scmp.eq.s32.totalorder %s9, 3
    %p26 = por %p24, %p25
    %p27 = scmp.ne.s32.totalorder %s19, %s22
    %p28 = scmp.eq.s32.totalorder %s9, 0
    %p29 = por %p27, %p28
    %p30 = scmp.ne.s32.totalorder %s19, %s22
    %p31 = scmp.eq.s32.totalorder %s14, 3
    %p32 = por %p30, %p31
    %p33 = scmp.ne.s32.totalorder %s22, %s23
    %p34 = scmp.eq.s32.totalorder %s14, 0
    %p35 = por %p33, %p34
    %p36 = scmp.ne.s32.totalorder %s22, %s23
    %p37 = scmp.eq.s32.totalorder %s15, 3
    %p38 = por %p36, %p37
    %p40 = scmp.ne.s32.totalorder %s23, %s39
    %p41 = scmp.eq.s32.totalorder %s15, 0
    %p42 = por %p40, %p41
    %s44 = sadd.s32 %s43, 1
    %p47 = scmp.eq.s32.totalorder %s9, 3
    %p48 = scmp.ne.s32.totalorder %s43, %s45
    %p49 = scmp.eq.s32.totalorder %s9, 0
    %p50 = por %p48, %p49
    %p51 = scmp.ne.s32.totalorder %s43, %s45
    %p52 = scmp.eq.s32.totalorder %s14, 3
    %p53 = por %p51, %p52
    %p54 = scmp.ne.s32.totalorder %s45, %s46
    %p55 = scmp.eq.s32.totalorder %s14, 0
    %p56 = por %p54, %p55
    %p57 = scmp.ne.s32.totalorder %s45, %s46
    %p58 = scmp.eq.s32.totalorder %s15, 3
    %p59 = por %p57, %p58
    %p61 = scmp.ne.s32.totalorder %s46, %s60
    %p62 = scmp.eq.s32.totalorder %s15, 0
    %p63 = por %p61, %p62
    %s65 = sadd.s32 %s64, 1
    %p68 = scmp.eq.s32.totalorder %s9, 3
    %p69 = scmp.ne.s32.totalorder %s64, %s66
    %p70 = scmp.eq.s32.totalorder %s9, 0
    %p71 = por %p69, %p70
    %p72 = scmp.ne.s32.totalorder %s64, %s66
    %p73 = scmp.eq.s32.totalorder %s14, 3
    %p74 = por %p72, %p73
    %p75 = scmp.ne.s32.totalorder %s66, %s67
    %p76 = scmp.eq.s32.totalorder %s14, 0
    %p77 = por %p75, %p76
    %p78 = scmp.ne.s32.totalorder %s66, %s67
    %p79 = scmp.eq.s32.totalorder %s15, 3
    %p80 = por %p78, %p79
    %p82 = scmp.ne.s32.totalorder %s67, %s81
    %p83 = scmp.eq.s32.totalorder %s15, 0
    %p84 = por %p82, %p83
    %s85 = ssub.s32 %s9, %s16
    %p86 = scmp.eq.s32.totalorder %s85, 0
    %s88 = sadd.s32 %s87, 1
    %s89 = scalar_select %p86, %s87, %s88
    %p92 = pneg %p86
    %p93 = scmp.eq.s32.totalorder %s9, 3
    %p94 = por %p92, %p93
    %p95 = scmp.ne.s32.totalorder %s87, %s90
    %p96 = scmp.eq.s32.totalorder %s9, 0
    %p97 = por %p95, %p96
    %p98 = scmp.ne.s32.totalorder %s87, %s90
    %p99 = scmp.eq.s32.totalorder %s14, 3
    %p100 = por %p98, %p99
    %p101 = scmp.ne.s32.totalorder %s90, %s91
    %p102 = scmp.eq.s32.totalorder %s14, 0
    %p103 = por %p101, %p102
    %p104 = scmp.ne.s32.totalorder %s90, %s91
    %p105 = scmp.eq.s32.totalorder %s15, 3
    %p106 = por %p104, %p105
    %p108 = scmp.ne.s32.totalorder %s91, %s107
    %p109 = scmp.eq.s32.totalorder %s15, 0
    %p110 = por %p108, %p109
    %p111 = scmp.le.s32.totalorder 1, %s9
    %p112 = scmp.lt.s32.totalorder %s9, 5
    %p113 = pnand %p111, %p112
    %p114 = pneg %p113
    // Predicated region
    $region9: #{ssmlp_forward.33} parent=5 // pred_check
      _
    $region10: #{ssmlp_forward.33} parent=5 // pred_check_branch
      %116 = sbr.rel (%p113) target = $region12
    $region11: #{ssmlp_forward.33} parent=5 // pred_region
      %s117 = ssub.s32 %s9, 1
      // Predicated region
      $region13: #{ssmlp_forward.33} parent=11 // pred_check
        %p118 = pneg %p56
      $region14: #{ssmlp_forward.33} parent=11 // pred_check_branch
        %120 = sbr.rel (%p118) target = $region16
      $region15: #{ssmlp_forward.33} parent=11 // pred_region
        _
      $region16: #{ssmlp_forward.33} parent=11 // pred_fallthru
        _
      // Predicated region
      $region17: #{ssmlp_forward.33} parent=11 // pred_check
        %p121 = pneg %p77
      $region18: #{ssmlp_forward.33} parent=11 // pred_check_branch
        %123 = sbr.rel (%p121) target = $region20
      $region19: #{ssmlp_forward.33} parent=11 // pred_region
        _
      $region20: #{ssmlp_forward.33} parent=11 // pred_fallthru
        _
    $region12: #{ssmlp_forward.33} parent=5 // pred_fallthru
      _
    %p124 = scmp.lt.s32.totalorder %s9, 4
    // Predicated region
    $region21: #{ssmlp_forward.33} parent=5 // pred_check
      %p125 = pneg %p124
    $region22: #{ssmlp_forward.33} parent=5 // pred_check_branch
      %127 = sbr.rel (%p125) target = $region24
    $region23: #{ssmlp_forward.33} parent=5 // pred_region
      // Predicated region
      $region25: #{ssmlp_forward.33} parent=23 // pred_check
        %p128 = pneg %p29
      $region26: #{ssmlp_forward.33} parent=23 // pred_check_branch
        %130 = sbr.rel (%p128) target = $region28
      $region27: #{ssmlp_forward.33} parent=23 // pred_region
        %s131 = smul.u32 64, %s9
        %p132 = scmp.lt.s32.totalorder %s131, 255
        %s133 = scalar_select %p132, %s131, 255
        %s134 = smul.addr %s133, 8
        %s135 = scalar_lea.vmem %s0, %s134
        %s136 = smul.u32 64, %s9
      $region28: #{ssmlp_forward.33} parent=23 // pred_fallthru
        _
    $region24: #{ssmlp_forward.33} parent=5 // pred_fallthru
      _
    %p137 = scmp.le.s32.totalorder 1, %s9
    %p138 = scmp.lt.s32.totalorder %s9, 5
    %p139 = pnand %p137, %p138
    %p140 = pneg %p139
    // Predicated region
    $region29: #{ssmlp_forward.33} parent=5 // pred_check
      _
    $region30: #{ssmlp_forward.33} parent=5 // pred_check_branch
      %142 = sbr.rel (%p139) target = $region32
    $region31: #{ssmlp_forward.33} parent=5 // pred_region
      %s143 = ssub.s32 %s9, 1
      %s144 = smul.u32 64, %s14
      %p145 = scmp.lt.s32.totalorder %s144, 255
      %s146 = scalar_select %p145, %s144, 255
      %s147 = smul.addr %s146, 8
      %s148 = scalar_lea.vmem %s0, %s147
      %p149 = pneg %p35
      %p150 = pneg %p32
      %p151 = pneg %p56
      %p152 = pneg %p53
      %p153 = pneg %p77
      %p154 = pneg %p74
      %p155 = pneg %p103
      %p156 = pneg %p100
      %s157 = smul.u32 64, %s14
      %p158 = scmp.lt.s32.totalorder %s157, 255
      %s159 = scalar_select %p158, %s157, 255
      %s160 = smul.addr %s159, 8
      %s161 = scalar_lea.vmem %s3, %s160
      %s162 = smul.u32 64, %s14
      %p163 = scmp.lt.s32.totalorder %s162, 255
      %s164 = scalar_select %p163, %s162, 255
      %s165 = smul.addr %s164, 8
      %s166 = scalar_lea.vmem %s0, %s165
      %s167 = smul.u32 64, %s14
      %s168 = smul.u32 64, %s14
      %p169 = scmp.lt.s32.totalorder %s168, 255
      %s170 = scalar_select %p169, %s168, 255
      %s171 = smul.addr %s170, 8
      %s172 = scalar_lea.vmem %s3, %s171
      %s173 = smul.u32 64, %s14
      %v174 = vld [vmem:[%s166] sm:$0xff]
      %v175 = vld [vmem:[%s166 + $0x8] sm:$0xff]
      %v176 = vld [vmem:[%s166 + $0x10] sm:$0xff]
      %v177 = vld [vmem:[%s166 + $0x18] sm:$0xff]
      %v178 = vld [vmem:[%s166 + $0x20] sm:$0xff]
      %v179 = vld [vmem:[%s166 + $0x28] sm:$0xff]
      %v180 = vld [vmem:[%s166 + $0x30] sm:$0xff]
      %v181 = vld [vmem:[%s166 + $0x38] sm:$0xff]
      %v182 = vld [vmem:[%s166 + $0x40] sm:$0xff]
      %v183 = vld [vmem:[%s166 + $0x48] sm:$0xff]
      %v184 = vld [vmem:[%s166 + $0x50] sm:$0xff]
      %v185 = vld [vmem:[%s166 + $0x58] sm:$0xff]
      %v186 = vld [vmem:[%s166 + $0x60] sm:$0xff]
      %v187 = vld [vmem:[%s166 + $0x68] sm:$0xff]
      %v188 = vld [vmem:[%s166 + $0x70] sm:$0xff]
      %v189 = vld [vmem:[%s166 + $0x78] sm:$0xff]
      %v190 = vld [vmem:[%s166 + $0x80] sm:$0xff]
      %v191 = vld [vmem:[%s166 + $0x88] sm:$0xff]
      %v192 = vld [vmem:[%s166 + $0x90] sm:$0xff]
      %v193 = vld [vmem:[%s166 + $0x98] sm:$0xff]
      %v194 = vld [vmem:[%s166 + $0xa0] sm:$0xff]
      %v195 = vld [vmem:[%s166 + $0xa8] sm:$0xff]
      %v196 = vld [vmem:[%s166 + $0xb0] sm:$0xff]
      %v197 = vld [vmem:[%s166 + $0xb8] sm:$0xff]
      %v198 = vld [vmem:[%s166 + $0xc0] sm:$0xff]
      %v199 = vld [vmem:[%s166 + $0xc8] sm:$0xff]
      %v200 = vld [vmem:[%s166 + $0xd0] sm:$0xff]
      %v201 = vld [vmem:[%s166 + $0xd8] sm:$0xff]
      %v202 = vld [vmem:[%s166 + $0xe0] sm:$0xff]
      %v203 = vld [vmem:[%s166 + $0xe8] sm:$0xff]
      %v204 = vld [vmem:[%s166 + $0xf0] sm:$0xff]
      %v205 = vld [vmem:[%s166 + $0xf8] sm:$0xff]
      %v206 = vld [vmem:[%s166 + $0x100] sm:$0xff]
      %v207 = vld [vmem:[%s166 + $0x108] sm:$0xff]
      %v208 = vld [vmem:[%s166 + $0x110] sm:$0xff]
      %v209 = vld [vmem:[%s166 + $0x118] sm:$0xff]
      %v210 = vld [vmem:[%s166 + $0x120] sm:$0xff]
      %v211 = vld [vmem:[%s166 + $0x128] sm:$0xff]
      %v212 = vld [vmem:[%s166 + $0x130] sm:$0xff]
      %v213 = vld [vmem:[%s166 + $0x138] sm:$0xff]
      %v214 = vld [vmem:[%s166 + $0x140] sm:$0xff]
      %v215 = vld [vmem:[%s166 + $0x148] sm:$0xff]
      %v216 = vld [vmem:[%s166 + $0x150] sm:$0xff]
      %v217 = vld [vmem:[%s166 + $0x158] sm:$0xff]
      %v218 = vld [vmem:[%s166 + $0x160] sm:$0xff]
      %v219 = vld [vmem:[%s166 + $0x168] sm:$0xff]
      %v220 = vld [vmem:[%s166 + $0x170] sm:$0xff]
      %v221 = vld [vmem:[%s166 + $0x178] sm:$0xff]
      %v222 = vld [vmem:[%s166 + $0x180] sm:$0xff]
      %v223 = vld [vmem:[%s166 + $0x188] sm:$0xff]
      %v224 = vld [vmem:[%s166 + $0x190] sm:$0xff]
      %v225 = vld [vmem:[%s166 + $0x198] sm:$0xff]
      %v226 = vld [vmem:[%s166 + $0x1a0] sm:$0xff]
      %v227 = vld [vmem:[%s166 + $0x1a8] sm:$0xff]
      %v228 = vld [vmem:[%s166 + $0x1b0] sm:$0xff]
      %v229 = vld [vmem:[%s166 + $0x1b8] sm:$0xff]
      %v230 = vld [vmem:[%s166 + $0x1c0] sm:$0xff]
      %v231 = vld [vmem:[%s166 + $0x1c8] sm:$0xff]
      %v232 = vld [vmem:[%s166 + $0x1d0] sm:$0xff]
      %v233 = vld [vmem:[%s166 + $0x1d8] sm:$0xff]
      %v234 = vld [vmem:[%s166 + $0x1e0] sm:$0xff]
      %v235 = vld [vmem:[%s166 + $0x1e8] sm:$0xff]
      %v236 = vld [vmem:[%s166 + $0x1f0] sm:$0xff]
      %v237 = vld [vmem:[%s166 + $0x1f8] sm:$0xff]
      %v238 = vld [vmem:[%s1] sm:$0xff]
      %v239 = vld [vmem:[%s1 + $0x8] sm:$0xff]
      %v240 = vld [vmem:[%s2] sm:$0x1]
      %v242 = vperm.slane %v240, 0
      %vm244 = vcmask 130048
      %v246 = vsel %vm244, %v174, 0
      %v249 = vsel %vm244, %v175, 0
      %v252 = vsel %vm244, %v176, 0
      %v255 = vsel %vm244, %v177, 0
      %v258 = vsel %vm244, %v178, 0
      %v261 = vsel %vm244, %v179, 0
      %v264 = vsel %vm244, %v180, 0
      %v267 = vsel %vm244, %v181, 0
      %v270 = vsel %vm244, %v182, 0
      %v273 = vsel %vm244, %v183, 0
      %v276 = vsel %vm244, %v184, 0
      %v279 = vsel %vm244, %v185, 0
      %v282 = vsel %vm244, %v186, 0
      %v285 = vsel %vm244, %v187, 0
      %v288 = vsel %vm244, %v188, 0
      %v291 = vsel %vm244, %v189, 0
      %v294 = vsel %vm244, %v190, 0
      %v297 = vsel %vm244, %v191, 0
      %v300 = vsel %vm244, %v192, 0
      %v303 = vsel %vm244, %v193, 0
      %v306 = vsel %vm244, %v194, 0
      %v309 = vsel %vm244, %v195, 0
      %v312 = vsel %vm244, %v196, 0
      %v315 = vsel %vm244, %v197, 0
      %v318 = vsel %vm244, %v198, 0
      %v321 = vsel %vm244, %v199, 0
      %v324 = vsel %vm244, %v200, 0
      %v327 = vsel %vm244, %v201, 0
      %v330 = vsel %vm244, %v202, 0
      %v333 = vsel %vm244, %v203, 0
      %v336 = vsel %vm244, %v204, 0
      %v339 = vsel %vm244, %v205, 0
      %v342 = vsel %vm244, %v206, 0
      %v345 = vsel %vm244, %v207, 0
      %v348 = vsel %vm244, %v208, 0
      %v351 = vsel %vm244, %v209, 0
      %v354 = vsel %vm244, %v210, 0
      %v357 = vsel %vm244, %v211, 0
      %v360 = vsel %vm244, %v212, 0
      %v363 = vsel %vm244, %v213, 0
      %v366 = vsel %vm244, %v214, 0
      %v369 = vsel %vm244, %v215, 0
      %v372 = vsel %vm244, %v216, 0
      %v375 = vsel %vm244, %v217, 0
      %v378 = vsel %vm244, %v218, 0
      %v381 = vsel %vm244, %v219, 0
      %v384 = vsel %vm244, %v220, 0
      %v387 = vsel %vm244, %v221, 0
      %v390 = vsel %vm244, %v222, 0
      %v393 = vsel %vm244, %v223, 0
      %v396 = vsel %vm244, %v224, 0
      %v399 = vsel %vm244, %v225, 0
      %v402 = vsel %vm244, %v226, 0
      %v405 = vsel %vm244, %v227, 0
      %v408 = vsel %vm244, %v228, 0
      %v411 = vsel %vm244, %v229, 0
      %v414 = vsel %vm244, %v230, 0
      %v417 = vsel %vm244, %v231, 0
      %v420 = vsel %vm244, %v232, 0
      %v423 = vsel %vm244, %v233, 0
      %v426 = vsel %vm244, %v234, 0
      %v429 = vsel %vm244, %v235, 0
      %v432 = vsel %vm244, %v236, 0
      %v435 = vsel %vm244, %v237, 0
      %437 = vmatpush.msra.mxu0 0.0
      %438 = vmatpush.msra.mxu0 0.0
      %439 = vmatpush.msra.mxu0 0.0
      %440 = vmatpush.msra.mxu0 0.0
      %441 = vmatpush.msra.mxu0 0.0
      %442 = vmatpush.msra.mxu0 0.0
      %443 = vmatpush.msra.mxu0 0.0
      %444 = vmatpush.msra.mxu0 0.0
      %445 = vmatpush.msra.mxu0 0.0
      %446 = vmatpush.msra.mxu0 0.0
      %447 = vmatpush.msra.mxu0 0.0
      %448 = vmatpush.msra.mxu0 0.0
      %449 = vmatpush.msra.mxu0 0.0
      %450 = vmatpush.msra.mxu0 0.0
      %451 = vmatpush.msra.mxu0 %v239
      %452 = vmatpush.msra.mxu0 %v238
      %453 = vmatmul.f32.gmra.mxu0 %v246
      %v454 = vpop.f32.mrf.mxu0
      %v455 = vadd.f32 %v242, %v454
      %456 = vmatmul.f32.gmra.mxu0 %v249
      %v457 = vpop.f32.mrf.mxu0
      %v458 = vadd.f32 %v242, %v457
      %459 = vmatmul.f32.gmra.mxu0 %v252
      %v460 = vpop.f32.mrf.mxu0
      %v461 = vadd.f32 %v242, %v460
      %462 = vmatmul.f32.gmra.mxu0 %v255
      %v463 = vpop.f32.mrf.mxu0
      %v464 = vadd.f32 %v242, %v463
      %465 = vmatmul.f32.gmra.mxu0 %v258
      %v466 = vpop.f32.mrf.mxu0
      %v467 = vadd.f32 %v242, %v466
      %468 = vmatmul.f32.gmra.mxu0 %v261
      %v469 = vpop.f32.mrf.mxu0
      %v470 = vadd.f32 %v242, %v469
      %471 = vmatmul.f32.gmra.mxu0 %v264
      %v472 = vpop.f32.mrf.mxu0
      %v473 = vadd.f32 %v242, %v472
      %474 = vmatmul.f32.gmra.mxu0 %v267
      %v475 = vpop.f32.mrf.mxu0
      %v476 = vadd.f32 %v242, %v475
      %477 = vmatmul.f32.gmra.mxu0 %v270
      %v478 = vpop.f32.mrf.mxu0
      %v479 = vadd.f32 %v242, %v478
      %480 = vmatmul.f32.gmra.mxu0 %v273
      %v481 = vpop.f32.mrf.mxu0
      %v482 = vadd.f32 %v242, %v481
      %483 = vmatmul.f32.gmra.mxu0 %v276
      %v484 = vpop.f32.mrf.mxu0
      %v485 = vadd.f32 %v242, %v484
      %486 = vmatmul.f32.gmra.mxu0 %v279
      %v487 = vpop.f32.mrf.mxu0
      %v488 = vadd.f32 %v242, %v487
      %489 = vmatmul.f32.gmra.mxu0 %v282
      %v490 = vpop.f32.mrf.mxu0
      %v491 = vadd.f32 %v242, %v490
      %492 = vmatmul.f32.gmra.mxu0 %v285
      %v493 = vpop.f32.mrf.mxu0
      %v494 = vadd.f32 %v242, %v493
      %495 = vmatmul.f32.gmra.mxu0 %v288
      %v496 = vpop.f32.mrf.mxu0
      %v497 = vadd.f32 %v242, %v496
      %498 = vmatmul.f32.gmra.mxu0 %v291
      %v499 = vpop.f32.mrf.mxu0
      %v500 = vadd.f32 %v242, %v499
      %501 = vmatmul.f32.gmra.mxu0 %v294
      %v502 = vpop.f32.mrf.mxu0
      %v503 = vadd.f32 %v242, %v502
      %504 = vmatmul.f32.gmra.mxu0 %v297
      %v505 = vpop.f32.mrf.mxu0
      %v506 = vadd.f32 %v242, %v505
      %507 = vmatmul.f32.gmra.mxu0 %v300
      %v508 = vpop.f32.mrf.mxu0
      %v509 = vadd.f32 %v242, %v508
      %510 = vmatmul.f32.gmra.mxu0 %v303
      %v511 = vpop.f32.mrf.mxu0
      %v512 = vadd.f32 %v242, %v511
      %513 = vmatmul.f32.gmra.mxu0 %v306
      %v514 = vpop.f32.mrf.mxu0
      %v515 = vadd.f32 %v242, %v514
      %516 = vmatmul.f32.gmra.mxu0 %v309
      %v517 = vpop.f32.mrf.mxu0
      %v518 = vadd.f32 %v242, %v517
      %519 = vmatmul.f32.gmra.mxu0 %v312
      %v520 = vpop.f32.mrf.mxu0
      %v521 = vadd.f32 %v242, %v520
      %522 = vmatmul.f32.gmra.mxu0 %v315
      %v523 = vpop.f32.mrf.mxu0
      %v524 = vadd.f32 %v242, %v523
      %525 = vmatmul.f32.gmra.mxu0 %v318
      %v526 = vpop.f32.mrf.mxu0
      %v527 = vadd.f32 %v242, %v526
      %528 = vmatmul.f32.gmra.mxu0 %v321
      %v529 = vpop.f32.mrf.mxu0
      %v530 = vadd.f32 %v242, %v529
      %531 = vmatmul.f32.gmra.mxu0 %v324
      %v532 = vpop.f32.mrf.mxu0
      %v533 = vadd.f32 %v242, %v532
      %534 = vmatmul.f32.gmra.mxu0 %v327
      %v535 = vpop.f32.mrf.mxu0
      %v536 = vadd.f32 %v242, %v535
      %537 = vmatmul.f32.gmra.mxu0 %v330
      %v538 = vpop.f32.mrf.mxu0
      %v539 = vadd.f32 %v242, %v538
      %540 = vmatmul.f32.gmra.mxu0 %v333
      %v541 = vpop.f32.mrf.mxu0
      %v542 = vadd.f32 %v242, %v541
      %543 = vmatmul.f32.gmra.mxu0 %v336
      %v544 = vpop.f32.mrf.mxu0
      %v545 = vadd.f32 %v242, %v544
      %546 = vmatmul.f32.gmra.mxu0 %v339
      %v547 = vpop.f32.mrf.mxu0
      %v548 = vadd.f32 %v242, %v547
      %549 = vmatmul.f32.gmra.mxu0 %v342
      %v550 = vpop.f32.mrf.mxu0
      %v551 = vadd.f32 %v242, %v550
      %552 = vmatmul.f32.gmra.mxu0 %v345
      %v553 = vpop.f32.mrf.mxu0
      %v554 = vadd.f32 %v242, %v553
      %555 = vmatmul.f32.gmra.mxu0 %v348
      %v556 = vpop.f32.mrf.mxu0
      %v557 = vadd.f32 %v242, %v556
      %558 = vmatmul.f32.gmra.mxu0 %v351
      %v559 = vpop.f32.mrf.mxu0
      %v560 = vadd.f32 %v242, %v559
      %561 = vmatmul.f32.gmra.mxu0 %v354
      %v562 = vpop.f32.mrf.mxu0
      %v563 = vadd.f32 %v242, %v562
      %564 = vmatmul.f32.gmra.mxu0 %v357
      %v565 = vpop.f32.mrf.mxu0
      %v566 = vadd.f32 %v242, %v565
      %567 = vmatmul.f32.gmra.mxu0 %v360
      %v568 = vpop.f32.mrf.mxu0
      %v569 = vadd.f32 %v242, %v568
      %570 = vmatmul.f32.gmra.mxu0 %v363
      %v571 = vpop.f32.mrf.mxu0
      %v572 = vadd.f32 %v242, %v571
      %573 = vmatmul.f32.gmra.mxu0 %v366
      %v574 = vpop.f32.mrf.mxu0
      %v575 = vadd.f32 %v242, %v574
      %576 = vmatmul.f32.gmra.mxu0 %v369
      %v577 = vpop.f32.mrf.mxu0
      %v578 = vadd.f32 %v242, %v577
      %579 = vmatmul.f32.gmra.mxu0 %v372
      %v580 = vpop.f32.mrf.mxu0
      %v581 = vadd.f32 %v242, %v580
      %582 = vmatmul.f32.gmra.mxu0 %v375
      %v583 = vpop.f32.mrf.mxu0
      %v584 = vadd.f32 %v242, %v583
      %585 = vmatmul.f32.gmra.mxu0 %v378
      %v586 = vpop.f32.mrf.mxu0
      %v587 = vadd.f32 %v242, %v586
      %588 = vmatmul.f32.gmra.mxu0 %v381
      %v589 = vpop.f32.mrf.mxu0
      %v590 = vadd.f32 %v242, %v589
      %591 = vmatmul.f32.gmra.mxu0 %v384
      %v592 = vpop.f32.mrf.mxu0
      %v593 = vadd.f32 %v242, %v592
      %594 = vmatmul.f32.gmra.mxu0 %v387
      %v595 = vpop.f32.mrf.mxu0
      %v596 = vadd.f32 %v242, %v595
      %597 = vmatmul.f32.gmra.mxu0 %v390
      %v598 = vpop.f32.mrf.mxu0
      %v599 = vadd.f32 %v242, %v598
      %600 = vmatmul.f32.gmra.mxu0 %v393
      %v601 = vpop.f32.mrf.mxu0
      %v602 = vadd.f32 %v242, %v601
      %603 = vmatmul.f32.gmra.mxu0 %v396
      %v604 = vpop.f32.mrf.mxu0
      %v605 = vadd.f32 %v242, %v604
      %606 = vmatmul.f32.gmra.mxu0 %v399
      %v607 = vpop.f32.mrf.mxu0
      %v608 = vadd.f32 %v242, %v607
      %609 = vmatmul.f32.gmra.mxu0 %v402
      %v610 = vpop.f32.mrf.mxu0
      %v611 = vadd.f32 %v242, %v610
      %612 = vmatmul.f32.gmra.mxu0 %v405
      %v613 = vpop.f32.mrf.mxu0
      %v614 = vadd.f32 %v242, %v613
      %615 = vmatmul.f32.gmra.mxu0 %v408
      %v616 = vpop.f32.mrf.mxu0
      %v617 = vadd.f32 %v242, %v616
      %618 = vmatmul.f32.gmra.mxu0 %v411
      %v619 = vpop.f32.mrf.mxu0
      %v620 = vadd.f32 %v242, %v619
      %621 = vmatmul.f32.gmra.mxu0 %v414
      %v622 = vpop.f32.mrf.mxu0
      %v623 = vadd.f32 %v242, %v622
      %624 = vmatmul.f32.gmra.mxu0 %v417
      %v625 = vpop.f32.mrf.mxu0
      %v626 = vadd.f32 %v242, %v625
      %627 = vmatmul.f32.gmra.mxu0 %v420
      %v628 = vpop.f32.mrf.mxu0
      %v629 = vadd.f32 %v242, %v628
      %630 = vmatmul.f32.gmra.mxu0 %v423
      %v631 = vpop.f32.mrf.mxu0
      %v632 = vadd.f32 %v242, %v631
      %633 = vmatmul.f32.gmra.mxu0 %v426
      %v634 = vpop.f32.mrf.mxu0
      %v635 = vadd.f32 %v242, %v634
      %636 = vmatmul.f32.gmra.mxu0 %v429
      %v637 = vpop.f32.mrf.mxu0
      %v638 = vadd.f32 %v242, %v637
      %639 = vmatmul.f32.gmra.mxu0 %v432
      %v640 = vpop.f32.mrf.mxu0
      %v641 = vadd.f32 %v242, %v640
      %642 = vmatmul.f32.gmra.mxu0 %v435
      %v643 = vpop.f32.mrf.mxu0
      %v644 = vadd.f32 %v242, %v643
      %645 = vdwg.mxu0
      %646 = vst.msk [vmem:[%s172] sm:$0xff] %vm244, %v455
      %647 = vst.msk [vmem:[%s172 + $0x8] sm:$0xff] %vm244, %v458
      %648 = vst.msk [vmem:[%s172 + $0x10] sm:$0xff] %vm244, %v461
      %649 = vst.msk [vmem:[%s172 + $0x18] sm:$0xff] %vm244, %v464
      %650 = vst.msk [vmem:[%s172 + $0x20] sm:$0xff] %vm244, %v467
      %651 = vst.msk [vmem:[%s172 + $0x28] sm:$0xff] %vm244, %v470
      %652 = vst.msk [vmem:[%s172 + $0x30] sm:$0xff] %vm244, %v473
      %653 = vst.msk [vmem:[%s172 + $0x38] sm:$0xff] %vm244, %v476
      %654 = vst.msk [vmem:[%s172 + $0x40] sm:$0xff] %vm244, %v479
      %655 = vst.msk [vmem:[%s172 + $0x48] sm:$0xff] %vm244, %v482
      %656 = vst.msk [vmem:[%s172 + $0x50] sm:$0xff] %vm244, %v485
      %657 = vst.msk [vmem:[%s172 + $0x58] sm:$0xff] %vm244, %v488
      %658 = vst.msk [vmem:[%s172 + $0x60] sm:$0xff] %vm244, %v491
      %659 = vst.msk [vmem:[%s172 + $0x68] sm:$0xff] %vm244, %v494
      %660 = vst.msk [vmem:[%s172 + $0x70] sm:$0xff] %vm244, %v497
      %661 = vst.msk [vmem:[%s172 + $0x78] sm:$0xff] %vm244, %v500
      %662 = vst.msk [vmem:[%s172 + $0x80] sm:$0xff] %vm244, %v503
      %663 = vst.msk [vmem:[%s172 + $0x88] sm:$0xff] %vm244, %v506
      %664 = vst.msk [vmem:[%s172 + $0x90] sm:$0xff] %vm244, %v509
      %665 = vst.msk [vmem:[%s172 + $0x98] sm:$0xff] %vm244, %v512
      %666 = vst.msk [vmem:[%s172 + $0xa0] sm:$0xff] %vm244, %v515
      %667 = vst.msk [vmem:[%s172 + $0xa8] sm:$0xff] %vm244, %v518
      %668 = vst.msk [vmem:[%s172 + $0xb0] sm:$0xff] %vm244, %v521
      %669 = vst.msk [vmem:[%s172 + $0xb8] sm:$0xff] %vm244, %v524
      %670 = vst.msk [vmem:[%s172 + $0xc0] sm:$0xff] %vm244, %v527
      %671 = vst.msk [vmem:[%s172 + $0xc8] sm:$0xff] %vm244, %v530
      %672 = vst.msk [vmem:[%s172 + $0xd0] sm:$0xff] %vm244, %v533
      %673 = vst.msk [vmem:[%s172 + $0xd8] sm:$0xff] %vm244, %v536
      %674 = vst.msk [vmem:[%s172 + $0xe0] sm:$0xff] %vm244, %v539
      %675 = vst.msk [vmem:[%s172 + $0xe8] sm:$0xff] %vm244, %v542
      %676 = vst.msk [vmem:[%s172 + $0xf0] sm:$0xff] %vm244, %v545
      %677 = vst.msk [vmem:[%s172 + $0xf8] sm:$0xff] %vm244, %v548
      %678 = vst.msk [vmem:[%s172 + $0x100] sm:$0xff] %vm244, %v551
      %679 = vst.msk [vmem:[%s172 + $0x108] sm:$0xff] %vm244, %v554
      %680 = vst.msk [vmem:[%s172 + $0x110] sm:$0xff] %vm244, %v557
      %681 = vst.msk [vmem:[%s172 + $0x118] sm:$0xff] %vm244, %v560
      %682 = vst.msk [vmem:[%s172 + $0x120] sm:$0xff] %vm244, %v563
      %683 = vst.msk [vmem:[%s172 + $0x128] sm:$0xff] %vm244, %v566
      %684 = vst.msk [vmem:[%s172 + $0x130] sm:$0xff] %vm244, %v569
      %685 = vst.msk [vmem:[%s172 + $0x138] sm:$0xff] %vm244, %v572
      %686 = vst.msk [vmem:[%s172 + $0x140] sm:$0xff] %vm244, %v575
      %687 = vst.msk [vmem:[%s172 + $0x148] sm:$0xff] %vm244, %v578
      %688 = vst.msk [vmem:[%s172 + $0x150] sm:$0xff] %vm244, %v581
      %689 = vst.msk [vmem:[%s172 + $0x158] sm:$0xff] %vm244, %v584
      %690 = vst.msk [vmem:[%s172 + $0x160] sm:$0xff] %vm244, %v587
      %691 = vst.msk [vmem:[%s172 + $0x168] sm:$0xff] %vm244, %v590
      %692 = vst.msk [vmem:[%s172 + $0x170] sm:$0xff] %vm244, %v593
      %693 = vst.msk [vmem:[%s172 + $0x178] sm:$0xff] %vm244, %v596
      %694 = vst.msk [vmem:[%s172 + $0x180] sm:$0xff] %vm244, %v599
      %695 = vst.msk [vmem:[%s172 + $0x188] sm:$0xff] %vm244, %v602
      %696 = vst.msk [vmem:[%s172 + $0x190] sm:$0xff] %vm244, %v605
      %697 = vst.msk [vmem:[%s172 + $0x198] sm:$0xff] %vm244, %v608
      %698 = vst.msk [vmem:[%s172 + $0x1a0] sm:$0xff] %vm244, %v611
      %699 = vst.msk [vmem:[%s172 + $0x1a8] sm:$0xff] %vm244, %v614
      %700 = vst.msk [vmem:[%s172 + $0x1b0] sm:$0xff] %vm244, %v617
      %701 = vst.msk [vmem:[%s172 + $0x1b8] sm:$0xff] %vm244, %v620
      %702 = vst.msk [vmem:[%s172 + $0x1c0] sm:$0xff] %vm244, %v623
      %703 = vst.msk [vmem:[%s172 + $0x1c8] sm:$0xff] %vm244, %v626
      %704 = vst.msk [vmem:[%s172 + $0x1d0] sm:$0xff] %vm244, %v629
      %705 = vst.msk [vmem:[%s172 + $0x1d8] sm:$0xff] %vm244, %v632
      %706 = vst.msk [vmem:[%s172 + $0x1e0] sm:$0xff] %vm244, %v635
      %707 = vst.msk [vmem:[%s172 + $0x1e8] sm:$0xff] %vm244, %v638
      %708 = vst.msk [vmem:[%s172 + $0x1f0] sm:$0xff] %vm244, %v641
      %709 = vst.msk [vmem:[%s172 + $0x1f8] sm:$0xff] %vm244, %v644
      %s710 = smul.u32 64, %s14
      %p711 = scmp.lt.s32.totalorder %s710, 255
      %s712 = scalar_select %p711, %s710, 255
      %s713 = smul.addr %s712, 8
      %s714 = scalar_lea.vmem %s3, %s713
      // Predicated region
      $region33: #{ssmlp_forward.33} parent=31 // pred_check
        %p715 = pneg %p100
      $region34: #{ssmlp_forward.33} parent=31 // pred_check_branch
        %717 = sbr.rel (%p715) target = $region36
      $region35: #{ssmlp_forward.33} parent=31 // pred_region
        %s718 = smul.u32 64, %s14
      $region36: #{ssmlp_forward.33} parent=31 // pred_fallthru
        _
    $region32: #{ssmlp_forward.33} parent=5 // pred_fallthru
      _
    %p719 = scmp.le.s32.totalorder 2, %s9
    // Predicated region
    $region37: #{ssmlp_forward.33} parent=5 // pred_check
      %p720 = pneg %p719
    $region38: #{ssmlp_forward.33} parent=5 // pred_check_branch
      %722 = sbr.rel (%p720) target = $region40
    $region39: #{ssmlp_forward.33} parent=5 // pred_region
      %s723 = ssub.s32 %s9, 2
      // Predicated region
      $region41: #{ssmlp_forward.33} parent=39 // pred_check
        %p724 = pneg %p106
      $region42: #{ssmlp_forward.33} parent=39 // pred_check_branch
        %726 = sbr.rel (%p724) target = $region44
      $region43: #{ssmlp_forward.33} parent=39 // pred_region
        %s727 = smul.u32 64, %s15
        %p728 = scmp.lt.s32.totalorder %s727, 255
        %s729 = scalar_select %p728, %s727, 255
        %s730 = smul.addr %s729, 8
        %s731 = scalar_lea.vmem %s3, %s730
      $region44: #{ssmlp_forward.33} parent=39 // pred_fallthru
        _
    $region40: #{ssmlp_forward.33} parent=5 // pred_fallthru
      _
  $region6: #{ssmlp_forward.33} parent=0 // loop_footer
    %s13 = sadd.s32 1, %s9
  $region7: #{ssmlp_forward.33} parent=0 // loop_footer_branch
    %8 = sbr.rel target = $region3
  $region8: #{ssmlp_forward.33} parent=0 // loop_exit
    _

// kernel: ssmlp_forward.35
$region0: #{ssmlp_forward.35}
  #allocation0 [shape = 'u32[]', space=smem, size = 0x4, offset = 0x4, fixed_abs, tag = 'smem constant byte address 0x4 - core index']
  #allocation1 [shape = 'u32[72,128]{1,0:T(1,128)}', space=vmem, size = 0x9000, scoped, tag = 'internal scratch']
  %s0 = inlined_call_operand.vmem [shape: f32[2,32], index: 0, kind: input, shape index: {}]
  %s1 = inlined_call_operand.vmem [shape: f32[32,8], index: 1, kind: input, shape index: {}]
  %s2 = inlined_call_operand.vmem [shape: f32[1,8], index: 2, kind: input, shape index: {}]
  %s3 = inlined_call_operand.vmem [shape: f32[2,8], index: 3, kind: output, shape index: {}]
  %s4 = sld [smem:[#allocation0]]
  $region22: #{ssmlp_forward.35} parent=0
    _
  %s6 = ssub.s32 1, %s4
  %s7 = scalar_select 0, %s6, %s4
  // Predicated region
  $region2: #{ssmlp_forward.35} parent=0 // pred_check
    _
  $region3: #{ssmlp_forward.35} parent=0 // pred_check_branch
    %9 = sbr.rel (0) target = $region5
  $region4: #{ssmlp_forward.35} parent=0 // pred_region
    _
  $region5: #{ssmlp_forward.35} parent=0 // pred_fallthru
    _
  // Predicated region
  $region6: #{ssmlp_forward.35} parent=0 // pred_check
    _
  $region7: #{ssmlp_forward.35} parent=0 // pred_check_branch
    %11 = sbr.rel (0) target = $region9
  $region8: #{ssmlp_forward.35} parent=0 // pred_region
    _
  $region9: #{ssmlp_forward.35} parent=0 // pred_fallthru
    _
  // Predicated region
  $region10: #{ssmlp_forward.35} parent=0 // pred_check
    _
  $region11: #{ssmlp_forward.35} parent=0 // pred_check_branch
    %13 = sbr.rel (0) target = $region13
  $region12: #{ssmlp_forward.35} parent=0 // pred_region
    _
  $region13: #{ssmlp_forward.35} parent=0 // pred_fallthru
    _
  %v14 = vld [vmem:[%s0] sm:$0x3]
  %v15 = vld [vmem:[%s1] sm:$0xff]
  %v16 = vld [vmem:[%s1 + $0x8] sm:$0xff]
  %v17 = vld [vmem:[%s1 + $0x10] sm:$0xff]
  %v18 = vld [vmem:[%s1 + $0x18] sm:$0xff]
  %v19 = vld [vmem:[%s2] sm:$0x1]
  %v21 = vperm.slane %v19, 0
  %vm23 = vcmask 261120
  %v25 = vsel %vm23, %v14, 0
  %27 = vmatpush.msra.mxu0 0.0
  %28 = vmatpush.msra.mxu0 0.0
  %29 = vmatpush.msra.mxu0 0.0
  %30 = vmatpush.msra.mxu0 0.0
  %31 = vmatpush.msra.mxu0 0.0
  %32 = vmatpush.msra.mxu0 0.0
  %33 = vmatpush.msra.mxu0 0.0
  %34 = vmatpush.msra.mxu0 0.0
  %35 = vmatpush.msra.mxu0 0.0
  %36 = vmatpush.msra.mxu0 0.0
  %37 = vmatpush.msra.mxu0 0.0
  %38 = vmatpush.msra.mxu0 0.0
  %39 = vmatpush.msra.mxu0 %v18
  %40 = vmatpush.msra.mxu0 %v17
  %41 = vmatpush.msra.mxu0 %v16
  %42 = vmatpush.msra.mxu0 %v15
  %43 = vmatmul.f32.gmra.mxu0 %v25
  %v44 = vpop.f32.mrf.mxu0
  %v45 = vadd.f32 %v21, %v44
  %46 = vdwg.mxu0
  %v47 = vmul.f32 %v45, 0.5
  %v48 = vmul.f32 %v45, 0.044715
  %v49 = vmul.f32 %v48, %v45
  %v50 = vmul.f32 %v49, %v45
  %v51 = vadd.f32 %v45, %v50
  %v52 = vmul.f32 %v51, 0.7978846
  %v53 = vtanh.pop %v52
  %v54 = vadd.f32 %v53, 1.0
  %v55 = vmul.f32 %v47, %v54
  %vm56 = vcmask 58368
  %57 = vst.msk [vmem:[%s3] sm:$0x3] %vm56, %v55
  // Predicated region
  $region14: #{ssmlp_forward.35} parent=0 // pred_check
    _
  $region15: #{ssmlp_forward.35} parent=0 // pred_check_branch
    %59 = sbr.rel (0) target = $region17
  $region16: #{ssmlp_forward.35} parent=0 // pred_region
    _
  $region17: #{ssmlp_forward.35} parent=0 // pred_fallthru
    _
  // Predicated region
  $region18: #{ssmlp_forward.35} parent=0 // pred_check
    _
  $region19: #{ssmlp_forward.35} parent=0 // pred_check_branch
    %61 = sbr.rel (0) target = $region21
  $region20: #{ssmlp_forward.35} parent=0 // pred_region
    _
  $region21: #{ssmlp_forward.35} parent=0 // pred_fallthru
    _

// kernel: ssmlp_forward.36
$region0: #{ssmlp_forward.36}
  #allocation0 [shape = 'u32[]', space=smem, size = 0x4, offset = 0x4, fixed_abs, tag = 'smem constant byte address 0x4 - core index']
  #allocation1 [shape = 'u32[72,128]{1,0:T(1,128)}', space=vmem, size = 0x9000, scoped, tag = 'internal scratch']
  %s0 = inlined_call_operand.vmem [shape: f32[2,8], index: 0, kind: input, shape index: {}]
  %s1 = inlined_call_operand.vmem [shape: f32[8,96], index: 1, kind: input, shape index: {}]
  %s2 = inlined_call_operand.vmem [shape: f32[1,96], index: 2, kind: input, shape index: {}]
  %s3 = inlined_call_operand.vmem [shape: f32[2,96], index: 3, kind: output, shape index: {}]
  %s4 = sld [smem:[#allocation0]]
  $region22: #{ssmlp_forward.36} parent=0
    _
  %s6 = ssub.s32 1, %s4
  %s7 = scalar_select 0, %s6, %s4
  // Predicated region
  $region2: #{ssmlp_forward.36} parent=0 // pred_check
    _
  $region3: #{ssmlp_forward.36} parent=0 // pred_check_branch
    %9 = sbr.rel (0) target = $region5
  $region4: #{ssmlp_forward.36} parent=0 // pred_region
    _
  $region5: #{ssmlp_forward.36} parent=0 // pred_fallthru
    _
  // Predicated region
  $region6: #{ssmlp_forward.36} parent=0 // pred_check
    _
  $region7: #{ssmlp_forward.36} parent=0 // pred_check_branch
    %11 = sbr.rel (0) target = $region9
  $region8: #{ssmlp_forward.36} parent=0 // pred_region
    _
  $region9: #{ssmlp_forward.36} parent=0 // pred_fallthru
    _
  // Predicated region
  $region10: #{ssmlp_forward.36} parent=0 // pred_check
    _
  $region11: #{ssmlp_forward.36} parent=0 // pred_check_branch
    %13 = sbr.rel (0) target = $region13
  $region12: #{ssmlp_forward.36} parent=0 // pred_region
    _
  $region13: #{ssmlp_forward.36} parent=0 // pred_fallthru
    _
  %v14 = vld [vmem:[%s0] sm:$0x3]
  %v15 = vld [vmem:[%s1] sm:$0xff]
  %v16 = vld [vmem:[%s2] sm:$0x1]
  %v18 = vperm.slane %v16, 0
  %vm20 = vcmask 64512
  %v22 = vsel %vm20, %v14, 0
  %24 = vmatpush.msra.mxu0 0.0
  %25 = vmatpush.msra.mxu0 0.0
  %26 = vmatpush.msra.mxu0 0.0
  %27 = vmatpush.msra.mxu0 0.0
  %28 = vmatpush.msra.mxu0 0.0
  %29 = vmatpush.msra.mxu0 0.0
  %30 = vmatpush.msra.mxu0 0.0
  %31 = vmatpush.msra.mxu0 0.0
  %32 = vmatpush.msra.mxu0 0.0
  %33 = vmatpush.msra.mxu0 0.0
  %34 = vmatpush.msra.mxu0 0.0
  %35 = vmatpush.msra.mxu0 0.0
  %36 = vmatpush.msra.mxu0 0.0
  %37 = vmatpush.msra.mxu0 0.0
  %38 = vmatpush.msra.mxu0 0.0
  %39 = vmatpush.msra.mxu0 %v15
  %40 = vmatmul.f32.gmra.mxu0 %v22
  %v41 = vpop.f32.mrf.mxu0
  %v42 = vadd.f32 %v18, %v41
  %43 = vdwg.mxu0
  %vm44 = vcmask 779264
  %45 = vst.msk [vmem:[%s3] sm:$0x3] %vm44, %v42
  // Predicated region
  $region14: #{ssmlp_forward.36} parent=0 // pred_check
    _
  $region15: #{ssmlp_forward.36} parent=0 // pred_check_branch
    %47 = sbr.rel (0) target = $region17
  $region16: #{ssmlp_forward.36} parent=0 // pred_region
    _
  $region17: #{ssmlp_forward.36} parent=0 // pred_fallthru
    _
  // Predicated region
  $region18: #{ssmlp_forward.36} parent=0 // pred_check
    _
  $region19: #{ssmlp_forward.36} parent=0 // pred_check_branch
    %49 = sbr.rel (0) target = $region21
  $region20: #{ssmlp_forward.36} parent=0 // pred_region
    _
  $region21: #{ssmlp_forward.36} parent=0 // pred_fallthru
    _

// kernel: ssmlp_forward.51
$region0: #{ssmlp_forward.51}
  #allocation0 [shape = 'u32[]', space=smem, size = 0x4, offset = 0x4, fixed_abs, tag = 'smem constant byte address 0x4 - core index']
  #allocation1 [shape = 'u32[72,128]{1,0:T(1,128)}', space=vmem, size = 0x9000, scoped, tag = 'internal scratch']
  %s0 = inlined_call_operand.vmem [shape: f32[2,32], index: 0, kind: input, shape index: {}]
  %s1 = inlined_call_operand.vmem [shape: f32[32,10], index: 1, kind: input, shape index: {}]
  %s2 = inlined_call_operand.vmem [shape: f32[1,10], index: 2, kind: input, shape index: {}]
  %s3 = inlined_call_operand.hbm [shape: f32[2,10], index: 3, kind: output, shape index: {}]
  %s4 = sld [smem:[#allocation0]]
  $region22: #{ssmlp_forward.51} parent=0
    _
  %s6 = ssub.s32 1, %s4
  %s7 = scalar_select 0, %s6, %s4
  $region1: #{ssmlp_forward.51} parent=0
    #allocation2 [shape = 'u8[1024]{0}', space=vmem, size = 0x400, scoped, tag = 'output window, operand 0, single buffered']
    #allocation3 [shape = 's32[1]{0}', space=sflag, size = 0x4, scoped, tag = 'scoped memory for ssmlp_forward.51']
    %8 = vsyncpa [#allocation3], 0
    // Predicated region
    $region2: #{ssmlp_forward.51} parent=1 // pred_check
      _
    $region3: #{ssmlp_forward.51} parent=1 // pred_check_branch
      %10 = sbr.rel (0) target = $region5
    $region4: #{ssmlp_forward.51} parent=1 // pred_region
      _
    $region5: #{ssmlp_forward.51} parent=1 // pred_fallthru
      _
    // Predicated region
    $region6: #{ssmlp_forward.51} parent=1 // pred_check
      _
    $region7: #{ssmlp_forward.51} parent=1 // pred_check_branch
      %12 = sbr.rel (0) target = $region9
    $region8: #{ssmlp_forward.51} parent=1 // pred_region
      _
    $region9: #{ssmlp_forward.51} parent=1 // pred_fallthru
      _
    // Predicated region
    $region10: #{ssmlp_forward.51} parent=1 // pred_check
      _
    $region11: #{ssmlp_forward.51} parent=1 // pred_check_branch
      %14 = sbr.rel (0) target = $region13
    $region12: #{ssmlp_forward.51} parent=1 // pred_region
      _
    $region13: #{ssmlp_forward.51} parent=1 // pred_fallthru
      _
    %v15 = vld [vmem:[%s0] sm:$0x3]
    %v16 = vld [vmem:[%s1] sm:$0xff]
    %v17 = vld [vmem:[%s1 + $0x8] sm:$0xff]
    %v18 = vld [vmem:[%s1 + $0x10] sm:$0xff]
    %v19 = vld [vmem:[%s1 + $0x18] sm:$0xff]
    %v20 = vld [vmem:[%s2] sm:$0x1]
    %v22 = vperm.slane %v20, 0
    %vm24 = vcmask 261120
    %v26 = vsel %vm24, %v15, 0
    %28 = vmatpush.msra.mxu0 0.0
    %29 = vmatpush.msra.mxu0 0.0
    %30 = vmatpush.msra.mxu0 0.0
    %31 = vmatpush.msra.mxu0 0.0
    %32 = vmatpush.msra.mxu0 0.0
    %33 = vmatpush.msra.mxu0 0.0
    %34 = vmatpush.msra.mxu0 0.0
    %35 = vmatpush.msra.mxu0 0.0
    %36 = vmatpush.msra.mxu0 0.0
    %37 = vmatpush.msra.mxu0 0.0
    %38 = vmatpush.msra.mxu0 0.0
    %39 = vmatpush.msra.mxu0 0.0
    %40 = vmatpush.msra.mxu0 %v19
    %41 = vmatpush.msra.mxu0 %v18
    %42 = vmatpush.msra.mxu0 %v17
    %43 = vmatpush.msra.mxu0 %v16
    %44 = vmatmul.f32.gmra.mxu0 %v26
    %v45 = vpop.f32.mrf.mxu0
    %v46 = vadd.f32 %v22, %v45
    %47 = vdwg.mxu0
    %vm48 = vcmask 74752
    %49 = vst.msk [vmem:[#allocation2] sm:$0x3] %vm48, %v46
    // Predicated region
    $region14: #{ssmlp_forward.51} parent=1 // pred_check
      _
    $region15: #{ssmlp_forward.51} parent=1 // pred_check_branch
      %51 = sbr.rel (0) target = $region17
    $region16: #{ssmlp_forward.51} parent=1 // pred_region
      %53 = vsyncadd [#allocation3], 0
      %s55 = sshll.u32 [#allocation2], 4
      %s56 = int_to_ptr.vmem [resolvable:$true] %s55
      %s57 = sshll.u32 %s3, 4
      %s58 = int_to_ptr.hbm [resolvable:$true] %s57
      %60 = dma.vmem_to_hbm [thread:$0]  %s56, 32, %s58, [#allocation3]
    $region17: #{ssmlp_forward.51} parent=1 // pred_fallthru
      _
    // Predicated region
    $region18: #{ssmlp_forward.51} parent=1 // pred_check
      _
    $region19: #{ssmlp_forward.51} parent=1 // pred_check_branch
      %62 = sbr.rel (0) target = $region21
    $region20: #{ssmlp_forward.51} parent=1 // pred_region
      %64 = dma.done [#allocation3], 32
    $region21: #{ssmlp_forward.51} parent=1 // pred_fallthru
      _
    %65 = vsyncpa [#allocation3], 1

// kernel: ssmlp_forward.38
$region0: #{ssmlp_forward.38}
  #allocation0 [shape = 'u32[]', space=smem, size = 0x4, offset = 0x4, fixed_abs, tag = 'smem constant byte address 0x4 - core index']
  #allocation1 [shape = 'u32[72,128]{1,0:T(1,128)}', space=vmem, size = 0x9000, scoped, tag = 'internal scratch']
  %s0 = inlined_call_operand.vmem [shape: f32[1024,32], index: 0, kind: input, shape index: {}]
  %s1 = inlined_call_operand.vmem [shape: f32[1,32], index: 1, kind: input, shape index: {}]
  %s2 = inlined_call_operand.vmem [shape: f32[1,32], index: 2, kind: input, shape index: {}]
  %s3 = inlined_call_operand.vmem [shape: f32[32,96], index: 3, kind: input, shape index: {}]
  %s4 = inlined_call_operand.vmem [shape: f32[1,96], index: 4, kind: input, shape index: {}]
  %s5 = inlined_call_operand.vmem [shape: f32[96,32], index: 5, kind: input, shape index: {}]
  %s6 = inlined_call_operand.vmem [shape: f32[1,32], index: 6, kind: input, shape index: {}]
  %s7 = inlined_call_operand.vmem [shape: f32[1024,32], index: 7, kind: output, shape index: {}]
  %s8 = sld [smem:[#allocation0]]
  $region61: #{ssmlp_forward.38} parent=0
    _
  %s10 = ssub.s32 1, %s8
  %s11 = scalar_select 0, %s10, %s8
  loop: start=0, step=1, limit=4
  $region2: #{ssmlp_forward.38} parent=0 // loop_pre_header
    _
  $region3: #{ssmlp_forward.38} parent=0 // loop_header
    %s13 = sphi 0, %s17
    %p14 = scmp.ge.s32.totalorder %s13, 4
    %s23 = sphi 0, %s25
    %s26 = sphi 0, %s23
    %s27 = sphi 0, %s26
    %s43 = sphi 0, %s27
    %s47 = sphi 0, %s47
    %s49 = sphi 0, %s47
    %s50 = sphi 0, %s49
    %s64 = sphi 0, %s50
    %s68 = sphi 0, %s68
    %s70 = sphi 0, %s68
    %s71 = sphi 0, %s70
    %s85 = sphi 0, %s71
    %s89 = sphi 0, %s89
    %s91 = sphi 0, %s89
    %s92 = sphi 0, %s91
    %s106 = sphi 0, %s92
    %s110 = sphi 0, %s110
    %s112 = sphi 0, %s110
    %s113 = sphi 0, %s112
    %s127 = sphi 0, %s113
    %s131 = sphi 0, %s131
    %s133 = sphi 0, %s131
    %s134 = sphi 0, %s133
    %s148 = sphi 0, %s134
    %s152 = sphi 0, %s152
    %s154 = sphi 0, %s152
    %s155 = sphi 0, %s154
    %s169 = sphi 0, %s155
    %s175 = sphi 0, %s177
    %s178 = sphi 0, %s175
    %s179 = sphi 0, %s178
    %s195 = sphi 0, %s179
  $region4: #{ssmlp_forward.38} parent=0 // loop_header_branch
    %16 = sbr.rel (%p14) target = $region8
  $region5: #{ssmlp_forward.38} parent=0 // loop_body
    %s18 = ssub.s32 %s13, 1
    %s19 = ssub.s32 %s13, 2
    %s20 = sadd.s32 %s13, 1
    %s21 = ssub.s32 %s13, %s20
    %p22 = scmp.eq.s32.totalorder %s21, 0
    %s24 = sadd.s32 %s23, 1
    %s25 = scalar_select %p22, %s23, %s24
    %p28 = pneg %p22
    %p29 = scmp.eq.s32.totalorder %s13, 1
    %p30 = por %p28, %p29
    %p31 = scmp.ne.s32.totalorder %s23, %s26
    %p32 = scmp.eq.s32.totalorder %s13, 0
    %p33 = por %p31, %p32
    %p34 = scmp.ne.s32.totalorder %s23, %s26
    %p35 = scmp.eq.s32.totalorder %s18, 1
    %p36 = por %p34, %p35
    %p37 = scmp.ne.s32.totalorder %s26, %s27
    %p38 = scmp.eq.s32.totalorder %s18, 0
    %p39 = por %p37, %p38
    %p40 = scmp.ne.s32.totalorder %s26, %s27
    %p41 = scmp.eq.s32.totalorder %s19, 1
    %p42 = por %p40, %p41
    %p44 = scmp.ne.s32.totalorder %s27, %s43
    %p45 = scmp.eq.s32.totalorder %s19, 0
    %p46 = por %p44, %p45
    %s48 = sadd.s32 %s47, 1
    %p51 = scmp.eq.s32.totalorder %s13, 1
    %p52 = scmp.ne.s32.totalorder %s47, %s49
    %p53 = scmp.eq.s32.totalorder %s13, 0
    %p54 = por %p52, %p53
    %p55 = scmp.ne.s32.totalorder %s47, %s49
    %p56 = scmp.eq.s32.totalorder %s18, 1
    %p57 = por %p55, %p56
    %p58 = scmp.ne.s32.totalorder %s49, %s50
    %p59 = scmp.eq.s32.totalorder %s18, 0
    %p60 = por %p58, %p59
    %p61 = scmp.ne.s32.totalorder %s49, %s50
    %p62 = scmp.eq.s32.totalorder %s19, 1
    %p63 = por %p61, %p62
    %p65 = scmp.ne.s32.totalorder %s50, %s64
    %p66 = scmp.eq.s32.totalorder %s19, 0
    %p67 = por %p65, %p66
    %s69 = sadd.s32 %s68, 1
    %p72 = scmp.eq.s32.totalorder %s13, 1
    %p73 = scmp.ne.s32.totalorder %s68, %s70
    %p74 = scmp.eq.s32.totalorder %s13, 0
    %p75 = por %p73, %p74
    %p76 = scmp.ne.s32.totalorder %s68, %s70
    %p77 = scmp.eq.s32.totalorder %s18, 1
    %p78 = por %p76, %p77
    %p79 = scmp.ne.s32.totalorder %s70, %s71
    %p80 = scmp.eq.s32.totalorder %s18, 0
    %p81 = por %p79, %p80
    %p82 = scmp.ne.s32.totalorder %s70, %s71
    %p83 = scmp.eq.s32.totalorder %s19, 1
    %p84 = por %p82, %p83
    %p86 = scmp.ne.s32.totalorder %s71, %s85
    %p87 = scmp.eq.s32.totalorder %s19, 0
    %p88 = por %p86, %p87
    %s90 = sadd.s32 %s89, 1
    %p93 = scmp.eq.s32.totalorder %s13, 1
    %p94 = scmp.ne.s32.totalorder %s89, %s91
    %p95 = scmp.eq.s32.totalorder %s13, 0
    %p96 = por %p94, %p95
    %p97 = scmp.ne.s32.totalorder %s89, %s91
    %p98 = scmp.eq.s32.totalorder %s18, 1
    %p99 = por %p97, %p98
    %p100 = scmp.ne.s32.totalorder %s91, %s92
    %p101 = scmp.eq.s32.totalorder %s18, 0
    %p102 = por %p100, %p101
    %p103 = scmp.ne.s32.totalorder %s91, %s92
    %p104 = scmp.eq.s32.totalorder %s19, 1
    %p105 = por %p103, %p104
    %p107 = scmp.ne.s32.totalorder %s92, %s106
    %p108 = scmp.eq.s32.totalorder %s19, 0
    %p109 = por %p107, %p108
    %s111 = sadd.s32 %s110, 1
    %p114 = scmp.eq.s32.totalorder %s13, 1
    %p115 = scmp.ne.s32.totalorder %s110, %s112
    %p116 = scmp.eq.s32.totalorder %s13, 0
    %p117 = por %p115, %p116
    %p118 = scmp.ne.s32.totalorder %s110, %s112
    %p119 = scmp.eq.s32.totalorder %s18, 1
    %p120 = por %p118, %p119
    %p121 = scmp.ne.s32.totalorder %s112, %s113
    %p122 = scmp.eq.s32.totalorder %s18, 0
    %p123 = por %p121, %p122
    %p124 = scmp.ne.s32.totalorder %s112, %s113
    %p125 = scmp.eq.s32.totalorder %s19, 1
    %p126 = por %p124, %p125
    %p128 = scmp.ne.s32.totalorder %s113, %s127
    %p129 = scmp.eq.s32.totalorder %s19, 0
    %p130 = por %p128, %p129
    %s132 = sadd.s32 %s131, 1
    %p135 = scmp.eq.s32.totalorder %s13, 1
    %p136 = scmp.ne.s32.totalorder %s131, %s133
    %p137 = scmp.eq.s32.totalorder %s13, 0
    %p138 = por %p136, %p137
    %p139 = scmp.ne.s32.totalorder %s131, %s133
    %p140 = scmp.eq.s32.totalorder %s18, 1
    %p141 = por %p139, %p140
    %p142 = scmp.ne.s32.totalorder %s133, %s134
    %p143 = scmp.eq.s32.totalorder %s18, 0
    %p144 = por %p142, %p143
    %p145 = scmp.ne.s32.totalorder %s133, %s134
    %p146 = scmp.eq.s32.totalorder %s19, 1
    %p147 = por %p145, %p146
    %p149 = scmp.ne.s32.totalorder %s134, %s148
    %p150 = scmp.eq.s32.totalorder %s19, 0
    %p151 = por %p149, %p150
    %s153 = sadd.s32 %s152, 1
    %p156 = scmp.eq.s32.totalorder %s13, 1
    %p157 = scmp.ne.s32.totalorder %s152, %s154
    %p158 = scmp.eq.s32.totalorder %s13, 0
    %p159 = por %p157, %p158
    %p160 = scmp.ne.s32.totalorder %s152, %s154
    %p161 = scmp.eq.s32.totalorder %s18, 1
    %p162 = por %p160, %p161
    %p163 = scmp.ne.s32.totalorder %s154, %s155
    %p164 = scmp.eq.s32.totalorder %s18, 0
    %p165 = por %p163, %p164
    %p166 = scmp.ne.s32.totalorder %s154, %s155
    %p167 = scmp.eq.s32.totalorder %s19, 1
    %p168 = por %p166, %p167
    %p170 = scmp.ne.s32.totalorder %s155, %s169
    %p171 = scmp.eq.s32.totalorder %s19, 0
    %p172 = por %p170, %p171
    %s173 = ssub.s32 %s13, %s20
    %p174 = scmp.eq.s32.totalorder %s173, 0
    %s176 = sadd.s32 %s175, 1
    %s177 = scalar_select %p174, %s175, %s176
    %p180 = pneg %p174
    %p181 = scmp.eq.s32.totalorder %s13, 1
    %p182 = por %p180, %p181
    %p183 = scmp.ne.s32.totalorder %s175, %s178
    %p184 = scmp.eq.s32.totalorder %s13, 0
    %p185 = por %p183, %p184
    %p186 = scmp.ne.s32.totalorder %s175, %s178
    %p187 = scmp.eq.s32.totalorder %s18, 1
    %p188 = por %p186, %p187
    %p189 = scmp.ne.s32.totalorder %s178, %s179
    %p190 = scmp.eq.s32.totalorder %s18, 0
    %p191 = por %p189, %p190
    %p192 = scmp.ne.s32.totalorder %s178, %s179
    %p193 = scmp.eq.s32.totalorder %s19, 1
    %p194 = por %p192, %p193
    %p196 = scmp.ne.s32.totalorder %s179, %s195
    %p197 = scmp.eq.s32.totalorder %s19, 0
    %p198 = por %p196, %p197
    %p199 = scmp.le.s32.totalorder 1, %s13
    %p200 = scmp.lt.s32.totalorder %s13, 3
    %p201 = pnand %p199, %p200
    %p202 = pneg %p201
    // Predicated region
    $region9: #{ssmlp_forward.38} parent=5 // pred_check
      _
    $region10: #{ssmlp_forward.38} parent=5 // pred_check_branch
      %204 = sbr.rel (%p201) target = $region12
    $region11: #{ssmlp_forward.38} parent=5 // pred_region
      %s205 = ssub.s32 %s13, 1
      // Predicated region
      $region13: #{ssmlp_forward.38} parent=11 // pred_check
        %p206 = pneg %p60
      $region14: #{ssmlp_forward.38} parent=11 // pred_check_branch
        %208 = sbr.rel (%p206) target = $region16
      $region15: #{ssmlp_forward.38} parent=11 // pred_region
        _
      $region16: #{ssmlp_forward.38} parent=11 // pred_fallthru
        _
      // Predicated region
      $region17: #{ssmlp_forward.38} parent=11 // pred_check
        %p209 = pneg %p81
      $region18: #{ssmlp_forward.38} parent=11 // pred_check_branch
        %211 = sbr.rel (%p209) target = $region20
      $region19: #{ssmlp_forward.38} parent=11 // pred_region
        _
      $region20: #{ssmlp_forward.38} parent=11 // pred_fallthru
        _
      // Predicated region
      $region21: #{ssmlp_forward.38} parent=11 // pred_check
        %p212 = pneg %p102
      $region22: #{ssmlp_forward.38} parent=11 // pred_check_branch
        %214 = sbr.rel (%p212) target = $region24
      $region23: #{ssmlp_forward.38} parent=11 // pred_region
        _
      $region24: #{ssmlp_forward.38} parent=11 // pred_fallthru
        _
      // Predicated region
      $region25: #{ssmlp_forward.38} parent=11 // pred_check
        %p215 = pneg %p123
      $region26: #{ssmlp_forward.38} parent=11 // pred_check_branch
        %217 = sbr.rel (%p215) target = $region28
      $region27: #{ssmlp_forward.38} parent=11 // pred_region
        _
      $region28: #{ssmlp_forward.38} parent=11 // pred_fallthru
        _
      // Predicated region
      $region29: #{ssmlp_forward.38} parent=11 // pred_check
        %p218 = pneg %p144
      $region30: #{ssmlp_forward.38} parent=11 // pred_check_branch
        %220 = sbr.rel (%p218) target = $region32
      $region31: #{ssmlp_forward.38} parent=11 // pred_region
        _
      $region32: #{ssmlp_forward.38} parent=11 // pred_fallthru
        _
      // Predicated region
      $region33: #{ssmlp_forward.38} parent=11 // pred_check
        %p221 = pneg %p165
      $region34: #{ssmlp_forward.38} parent=11 // pred_check_branch
        %223 = sbr.rel (%p221) target = $region36
      $region35: #{ssmlp_forward.38} parent=11 // pred_region
        _
      $region36: #{ssmlp_forward.38} parent=11 // pred_fallthru
        _
    $region12: #{ssmlp_forward.38} parent=5 // pred_fallthru
      _
    %p224 = scmp.lt.s32.totalorder %s13, 2
    // Predicated region
    $region37: #{ssmlp_forward.38} parent=5 // pred_check
      %p225 = pneg %p224
    $region38: #{ssmlp_forward.38} parent=5 // pred_check_branch
      %227 = sbr.rel (%p225) target = $region40
    $region39: #{ssmlp_forward.38} parent=5 // pred_region
      // Predicated region
      $region41: #{ssmlp_forward.38} parent=39 // pred_check
        %p228 = pneg %p33
      $region42: #{ssmlp_forward.38} parent=39 // pred_check_branch
        %230 = sbr.rel (%p228) target = $region44
      $region43: #{ssmlp_forward.38} parent=39 // pred_region
        %s231 = smul.u32 64, %s13
        %p232 = scmp.lt.s32.totalorder %s231, 127
        %s233 = scalar_select %p232, %s231, 127
        %s234 = smul.addr %s233, 8
        %s235 = scalar_lea.vmem %s0, %s234
        %s236 = smul.u32 64, %s13
      $region44: #{ssmlp_forward.38} parent=39 // pred_fallthru
        _
    $region40: #{ssmlp_forward.38} parent=5 // pred_fallthru
      _
    %p237 = scmp.le.s32.totalorder 1, %s13
    %p238 = scmp.lt.s32.totalorder %s13, 3
    %p239 = pnand %p237, %p238
    %p240 = pneg %p239
    // Predicated region
    $region45: #{ssmlp_forward.38} parent=5 // pred_check
      _
    $region46: #{ssmlp_forward.38} parent=5 // pred_check_branch
      %242 = sbr.rel (%p239) target = $region48
    $region47: #{ssmlp_forward.38} parent=5 // pred_region
      %s243 = ssub.s32 %s13, 1
      %s244 = smul.u32 64, %s18
      %p245 = scmp.lt.s32.totalorder %s244, 127
      %s246 = scalar_select %p245, %s244, 127
      %s247 = smul.addr %s246, 8
      %s248 = scalar_lea.vmem %s0, %s247
      %p249 = pneg %p39
      %p250 = pneg %p36
      %p251 = pneg %p60
      %p252 = pneg %p57
      %p253 = pneg %p81
      %p254 = pneg %p78
      %p255 = pneg %p102
      %p256 = pneg %p99
      %p257 = pneg %p123
      %p258 = pneg %p120
      %p259 = pneg %p144
      %p260 = pneg %p141
      %p261 = pneg %p165
      %p262 = pneg %p162
      %p263 = pneg %p191
      %p264 = pneg %p188
      %s265 = smul.u32 64, %s18
      %p266 = scmp.lt.s32.totalorder %s265, 127
      %s267 = scalar_select %p266, %s265, 127
      %s268 = smul.addr %s267, 8
      %s269 = scalar_lea.vmem %s7, %s268
      %s270 = smul.u32 64, %s18
      %p271 = scmp.lt.s32.totalorder %s270, 127
      %s272 = scalar_select %p271, %s270, 127
      %s273 = smul.addr %s272, 8
      %s274 = scalar_lea.vmem %s0, %s273
      %s275 = smul.u32 64, %s18
      %s276 = smul.u32 64, %s18
      %p277 = scmp.lt.s32.totalorder %s276, 127
      %s278 = scalar_select %p277, %s276, 127
      %s279 = smul.addr %s278, 8
      %s280 = scalar_lea.vmem %s7, %s279
      %s281 = smul.u32 64, %s18
      %v282 = vld [vmem:[%s274] sm:$0xff]
      %v283 = vld [vmem:[%s274 + $0x8] sm:$0xff]
      %v284 = vld [vmem:[%s274 + $0x10] sm:$0xff]
      %v285 = vld [vmem:[%s274 + $0x18] sm:$0xff]
      %v286 = vld [vmem:[%s274 + $0x20] sm:$0xff]
      %v287 = vld [vmem:[%s274 + $0x28] sm:$0xff]
      %v288 = vld [vmem:[%s274 + $0x30] sm:$0xff]
      %v289 = vld [vmem:[%s274 + $0x38] sm:$0xff]
      %v290 = vld [vmem:[%s274 + $0x40] sm:$0xff]
      %v291 = vld [vmem:[%s274 + $0x48] sm:$0xff]
      %v292 = vld [vmem:[%s274 + $0x50] sm:$0xff]
      %v293 = vld [vmem:[%s274 + $0x58] sm:$0xff]
      %v294 = vld [vmem:[%s274 + $0x60] sm:$0xff]
      %v295 = vld [vmem:[%s274 + $0x68] sm:$0xff]
      %v296 = vld [vmem:[%s274 + $0x70] sm:$0xff]
      %v297 = vld [vmem:[%s274 + $0x78] sm:$0xff]
      %v298 = vld [vmem:[%s274 + $0x80] sm:$0xff]
      %v299 = vld [vmem:[%s274 + $0x88] sm:$0xff]
      %v300 = vld [vmem:[%s274 + $0x90] sm:$0xff]
      %v301 = vld [vmem:[%s274 + $0x98] sm:$0xff]
      %v302 = vld [vmem:[%s274 + $0xa0] sm:$0xff]
      %v303 = vld [vmem:[%s274 + $0xa8] sm:$0xff]
      %v304 = vld [vmem:[%s274 + $0xb0] sm:$0xff]
      %v305 = vld [vmem:[%s274 + $0xb8] sm:$0xff]
      %v306 = vld [vmem:[%s274 + $0xc0] sm:$0xff]
      %v307 = vld [vmem:[%s274 + $0xc8] sm:$0xff]
      %v308 = vld [vmem:[%s274 + $0xd0] sm:$0xff]
      %v309 = vld [vmem:[%s274 + $0xd8] sm:$0xff]
      %v310 = vld [vmem:[%s274 + $0xe0] sm:$0xff]
      %v311 = vld [vmem:[%s274 + $0xe8] sm:$0xff]
      %v312 = vld [vmem:[%s274 + $0xf0] sm:$0xff]
      %v313 = vld [vmem:[%s274 + $0xf8] sm:$0xff]
      %v314 = vld [vmem:[%s274 + $0x100] sm:$0xff]
      %v315 = vld [vmem:[%s274 + $0x108] sm:$0xff]
      %v316 = vld [vmem:[%s274 + $0x110] sm:$0xff]
      %v317 = vld [vmem:[%s274 + $0x118] sm:$0xff]
      %v318 = vld [vmem:[%s274 + $0x120] sm:$0xff]
      %v319 = vld [vmem:[%s274 + $0x128] sm:$0xff]
      %v320 = vld [vmem:[%s274 + $0x130] sm:$0xff]
      %v321 = vld [vmem:[%s274 + $0x138] sm:$0xff]
      %v322 = vld [vmem:[%s274 + $0x140] sm:$0xff]
      %v323 = vld [vmem:[%s274 + $0x148] sm:$0xff]
      %v324 = vld [vmem:[%s274 + $0x150] sm:$0xff]
      %v325 = vld [vmem:[%s274 + $0x158] sm:$0xff]
      %v326 = vld [vmem:[%s274 + $0x160] sm:$0xff]
      %v327 = vld [vmem:[%s274 + $0x168] sm:$0xff]
      %v328 = vld [vmem:[%s274 + $0x170] sm:$0xff]
      %v329 = vld [vmem:[%s274 + $0x178] sm:$0xff]
      %v330 = vld [vmem:[%s274 + $0x180] sm:$0xff]
      %v331 = vld [vmem:[%s274 + $0x188] sm:$0xff]
      %v332 = vld [vmem:[%s274 + $0x190] sm:$0xff]
      %v333 = vld [vmem:[%s274 + $0x198] sm:$0xff]
      %v334 = vld [vmem:[%s274 + $0x1a0] sm:$0xff]
      %v335 = vld [vmem:[%s274 + $0x1a8] sm:$0xff]
      %v336 = vld [vmem:[%s274 + $0x1b0] sm:$0xff]
      %v337 = vld [vmem:[%s274 + $0x1b8] sm:$0xff]
      %v338 = vld [vmem:[%s274 + $0x1c0] sm:$0xff]
      %v339 = vld [vmem:[%s274 + $0x1c8] sm:$0xff]
      %v340 = vld [vmem:[%s274 + $0x1d0] sm:$0xff]
      %v341 = vld [vmem:[%s274 + $0x1d8] sm:$0xff]
      %v342 = vld [vmem:[%s274 + $0x1e0] sm:$0xff]
      %v343 = vld [vmem:[%s274 + $0x1e8] sm:$0xff]
      %v344 = vld [vmem:[%s274 + $0x1f0] sm:$0xff]
      %v345 = vld [vmem:[%s274 + $0x1f8] sm:$0xff]
      %vm346 = vcmask 261120
      %v347 = vsel %vm346, %v282, 0.0
      %348 = vadd.xlane.f32.xlu0 %v347
      %v349 = vpop.xlane.xlu0 %348
      %v350 = vsel %vm346, %v283, 0.0
      %351 = vadd.xlane.f32.xlu0 %v350
      %v352 = vpop.xlane.xlu0 %351
      %v353 = vsel %vm346, %v284, 0.0
      %354 = vadd.xlane.f32.xlu0 %v353
      %v355 = vpop.xlane.xlu0 %354
      %v356 = vsel %vm346, %v285, 0.0
      %357 = vadd.xlane.f32.xlu0 %v356
      %v358 = vpop.xlane.xlu0 %357
      %v359 = vsel %vm346, %v286, 0.0
      %360 = vadd.xlane.f32.xlu0 %v359
      %v361 = vpop.xlane.xlu0 %360
      %v362 = vsel %vm346, %v287, 0.0
      %363 = vadd.xlane.f32.xlu0 %v362
      %v364 = vpop.xlane.xlu0 %363
      %v365 = vsel %vm346, %v288, 0.0
      %366 = vadd.xlane.f32.xlu0 %v365
      %v367 = vpop.xlane.xlu0 %366
      %v368 = vsel %vm346, %v289, 0.0
      %369 = vadd.xlane.f32.xlu0 %v368
      %v370 = vpop.xlane.xlu0 %369
      %v371 = vsel %vm346, %v290, 0.0
      %372 = vadd.xlane.f32.xlu0 %v371
      %v373 = vpop.xlane.xlu0 %372
      %v374 = vsel %vm346, %v291, 0.0
      %375 = vadd.xlane.f32.xlu0 %v374
      %v376 = vpop.xlane.xlu0 %375
      %v377 = vsel %vm346, %v292, 0.0
      %378 = vadd.xlane.f32.xlu0 %v377
      %v379 = vpop.xlane.xlu0 %378
      %v380 = vsel %vm346, %v293, 0.0
      %381 = vadd.xlane.f32.xlu0 %v380
      %v382 = vpop.xlane.xlu0 %381
      %v383 = vsel %vm346, %v294, 0.0
      %384 = vadd.xlane.f32.xlu0 %v383
      %v385 = vpop.xlane.xlu0 %384
      %v386 = vsel %vm346, %v295, 0.0
      %387 = vadd.xlane.f32.xlu0 %v386
      %v388 = vpop.xlane.xlu0 %387
      %v389 = vsel %vm346, %v296, 0.0
      %390 = vadd.xlane.f32.xlu0 %v389
      %v391 = vpop.xlane.xlu0 %390
      %v392 = vsel %vm346, %v297, 0.0
      %393 = vadd.xlane.f32.xlu0 %v392
      %v394 = vpop.xlane.xlu0 %393
      %v395 = vsel %vm346, %v298, 0.0
      %396 = vadd.xlane.f32.xlu0 %v395
      %v397 = vpop.xlane.xlu0 %396
      %v398 = vsel %vm346, %v299, 0.0
      %399 = vadd.xlane.f32.xlu0 %v398
      %v400 = vpop.xlane.xlu0 %399
      %v401 = vsel %vm346, %v300, 0.0
      %402 = vadd.xlane.f32.xlu0 %v401
      %v403 = vpop.xlane.xlu0 %402
      %v404 = vsel %vm346, %v301, 0.0
      %405 = vadd.xlane.f32.xlu0 %v404
      %v406 = vpop.xlane.xlu0 %405
      %v407 = vsel %vm346, %v302, 0.0
      %408 = vadd.xlane.f32.xlu0 %v407
      %v409 = vpop.xlane.xlu0 %408
      %v410 = vsel %vm346, %v303, 0.0
      %411 = vadd.xlane.f32.xlu0 %v410
      %v412 = vpop.xlane.xlu0 %411
      %v413 = vsel %vm346, %v304, 0.0
      %414 = vadd.xlane.f32.xlu0 %v413
      %v415 = vpop.xlane.xlu0 %414
      %v416 = vsel %vm346, %v305, 0.0
      %417 = vadd.xlane.f32.xlu0 %v416
      %v418 = vpop.xlane.xlu0 %417
      %v419 = vsel %vm346, %v306, 0.0
      %420 = vadd.xlane.f32.xlu0 %v419
      %v421 = vpop.xlane.xlu0 %420
      %v422 = vsel %vm346, %v307, 0.0
      %423 = vadd.xlane.f32.xlu0 %v422
      %v424 = vpop.xlane.xlu0 %423
      %v425 = vsel %vm346, %v308, 0.0
      %426 = vadd.xlane.f32.xlu0 %v425
      %v427 = vpop.xlane.xlu0 %426
      %v428 = vsel %vm346, %v309, 0.0
      %429 = vadd.xlane.f32.xlu0 %v428
      %v430 = vpop.xlane.xlu0 %429
      %v431 = vsel %vm346, %v310, 0.0
      %432 = vadd.xlane.f32.xlu0 %v431
      %v433 = vpop.xlane.xlu0 %432
      %v434 = vsel %vm346, %v311, 0.0
      %435 = vadd.xlane.f32.xlu0 %v434
      %v436 = vpop.xlane.xlu0 %435
      %v437 = vsel %vm346, %v312, 0.0
      %438 = vadd.xlane.f32.xlu0 %v437
      %v439 = vpop.xlane.xlu0 %438
      %v440 = vsel %vm346, %v313, 0.0
      %441 = vadd.xlane.f32.xlu0 %v440
      %v442 = vpop.xlane.xlu0 %441
      %v443 = vsel %vm346, %v314, 0.0
      %444 = vadd.xlane.f32.xlu0 %v443
      %v445 = vpop.xlane.xlu0 %444
      %v446 = vsel %vm346, %v315, 0.0
      %447 = vadd.xlane.f32.xlu0 %v446
      %v448 = vpop.xlane.xlu0 %447
      %v449 = vsel %vm346, %v316, 0.0
      %450 = vadd.xlane.f32.xlu0 %v449
      %v451 = vpop.xlane.xlu0 %450
      %v452 = vsel %vm346, %v317, 0.0
      %453 = vadd.xlane.f32.xlu0 %v452
      %v454 = vpop.xlane.xlu0 %453
      %v455 = vsel %vm346, %v318, 0.0
      %456 = vadd.xlane.f32.xlu0 %v455
      %v457 = vpop.xlane.xlu0 %456
      %v458 = vsel %vm346, %v319, 0.0
      %459 = vadd.xlane.f32.xlu0 %v458
      %v460 = vpop.xlane.xlu0 %459
      %v461 = vsel %vm346, %v320, 0.0
      %462 = vadd.xlane.f32.xlu0 %v461
      %v463 = vpop.xlane.xlu0 %462
      %v464 = vsel %vm346, %v321, 0.0
      %465 = vadd.xlane.f32.xlu0 %v464
      %v466 = vpop.xlane.xlu0 %465
      %v467 = vsel %vm346, %v322, 0.0
      %468 = vadd.xlane.f32.xlu0 %v467
      %v469 = vpop.xlane.xlu0 %468
      %v470 = vsel %vm346, %v323, 0.0
      %471 = vadd.xlane.f32.xlu0 %v470
      %v472 = vpop.xlane.xlu0 %471
      %v473 = vsel %vm346, %v324, 0.0
      %474 = vadd.xlane.f32.xlu0 %v473
      %v475 = vpop.xlane.xlu0 %474
      %v476 = vsel %vm346, %v325, 0.0
      %477 = vadd.xlane.f32.xlu0 %v476
      %v478 = vpop.xlane.xlu0 %477
      %v479 = vsel %vm346, %v326, 0.0
      %480 = vadd.xlane.f32.xlu0 %v479
      %v481 = vpop.xlane.xlu0 %480
      %v482 = vsel %vm346, %v327, 0.0
      %483 = vadd.xlane.f32.xlu0 %v482
      %v484 = vpop.xlane.xlu0 %483
      %v485 = vsel %vm346, %v328, 0.0
      %486 = vadd.xlane.f32.xlu0 %v485
      %v487 = vpop.xlane.xlu0 %486
      %v488 = vsel %vm346, %v329, 0.0
      %489 = vadd.xlane.f32.xlu0 %v488
      %v490 = vpop.xlane.xlu0 %489
      %v491 = vsel %vm346, %v330, 0.0
      %492 = vadd.xlane.f32.xlu0 %v491
      %v493 = vpop.xlane.xlu0 %492
      %v494 = vsel %vm346, %v331, 0.0
      %495 = vadd.xlane.f32.xlu0 %v494
      %v496 = vpop.xlane.xlu0 %495
      %v497 = vsel %vm346, %v332, 0.0
      %498 = vadd.xlane.f32.xlu0 %v497
      %v499 = vpop.xlane.xlu0 %498
      %v500 = vsel %vm346, %v333, 0.0
      %501 = vadd.xlane.f32.xlu0 %v500
      %v502 = vpop.xlane.xlu0 %501
      %v503 = vsel %vm346, %v334, 0.0
      %504 = vadd.xlane.f32.xlu0 %v503
      %v505 = vpop.xlane.xlu0 %504
      %v506 = vsel %vm346, %v335, 0.0
      %507 = vadd.xlane.f32.xlu0 %v506
      %v508 = vpop.xlane.xlu0 %507
      %v509 = vsel %vm346, %v336, 0.0
      %510 = vadd.xlane.f32.xlu0 %v509
      %v511 = vpop.xlane.xlu0 %510
      %v512 = vsel %vm346, %v337, 0.0
      %513 = vadd.xlane.f32.xlu0 %v512
      %v514 = vpop.xlane.xlu0 %513
      %v515 = vsel %vm346, %v338, 0.0
      %516 = vadd.xlane.f32.xlu0 %v515
      %v517 = vpop.xlane.xlu0 %516
      %v518 = vsel %vm346, %v339, 0.0
      %519 = vadd.xlane.f32.xlu0 %v518
      %v520 = vpop.xlane.xlu0 %519
      %v521 = vsel %vm346, %v340, 0.0
      %522 = vadd.xlane.f32.xlu0 %v521
      %v523 = vpop.xlane.xlu0 %522
      %v524 = vsel %vm346, %v341, 0.0
      %525 = vadd.xlane.f32.xlu0 %v524
      %v526 = vpop.xlane.xlu0 %525
      %v527 = vsel %vm346, %v342, 0.0
      %528 = vadd.xlane.f32.xlu0 %v527
      %v529 = vpop.xlane.xlu0 %528
      %v530 = vsel %vm346, %v343, 0.0
      %531 = vadd.xlane.f32.xlu0 %v530
      %v532 = vpop.xlane.xlu0 %531
      %v533 = vsel %vm346, %v344, 0.0
      %534 = vadd.xlane.f32.xlu0 %v533
      %v535 = vpop.xlane.xlu0 %534
      %v536 = vsel %vm346, %v345, 0.0
      %537 = vadd.xlane.f32.xlu0 %v536
      %v538 = vpop.xlane.xlu0 %537
      %v539 = vrcp.pop 32.0
      %v540 = vmul.f32 32.0, %v539
      %v541 = vsub.f32 1.0, %v540
      %v542 = vmul.f32 %v539, %v541
      %v543 = vadd.f32 %v539, %v542
      %vm544 = vweird.f32 %v539
      %v545 = vsel %vm544, %v539, %v543
      %v546 = vmul.f32 %v349, %v545
      %v547 = vmul.f32 %v352, %v545
      %v548 = vmul.f32 %v355, %v545
      %v549 = vmul.f32 %v358, %v545
      %v550 = vmul.f32 %v361, %v545
      %v551 = vmul.f32 %v364, %v545
      %v552 = vmul.f32 %v367, %v545
      %v553 = vmul.f32 %v370, %v545
      %v554 = vmul.f32 %v373, %v545
      %v555 = vmul.f32 %v376, %v545
      %v556 = vmul.f32 %v379, %v545
      %v557 = vmul.f32 %v382, %v545
      %v558 = vmul.f32 %v385, %v545
      %v559 = vmul.f32 %v388, %v545
      %v560 = vmul.f32 %v391, %v545
      %v561 = vmul.f32 %v394, %v545
      %v562 = vmul.f32 %v397, %v545
      %v563 = vmul.f32 %v400, %v545
      %v564 = vmul.f32 %v403, %v545
      %v565 = vmul.f32 %v406, %v545
      %v566 = vmul.f32 %v409, %v545
      %v567 = vmul.f32 %v412, %v545
      %v568 = vmul.f32 %v415, %v545
      %v569 = vmul.f32 %v418, %v545
      %v570 = vmul.f32 %v421, %v545
      %v571 = vmul.f32 %v424, %v545
      %v572 = vmul.f32 %v427, %v545
      %v573 = vmul.f32 %v430, %v545
      %v574 = vmul.f32 %v433, %v545
      %v575 = vmul.f32 %v436, %v545
      %v576 = vmul.f32 %v439, %v545
      %v577 = vmul.f32 %v442, %v545
      %v578 = vmul.f32 %v445, %v545
      %v579 = vmul.f32 %v448, %v545
      %v580 = vmul.f32 %v451, %v545
      %v581 = vmul.f32 %v454, %v545
      %v582 = vmul.f32 %v457, %v545
      %v583 = vmul.f32 %v460, %v545
      %v584 = vmul.f32 %v463, %v545
      %v585 = vmul.f32 %v466, %v545
      %v586 = vmul.f32 %v469, %v545
      %v587 = vmul.f32 %v472, %v545
      %v588 = vmul.f32 %v475, %v545
      %v589 = vmul.f32 %v478, %v545
      %v590 = vmul.f32 %v481, %v545
      %v591 = vmul.f32 %v484, %v545
      %v592 = vmul.f32 %v487, %v545
      %v593 = vmul.f32 %v490, %v545
      %v594 = vmul.f32 %v493, %v545
      %v595 = vmul.f32 %v496, %v545
      %v596 = vmul.f32 %v499, %v545
      %v597 = vmul.f32 %v502, %v545
      %v598 = vmul.f32 %v505, %v545
      %v599 = vmul.f32 %v508, %v545
      %v600 = vmul.f32 %v511, %v545
      %v601 = vmul.f32 %v514, %v545
      %v602 = vmul.f32 %v517, %v545
      %v603 = vmul.f32 %v520, %v545
      %v604 = vmul.f32 %v523, %v545
      %v605 = vmul.f32 %v526, %v545
      %v606 = vmul.f32 %v529, %v545
      %v607 = vmul.f32 %v532, %v545
      %v608 = vmul.f32 %v535, %v545
      %v609 = vmul.f32 %v538, %v545
      %v610 = vmul.f32 %v282, %v282
      %v611 = vmul.f32 %v283, %v283
      %v612 = vmul.f32 %v284, %v284
      %v613 = vmul.f32 %v285, %v285
      %v614 = vmul.f32 %v286, %v286
      %v615 = vmul.f32 %v287, %v287
      %v616 = vmul.f32 %v288, %v288
      %v617 = vmul.f32 %v289, %v289
      %v618 = vmul.f32 %v290, %v290
      %v619 = vmul.f32 %v291, %v291
      %v620 = vmul.f32 %v292, %v292
      %v621 = vmul.f32 %v293, %v293
      %v622 = vmul.f32 %v294, %v294
      %v623 = vmul.f32 %v295, %v295
      %v624 = vmul.f32 %v296, %v296
      %v625 = vmul.f32 %v297, %v297
      %v626 = vmul.f32 %v298, %v298
      %v627 = vmul.f32 %v299, %v299
      %v628 = vmul.f32 %v300, %v300
      %v629 = vmul.f32 %v301, %v301
      %v630 = vmul.f32 %v302, %v302
      %v631 = vmul.f32 %v303, %v303
      %v632 = vmul.f32 %v304, %v304
      %v633 = vmul.f32 %v305, %v305
      %v634 = vmul.f32 %v306, %v306
      %v635 = vmul.f32 %v307, %v307
      %v636 = vmul.f32 %v308, %v308
      %v637 = vmul.f32 %v309, %v309
      %v638 = vmul.f32 %v310, %v310
      %v639 = vmul.f32 %v311, %v311
      %v640 = vmul.f32 %v312, %v312
      %v641 = vmul.f32 %v313, %v313
      %v642 = vmul.f32 %v314, %v314
      %v643 = vmul.f32 %v315, %v315
      %v644 = vmul.f32 %v316, %v316
      %v645 = vmul.f32 %v317, %v317
      %v646 = vmul.f32 %v318, %v318
      %v647 = vmul.f32 %v319, %v319
      %v648 = vmul.f32 %v320, %v320
      %v649 = vmul.f32 %v321, %v321
      %v650 = vmul.f32 %v322, %v322
      %v651 = vmul.f32 %v323, %v323
      %v652 = vmul.f32 %v324, %v324
      %v653 = vmul.f32 %v325, %v325
      %v654 = vmul.f32 %v326, %v326
      %v655 = vmul.f32 %v327, %v327
      %v656 = vmul.f32 %v328, %v328
      %v657 = vmul.f32 %v329, %v329
      %v658 = vmul.f32 %v330, %v330
      %v659 = vmul.f32 %v331, %v331
      %v660 = vmul.f32 %v332, %v332
      %v661 = vmul.f32 %v333, %v333
      %v662 = vmul.f32 %v334, %v334
      %v663 = vmul.f32 %v335, %v335
      %v664 = vmul.f32 %v336, %v336
      %v665 = vmul.f32 %v337, %v337
      %v666 = vmul.f32 %v338, %v338
      %v667 = vmul.f32 %v339, %v339
      %v668 = vmul.f32 %v340, %v340
      %v669 = vmul.f32 %v341, %v341
      %v670 = vmul.f32 %v342, %v342
      %v671 = vmul.f32 %v343, %v343
      %v672 = vmul.f32 %v344, %v344
      %v673 = vmul.f32 %v345, %v345
      %v674 = vsel %vm346, %v610, 0.0
      %675 = vadd.xlane.f32.xlu0 %v674
      %v676 = vpop.xlane.xlu0 %675
      %v677 = vsel %vm346, %v611, 0.0
      %678 = vadd.xlane.f32.xlu0 %v677
      %v679 = vpop.xlane.xlu0 %678
      %v680 = vsel %vm346, %v612, 0.0
      %681 = vadd.xlane.f32.xlu0 %v680
      %v682 = vpop.xlane.xlu0 %681
      %v683 = vsel %vm346, %v613, 0.0
      %684 = vadd.xlane.f32.xlu0 %v683
      %v685 = vpop.xlane.xlu0 %684
      %v686 = vsel %vm346, %v614, 0.0
      %687 = vadd.xlane.f32.xlu0 %v686
      %v688 = vpop.xlane.xlu0 %687
      %v689 = vsel %vm346, %v615, 0.0
      %690 = vadd.xlane.f32.xlu0 %v689
      %v691 = vpop.xlane.xlu0 %690
      %v692 = vsel %vm346, %v616, 0.0
      %693 = vadd.xlane.f32.xlu0 %v692
      %v694 = vpop.xlane.xlu0 %693
      %v695 = vsel %vm346, %v617, 0.0
      %696 = vadd.xlane.f32.xlu0 %v695
      %v697 = vpop.xlane.xlu0 %696
      %v698 = vsel %vm346, %v618, 0.0
      %699 = vadd.xlane.f32.xlu0 %v698
      %v700 = vpop.xlane.xlu0 %699
      %v701 = vsel %vm346, %v619, 0.0
      %702 = vadd.xlane.f32.xlu0 %v701
      %v703 = vpop.xlane.xlu0 %702
      %v704 = vsel %vm346, %v620, 0.0
      %705 = vadd.xlane.f32.xlu0 %v704
      %v706 = vpop.xlane.xlu0 %705
      %v707 = vsel %vm346, %v621, 0.0
      %708 = vadd.xlane.f32.xlu0 %v707
      %v709 = vpop.xlane.xlu0 %708
      %v710 = vsel %vm346, %v622, 0.0
      %711 = vadd.xlane.f32.xlu0 %v710
      %v712 = vpop.xlane.xlu0 %711
      %v713 = vsel %vm346, %v623, 0.0
      %714 = vadd.xlane.f32.xlu0 %v713
      %v715 = vpop.xlane.xlu0 %714
      %v716 = vsel %vm346, %v624, 0.0
      %717 = vadd.xlane.f32.xlu0 %v716
      %v718 = vpop.xlane.xlu0 %717
      %v719 = vsel %vm346, %v625, 0.0
      %720 = vadd.xlane.f32.xlu0 %v719
      %v721 = vpop.xlane.xlu0 %720
      %v722 = vsel %vm346, %v626, 0.0
      %723 = vadd.xlane.f32.xlu0 %v722
      %v724 = vpop.xlane.xlu0 %723
      %v725 = vsel %vm346, %v627, 0.0
      %726 = vadd.xlane.f32.xlu0 %v725
      %v727 = vpop.xlane.xlu0 %726
      %v728 = vsel %vm346, %v628, 0.0
      %729 = vadd.xlane.f32.xlu0 %v728
      %v730 = vpop.xlane.xlu0 %729
      %v731 = vsel %vm346, %v629, 0.0
      %732 = vadd.xlane.f32.xlu0 %v731
      %v733 = vpop.xlane.xlu0 %732
      %v734 = vsel %vm346, %v630, 0.0
      %735 = vadd.xlane.f32.xlu0 %v734
      %v736 = vpop.xlane.xlu0 %735
      %v737 = vsel %vm346, %v631, 0.0
      %738 = vadd.xlane.f32.xlu0 %v737
      %v739 = vpop.xlane.xlu0 %738
      %v740 = vsel %vm346, %v632, 0.0
      %741 = vadd.xlane.f32.xlu0 %v740
      %v742 = vpop.xlane.xlu0 %741
      %v743 = vsel %vm346, %v633, 0.0
      %744 = vadd.xlane.f32.xlu0 %v743
      %v745 = vpop.xlane.xlu0 %744
      %v746 = vsel %vm346, %v634, 0.0
      %747 = vadd.xlane.f32.xlu0 %v746
      %v748 = vpop.xlane.xlu0 %747
      %v749 = vsel %vm346, %v635, 0.0
      %750 = vadd.xlane.f32.xlu0 %v749
      %v751 = vpop.xlane.xlu0 %750
      %v752 = vsel %vm346, %v636, 0.0
      %753 = vadd.xlane.f32.xlu0 %v752
      %v754 = vpop.xlane.xlu0 %753
      %v755 = vsel %vm346, %v637, 0.0
      %756 = vadd.xlane.f32.xlu0 %v755
      %v757 = vpop.xlane.xlu0 %756
      %v758 = vsel %vm346, %v638, 0.0
      %759 = vadd.xlane.f32.xlu0 %v758
      %v760 = vpop.xlane.xlu0 %759
      %v761 = vsel %vm346, %v639, 0.0
      %762 = vadd.xlane.f32.xlu0 %v761
      %v763 = vpop.xlane.xlu0 %762
      %v764 = vsel %vm346, %v640, 0.0
      %765 = vadd.xlane.f32.xlu0 %v764
      %v766 = vpop.xlane.xlu0 %765
      %v767 = vsel %vm346, %v641, 0.0
      %768 = vadd.xlane.f32.xlu0 %v767
      %v769 = vpop.xlane.xlu0 %768
      %v770 = vsel %vm346, %v642, 0.0
      %771 = vadd.xlane.f32.xlu0 %v770
      %v772 = vpop.xlane.xlu0 %771
      %v773 = vsel %vm346, %v643, 0.0
      %774 = vadd.xlane.f32.xlu0 %v773
      %v775 = vpop.xlane.xlu0 %774
      %v776 = vsel %vm346, %v644, 0.0
      %777 = vadd.xlane.f32.xlu0 %v776
      %v778 = vpop.xlane.xlu0 %777
      %v779 = vsel %vm346, %v645, 0.0
      %780 = vadd.xlane.f32.xlu0 %v779
      %v781 = vpop.xlane.xlu0 %780
      %v782 = vsel %vm346, %v646, 0.0
      %783 = vadd.xlane.f32.xlu0 %v782
      %v784 = vpop.xlane.xlu0 %783
      %v785 = vsel %vm346, %v647, 0.0
      %786 = vadd.xlane.f32.xlu0 %v785
      %v787 = vpop.xlane.xlu0 %786
      %v788 = vsel %vm346, %v648, 0.0
      %789 = vadd.xlane.f32.xlu0 %v788
      %v790 = vpop.xlane.xlu0 %789
      %v791 = vsel %vm346, %v649, 0.0
      %792 = vadd.xlane.f32.xlu0 %v791
      %v793 = vpop.xlane.xlu0 %792
      %v794 = vsel %vm346, %v650, 0.0
      %795 = vadd.xlane.f32.xlu0 %v794
      %v796 = vpop.xlane.xlu0 %795
      %v797 = vsel %vm346, %v651, 0.0
      %798 = vadd.xlane.f32.xlu0 %v797
      %v799 = vpop.xlane.xlu0 %798
      %v800 = vsel %vm346, %v652, 0.0
      %801 = vadd.xlane.f32.xlu0 %v800
      %v802 = vpop.xlane.xlu0 %801
      %v803 = vsel %vm346, %v653, 0.0
      %804 = vadd.xlane.f32.xlu0 %v803
      %v805 = vpop.xlane.xlu0 %804
      %v806 = vsel %vm346, %v654, 0.0
      %807 = vadd.xlane.f32.xlu0 %v806
      %v808 = vpop.xlane.xlu0 %807
      %v809 = vsel %vm346, %v655, 0.0
      %810 = vadd.xlane.f32.xlu0 %v809
      %v811 = vpop.xlane.xlu0 %810
      %v812 = vsel %vm346, %v656, 0.0
      %813 = vadd.xlane.f32.xlu0 %v812
      %v814 = vpop.xlane.xlu0 %813
      %v815 = vsel %vm346, %v657, 0.0
      %816 = vadd.xlane.f32.xlu0 %v815
      %v817 = vpop.xlane.xlu0 %816
      %v818 = vsel %vm346, %v658, 0.0
      %819 = vadd.xlane.f32.xlu0 %v818
      %v820 = vpop.xlane.xlu0 %819
      %v821 = vsel %vm346, %v659, 0.0
      %822 = vadd.xlane.f32.xlu0 %v821
      %v823 = vpop.xlane.xlu0 %822
      %v824 = vsel %vm346, %v660, 0.0
      %825 = vadd.xlane.f32.xlu0 %v824
      %v826 = vpop.xlane.xlu0 %825
      %v827 = vsel %vm346, %v661, 0.0
      %828 = vadd.xlane.f32.xlu0 %v827
      %v829 = vpop.xlane.xlu0 %828
      %v830 = vsel %vm346, %v662, 0.0
      %831 = vadd.xlane.f32.xlu0 %v830
      %v832 = vpop.xlane.xlu0 %831
      %v833 = vsel %vm346, %v663, 0.0
      %834 = vadd.xlane.f32.xlu0 %v833
      %v835 = vpop.xlane.xlu0 %834
      %v836 = vsel %vm346, %v664, 0.0
      %837 = vadd.xlane.f32.xlu0 %v836
      %v838 = vpop.xlane.xlu0 %837
      %v839 = vsel %vm346, %v665, 0.0
      %840 = vadd.xlane.f32.xlu0 %v839
      %v841 = vpop.xlane.xlu0 %840
      %v842 = vsel %vm346, %v666, 0.0
      %843 = vadd.xlane.f32.xlu0 %v842
      %v844 = vpop.xlane.xlu0 %843
      %v845 = vsel %vm346, %v667, 0.0
      %846 = vadd.xlane.f32.xlu0 %v845
      %v847 = vpop.xlane.xlu0 %846
      %v848 = vsel %vm346, %v668, 0.0
      %849 = vadd.xlane.f32.xlu0 %v848
      %v850 = vpop.xlane.xlu0 %849
      %v851 = vsel %vm346, %v669, 0.0
      %852 = vadd.xlane.f32.xlu0 %v851
      %v853 = vpop.xlane.xlu0 %852
      %v854 = vsel %vm346, %v670, 0.0
      %855 = vadd.xlane.f32.xlu0 %v854
      %v856 = vpop.xlane.xlu0 %855
      %v857 = vsel %vm346, %v671, 0.0
      %858 = vadd.xlane.f32.xlu0 %v857
      %v859 = vpop.xlane.xlu0 %858
      %v860 = vsel %vm346, %v672, 0.0
      %861 = vadd.xlane.f32.xlu0 %v860
      %v862 = vpop.xlane.xlu0 %861
      %v863 = vsel %vm346, %v673, 0.0
      %864 = vadd.xlane.f32.xlu0 %v863
      %v865 = vpop.xlane.xlu0 %864
      %v866 = vmul.f32 %v676, %v545
      %v867 = vmul.f32 %v679, %v545
      %v868 = vmul.f32 %v682, %v545
      %v869 = vmul.f32 %v685, %v545
      %v870 = vmul.f32 %v688, %v545
      %v871 = vmul.f32 %v691, %v545
      %v872 = vmul.f32 %v694, %v545
      %v873 = vmul.f32 %v697, %v545
      %v874 = vmul.f32 %v700, %v545
      %v875 = vmul.f32 %v703, %v545
      %v876 = vmul.f32 %v706, %v545
      %v877 = vmul.f32 %v709, %v545
      %v878 = vmul.f32 %v712, %v545
      %v879 = vmul.f32 %v715, %v545
      %v880 = vmul.f32 %v718, %v545
      %v881 = vmul.f32 %v721, %v545
      %v882 = vmul.f32 %v724, %v545
      %v883 = vmul.f32 %v727, %v545
      %v884 = vmul.f32 %v730, %v545
      %v885 = vmul.f32 %v733, %v545
      %v886 = vmul.f32 %v736, %v545
      %v887 = vmul.f32 %v739, %v545
      %v888 = vmul.f32 %v742, %v545
      %v889 = vmul.f32 %v745, %v545
      %v890 = vmul.f32 %v748, %v545
      %v891 = vmul.f32 %v751, %v545
      %v892 = vmul.f32 %v754, %v545
      %v893 = vmul.f32 %v757, %v545
      %v894 = vmul.f32 %v760, %v545
      %v895 = vmul.f32 %v763, %v545
      %v896 = vmul.f32 %v766, %v545
      %v897 = vmul.f32 %v769, %v545
      %v898 = vmul.f32 %v772, %v545
      %v899 = vmul.f32 %v775, %v545
      %v900 = vmul.f32 %v778, %v545
      %v901 = vmul.f32 %v781, %v545
      %v902 = vmul.f32 %v784, %v545
      %v903 = vmul.f32 %v787, %v545
      %v904 = vmul.f32 %v790, %v545
      %v905 = vmul.f32 %v793, %v545
      %v906 = vmul.f32 %v796, %v545
      %v907 = vmul.f32 %v799, %v545
      %v908 = vmul.f32 %v802, %v545
      %v909 = vmul.f32 %v805, %v545
      %v910 = vmul.f32 %v808, %v545
      %v911 = vmul.f32 %v811, %v545
      %v912 = vmul.f32 %v814, %v545
      %v913 = vmul.f32 %v817, %v545
      %v914 = vmul.f32 %v820, %v545
      %v915 = vmul.f32 %v823, %v545
      %v916 = vmul.f32 %v826, %v545
      %v917 = vmul.f32 %v829, %v545
      %v918 = vmul.f32 %v832, %v545
      %v919 = vmul.f32 %v835, %v545
      %v920 = vmul.f32 %v838, %v545
      %v921 = vmul.f32 %v841, %v545
      %v922 = vmul.f32 %v844, %v545
      %v923 = vmul.f32 %v847, %v545
      %v924 = vmul.f32 %v850, %v545
      %v925 = vmul.f32 %v853, %v545
      %v926 = vmul.f32 %v856, %v545
      %v927 = vmul.f32 %v859, %v545
      %v928 = vmul.f32 %v862, %v545
      %v929 = vmul.f32 %v865, %v545
      %v930 = vmul.f32 %v546, %v546
      %v931 = vmul.f32 %v547, %v547
      %v932 = vmul.f32 %v548, %v548
      %v933 = vmul.f32 %v549, %v549
      %v934 = vmul.f32 %v550, %v550
      %v935 = vmul.f32 %v551, %v551
      %v936 = vmul.f32 %v552, %v552
      %v937 = vmul.f32 %v553, %v553
      %v938 = vmul.f32 %v554, %v554
      %v939 = vmul.f32 %v555, %v555
      %v940 = vmul.f32 %v556, %v556
      %v941 = vmul.f32 %v557, %v557
      %v942 = vmul.f32 %v558, %v558
      %v943 = vmul.f32 %v559, %v559
      %v944 = vmul.f32 %v560, %v560
      %v945 = vmul.f32 %v561, %v561
      %v946 = vmul.f32 %v562, %v562
      %v947 = vmul.f32 %v563, %v563
      %v948 = vmul.f32 %v564, %v564
      %v949 = vmul.f32 %v565, %v565
      %v950 = vmul.f32 %v566, %v566
      %v951 = vmul.f32 %v567, %v567
      %v952 = vmul.f32 %v568, %v568
      %v953 = vmul.f32 %v569, %v569
      %v954 = vmul.f32 %v570, %v570
      %v955 = vmul.f32 %v571, %v571
      %v956 = vmul.f32 %v572, %v572
      %v957 = vmul.f32 %v573, %v573
      %v958 = vmul.f32 %v574, %v574
      %v959 = vmul.f32 %v575, %v575
      %v960 = vmul.f32 %v576, %v576
      %v961 = vmul.f32 %v577, %v577
      %v962 = vmul.f32 %v578, %v578
      %v963 = vmul.f32 %v579, %v579
      %v964 = vmul.f32 %v580, %v580
      %v965 = vmul.f32 %v581, %v581
      %v966 = vmul.f32 %v582, %v582
      %v967 = vmul.f32 %v583, %v583
      %v968 = vmul.f32 %v584, %v584
      %v969 = vmul.f32 %v585, %v585
      %v970 = vmul.f32 %v586, %v586
      %v971 = vmul.f32 %v587, %v587
      %v972 = vmul.f32 %v588, %v588
      %v973 = vmul.f32 %v589, %v589
      %v974 = vmul.f32 %v590, %v590
      %v975 = vmul.f32 %v591, %v591
      %v976 = vmul.f32 %v592, %v592
      %v977 = vmul.f32 %v593, %v593
      %v978 = vmul.f32 %v594, %v594
      %v979 = vmul.f32 %v595, %v595
      %v980 = vmul.f32 %v596, %v596
      %v981 = vmul.f32 %v597, %v597
      %v982 = vmul.f32 %v598, %v598
      %v983 = vmul.f32 %v599, %v599
      %v984 = vmul.f32 %v600, %v600
      %v985 = vmul.f32 %v601, %v601
      %v986 = vmul.f32 %v602, %v602
      %v987 = vmul.f32 %v603, %v603
      %v988 = vmul.f32 %v604, %v604
      %v989 = vmul.f32 %v605, %v605
      %v990 = vmul.f32 %v606, %v606
      %v991 = vmul.f32 %v607, %v607
      %v992 = vmul.f32 %v608, %v608
      %v993 = vmul.f32 %v609, %v609
      %v994 = vsub.f32 %v866, %v930
      %v995 = vsub.f32 %v867, %v931
      %v996 = vsub.f32 %v868, %v932
      %v997 = vsub.f32 %v869, %v933
      %v998 = vsub.f32 %v870, %v934
      %v999 = vsub.f32 %v871, %v935
      %v1000 = vsub.f32 %v872, %v936
      %v1001 = vsub.f32 %v873, %v937
      %v1002 = vsub.f32 %v874, %v938
      %v1003 = vsub.f32 %v875, %v939
      %v1004 = vsub.f32 %v876, %v940
      %v1005 = vsub.f32 %v877, %v941
      %v1006 = vsub.f32 %v878, %v942
      %v1007 = vsub.f32 %v879, %v943
      %v1008 = vsub.f32 %v880, %v944
      %v1009 = vsub.f32 %v881, %v945
      %v1010 = vsub.f32 %v882, %v946
      %v1011 = vsub.f32 %v883, %v947
      %v1012 = vsub.f32 %v884, %v948
      %v1013 = vsub.f32 %v885, %v949
      %v1014 = vsub.f32 %v886, %v950
      %v1015 = vsub.f32 %v887, %v951
      %v1016 = vsub.f32 %v888, %v952
      %v1017 = vsub.f32 %v889, %v953
      %v1018 = vsub.f32 %v890, %v954
      %v1019 = vsub.f32 %v891, %v955
      %v1020 = vsub.f32 %v892, %v956
      %v1021 = vsub.f32 %v893, %v957
      %v1022 = vsub.f32 %v894, %v958
      %v1023 = vsub.f32 %v895, %v959
      %v1024 = vsub.f32 %v896, %v960
      %v1025 = vsub.f32 %v897, %v961
      %v1026 = vsub.f32 %v898, %v962
      %v1027 = vsub.f32 %v899, %v963
      %v1028 = vsub.f32 %v900, %v964
      %v1029 = vsub.f32 %v901, %v965
      %v1030 = vsub.f32 %v902, %v966
      %v1031 = vsub.f32 %v903, %v967
      %v1032 = vsub.f32 %v904, %v968
      %v1033 = vsub.f32 %v905, %v969
      %v1034 = vsub.f32 %v906, %v970
      %v1035 = vsub.f32 %v907, %v971
      %v1036 = vsub.f32 %v908, %v972
      %v1037 = vsub.f32 %v909, %v973
      %v1038 = vsub.f32 %v910, %v974
      %v1039 = vsub.f32 %v911, %v975
      %v1040 = vsub.f32 %v912, %v976
      %v1041 = vsub.f32 %v913, %v977
      %v1042 = vsub.f32 %v914, %v978
      %v1043 = vsub.f32 %v915, %v979
      %v1044 = vsub.f32 %v916, %v980
      %v1045 = vsub.f32 %v917, %v981
      %v1046 = vsub.f32 %v918, %v982
      %v1047 = vsub.f32 %v919, %v983
      %v1048 = vsub.f32 %v920, %v984
      %v1049 = vsub.f32 %v921, %v985
      %v1050 = vsub.f32 %v922, %v986
      %v1051 = vsub.f32 %v923, %v987
      %v1052 = vsub.f32 %v924, %v988
      %v1053 = vsub.f32 %v925, %v989
      %v1054 = vsub.f32 %v926, %v990
      %v1055 = vsub.f32 %v927, %v991
      %v1056 = vsub.f32 %v928, %v992
      %v1057 = vsub.f32 %v929, %v993
      %v1058 = vmax.f32 %v994, 0.0
      %v1059 = vmax.f32 %v995, 0.0
      %v1060 = vmax.f32 %v996, 0.0
      %v1061 = vmax.f32 %v997, 0.0
      %v1062 = vmax.f32 %v998, 0.0
      %v1063 = vmax.f32 %v999, 0.0
      %v1064 = vmax.f32 %v1000, 0.0
      %v1065 = vmax.f32 %v1001, 0.0
      %v1066 = vmax.f32 %v1002, 0.0
      %v1067 = vmax.f32 %v1003, 0.0
      %v1068 = vmax.f32 %v1004, 0.0
      %v1069 = vmax.f32 %v1005, 0.0
      %v1070 = vmax.f32 %v1006, 0.0
      %v1071 = vmax.f32 %v1007, 0.0
      %v1072 = vmax.f32 %v1008, 0.0
      %v1073 = vmax.f32 %v1009, 0.0
      %v1074 = vmax.f32 %v1010, 0.0
      %v1075 = vmax.f32 %v1011, 0.0
      %v1076 = vmax.f32 %v1012, 0.0
      %v1077 = vmax.f32 %v1013, 0.0
      %v1078 = vmax.f32 %v1014, 0.0
      %v1079 = vmax.f32 %v1015, 0.0
      %v1080 = vmax.f32 %v1016, 0.0
      %v1081 = vmax.f32 %v1017, 0.0
      %v1082 = vmax.f32 %v1018, 0.0
      %v1083 = vmax.f32 %v1019, 0.0
      %v1084 = vmax.f32 %v1020, 0.0
      %v1085 = vmax.f32 %v1021, 0.0
      %v1086 = vmax.f32 %v1022, 0.0
      %v1087 = vmax.f32 %v1023, 0.0
      %v1088 = vmax.f32 %v1024, 0.0
      %v1089 = vmax.f32 %v1025, 0.0
      %v1090 = vmax.f32 %v1026, 0.0
      %v1091 = vmax.f32 %v1027, 0.0
      %v1092 = vmax.f32 %v1028, 0.0
      %v1093 = vmax.f32 %v1029, 0.0
      %v1094 = vmax.f32 %v1030, 0.0
      %v1095 = vmax.f32 %v1031, 0.0
      %v1096 = vmax.f32 %v1032, 0.0
      %v1097 = vmax.f32 %v1033, 0.0
      %v1098 = vmax.f32 %v1034, 0.0
      %v1099 = vmax.f32 %v1035, 0.0
      %v1100 = vmax.f32 %v1036, 0.0
      %v1101 = vmax.f32 %v1037, 0.0
      %v1102 = vmax.f32 %v1038, 0.0
      %v1103 = vmax.f32 %v1039, 0.0
      %v1104 = vmax.f32 %v1040, 0.0
      %v1105 = vmax.f32 %v1041, 0.0
      %v1106 = vmax.f32 %v1042, 0.0
      %v1107 = vmax.f32 %v1043, 0.0
      %v1108 = vmax.f32 %v1044, 0.0
      %v1109 = vmax.f32 %v1045, 0.0
      %v1110 = vmax.f32 %v1046, 0.0
      %v1111 = vmax.f32 %v1047, 0.0
      %v1112 = vmax.f32 %v1048, 0.0
      %v1113 = vmax.f32 %v1049, 0.0
      %v1114 = vmax.f32 %v1050, 0.0
      %v1115 = vmax.f32 %v1051, 0.0
      %v1116 = vmax.f32 %v1052, 0.0
      %v1117 = vmax.f32 %v1053, 0.0
      %v1118 = vmax.f32 %v1054, 0.0
      %v1119 = vmax.f32 %v1055, 0.0
      %v1120 = vmax.f32 %v1056, 0.0
      %v1121 = vmax.f32 %v1057, 0.0
      %v1122 = vsub.f32 %v282, %v546
      %v1123 = vsub.f32 %v283, %v547
      %v1124 = vsub.f32 %v284, %v548
      %v1125 = vsub.f32 %v285, %v549
      %v1126 = vsub.f32 %v286, %v550
      %v1127 = vsub.f32 %v287, %v551
      %v1128 = vsub.f32 %v288, %v552
      %v1129 = vsub.f32 %v289, %v553
      %v1130 = vsub.f32 %v290, %v554
      %v1131 = vsub.f32 %v291, %v555
      %v1132 = vsub.f32 %v292, %v556
      %v1133 = vsub.f32 %v293, %v557
      %v1134 = vsub.f32 %v294, %v558
      %v1135 = vsub.f32 %v295, %v559
      %v1136 = vsub.f32 %v296, %v560
      %v1137 = vsub.f32 %v297, %v561
      %v1138 = vsub.f32 %v298, %v562
      %v1139 = vsub.f32 %v299, %v563
      %v1140 = vsub.f32 %v300, %v564
      %v1141 = vsub.f32 %v301, %v565
      %v1142 = vsub.f32 %v302, %v566
      %v1143 = vsub.f32 %v303, %v567
      %v1144 = vsub.f32 %v304, %v568
      %v1145 = vsub.f32 %v305, %v569
      %v1146 = vsub.f32 %v306, %v570
      %v1147 = vsub.f32 %v307, %v571
      %v1148 = vsub.f32 %v308, %v572
      %v1149 = vsub.f32 %v309, %v573
      %v1150 = vsub.f32 %v310, %v574
      %v1151 = vsub.f32 %v311, %v575
      %v1152 = vsub.f32 %v312, %v576
      %v1153 = vsub.f32 %v313, %v577
      %v1154 = vsub.f32 %v314, %v578
      %v1155 = vsub.f32 %v315, %v579
      %v1156 = vsub.f32 %v316, %v580
      %v1157 = vsub.f32 %v317, %v581
      %v1158 = vsub.f32 %v318, %v582
      %v1159 = vsub.f32 %v319, %v583
      %v1160 = vsub.f32 %v320, %v584
      %v1161 = vsub.f32 %v321, %v585
      %v1162 = vsub.f32 %v322, %v586
      %v1163 = vsub.f32 %v323, %v587
      %v1164 = vsub.f32 %v324, %v588
      %v1165 = vsub.f32 %v325, %v589
      %v1166 = vsub.f32 %v326, %v590
      %v1167 = vsub.f32 %v327, %v591
      %v1168 = vsub.f32 %v328, %v592
      %v1169 = vsub.f32 %v329, %v593
      %v1170 = vsub.f32 %v330, %v594
      %v1171 = vsub.f32 %v331, %v595
      %v1172 = vsub.f32 %v332, %v596
      %v1173 = vsub.f32 %v333, %v597
      %v1174 = vsub.f32 %v334, %v598
      %v1175 = vsub.f32 %v335, %v599
      %v1176 = vsub.f32 %v336, %v600
      %v1177 = vsub.f32 %v337, %v601
      %v1178 = vsub.f32 %v338, %v602
      %v1179 = vsub.f32 %v339, %v603
      %v1180 = vsub.f32 %v340, %v604
      %v1181 = vsub.f32 %v341, %v605
      %v1182 = vsub.f32 %v342, %v606
      %v1183 = vsub.f32 %v343, %v607
      %v1184 = vsub.f32 %v344, %v608
      %v1185 = vsub.f32 %v345, %v609
      %v1186 = vadd.f32 %v1058, 1e-05
      %v1187 = vadd.f32 %v1059, 1e-05
      %v1188 = vadd.f32 %v1060, 1e-05
      %v1189 = vadd.f32 %v1061, 1e-05
      %v1190 = vadd.f32 %v1062, 1e-05
      %v1191 = vadd.f32 %v1063, 1e-05
      %v1192 = vadd.f32 %v1064, 1e-05
      %v1193 = vadd.f32 %v1065, 1e-05
      %v1194 = vadd.f32 %v1066, 1e-05
      %v1195 = vadd.f32 %v1067, 1e-05
      %v1196 = vadd.f32 %v1068, 1e-05
      %v1197 = vadd.f32 %v1069, 1e-05
      %v1198 = vadd.f32 %v1070, 1e-05
      %v1199 = vadd.f32 %v1071, 1e-05
      %v1200 = vadd.f32 %v1072, 1e-05
      %v1201 = vadd.f32 %v1073, 1e-05
      %v1202 = vadd.f32 %v1074, 1e-05
      %v1203 = vadd.f32 %v1075, 1e-05
      %v1204 = vadd.f32 %v1076, 1e-05
      %v1205 = vadd.f32 %v1077, 1e-05
      %v1206 = vadd.f32 %v1078, 1e-05
      %v1207 = vadd.f32 %v1079, 1e-05
      %v1208 = vadd.f32 %v1080, 1e-05
      %v1209 = vadd.f32 %v1081, 1e-05
      %v1210 = vadd.f32 %v1082, 1e-05
      %v1211 = vadd.f32 %v1083, 1e-05
      %v1212 = vadd.f32 %v1084, 1e-05
      %v1213 = vadd.f32 %v1085, 1e-05
      %v1214 = vadd.f32 %v1086, 1e-05
      %v1215 = vadd.f32 %v1087, 1e-05
      %v1216 = vadd.f32 %v1088, 1e-05
      %v1217 = vadd.f32 %v1089, 1e-05
      %v1218 = vadd.f32 %v1090, 1e-05
      %v1219 = vadd.f32 %v1091, 1e-05
      %v1220 = vadd.f32 %v1092, 1e-05
      %v1221 = vadd.f32 %v1093, 1e-05
      %v1222 = vadd.f32 %v1094, 1e-05
      %v1223 = vadd.f32 %v1095, 1e-05
      %v1224 = vadd.f32 %v1096, 1e-05
      %v1225 = vadd.f32 %v1097, 1e-05
      %v1226 = vadd.f32 %v1098, 1e-05
      %v1227 = vadd.f32 %v1099, 1e-05
      %v1228 = vadd.f32 %v1100, 1e-05
      %v1229 = vadd.f32 %v1101, 1e-05
      %v1230 = vadd.f32 %v1102, 1e-05
      %v1231 = vadd.f32 %v1103, 1e-05
      %v1232 = vadd.f32 %v1104, 1e-05
      %v1233 = vadd.f32 %v1105, 1e-05
      %v1234 = vadd.f32 %v1106, 1e-05
      %v1235 = vadd.f32 %v1107, 1e-05
      %v1236 = vadd.f32 %v1108, 1e-05
      %v1237 = vadd.f32 %v1109, 1e-05
      %v1238 = vadd.f32 %v1110, 1e-05
      %v1239 = vadd.f32 %v1111, 1e-05
      %v1240 = vadd.f32 %v1112, 1e-05
      %v1241 = vadd.f32 %v1113, 1e-05
      %v1242 = vadd.f32 %v1114, 1e-05
      %v1243 = vadd.f32 %v1115, 1e-05
      %v1244 = vadd.f32 %v1116, 1e-05
      %v1245 = vadd.f32 %v1117, 1e-05
      %v1246 = vadd.f32 %v1118, 1e-05
      %v1247 = vadd.f32 %v1119, 1e-05
      %v1248 = vadd.f32 %v1120, 1e-05
      %v1249 = vadd.f32 %v1121, 1e-05
      %v1250 = vrsqrt.pop %v1186
      %v1251 = vmul.f32 %v1250, %v1186
      %v1252 = vmul.f32 %v1251, %v1250
      %v1253 = vmul.f32 0.5, %v1252
      %v1254 = vsub.f32 1.5, %v1253
      %v1255 = vmul.f32 %v1250, %v1254
      %vm1256 = vweird.f32 %v1186
      %vm1257 = vweird.f32 %v1250
      %vm1258 = vmor %vm1256, %vm1257
      %v1259 = vsel %vm1258, %v1250, %v1255
      %v1260 = vrsqrt.pop %v1187
      %v1261 = vmul.f32 %v1260, %v1187
      %v1262 = vmul.f32 %v1261, %v1260
      %v1263 = vmul.f32 0.5, %v1262
      %v1264 = vsub.f32 1.5, %v1263
      %v1265 = vmul.f32 %v1260, %v1264
      %vm1266 = vweird.f32 %v1187
      %vm1267 = vweird.f32 %v1260
      %vm1268 = vmor %vm1266, %vm1267
      %v1269 = vsel %vm1268, %v1260, %v1265
      %v1270 = vrsqrt.pop %v1188
      %v1271 = vmul.f32 %v1270, %v1188
      %v1272 = vmul.f32 %v1271, %v1270
      %v1273 = vmul.f32 0.5, %v1272
      %v1274 = vsub.f32 1.5, %v1273
      %v1275 = vmul.f32 %v1270, %v1274
      %vm1276 = vweird.f32 %v1188
      %vm1277 = vweird.f32 %v1270
      %vm1278 = vmor %vm1276, %vm1277
      %v1279 = vsel %vm1278, %v1270, %v1275
      %v1280 = vrsqrt.pop %v1189
      %v1281 = vmul.f32 %v1280, %v1189
      %v1282 = vmul.f32 %v1281, %v1280
      %v1283 = vmul.f32 0.5, %v1282
      %v1284 = vsub.f32 1.5, %v1283
      %v1285 = vmul.f32 %v1280, %v1284
      %vm1286 = vweird.f32 %v1189
      %vm1287 = vweird.f32 %v1280
      %vm1288 = vmor %vm1286, %vm1287
      %v1289 = vsel %vm1288, %v1280, %v1285
      %v1290 = vrsqrt.pop %v1190
      %v1291 = vmul.f32 %v1290, %v1190
      %v1292 = vmul.f32 %v1291, %v1290
      %v1293 = vmul.f32 0.5, %v1292
      %v1294 = vsub.f32 1.5, %v1293
      %v1295 = vmul.f32 %v1290, %v1294
      %vm1296 = vweird.f32 %v1190
      %vm1297 = vweird.f32 %v1290
      %vm1298 = vmor %vm1296, %vm1297
      %v1299 = vsel %vm1298, %v1290, %v1295
      %v1300 = vrsqrt.pop %v1191
      %v1301 = vmul.f32 %v1300, %v1191
      %v1302 = vmul.f32 %v1301, %v1300
      %v1303 = vmul.f32 0.5, %v1302
      %v1304 = vsub.f32 1.5, %v1303
      %v1305 = vmul.f32 %v1300, %v1304
      %vm1306 = vweird.f32 %v1191
      %vm1307 = vweird.f32 %v1300
      %vm1308 = vmor %vm1306, %vm1307
      %v1309 = vsel %vm1308, %v1300, %v1305
      %v1310 = vrsqrt.pop %v1192
      %v1311 = vmul.f32 %v1310, %v1192
      %v1312 = vmul.f32 %v1311, %v1310
      %v1313 = vmul.f32 0.5, %v1312
      %v1314 = vsub.f32 1.5, %v1313
      %v1315 = vmul.f32 %v1310, %v1314
      %vm1316 = vweird.f32 %v1192
      %vm1317 = vweird.f32 %v1310
      %vm1318 = vmor %vm1316, %vm1317
      %v1319 = vsel %vm1318, %v1310, %v1315
      %v1320 = vrsqrt.pop %v1193
      %v1321 = vmul.f32 %v1320, %v1193
      %v1322 = vmul.f32 %v1321, %v1320
      %v1323 = vmul.f32 0.5, %v1322
      %v1324 = vsub.f32 1.5, %v1323
      %v1325 = vmul.f32 %v1320, %v1324
      %vm1326 = vweird.f32 %v1193
      %vm1327 = vweird.f32 %v1320
      %vm1328 = vmor %vm1326, %vm1327
      %v1329 = vsel %vm1328, %v1320, %v1325
      %v1330 = vrsqrt.pop %v1194
      %v1331 = vmul.f32 %v1330, %v1194
      %v1332 = vmul.f32 %v1331, %v1330
      %v1333 = vmul.f32 0.5, %v1332
      %v1334 = vsub.f32 1.5, %v1333
      %v1335 = vmul.f32 %v1330, %v1334
      %vm1336 = vweird.f32 %v1194
      %vm1337 = vweird.f32 %v1330
      %vm1338 = vmor %vm1336, %vm1337
      %v1339 = vsel %vm1338, %v1330, %v1335
      %v1340 = vrsqrt.pop %v1195
      %v1341 = vmul.f32 %v1340, %v1195
      %v1342 = vmul.f32 %v1341, %v1340
      %v1343 = vmul.f32 0.5, %v1342
      %v1344 = vsub.f32 1.5, %v1343
      %v1345 = vmul.f32 %v1340, %v1344
      %vm1346 = vweird.f32 %v1195
      %vm1347 = vweird.f32 %v1340
      %vm1348 = vmor %vm1346, %vm1347
      %v1349 = vsel %vm1348, %v1340, %v1345
      %v1350 = vrsqrt.pop %v1196
      %v1351 = vmul.f32 %v1350, %v1196
      %v1352 = vmul.f32 %v1351, %v1350
      %v1353 = vmul.f32 0.5, %v1352
      %v1354 = vsub.f32 1.5, %v1353
      %v1355 = vmul.f32 %v1350, %v1354
      %vm1356 = vweird.f32 %v1196
      %vm1357 = vweird.f32 %v1350
      %vm1358 = vmor %vm1356, %vm1357
      %v1359 = vsel %vm1358, %v1350, %v1355
      %v1360 = vrsqrt.pop %v1197
      %v1361 = vmul.f32 %v1360, %v1197
      %v1362 = vmul.f32 %v1361, %v1360
      %v1363 = vmul.f32 0.5, %v1362
      %v1364 = vsub.f32 1.5, %v1363
      %v1365 = vmul.f32 %v1360, %v1364
      %vm1366 = vweird.f32 %v1197
      %vm1367 = vweird.f32 %v1360
      %vm1368 = vmor %vm1366, %vm1367
      %v1369 = vsel %vm1368, %v1360, %v1365
      %v1370 = vrsqrt.pop %v1198
      %v1371 = vmul.f32 %v1370, %v1198
      %v1372 = vmul.f32 %v1371, %v1370
      %v1373 = vmul.f32 0.5, %v1372
      %v1374 = vsub.f32 1.5, %v1373
      %v1375 = vmul.f32 %v1370, %v1374
      %vm1376 = vweird.f32 %v1198
      %vm1377 = vweird.f32 %v1370
      %vm1378 = vmor %vm1376, %vm1377
      %v1379 = vsel %vm1378, %v1370, %v1375
      %v1380 = vrsqrt.pop %v1199
      %v1381 = vmul.f32 %v1380, %v1199
      %v1382 = vmul.f32 %v1381, %v1380
      %v1383 = vmul.f32 0.5, %v1382
      %v1384 = vsub.f32 1.5, %v1383
      %v1385 = vmul.f32 %v1380, %v1384
      %vm1386 = vweird.f32 %v1199
      %vm1387 = vweird.f32 %v1380
      %vm1388 = vmor %vm1386, %vm1387
      %v1389 = vsel %vm1388, %v1380, %v1385
      %v1390 = vrsqrt.pop %v1200
      %v1391 = vmul.f32 %v1390, %v1200
      %v1392 = vmul.f32 %v1391, %v1390
      %v1393 = vmul.f32 0.5, %v1392
      %v1394 = vsub.f32 1.5, %v1393
      %v1395 = vmul.f32 %v1390, %v1394
      %vm1396 = vweird.f32 %v1200
      %vm1397 = vweird.f32 %v1390
      %vm1398 = vmor %vm1396, %vm1397
      %v1399 = vsel %vm1398, %v1390, %v1395
      %v1400 = vrsqrt.pop %v1201
      %v1401 = vmul.f32 %v1400, %v1201
      %v1402 = vmul.f32 %v1401, %v1400
      %v1403 = vmul.f32 0.5, %v1402
      %v1404 = vsub.f32 1.5, %v1403
      %v1405 = vmul.f32 %v1400, %v1404
      %vm1406 = vweird.f32 %v1201
      %vm1407 = vweird.f32 %v1400
      %vm1408 = vmor %vm1406, %vm1407
      %v1409 = vsel %vm1408, %v1400, %v1405
      %v1410 = vrsqrt.pop %v1202
      %v1411 = vmul.f32 %v1410, %v1202
      %v1412 = vmul.f32 %v1411, %v1410
      %v1413 = vmul.f32 0.5, %v1412
      %v1414 = vsub.f32 1.5, %v1413
      %v1415 = vmul.f32 %v1410, %v1414
      %vm1416 = vweird.f32 %v1202
      %vm1417 = vweird.f32 %v1410
      %vm1418 = vmor %vm1416, %vm1417
      %v1419 = vsel %vm1418, %v1410, %v1415
      %v1420 = vrsqrt.pop %v1203
      %v1421 = vmul.f32 %v1420, %v1203
      %v1422 = vmul.f32 %v1421, %v1420
      %v1423 = vmul.f32 0.5, %v1422
      %v1424 = vsub.f32 1.5, %v1423
      %v1425 = vmul.f32 %v1420, %v1424
      %vm1426 = vweird.f32 %v1203
      %vm1427 = vweird.f32 %v1420
      %vm1428 = vmor %vm1426, %vm1427
      %v1429 = vsel %vm1428, %v1420, %v1425
      %v1430 = vrsqrt.pop %v1204
      %v1431 = vmul.f32 %v1430, %v1204
      %v1432 = vmul.f32 %v1431, %v1430
      %v1433 = vmul.f32 0.5, %v1432
      %v1434 = vsub.f32 1.5, %v1433
      %v1435 = vmul.f32 %v1430, %v1434
      %vm1436 = vweird.f32 %v1204
      %vm1437 = vweird.f32 %v1430
      %vm1438 = vmor %vm1436, %vm1437
      %v1439 = vsel %vm1438, %v1430, %v1435
      %v1440 = vrsqrt.pop %v1205
      %v1441 = vmul.f32 %v1440, %v1205
      %v1442 = vmul.f32 %v1441, %v1440
      %v1443 = vmul.f32 0.5, %v1442
      %v1444 = vsub.f32 1.5, %v1443
      %v1445 = vmul.f32 %v1440, %v1444
      %vm1446 = vweird.f32 %v1205
      %vm1447 = vweird.f32 %v1440
      %vm1448 = vmor %vm1446, %vm1447
      %v1449 = vsel %vm1448, %v1440, %v1445
      %v1450 = vrsqrt.pop %v1206
      %v1451 = vmul.f32 %v1450, %v1206
      %v1452 = vmul.f32 %v1451, %v1450
      %v1453 = vmul.f32 0.5, %v1452
      %v1454 = vsub.f32 1.5, %v1453
      %v1455 = vmul.f32 %v1450, %v1454
      %vm1456 = vweird.f32 %v1206
      %vm1457 = vweird.f32 %v1450
      %vm1458 = vmor %vm1456, %vm1457
      %v1459 = vsel %vm1458, %v1450, %v1455
      %v1460 = vrsqrt.pop %v1207
      %v1461 = vmul.f32 %v1460, %v1207
      %v1462 = vmul.f32 %v1461, %v1460
      %v1463 = vmul.f32 0.5, %v1462
      %v1464 = vsub.f32 1.5, %v1463
      %v1465 = vmul.f32 %v1460, %v1464
      %vm1466 = vweird.f32 %v1207
      %vm1467 = vweird.f32 %v1460
      %vm1468 = vmor %vm1466, %vm1467
      %v1469 = vsel %vm1468, %v1460, %v1465
      %v1470 = vrsqrt.pop %v1208
      %v1471 = vmul.f32 %v1470, %v1208
      %v1472 = vmul.f32 %v1471, %v1470
      %v1473 = vmul.f32 0.5, %v1472
      %v1474 = vsub.f32 1.5, %v1473
      %v1475 = vmul.f32 %v1470, %v1474
      %vm1476 = vweird.f32 %v1208
      %vm1477 = vweird.f32 %v1470
      %vm1478 = vmor %vm1476, %vm1477
      %v1479 = vsel %vm1478, %v1470, %v1475
      %v1480 = vrsqrt.pop %v1209
      %v1481 = vmul.f32 %v1480, %v1209
      %v1482 = vmul.f32 %v1481, %v1480
      %v1483 = vmul.f32 0.5, %v1482
      %v1484 = vsub.f32 1.5, %v1483
      %v1485 = vmul.f32 %v1480, %v1484
      %vm1486 = vweird.f32 %v1209
      %vm1487 = vweird.f32 %v1480
      %vm1488 = vmor %vm1486, %vm1487
      %v1489 = vsel %vm1488, %v1480, %v1485
      %v1490 = vrsqrt.pop %v1210
      %v1491 = vmul.f32 %v1490, %v1210
      %v1492 = vmul.f32 %v1491, %v1490
      %v1493 = vmul.f32 0.5, %v1492
      %v1494 = vsub.f32 1.5, %v1493
      %v1495 = vmul.f32 %v1490, %v1494
      %vm1496 = vweird.f32 %v1210
      %vm1497 = vweird.f32 %v1490
      %vm1498 = vmor %vm1496, %vm1497
      %v1499 = vsel %vm1498, %v1490, %v1495
      %v1500 = vrsqrt.pop %v1211
      %v1501 = vmul.f32 %v1500, %v1211
      %v1502 = vmul.f32 %v1501, %v1500
      %v1503 = vmul.f32 0.5, %v1502
      %v1504 = vsub.f32 1.5, %v1503
      %v1505 = vmul.f32 %v1500, %v1504
      %vm1506 = vweird.f32 %v1211
      %vm1507 = vweird.f32 %v1500
      %vm1508 = vmor %vm1506, %vm1507
      %v1509 = vsel %vm1508, %v1500, %v1505
      %v1510 = vrsqrt.pop %v1212
      %v1511 = vmul.f32 %v1510, %v1212
      %v1512 = vmul.f32 %v1511, %v1510
      %v1513 = vmul.f32 0.5, %v1512
      %v1514 = vsub.f32 1.5, %v1513
      %v1515 = vmul.f32 %v1510, %v1514
      %vm1516 = vweird.f32 %v1212
      %vm1517 = vweird.f32 %v1510
      %vm1518 = vmor %vm1516, %vm1517
      %v1519 = vsel %vm1518, %v1510, %v1515
      %v1520 = vrsqrt.pop %v1213
      %v1521 = vmul.f32 %v1520, %v1213
      %v1522 = vmul.f32 %v1521, %v1520
      %v1523 = vmul.f32 0.5, %v1522
      %v1524 = vsub.f32 1.5, %v1523
      %v1525 = vmul.f32 %v1520, %v1524
      %vm1526 = vweird.f32 %v1213
      %vm1527 = vweird.f32 %v1520
      %vm1528 = vmor %vm1526, %vm1527
      %v1529 = vsel %vm1528, %v1520, %v1525
      %v1530 = vrsqrt.pop %v1214
      %v1531 = vmul.f32 %v1530, %v1214
      %v1532 = vmul.f32 %v1531, %v1530
      %v1533 = vmul.f32 0.5, %v1532
      %v1534 = vsub.f32 1.5, %v1533
      %v1535 = vmul.f32 %v1530, %v1534
      %vm1536 = vweird.f32 %v1214
      %vm1537 = vweird.f32 %v1530
      %vm1538 = vmor %vm1536, %vm1537
      %v1539 = vsel %vm1538, %v1530, %v1535
      %v1540 = vrsqrt.pop %v1215
      %v1541 = vmul.f32 %v1540, %v1215
      %v1542 = vmul.f32 %v1541, %v1540
      %v1543 = vmul.f32 0.5, %v1542
      %v1544 = vsub.f32 1.5, %v1543
      %v1545 = vmul.f32 %v1540, %v1544
      %vm1546 = vweird.f32 %v1215
      %vm1547 = vweird.f32 %v1540
      %vm1548 = vmor %vm1546, %vm1547
      %v1549 = vsel %vm1548, %v1540, %v1545
      %v1550 = vrsqrt.pop %v1216
      %v1551 = vmul.f32 %v1550, %v1216
      %v1552 = vmul.f32 %v1551, %v1550
      %v1553 = vmul.f32 0.5, %v1552
      %v1554 = vsub.f32 1.5, %v1553
      %v1555 = vmul.f32 %v1550, %v1554
      %vm1556 = vweird.f32 %v1216
      %vm1557 = vweird.f32 %v1550
      %vm1558 = vmor %vm1556, %vm1557
      %v1559 = vsel %vm1558, %v1550, %v1555
      %v1560 = vrsqrt.pop %v1217
      %v1561 = vmul.f32 %v1560, %v1217
      %v1562 = vmul.f32 %v1561, %v1560
      %v1563 = vmul.f32 0.5, %v1562
      %v1564 = vsub.f32 1.5, %v1563
      %v1565 = vmul.f32 %v1560, %v1564
      %vm1566 = vweird.f32 %v1217
      %vm1567 = vweird.f32 %v1560
      %vm1568 = vmor %vm1566, %vm1567
      %v1569 = vsel %vm1568, %v1560, %v1565
      %v1570 = vrsqrt.pop %v1218
      %v1571 = vmul.f32 %v1570, %v1218
      %v1572 = vmul.f32 %v1571, %v1570
      %v1573 = vmul.f32 0.5, %v1572
      %v1574 = vsub.f32 1.5, %v1573
      %v1575 = vmul.f32 %v1570, %v1574
      %vm1576 = vweird.f32 %v1218
      %vm1577 = vweird.f32 %v1570
      %vm1578 = vmor %vm1576, %vm1577
      %v1579 = vsel %vm1578, %v1570, %v1575
      %v1580 = vrsqrt.pop %v1219
      %v1581 = vmul.f32 %v1580, %v1219
      %v1582 = vmul.f32 %v1581, %v1580
      %v1583 = vmul.f32 0.5, %v1582
      %v1584 = vsub.f32 1.5, %v1583
      %v1585 = vmul.f32 %v1580, %v1584
      %vm1586 = vweird.f32 %v1219
      %vm1587 = vweird.f32 %v1580
      %vm1588 = vmor %vm1586, %vm1587
      %v1589 = vsel %vm1588, %v1580, %v1585
      %v1590 = vrsqrt.pop %v1220
      %v1591 = vmul.f32 %v1590, %v1220
      %v1592 = vmul.f32 %v1591, %v1590
      %v1593 = vmul.f32 0.5, %v1592
      %v1594 = vsub.f32 1.5, %v1593
      %v1595 = vmul.f32 %v1590, %v1594
      %vm1596 = vweird.f32 %v1220
      %vm1597 = vweird.f32 %v1590
      %vm1598 = vmor %vm1596, %vm1597
      %v1599 = vsel %vm1598, %v1590, %v1595
      %v1600 = vrsqrt.pop %v1221
      %v1601 = vmul.f32 %v1600, %v1221
      %v1602 = vmul.f32 %v1601, %v1600
      %v1603 = vmul.f32 0.5, %v1602
      %v1604 = vsub.f32 1.5, %v1603
      %v1605 = vmul.f32 %v1600, %v1604
      %vm1606 = vweird.f32 %v1221
      %vm1607 = vweird.f32 %v1600
      %vm1608 = vmor %vm1606, %vm1607
      %v1609 = vsel %vm1608, %v1600, %v1605
      %v1610 = vrsqrt.pop %v1222
      %v1611 = vmul.f32 %v1610, %v1222
      %v1612 = vmul.f32 %v1611, %v1610
      %v1613 = vmul.f32 0.5, %v1612
      %v1614 = vsub.f32 1.5, %v1613
      %v1615 = vmul.f32 %v1610, %v1614
      %vm1616 = vweird.f32 %v1222
      %vm1617 = vweird.f32 %v1610
      %vm1618 = vmor %vm1616, %vm1617
      %v1619 = vsel %vm1618, %v1610, %v1615
      %v1620 = vrsqrt.pop %v1223
      %v1621 = vmul.f32 %v1620, %v1223
      %v1622 = vmul.f32 %v1621, %v1620
      %v1623 = vmul.f32 0.5, %v1622
      %v1624 = vsub.f32 1.5, %v1623
      %v1625 = vmul.f32 %v1620, %v1624
      %vm1626 = vweird.f32 %v1223
      %vm1627 = vweird.f32 %v1620
      %vm1628 = vmor %vm1626, %vm1627
      %v1629 = vsel %vm1628, %v1620, %v1625
      %v1630 = vrsqrt.pop %v1224
      %v1631 = vmul.f32 %v1630, %v1224
      %v1632 = vmul.f32 %v1631, %v1630
      %v1633 = vmul.f32 0.5, %v1632
      %v1634 = vsub.f32 1.5, %v1633
      %v1635 = vmul.f32 %v1630, %v1634
      %vm1636 = vweird.f32 %v1224
      %vm1637 = vweird.f32 %v1630
      %vm1638 = vmor %vm1636, %vm1637
      %v1639 = vsel %vm1638, %v1630, %v1635
      %v1640 = vrsqrt.pop %v1225
      %v1641 = vmul.f32 %v1640, %v1225
      %v1642 = vmul.f32 %v1641, %v1640
      %v1643 = vmul.f32 0.5, %v1642
      %v1644 = vsub.f32 1.5, %v1643
      %v1645 = vmul.f32 %v1640, %v1644
      %vm1646 = vweird.f32 %v1225
      %vm1647 = vweird.f32 %v1640
      %vm1648 = vmor %vm1646, %vm1647
      %v1649 = vsel %vm1648, %v1640, %v1645
      %v1650 = vrsqrt.pop %v1226
      %v1651 = vmul.f32 %v1650, %v1226
      %v1652 = vmul.f32 %v1651, %v1650
      %v1653 = vmul.f32 0.5, %v1652
      %v1654 = vsub.f32 1.5, %v1653
      %v1655 = vmul.f32 %v1650, %v1654
      %vm1656 = vweird.f32 %v1226
      %vm1657 = vweird.f32 %v1650
      %vm1658 = vmor %vm1656, %vm1657
      %v1659 = vsel %vm1658, %v1650, %v1655
      %v1660 = vrsqrt.pop %v1227
      %v1661 = vmul.f32 %v1660, %v1227
      %v1662 = vmul.f32 %v1661, %v1660
      %v1663 = vmul.f32 0.5, %v1662
      %v1664 = vsub.f32 1.5, %v1663
      %v1665 = vmul.f32 %v1660, %v1664
      %vm1666 = vweird.f32 %v1227
      %vm1667 = vweird.f32 %v1660
      %vm1668 = vmor %vm1666, %vm1667
      %v1669 = vsel %vm1668, %v1660, %v1665
      %v1670 = vrsqrt.pop %v1228
      %v1671 = vmul.f32 %v1670, %v1228
      %v1672 = vmul.f32 %v1671, %v1670
      %v1673 = vmul.f32 0.5, %v1672
      %v1674 = vsub.f32 1.5, %v1673
      %v1675 = vmul.f32 %v1670, %v1674
      %vm1676 = vweird.f32 %v1228
      %vm1677 = vweird.f32 %v1670
      %vm1678 = vmor %vm1676, %vm1677
      %v1679 = vsel %vm1678, %v1670, %v1675
      %v1680 = vrsqrt.pop %v1229
      %v1681 = vmul.f32 %v1680, %v1229
      %v1682 = vmul.f32 %v1681, %v1680
      %v1683 = vmul.f32 0.5, %v1682
      %v1684 = vsub.f32 1.5, %v1683
      %v1685 = vmul.f32 %v1680, %v1684
      %vm1686 = vweird.f32 %v1229
      %vm1687 = vweird.f32 %v1680
      %vm1688 = vmor %vm1686, %vm1687
      %v1689 = vsel %vm1688, %v1680, %v1685
      %v1690 = vrsqrt.pop %v1230
      %v1691 = vmul.f32 %v1690, %v1230
      %v1692 = vmul.f32 %v1691, %v1690
      %v1693 = vmul.f32 0.5, %v1692
      %v1694 = vsub.f32 1.5, %v1693
      %v1695 = vmul.f32 %v1690, %v1694
      %vm1696 = vweird.f32 %v1230
      %vm1697 = vweird.f32 %v1690
      %vm1698 = vmor %vm1696, %vm1697
      %v1699 = vsel %vm1698, %v1690, %v1695
      %v1700 = vrsqrt.pop %v1231
      %v1701 = vmul.f32 %v1700, %v1231
      %v1702 = vmul.f32 %v1701, %v1700
      %v1703 = vmul.f32 0.5, %v1702
      %v1704 = vsub.f32 1.5, %v1703
      %v1705 = vmul.f32 %v1700, %v1704
      %vm1706 = vweird.f32 %v1231
      %vm1707 = vweird.f32 %v1700
      %vm1708 = vmor %vm1706, %vm1707
      %v1709 = vsel %vm1708, %v1700, %v1705
      %v1710 = vrsqrt.pop %v1232
      %v1711 = vmul.f32 %v1710, %v1232
      %v1712 = vmul.f32 %v1711, %v1710
      %v1713 = vmul.f32 0.5, %v1712
      %v1714 = vsub.f32 1.5, %v1713
      %v1715 = vmul.f32 %v1710, %v1714
      %vm1716 = vweird.f32 %v1232
      %vm1717 = vweird.f32 %v1710
      %vm1718 = vmor %vm1716, %vm1717
      %v1719 = vsel %vm1718, %v1710, %v1715
      %v1720 = vrsqrt.pop %v1233
      %v1721 = vmul.f32 %v1720, %v1233
      %v1722 = vmul.f32 %v1721, %v1720
      %v1723 = vmul.f32 0.5, %v1722
      %v1724 = vsub.f32 1.5, %v1723
      %v1725 = vmul.f32 %v1720, %v1724
      %vm1726 = vweird.f32 %v1233
      %vm1727 = vweird.f32 %v1720
      %vm1728 = vmor %vm1726, %vm1727
      %v1729 = vsel %vm1728, %v1720, %v1725
      %v1730 = vrsqrt.pop %v1234
      %v1731 = vmul.f32 %v1730, %v1234
      %v1732 = vmul.f32 %v1731, %v1730
      %v1733 = vmul.f32 0.5, %v1732
      %v1734 = vsub.f32 1.5, %v1733
      %v1735 = vmul.f32 %v1730, %v1734
      %vm1736 = vweird.f32 %v1234
      %vm1737 = vweird.f32 %v1730
      %vm1738 = vmor %vm1736, %vm1737
      %v1739 = vsel %vm1738, %v1730, %v1735
      %v1740 = vrsqrt.pop %v1235
      %v1741 = vmul.f32 %v1740, %v1235
      %v1742 = vmul.f32 %v1741, %v1740
      %v1743 = vmul.f32 0.5, %v1742
      %v1744 = vsub.f32 1.5, %v1743
      %v1745 = vmul.f32 %v1740, %v1744
      %vm1746 = vweird.f32 %v1235
      %vm1747 = vweird.f32 %v1740
      %vm1748 = vmor %vm1746, %vm1747
      %v1749 = vsel %vm1748, %v1740, %v1745
      %v1750 = vrsqrt.pop %v1236
      %v1751 = vmul.f32 %v1750, %v1236
      %v1752 = vmul.f32 %v1751, %v1750
      %v1753 = vmul.f32 0.5, %v1752
      %v1754 = vsub.f32 1.5, %v1753
      %v1755 = vmul.f32 %v1750, %v1754
      %vm1756 = vweird.f32 %v1236
      %vm1757 = vweird.f32 %v1750
      %vm1758 = vmor %vm1756, %vm1757
      %v1759 = vsel %vm1758, %v1750, %v1755
      %v1760 = vrsqrt.pop %v1237
      %v1761 = vmul.f32 %v1760, %v1237
      %v1762 = vmul.f32 %v1761, %v1760
      %v1763 = vmul.f32 0.5, %v1762
      %v1764 = vsub.f32 1.5, %v1763
      %v1765 = vmul.f32 %v1760, %v1764
      %vm1766 = vweird.f32 %v1237
      %vm1767 = vweird.f32 %v1760
      %vm1768 = vmor %vm1766, %vm1767
      %v1769 = vsel %vm1768, %v1760, %v1765
      %v1770 = vrsqrt.pop %v1238
      %v1771 = vmul.f32 %v1770, %v1238
      %v1772 = vmul.f32 %v1771, %v1770
      %v1773 = vmul.f32 0.5, %v1772
      %v1774 = vsub.f32 1.5, %v1773
      %v1775 = vmul.f32 %v1770, %v1774
      %vm1776 = vweird.f32 %v1238
      %vm1777 = vweird.f32 %v1770
      %vm1778 = vmor %vm1776, %vm1777
      %v1779 = vsel %vm1778, %v1770, %v1775
      %v1780 = vrsqrt.pop %v1239
      %v1781 = vmul.f32 %v1780, %v1239
      %v1782 = vmul.f32 %v1781, %v1780
      %v1783 = vmul.f32 0.5, %v1782
      %v1784 = vsub.f32 1.5, %v1783
      %v1785 = vmul.f32 %v1780, %v1784
      %vm1786 = vweird.f32 %v1239
      %vm1787 = vweird.f32 %v1780
      %vm1788 = vmor %vm1786, %vm1787
      %v1789 = vsel %vm1788, %v1780, %v1785
      %v1790 = vrsqrt.pop %v1240
      %v1791 = vmul.f32 %v1790, %v1240
      %v1792 = vmul.f32 %v1791, %v1790
      %v1793 = vmul.f32 0.5, %v1792
      %v1794 = vsub.f32 1.5, %v1793
      %v1795 = vmul.f32 %v1790, %v1794
      %vm1796 = vweird.f32 %v1240
      %vm1797 = vweird.f32 %v1790
      %vm1798 = vmor %vm1796, %vm1797
      %v1799 = vsel %vm1798, %v1790, %v1795
      %v1800 = vrsqrt.pop %v1241
      %v1801 = vmul.f32 %v1800, %v1241
      %v1802 = vmul.f32 %v1801, %v1800
      %v1803 = vmul.f32 0.5, %v1802
      %v1804 = vsub.f32 1.5, %v1803
      %v1805 = vmul.f32 %v1800, %v1804
      %vm1806 = vweird.f32 %v1241
      %vm1807 = vweird.f32 %v1800
      %vm1808 = vmor %vm1806, %vm1807
      %v1809 = vsel %vm1808, %v1800, %v1805
      %v1810 = vrsqrt.pop %v1242
      %v1811 = vmul.f32 %v1810, %v1242
      %v1812 = vmul.f32 %v1811, %v1810
      %v1813 = vmul.f32 0.5, %v1812
      %v1814 = vsub.f32 1.5, %v1813
      %v1815 = vmul.f32 %v1810, %v1814
      %vm1816 = vweird.f32 %v1242
      %vm1817 = vweird.f32 %v1810
      %vm1818 = vmor %vm1816, %vm1817
      %v1819 = vsel %vm1818, %v1810, %v1815
      %v1820 = vrsqrt.pop %v1243
      %v1821 = vmul.f32 %v1820, %v1243
      %v1822 = vmul.f32 %v1821, %v1820
      %v1823 = vmul.f32 0.5, %v1822
      %v1824 = vsub.f32 1.5, %v1823
      %v1825 = vmul.f32 %v1820, %v1824
      %vm1826 = vweird.f32 %v1243
      %vm1827 = vweird.f32 %v1820
      %vm1828 = vmor %vm1826, %vm1827
      %v1829 = vsel %vm1828, %v1820, %v1825
      %v1830 = vrsqrt.pop %v1244
      %v1831 = vmul.f32 %v1830, %v1244
      %v1832 = vmul.f32 %v1831, %v1830
      %v1833 = vmul.f32 0.5, %v1832
      %v1834 = vsub.f32 1.5, %v1833
      %v1835 = vmul.f32 %v1830, %v1834
      %vm1836 = vweird.f32 %v1244
      %vm1837 = vweird.f32 %v1830
      %vm1838 = vmor %vm1836, %vm1837
      %v1839 = vsel %vm1838, %v1830, %v1835
      %v1840 = vrsqrt.pop %v1245
      %v1841 = vmul.f32 %v1840, %v1245
      %v1842 = vmul.f32 %v1841, %v1840
      %v1843 = vmul.f32 0.5, %v1842
      %v1844 = vsub.f32 1.5, %v1843
      %v1845 = vmul.f32 %v1840, %v1844
      %vm1846 = vweird.f32 %v1245
      %vm1847 = vweird.f32 %v1840
      %vm1848 = vmor %vm1846, %vm1847
      %v1849 = vsel %vm1848, %v1840, %v1845
      %v1850 = vrsqrt.pop %v1246
      %v1851 = vmul.f32 %v1850, %v1246
      %v1852 = vmul.f32 %v1851, %v1850
      %v1853 = vmul.f32 0.5, %v1852
      %v1854 = vsub.f32 1.5, %v1853
      %v1855 = vmul.f32 %v1850, %v1854
      %vm1856 = vweird.f32 %v1246
      %vm1857 = vweird.f32 %v1850
      %vm1858 = vmor %vm1856, %vm1857
      %v1859 = vsel %vm1858, %v1850, %v1855
      %v1860 = vrsqrt.pop %v1247
      %v1861 = vmul.f32 %v1860, %v1247
      %v1862 = vmul.f32 %v1861, %v1860
      %v1863 = vmul.f32 0.5, %v1862
      %v1864 = vsub.f32 1.5, %v1863
      %v1865 = vmul.f32 %v1860, %v1864
      %vm1866 = vweird.f32 %v1247
      %vm1867 = vweird.f32 %v1860
      %vm1868 = vmor %vm1866, %vm1867
      %v1869 = vsel %vm1868, %v1860, %v1865
      %v1870 = vrsqrt.pop %v1248
      %v1871 = vmul.f32 %v1870, %v1248
      %v1872 = vmul.f32 %v1871, %v1870
      %v1873 = vmul.f32 0.5, %v1872
      %v1874 = vsub.f32 1.5, %v1873
      %v1875 = vmul.f32 %v1870, %v1874
      %vm1876 = vweird.f32 %v1248
      %vm1877 = vweird.f32 %v1870
      %vm1878 = vmor %vm1876, %vm1877
      %v1879 = vsel %vm1878, %v1870, %v1875
      %v1880 = vrsqrt.pop %v1249
      %v1881 = vmul.f32 %v1880, %v1249
      %v1882 = vmul.f32 %v1881, %v1880
      %v1883 = vmul.f32 0.5, %v1882
      %v1884 = vsub.f32 1.5, %v1883
      %v1885 = vmul.f32 %v1880, %v1884
      %vm1886 = vweird.f32 %v1249
      %vm1887 = vweird.f32 %v1880
      %vm1888 = vmor %vm1886, %vm1887
      %v1889 = vsel %vm1888, %v1880, %v1885
      %v1890 = vmul.f32 %v1122, %v1259
      %v1891 = vmul.f32 %v1123, %v1269
      %v1892 = vmul.f32 %v1124, %v1279
      %v1893 = vmul.f32 %v1125, %v1289
      %v1894 = vmul.f32 %v1126, %v1299
      %v1895 = vmul.f32 %v1127, %v1309
      %v1896 = vmul.f32 %v1128, %v1319
      %v1897 = vmul.f32 %v1129, %v1329
      %v1898 = vmul.f32 %v1130, %v1339
      %v1899 = vmul.f32 %v1131, %v1349
      %v1900 = vmul.f32 %v1132, %v1359
      %v1901 = vmul.f32 %v1133, %v1369
      %v1902 = vmul.f32 %v1134, %v1379
      %v1903 = vmul.f32 %v1135, %v1389
      %v1904 = vmul.f32 %v1136, %v1399
      %v1905 = vmul.f32 %v1137, %v1409
      %v1906 = vmul.f32 %v1138, %v1419
      %v1907 = vmul.f32 %v1139, %v1429
      %v1908 = vmul.f32 %v1140, %v1439
      %v1909 = vmul.f32 %v1141, %v1449
      %v1910 = vmul.f32 %v1142, %v1459
      %v1911 = vmul.f32 %v1143, %v1469
      %v1912 = vmul.f32 %v1144, %v1479
      %v1913 = vmul.f32 %v1145, %v1489
      %v1914 = vmul.f32 %v1146, %v1499
      %v1915 = vmul.f32 %v1147, %v1509
      %v1916 = vmul.f32 %v1148, %v1519
      %v1917 = vmul.f32 %v1149, %v1529
      %v1918 = vmul.f32 %v1150, %v1539
      %v1919 = vmul.f32 %v1151, %v1549
      %v1920 = vmul.f32 %v1152, %v1559
      %v1921 = vmul.f32 %v1153, %v1569
      %v1922 = vmul.f32 %v1154, %v1579
      %v1923 = vmul.f32 %v1155, %v1589
      %v1924 = vmul.f32 %v1156, %v1599
      %v1925 = vmul.f32 %v1157, %v1609
      %v1926 = vmul.f32 %v1158, %v1619
      %v1927 = vmul.f32 %v1159, %v1629
      %v1928 = vmul.f32 %v1160, %v1639
      %v1929 = vmul.f32 %v1161, %v1649
      %v1930 = vmul.f32 %v1162, %v1659
      %v1931 = vmul.f32 %v1163, %v1669
      %v1932 = vmul.f32 %v1164, %v1679
      %v1933 = vmul.f32 %v1165, %v1689
      %v1934 = vmul.f32 %v1166, %v1699
      %v1935 = vmul.f32 %v1167, %v1709
      %v1936 = vmul.f32 %v1168, %v1719
      %v1937 = vmul.f32 %v1169, %v1729
      %v1938 = vmul.f32 %v1170, %v1739
      %v1939 = vmul.f32 %v1171, %v1749
      %v1940 = vmul.f32 %v1172, %v1759
      %v1941 = vmul.f32 %v1173, %v1769
      %v1942 = vmul.f32 %v1174, %v1779
      %v1943 = vmul.f32 %v1175, %v1789
      %v1944 = vmul.f32 %v1176, %v1799
      %v1945 = vmul.f32 %v1177, %v1809
      %v1946 = vmul.f32 %v1178, %v1819
      %v1947 = vmul.f32 %v1179, %v1829
      %v1948 = vmul.f32 %v1180, %v1839
      %v1949 = vmul.f32 %v1181, %v1849
      %v1950 = vmul.f32 %v1182, %v1859
      %v1951 = vmul.f32 %v1183, %v1869
      %v1952 = vmul.f32 %v1184, %v1879
      %v1953 = vmul.f32 %v1185, %v1889
      %v1954 = vld [vmem:[%s1] sm:$0x1]
      %v1956 = vperm.slane %v1954, 0
      %v1958 = vmul.f32 %v1890, %v1956
      %v1959 = vmul.f32 %v1891, %v1956
      %v1960 = vmul.f32 %v1892, %v1956
      %v1961 = vmul.f32 %v1893, %v1956
      %v1962 = vmul.f32 %v1894, %v1956
      %v1963 = vmul.f32 %v1895, %v1956
      %v1964 = vmul.f32 %v1896, %v1956
      %v1965 = vmul.f32 %v1897, %v1956
      %v1966 = vmul.f32 %v1898, %v1956
      %v1967 = vmul.f32 %v1899, %v1956
      %v1968 = vmul.f32 %v1900, %v1956
      %v1969 = vmul.f32 %v1901, %v1956
      %v1970 = vmul.f32 %v1902, %v1956
      %v1971 = vmul.f32 %v1903, %v1956
      %v1972 = vmul.f32 %v1904, %v1956
      %v1973 = vmul.f32 %v1905, %v1956
      %v1974 = vmul.f32 %v1906, %v1956
      %v1975 = vmul.f32 %v1907, %v1956
      %v1976 = vmul.f32 %v1908, %v1956
      %v1977 = vmul.f32 %v1909, %v1956
      %v1978 = vmul.f32 %v1910, %v1956
      %v1979 = vmul.f32 %v1911, %v1956
      %v1980 = vmul.f32 %v1912, %v1956
      %v1981 = vmul.f32 %v1913, %v1956
      %v1982 = vmul.f32 %v1914, %v1956
      %v1983 = vmul.f32 %v1915, %v1956
      %v1984 = vmul.f32 %v1916, %v1956
      %v1985 = vmul.f32 %v1917, %v1956
      %v1986 = vmul.f32 %v1918, %v1956
      %v1987 = vmul.f32 %v1919, %v1956
      %v1988 = vmul.f32 %v1920, %v1956
      %v1989 = vmul.f32 %v1921, %v1956
      %v1990 = vmul.f32 %v1922, %v1956
      %v1991 = vmul.f32 %v1923, %v1956
      %v1992 = vmul.f32 %v1924, %v1956
      %v1993 = vmul.f32 %v1925, %v1956
      %v1994 = vmul.f32 %v1926, %v1956
      %v1995 = vmul.f32 %v1927, %v1956
      %v1996 = vmul.f32 %v1928, %v1956
      %v1997 = vmul.f32 %v1929, %v1956
      %v1998 = vmul.f32 %v1930, %v1956
      %v1999 = vmul.f32 %v1931, %v1956
      %v2000 = vmul.f32 %v1932, %v1956
      %v2001 = vmul.f32 %v1933, %v1956
      %v2002 = vmul.f32 %v1934, %v1956
      %v2003 = vmul.f32 %v1935, %v1956
      %v2004 = vmul.f32 %v1936, %v1956
      %v2005 = vmul.f32 %v1937, %v1956
      %v2006 = vmul.f32 %v1938, %v1956
      %v2007 = vmul.f32 %v1939, %v1956
      %v2008 = vmul.f32 %v1940, %v1956
      %v2009 = vmul.f32 %v1941, %v1956
      %v2010 = vmul.f32 %v1942, %v1956
      %v2011 = vmul.f32 %v1943, %v1956
      %v2012 = vmul.f32 %v1944, %v1956
      %v2013 = vmul.f32 %v1945, %v1956
      %v2014 = vmul.f32 %v1946, %v1956
      %v2015 = vmul.f32 %v1947, %v1956
      %v2016 = vmul.f32 %v1948, %v1956
      %v2017 = vmul.f32 %v1949, %v1956
      %v2018 = vmul.f32 %v1950, %v1956
      %v2019 = vmul.f32 %v1951, %v1956
      %v2020 = vmul.f32 %v1952, %v1956
      %v2021 = vmul.f32 %v1953, %v1956
      %v2022 = vld [vmem:[%s2] sm:$0x1]
      %v2024 = vperm.slane %v2022, 0
      %v2026 = vadd.f32 %v1958, %v2024
      %v2027 = vadd.f32 %v1959, %v2024
      %v2028 = vadd.f32 %v1960, %v2024
      %v2029 = vadd.f32 %v1961, %v2024
      %v2030 = vadd.f32 %v1962, %v2024
      %v2031 = vadd.f32 %v1963, %v2024
      %v2032 = vadd.f32 %v1964, %v2024
      %v2033 = vadd.f32 %v1965, %v2024
      %v2034 = vadd.f32 %v1966, %v2024
      %v2035 = vadd.f32 %v1967, %v2024
      %v2036 = vadd.f32 %v1968, %v2024
      %v2037 = vadd.f32 %v1969, %v2024
      %v2038 = vadd.f32 %v1970, %v2024
      %v2039 = vadd.f32 %v1971, %v2024
      %v2040 = vadd.f32 %v1972, %v2024
      %v2041 = vadd.f32 %v1973, %v2024
      %v2042 = vadd.f32 %v1974, %v2024
      %v2043 = vadd.f32 %v1975, %v2024
      %v2044 = vadd.f32 %v1976, %v2024
      %v2045 = vadd.f32 %v1977, %v2024
      %v2046 = vadd.f32 %v1978, %v2024
      %v2047 = vadd.f32 %v1979, %v2024
      %v2048 = vadd.f32 %v1980, %v2024
      %v2049 = vadd.f32 %v1981, %v2024
      %v2050 = vadd.f32 %v1982, %v2024
      %v2051 = vadd.f32 %v1983, %v2024
      %v2052 = vadd.f32 %v1984, %v2024
      %v2053 = vadd.f32 %v1985, %v2024
      %v2054 = vadd.f32 %v1986, %v2024
      %v2055 = vadd.f32 %v1987, %v2024
      %v2056 = vadd.f32 %v1988, %v2024
      %v2057 = vadd.f32 %v1989, %v2024
      %v2058 = vadd.f32 %v1990, %v2024
      %v2059 = vadd.f32 %v1991, %v2024
      %v2060 = vadd.f32 %v1992, %v2024
      %v2061 = vadd.f32 %v1993, %v2024
      %v2062 = vadd.f32 %v1994, %v2024
      %v2063 = vadd.f32 %v1995, %v2024
      %v2064 = vadd.f32 %v1996, %v2024
      %v2065 = vadd.f32 %v1997, %v2024
      %v2066 = vadd.f32 %v1998, %v2024
      %v2067 = vadd.f32 %v1999, %v2024
      %v2068 = vadd.f32 %v2000, %v2024
      %v2069 = vadd.f32 %v2001, %v2024
      %v2070 = vadd.f32 %v2002, %v2024
      %v2071 = vadd.f32 %v2003, %v2024
      %v2072 = vadd.f32 %v2004, %v2024
      %v2073 = vadd.f32 %v2005, %v2024
      %v2074 = vadd.f32 %v2006, %v2024
      %v2075 = vadd.f32 %v2007, %v2024
      %v2076 = vadd.f32 %v2008, %v2024
      %v2077 = vadd.f32 %v2009, %v2024
      %v2078 = vadd.f32 %v2010, %v2024
      %v2079 = vadd.f32 %v2011, %v2024
      %v2080 = vadd.f32 %v2012, %v2024
      %v2081 = vadd.f32 %v2013, %v2024
      %v2082 = vadd.f32 %v2014, %v2024
      %v2083 = vadd.f32 %v2015, %v2024
      %v2084 = vadd.f32 %v2016, %v2024
      %v2085 = vadd.f32 %v2017, %v2024
      %v2086 = vadd.f32 %v2018, %v2024
      %v2087 = vadd.f32 %v2019, %v2024
      %v2088 = vadd.f32 %v2020, %v2024
      %v2089 = vadd.f32 %v2021, %v2024
      %v2090 = vld [vmem:[%s3] sm:$0xff]
      %v2091 = vld [vmem:[%s3 + $0x8] sm:$0xff]
      %v2092 = vld [vmem:[%s3 + $0x10] sm:$0xff]
      %v2093 = vld [vmem:[%s3 + $0x18] sm:$0xff]
      %v2094 = vld [vmem:[%s4] sm:$0x1]
      %v2096 = vperm.slane %v2094, 0
      %v2099 = vsel %vm346, %v2026, 0
      %v2102 = vsel %vm346, %v2027, 0
      %v2105 = vsel %vm346, %v2028, 0
      %v2108 = vsel %vm346, %v2029, 0
      %v2111 = vsel %vm346, %v2030, 0
      %v2114 = vsel %vm346, %v2031, 0
      %v2117 = vsel %vm346, %v2032, 0
      %v2120 = vsel %vm346, %v2033, 0
      %v2123 = vsel %vm346, %v2034, 0
      %v2126 = vsel %vm346, %v2035, 0
      %v2129 = vsel %vm346, %v2036, 0
      %v2132 = vsel %vm346, %v2037, 0
      %v2135 = vsel %vm346, %v2038, 0
      %v2138 = vsel %vm346, %v2039, 0
      %v2141 = vsel %vm346, %v2040, 0
      %v2144 = vsel %vm346, %v2041, 0
      %v2147 = vsel %vm346, %v2042, 0
      %v2150 = vsel %vm346, %v2043, 0
      %v2153 = vsel %vm346, %v2044, 0
      %v2156 = vsel %vm346, %v2045, 0
      %v2159 = vsel %vm346, %v2046, 0
      %v2162 = vsel %vm346, %v2047, 0
      %v2165 = vsel %vm346, %v2048, 0
      %v2168 = vsel %vm346, %v2049, 0
      %v2171 = vsel %vm346, %v2050, 0
      %v2174 = vsel %vm346, %v2051, 0
      %v2177 = vsel %vm346, %v2052, 0
      %v2180 = vsel %vm346, %v2053, 0
      %v2183 = vsel %vm346, %v2054, 0
      %v2186 = vsel %vm346, %v2055, 0
      %v2189 = vsel %vm346, %v2056, 0
      %v2192 = vsel %vm346, %v2057, 0
      %v2195 = vsel %vm346, %v2058, 0
      %v2198 = vsel %vm346, %v2059, 0
      %v2201 = vsel %vm346, %v2060, 0
      %v2204 = vsel %vm346, %v2061, 0
      %v2207 = vsel %vm346, %v2062, 0
      %v2210 = vsel %vm346, %v2063, 0
      %v2213 = vsel %vm346, %v2064, 0
      %v2216 = vsel %vm346, %v2065, 0
      %v2219 = vsel %vm346, %v2066, 0
      %v2222 = vsel %vm346, %v2067, 0
      %v2225 = vsel %vm346, %v2068, 0
      %v2228 = vsel %vm346, %v2069, 0
      %v2231 = vsel %vm346, %v2070, 0
      %v2234 = vsel %vm346, %v2071, 0
      %v2237 = vsel %vm346, %v2072, 0
      %v2240 = vsel %vm346, %v2073, 0
      %v2243 = vsel %vm346, %v2074, 0
      %v2246 = vsel %vm346, %v2075, 0
      %v2249 = vsel %vm346, %v2076, 0
      %v2252 = vsel %vm346, %v2077, 0
      %v2255 = vsel %vm346, %v2078, 0
      %v2258 = vsel %vm346, %v2079, 0
      %v2261 = vsel %vm346, %v2080, 0
      %v2264 = vsel %vm346, %v2081, 0
      %v2267 = vsel %vm346, %v2082, 0
      %v2270 = vsel %vm346, %v2083, 0
      %v2273 = vsel %vm346, %v2084, 0
      %v2276 = vsel %vm346, %v2085, 0
      %v2279 = vsel %vm346, %v2086, 0
      %v2282 = vsel %vm346, %v2087, 0
      %v2285 = vsel %vm346, %v2088, 0
      %v2288 = vsel %vm346, %v2089, 0
      %2290 = vmatpush.msra.mxu0 0.0
      %2291 = vmatpush.msra.mxu0 0.0
      %2292 = vmatpush.msra.mxu0 0.0
      %2293 = vmatpush.msra.mxu0 0.0
      %2294 = vmatpush.msra.mxu0 0.0
      %2295 = vmatpush.msra.mxu0 0.0
      %2296 = vmatpush.msra.mxu0 0.0
      %2297 = vmatpush.msra.mxu0 0.0
      %2298 = vmatpush.msra.mxu0 0.0
      %2299 = vmatpush.msra.mxu0 0.0
      %2300 = vmatpush.msra.mxu0 0.0
      %2301 = vmatpush.msra.mxu0 0.0
      %2302 = vmatpush.msra.mxu0 %v2093
      %2303 = vmatpush.msra.mxu0 %v2092
      %2304 = vmatpush.msra.mxu0 %v2091
      %2305 = vmatpush.msra.mxu0 %v2090
      %2306 = vmatmul.f32.gmra.mxu0 %v2099
      %v2307 = vpop.f32.mrf.mxu0
      %v2308 = vadd.f32 %v2096, %v2307
      %2309 = vmatmul.f32.gmra.mxu0 %v2102
      %v2310 = vpop.f32.mrf.mxu0
      %v2311 = vadd.f32 %v2096, %v2310
      %2312 = vmatmul.f32.gmra.mxu0 %v2105
      %v2313 = vpop.f32.mrf.mxu0
      %v2314 = vadd.f32 %v2096, %v2313
      %2315 = vmatmul.f32.gmra.mxu0 %v2108
      %v2316 = vpop.f32.mrf.mxu0
      %v2317 = vadd.f32 %v2096, %v2316
      %2318 = vmatmul.f32.gmra.mxu0 %v2111
      %v2319 = vpop.f32.mrf.mxu0
      %v2320 = vadd.f32 %v2096, %v2319
      %2321 = vmatmul.f32.gmra.mxu0 %v2114
      %v2322 = vpop.f32.mrf.mxu0
      %v2323 = vadd.f32 %v2096, %v2322
      %2324 = vmatmul.f32.gmra.mxu0 %v2117
      %v2325 = vpop.f32.mrf.mxu0
      %v2326 = vadd.f32 %v2096, %v2325
      %2327 = vmatmul.f32.gmra.mxu0 %v2120
      %v2328 = vpop.f32.mrf.mxu0
      %v2329 = vadd.f32 %v2096, %v2328
      %2330 = vmatmul.f32.gmra.mxu0 %v2123
      %v2331 = vpop.f32.mrf.mxu0
      %v2332 = vadd.f32 %v2096, %v2331
      %2333 = vmatmul.f32.gmra.mxu0 %v2126
      %v2334 = vpop.f32.mrf.mxu0
      %v2335 = vadd.f32 %v2096, %v2334
      %2336 = vmatmul.f32.gmra.mxu0 %v2129
      %v2337 = vpop.f32.mrf.mxu0
      %v2338 = vadd.f32 %v2096, %v2337
      %2339 = vmatmul.f32.gmra.mxu0 %v2132
      %v2340 = vpop.f32.mrf.mxu0
      %v2341 = vadd.f32 %v2096, %v2340
      %2342 = vmatmul.f32.gmra.mxu0 %v2135
      %v2343 = vpop.f32.mrf.mxu0
      %v2344 = vadd.f32 %v2096, %v2343
      %2345 = vmatmul.f32.gmra.mxu0 %v2138
      %v2346 = vpop.f32.mrf.mxu0
      %v2347 = vadd.f32 %v2096, %v2346
      %2348 = vmatmul.f32.gmra.mxu0 %v2141
      %v2349 = vpop.f32.mrf.mxu0
      %v2350 = vadd.f32 %v2096, %v2349
      %2351 = vmatmul.f32.gmra.mxu0 %v2144
      %v2352 = vpop.f32.mrf.mxu0
      %v2353 = vadd.f32 %v2096, %v2352
      %2354 = vmatmul.f32.gmra.mxu0 %v2147
      %v2355 = vpop.f32.mrf.mxu0
      %v2356 = vadd.f32 %v2096, %v2355
      %2357 = vmatmul.f32.gmra.mxu0 %v2150
      %v2358 = vpop.f32.mrf.mxu0
      %v2359 = vadd.f32 %v2096, %v2358
      %2360 = vmatmul.f32.gmra.mxu0 %v2153
      %v2361 = vpop.f32.mrf.mxu0
      %v2362 = vadd.f32 %v2096, %v2361
      %2363 = vmatmul.f32.gmra.mxu0 %v2156
      %v2364 = vpop.f32.mrf.mxu0
      %v2365 = vadd.f32 %v2096, %v2364
      %2366 = vmatmul.f32.gmra.mxu0 %v2159
      %v2367 = vpop.f32.mrf.mxu0
      %v2368 = vadd.f32 %v2096, %v2367
      %2369 = vmatmul.f32.gmra.mxu0 %v2162
      %v2370 = vpop.f32.mrf.mxu0
      %v2371 = vadd.f32 %v2096, %v2370
      %2372 = vmatmul.f32.gmra.mxu0 %v2165
      %v2373 = vpop.f32.mrf.mxu0
      %v2374 = vadd.f32 %v2096, %v2373
      %2375 = vmatmul.f32.gmra.mxu0 %v2168
      %v2376 = vpop.f32.mrf.mxu0
      %v2377 = vadd.f32 %v2096, %v2376
      %2378 = vmatmul.f32.gmra.mxu0 %v2171
      %v2379 = vpop.f32.mrf.mxu0
      %v2380 = vadd.f32 %v2096, %v2379
      %2381 = vmatmul.f32.gmra.mxu0 %v2174
      %v2382 = vpop.f32.mrf.mxu0
      %v2383 = vadd.f32 %v2096, %v2382
      %2384 = vmatmul.f32.gmra.mxu0 %v2177
      %v2385 = vpop.f32.mrf.mxu0
      %v2386 = vadd.f32 %v2096, %v2385
      %2387 = vmatmul.f32.gmra.mxu0 %v2180
      %v2388 = vpop.f32.mrf.mxu0
      %v2389 = vadd.f32 %v2096, %v2388
      %2390 = vmatmul.f32.gmra.mxu0 %v2183
      %v2391 = vpop.f32.mrf.mxu0
      %v2392 = vadd.f32 %v2096, %v2391
      %2393 = vmatmul.f32.gmra.mxu0 %v2186
      %v2394 = vpop.f32.mrf.mxu0
      %v2395 = vadd.f32 %v2096, %v2394
      %2396 = vmatmul.f32.gmra.mxu0 %v2189
      %v2397 = vpop.f32.mrf.mxu0
      %v2398 = vadd.f32 %v2096, %v2397
      %2399 = vmatmul.f32.gmra.mxu0 %v2192
      %v2400 = vpop.f32.mrf.mxu0
      %v2401 = vadd.f32 %v2096, %v2400
      %2402 = vmatmul.f32.gmra.mxu0 %v2195
      %v2403 = vpop.f32.mrf.mxu0
      %v2404 = vadd.f32 %v2096, %v2403
      %2405 = vmatmul.f32.gmra.mxu0 %v2198
      %v2406 = vpop.f32.mrf.mxu0
      %v2407 = vadd.f32 %v2096, %v2406
      %2408 = vmatmul.f32.gmra.mxu0 %v2201
      %v2409 = vpop.f32.mrf.mxu0
      %v2410 = vadd.f32 %v2096, %v2409
      %2411 = vmatmul.f32.gmra.mxu0 %v2204
      %v2412 = vpop.f32.mrf.mxu0
      %v2413 = vadd.f32 %v2096, %v2412
      %2414 = vmatmul.f32.gmra.mxu0 %v2207
      %v2415 = vpop.f32.mrf.mxu0
      %v2416 = vadd.f32 %v2096, %v2415
      %2417 = vmatmul.f32.gmra.mxu0 %v2210
      %v2418 = vpop.f32.mrf.mxu0
      %v2419 = vadd.f32 %v2096, %v2418
      %2420 = vmatmul.f32.gmra.mxu0 %v2213
      %v2421 = vpop.f32.mrf.mxu0
      %v2422 = vadd.f32 %v2096, %v2421
      %2423 = vmatmul.f32.gmra.mxu0 %v2216
      %v2424 = vpop.f32.mrf.mxu0
      %v2425 = vadd.f32 %v2096, %v2424
      %2426 = vmatmul.f32.gmra.mxu0 %v2219
      %v2427 = vpop.f32.mrf.mxu0
      %v2428 = vadd.f32 %v2096, %v2427
      %2429 = vmatmul.f32.gmra.mxu0 %v2222
      %v2430 = vpop.f32.mrf.mxu0
      %v2431 = vadd.f32 %v2096, %v2430
      %2432 = vmatmul.f32.gmra.mxu0 %v2225
      %v2433 = vpop.f32.mrf.mxu0
      %v2434 = vadd.f32 %v2096, %v2433
      %2435 = vmatmul.f32.gmra.mxu0 %v2228
      %v2436 = vpop.f32.mrf.mxu0
      %v2437 = vadd.f32 %v2096, %v2436
      %2438 = vmatmul.f32.gmra.mxu0 %v2231
      %v2439 = vpop.f32.mrf.mxu0
      %v2440 = vadd.f32 %v2096, %v2439
      %2441 = vmatmul.f32.gmra.mxu0 %v2234
      %v2442 = vpop.f32.mrf.mxu0
      %v2443 = vadd.f32 %v2096, %v2442
      %2444 = vmatmul.f32.gmra.mxu0 %v2237
      %v2445 = vpop.f32.mrf.mxu0
      %v2446 = vadd.f32 %v2096, %v2445
      %2447 = vmatmul.f32.gmra.mxu0 %v2240
      %v2448 = vpop.f32.mrf.mxu0
      %v2449 = vadd.f32 %v2096, %v2448
      %2450 = vmatmul.f32.gmra.mxu0 %v2243
      %v2451 = vpop.f32.mrf.mxu0
      %v2452 = vadd.f32 %v2096, %v2451
      %2453 = vmatmul.f32.gmra.mxu0 %v2246
      %v2454 = vpop.f32.mrf.mxu0
      %v2455 = vadd.f32 %v2096, %v2454
      %2456 = vmatmul.f32.gmra.mxu0 %v2249
      %v2457 = vpop.f32.mrf.mxu0
      %v2458 = vadd.f32 %v2096, %v2457
      %2459 = vmatmul.f32.gmra.mxu0 %v2252
      %v2460 = vpop.f32.mrf.mxu0
      %v2461 = vadd.f32 %v2096, %v2460
      %2462 = vmatmul.f32.gmra.mxu0 %v2255
      %v2463 = vpop.f32.mrf.mxu0
      %v2464 = vadd.f32 %v2096, %v2463
      %2465 = vmatmul.f32.gmra.mxu0 %v2258
      %v2466 = vpop.f32.mrf.mxu0
      %v2467 = vadd.f32 %v2096, %v2466
      %2468 = vmatmul.f32.gmra.mxu0 %v2261
      %v2469 = vpop.f32.mrf.mxu0
      %v2470 = vadd.f32 %v2096, %v2469
      %2471 = vmatmul.f32.gmra.mxu0 %v2264
      %v2472 = vpop.f32.mrf.mxu0
      %v2473 = vadd.f32 %v2096, %v2472
      %2474 = vmatmul.f32.gmra.mxu0 %v2267
      %v2475 = vpop.f32.mrf.mxu0
      %v2476 = vadd.f32 %v2096, %v2475
      %2477 = vmatmul.f32.gmra.mxu0 %v2270
      %v2478 = vpop.f32.mrf.mxu0
      %v2479 = vadd.f32 %v2096, %v2478
      %2480 = vmatmul.f32.gmra.mxu0 %v2273
      %v2481 = vpop.f32.mrf.mxu0
      %v2482 = vadd.f32 %v2096, %v2481
      %2483 = vmatmul.f32.gmra.mxu0 %v2276
      %v2484 = vpop.f32.mrf.mxu0
      %v2485 = vadd.f32 %v2096, %v2484
      %2486 = vmatmul.f32.gmra.mxu0 %v2279
      %v2487 = vpop.f32.mrf.mxu0
      %v2488 = vadd.f32 %v2096, %v2487
      %2489 = vmatmul.f32.gmra.mxu0 %v2282
      %v2490 = vpop.f32.mrf.mxu0
      %v2491 = vadd.f32 %v2096, %v2490
      %2492 = vmatmul.f32.gmra.mxu0 %v2285
      %v2493 = vpop.f32.mrf.mxu0
      %v2494 = vadd.f32 %v2096, %v2493
      %2495 = vmatmul.f32.gmra.mxu0 %v2288
      %v2496 = vpop.f32.mrf.mxu0
      %v2497 = vadd.f32 %v2096, %v2496
      %2498 = vdwg.mxu0
      %v2499 = vmul.f32 %v2308, 0.5
      %v2500 = vmul.f32 %v2311, 0.5
      %v2501 = vmul.f32 %v2314, 0.5
      %v2502 = vmul.f32 %v2317, 0.5
      %v2503 = vmul.f32 %v2320, 0.5
      %v2504 = vmul.f32 %v2323, 0.5
      %v2505 = vmul.f32 %v2326, 0.5
      %v2506 = vmul.f32 %v2329, 0.5
      %v2507 = vmul.f32 %v2332, 0.5
      %v2508 = vmul.f32 %v2335, 0.5
      %v2509 = vmul.f32 %v2338, 0.5
      %v2510 = vmul.f32 %v2341, 0.5
      %v2511 = vmul.f32 %v2344, 0.5
      %v2512 = vmul.f32 %v2347, 0.5
      %v2513 = vmul.f32 %v2350, 0.5
      %v2514 = vmul.f32 %v2353, 0.5
      %v2515 = vmul.f32 %v2356, 0.5
      %v2516 = vmul.f32 %v2359, 0.5
      %v2517 = vmul.f32 %v2362, 0.5
      %v2518 = vmul.f32 %v2365, 0.5
      %v2519 = vmul.f32 %v2368, 0.5
      %v2520 = vmul.f32 %v2371, 0.5
      %v2521 = vmul.f32 %v2374, 0.5
      %v2522 = vmul.f32 %v2377, 0.5
      %v2523 = vmul.f32 %v2380, 0.5
      %v2524 = vmul.f32 %v2383, 0.5
      %v2525 = vmul.f32 %v2386, 0.5
      %v2526 = vmul.f32 %v2389, 0.5
      %v2527 = vmul.f32 %v2392, 0.5
      %v2528 = vmul.f32 %v2395, 0.5
      %v2529 = vmul.f32 %v2398, 0.5
      %v2530 = vmul.f32 %v2401, 0.5
      %v2531 = vmul.f32 %v2404, 0.5
      %v2532 = vmul.f32 %v2407, 0.5
      %v2533 = vmul.f32 %v2410, 0.5
      %v2534 = vmul.f32 %v2413, 0.5
      %v2535 = vmul.f32 %v2416, 0.5
      %v2536 = vmul.f32 %v2419, 0.5
      %v2537 = vmul.f32 %v2422, 0.5
      %v2538 = vmul.f32 %v2425, 0.5
      %v2539 = vmul.f32 %v2428, 0.5
      %v2540 = vmul.f32 %v2431, 0.5
      %v2541 = vmul.f32 %v2434, 0.5
      %v2542 = vmul.f32 %v2437, 0.5
      %v2543 = vmul.f32 %v2440, 0.5
      %v2544 = vmul.f32 %v2443, 0.5
      %v2545 = vmul.f32 %v2446, 0.5
      %v2546 = vmul.f32 %v2449, 0.5
      %v2547 = vmul.f32 %v2452, 0.5
      %v2548 = vmul.f32 %v2455, 0.5
      %v2549 = vmul.f32 %v2458, 0.5
      %v2550 = vmul.f32 %v2461, 0.5
      %v2551 = vmul.f32 %v2464, 0.5
      %v2552 = vmul.f32 %v2467, 0.5
      %v2553 = vmul.f32 %v2470, 0.5
      %v2554 = vmul.f32 %v2473, 0.5
      %v2555 = vmul.f32 %v2476, 0.5
      %v2556 = vmul.f32 %v2479, 0.5
      %v2557 = vmul.f32 %v2482, 0.5
      %v2558 = vmul.f32 %v2485, 0.5
      %v2559 = vmul.f32 %v2488, 0.5
      %v2560 = vmul.f32 %v2491, 0.5
      %v2561 = vmul.f32 %v2494, 0.5
      %v2562 = vmul.f32 %v2497, 0.5
      %v2563 = vmul.f32 %v2308, 0.044715
      %v2564 = vmul.f32 %v2311, 0.044715
      %v2565 = vmul.f32 %v2314, 0.044715
      %v2566 = vmul.f32 %v2317, 0.044715
      %v2567 = vmul.f32 %v2320, 0.044715
      %v2568 = vmul.f32 %v2323, 0.044715
      %v2569 = vmul.f32 %v2326, 0.044715
      %v2570 = vmul.f32 %v2329, 0.044715
      %v2571 = vmul.f32 %v2332, 0.044715
      %v2572 = vmul.f32 %v2335, 0.044715
      %v2573 = vmul.f32 %v2338, 0.044715
      %v2574 = vmul.f32 %v2341, 0.044715
      %v2575 = vmul.f32 %v2344, 0.044715
      %v2576 = vmul.f32 %v2347, 0.044715
      %v2577 = vmul.f32 %v2350, 0.044715
      %v2578 = vmul.f32 %v2353, 0.044715
      %v2579 = vmul.f32 %v2356, 0.044715
      %v2580 = vmul.f32 %v2359, 0.044715
      %v2581 = vmul.f32 %v2362, 0.044715
      %v2582 = vmul.f32 %v2365, 0.044715
      %v2583 = vmul.f32 %v2368, 0.044715
      %v2584 = vmul.f32 %v2371, 0.044715
      %v2585 = vmul.f32 %v2374, 0.044715
      %v2586 = vmul.f32 %v2377, 0.044715
      %v2587 = vmul.f32 %v2380, 0.044715
      %v2588 = vmul.f32 %v2383, 0.044715
      %v2589 = vmul.f32 %v2386, 0.044715
      %v2590 = vmul.f32 %v2389, 0.044715
      %v2591 = vmul.f32 %v2392, 0.044715
      %v2592 = vmul.f32 %v2395, 0.044715
      %v2593 = vmul.f32 %v2398, 0.044715
      %v2594 = vmul.f32 %v2401, 0.044715
      %v2595 = vmul.f32 %v2404, 0.044715
      %v2596 = vmul.f32 %v2407, 0.044715
      %v2597 = vmul.f32 %v2410, 0.044715
      %v2598 = vmul.f32 %v2413, 0.044715
      %v2599 = vmul.f32 %v2416, 0.044715
      %v2600 = vmul.f32 %v2419, 0.044715
      %v2601 = vmul.f32 %v2422, 0.044715
      %v2602 = vmul.f32 %v2425, 0.044715
      %v2603 = vmul.f32 %v2428, 0.044715
      %v2604 = vmul.f32 %v2431, 0.044715
      %v2605 = vmul.f32 %v2434, 0.044715
      %v2606 = vmul.f32 %v2437, 0.044715
      %v2607 = vmul.f32 %v2440, 0.044715
      %v2608 = vmul.f32 %v2443, 0.044715
      %v2609 = vmul.f32 %v2446, 0.044715
      %v2610 = vmul.f32 %v2449, 0.044715
      %v2611 = vmul.f32 %v2452, 0.044715
      %v2612 = vmul.f32 %v2455, 0.044715
      %v2613 = vmul.f32 %v2458, 0.044715
      %v2614 = vmul.f32 %v2461, 0.044715
      %v2615 = vmul.f32 %v2464, 0.044715
      %v2616 = vmul.f32 %v2467, 0.044715
      %v2617 = vmul.f32 %v2470, 0.044715
      %v2618 = vmul.f32 %v2473, 0.044715
      %v2619 = vmul.f32 %v2476, 0.044715
      %v2620 = vmul.f32 %v2479, 0.044715
      %v2621 = vmul.f32 %v2482, 0.044715
      %v2622 = vmul.f32 %v2485, 0.044715
      %v2623 = vmul.f32 %v2488, 0.044715
      %v2624 = vmul.f32 %v2491, 0.044715
      %v2625 = vmul.f32 %v2494, 0.044715
      %v2626 = vmul.f32 %v2497, 0.044715
      %v2627 = vmul.f32 %v2563, %v2308
      %v2628 = vmul.f32 %v2564, %v2311
      %v2629 = vmul.f32 %v2565, %v2314
      %v2630 = vmul.f32 %v2566, %v2317
      %v2631 = vmul.f32 %v2567, %v2320
      %v2632 = vmul.f32 %v2568, %v2323
      %v2633 = vmul.f32 %v2569, %v2326
      %v2634 = vmul.f32 %v2570, %v2329
      %v2635 = vmul.f32 %v2571, %v2332
      %v2636 = vmul.f32 %v2572, %v2335
      %v2637 = vmul.f32 %v2573, %v2338
      %v2638 = vmul.f32 %v2574, %v2341
      %v2639 = vmul.f32 %v2575, %v2344
      %v2640 = vmul.f32 %v2576, %v2347
      %v2641 = vmul.f32 %v2577, %v2350
      %v2642 = vmul.f32 %v2578, %v2353
      %v2643 = vmul.f32 %v2579, %v2356
      %v2644 = vmul.f32 %v2580, %v2359
      %v2645 = vmul.f32 %v2581, %v2362
      %v2646 = vmul.f32 %v2582, %v2365
      %v2647 = vmul.f32 %v2583, %v2368
      %v2648 = vmul.f32 %v2584, %v2371
      %v2649 = vmul.f32 %v2585, %v2374
      %v2650 = vmul.f32 %v2586, %v2377
      %v2651 = vmul.f32 %v2587, %v2380
      %v2652 = vmul.f32 %v2588, %v2383
      %v2653 = vmul.f32 %v2589, %v2386
      %v2654 = vmul.f32 %v2590, %v2389
      %v2655 = vmul.f32 %v2591, %v2392
      %v2656 = vmul.f32 %v2592, %v2395
      %v2657 = vmul.f32 %v2593, %v2398
      %v2658 = vmul.f32 %v2594, %v2401
      %v2659 = vmul.f32 %v2595, %v2404
      %v2660 = vmul.f32 %v2596, %v2407
      %v2661 = vmul.f32 %v2597, %v2410
      %v2662 = vmul.f32 %v2598, %v2413
      %v2663 = vmul.f32 %v2599, %v2416
      %v2664 = vmul.f32 %v2600, %v2419
      %v2665 = vmul.f32 %v2601, %v2422
      %v2666 = vmul.f32 %v2602, %v2425
      %v2667 = vmul.f32 %v2603, %v2428
      %v2668 = vmul.f32 %v2604, %v2431
      %v2669 = vmul.f32 %v2605, %v2434
      %v2670 = vmul.f32 %v2606, %v2437
      %v2671 = vmul.f32 %v2607, %v2440
      %v2672 = vmul.f32 %v2608, %v2443
      %v2673 = vmul.f32 %v2609, %v2446
      %v2674 = vmul.f32 %v2610, %v2449
      %v2675 = vmul.f32 %v2611, %v2452
      %v2676 = vmul.f32 %v2612, %v2455
      %v2677 = vmul.f32 %v2613, %v2458
      %v2678 = vmul.f32 %v2614, %v2461
      %v2679 = vmul.f32 %v2615, %v2464
      %v2680 = vmul.f32 %v2616, %v2467
      %v2681 = vmul.f32 %v2617, %v2470
      %v2682 = vmul.f32 %v2618, %v2473
      %v2683 = vmul.f32 %v2619, %v2476
      %v2684 = vmul.f32 %v2620, %v2479
      %v2685 = vmul.f32 %v2621, %v2482
      %v2686 = vmul.f32 %v2622, %v2485
      %v2687 = vmul.f32 %v2623, %v2488
      %v2688 = vmul.f32 %v2624, %v2491
      %v2689 = vmul.f32 %v2625, %v2494
      %v2690 = vmul.f32 %v2626, %v2497
      %v2691 = vmul.f32 %v2627, %v2308
      %v2692 = vmul.f32 %v2628, %v2311
      %v2693 = vmul.f32 %v2629, %v2314
      %v2694 = vmul.f32 %v2630, %v2317
      %v2695 = vmul.f32 %v2631, %v2320
      %v2696 = vmul.f32 %v2632, %v2323
      %v2697 = vmul.f32 %v2633, %v2326
      %v2698 = vmul.f32 %v2634, %v2329
      %v2699 = vmul.f32 %v2635, %v2332
      %v2700 = vmul.f32 %v2636, %v2335
      %v2701 = vmul.f32 %v2637, %v2338
      %v2702 = vmul.f32 %v2638, %v2341
      %v2703 = vmul.f32 %v2639, %v2344
      %v2704 = vmul.f32 %v2640, %v2347
      %v2705 = vmul.f32 %v2641, %v2350
      %v2706 = vmul.f32 %v2642, %v2353
      %v2707 = vmul.f32 %v2643, %v2356
      %v2708 = vmul.f32 %v2644, %v2359
      %v2709 = vmul.f32 %v2645, %v2362
      %v2710 = vmul.f32 %v2646, %v2365
      %v2711 = vmul.f32 %v2647, %v2368
      %v2712 = vmul.f32 %v2648, %v2371
      %v2713 = vmul.f32 %v2649, %v2374
      %v2714 = vmul.f32 %v2650, %v2377
      %v2715 = vmul.f32 %v2651, %v2380
      %v2716 = vmul.f32 %v2652, %v2383
      %v2717 = vmul.f32 %v2653, %v2386
      %v2718 = vmul.f32 %v2654, %v2389
      %v2719 = vmul.f32 %v2655, %v2392
      %v2720 = vmul.f32 %v2656, %v2395
      %v2721 = vmul.f32 %v2657, %v2398
      %v2722 = vmul.f32 %v2658, %v2401
      %v2723 = vmul.f32 %v2659, %v2404
      %v2724 = vmul.f32 %v2660, %v2407
      %v2725 = vmul.f32 %v2661, %v2410
      %v2726 = vmul.f32 %v2662, %v2413
      %v2727 = vmul.f32 %v2663, %v2416
      %v2728 = vmul.f32 %v2664, %v2419
      %v2729 = vmul.f32 %v2665, %v2422
      %v2730 = vmul.f32 %v2666, %v2425
      %v2731 = vmul.f32 %v2667, %v2428
      %v2732 = vmul.f32 %v2668, %v2431
      %v2733 = vmul.f32 %v2669, %v2434
      %v2734 = vmul.f32 %v2670, %v2437
      %v2735 = vmul.f32 %v2671, %v2440
      %v2736 = vmul.f32 %v2672, %v2443
      %v2737 = vmul.f32 %v2673, %v2446
      %v2738 = vmul.f32 %v2674, %v2449
      %v2739 = vmul.f32 %v2675, %v2452
      %v2740 = vmul.f32 %v2676, %v2455
      %v2741 = vmul.f32 %v2677, %v2458
      %v2742 = vmul.f32 %v2678, %v2461
      %v2743 = vmul.f32 %v2679, %v2464
      %v2744 = vmul.f32 %v2680, %v2467
      %v2745 = vmul.f32 %v2681, %v2470
      %v2746 = vmul.f32 %v2682, %v2473
      %v2747 = vmul.f32 %v2683, %v2476
      %v2748 = vmul.f32 %v2684, %v2479
      %v2749 = vmul.f32 %v2685, %v2482
      %v2750 = vmul.f32 %v2686, %v2485
      %v2751 = vmul.f32 %v2687, %v2488
      %v2752 = vmul.f32 %v2688, %v2491
      %v2753 = vmul.f32 %v2689, %v2494
      %v2754 = vmul.f32 %v2690, %v2497
      %v2755 = vadd.f32 %v2308, %v2691
      %v2756 = vadd.f32 %v2311, %v2692
      %v2757 = vadd.f32 %v2314, %v2693
      %v2758 = vadd.f32 %v2317, %v2694
      %v2759 = vadd.f32 %v2320, %v2695
      %v2760 = vadd.f32 %v2323, %v2696
      %v2761 = vadd.f32 %v2326, %v2697
      %v2762 = vadd.f32 %v2329, %v2698
      %v2763 = vadd.f32 %v2332, %v2699
      %v2764 = vadd.f32 %v2335, %v2700
      %v2765 = vadd.f32 %v2338, %v2701
      %v2766 = vadd.f32 %v2341, %v2702
      %v2767 = vadd.f32 %v2344, %v2703
      %v2768 = vadd.f32 %v2347, %v2704
      %v2769 = vadd.f32 %v2350, %v2705
      %v2770 = vadd.f32 %v2353, %v2706
      %v2771 = vadd.f32 %v2356, %v2707
      %v2772 = vadd.f32 %v2359, %v2708
      %v2773 = vadd.f32 %v2362, %v2709
      %v2774 = vadd.f32 %v2365, %v2710
      %v2775 = vadd.f32 %v2368, %v2711
      %v2776 = vadd.f32 %v2371, %v2712
      %v2777 = vadd.f32 %v2374, %v2713
      %v2778 = vadd.f32 %v2377, %v2714
      %v2779 = vadd.f32 %v2380, %v2715
      %v2780 = vadd.f32 %v2383, %v2716
      %v2781 = vadd.f32 %v2386, %v2717
      %v2782 = vadd.f32 %v2389, %v2718
      %v2783 = vadd.f32 %v2392, %v2719
      %v2784 = vadd.f32 %v2395, %v2720
      %v2785 = vadd.f32 %v2398, %v2721
      %v2786 = vadd.f32 %v2401, %v2722
      %v2787 = vadd.f32 %v2404, %v2723
      %v2788 = vadd.f32 %v2407, %v2724
      %v2789 = vadd.f32 %v2410, %v2725
      %v2790 = vadd.f32 %v2413, %v2726
      %v2791 = vadd.f32 %v2416, %v2727
      %v2792 = vadd.f32 %v2419, %v2728
      %v2793 = vadd.f32 %v2422, %v2729
      %v2794 = vadd.f32 %v2425, %v2730
      %v2795 = vadd.f32 %v2428, %v2731
      %v2796 = vadd.f32 %v2431, %v2732
      %v2797 = vadd.f32 %v2434, %v2733
      %v2798 = vadd.f32 %v2437, %v2734
      %v2799 = vadd.f32 %v2440, %v2735
      %v2800 = vadd.f32 %v2443, %v2736
      %v2801 = vadd.f32 %v2446, %v2737
      %v2802 = vadd.f32 %v2449, %v2738
      %v2803 = vadd.f32 %v2452, %v2739
      %v2804 = vadd.f32 %v2455, %v2740
      %v2805 = vadd.f32 %v2458, %v2741
      %v2806 = vadd.f32 %v2461, %v2742
      %v2807 = vadd.f32 %v2464, %v2743
      %v2808 = vadd.f32 %v2467, %v2744
      %v2809 = vadd.f32 %v2470, %v2745
      %v2810 = vadd.f32 %v2473, %v2746
      %v2811 = vadd.f32 %v2476, %v2747
      %v2812 = vadd.f32 %v2479, %v2748
      %v2813 = vadd.f32 %v2482, %v2749
      %v2814 = vadd.f32 %v2485, %v2750
      %v2815 = vadd.f32 %v2488, %v2751
      %v2816 = vadd.f32 %v2491, %v2752
      %v2817 = vadd.f32 %v2494, %v2753
      %v2818 = vadd.f32 %v2497, %v2754
      %v2819 = vmul.f32 %v2755, 0.7978846
      %v2820 = vmul.f32 %v2756, 0.7978846
      %v2821 = vmul.f32 %v2757, 0.7978846
      %v2822 = vmul.f32 %v2758, 0.7978846
      %v2823 = vmul.f32 %v2759, 0.7978846
      %v2824 = vmul.f32 %v2760, 0.7978846
      %v2825 = vmul.f32 %v2761, 0.7978846
      %v2826 = vmul.f32 %v2762, 0.7978846
      %v2827 = vmul.f32 %v2763, 0.7978846
      %v2828 = vmul.f32 %v2764, 0.7978846
      %v2829 = vmul.f32 %v2765, 0.7978846
      %v2830 = vmul.f32 %v2766, 0.7978846
      %v2831 = vmul.f32 %v2767, 0.7978846
      %v2832 = vmul.f32 %v2768, 0.7978846
      %v2833 = vmul.f32 %v2769, 0.7978846
      %v2834 = vmul.f32 %v2770, 0.7978846
      %v2835 = vmul.f32 %v2771, 0.7978846
      %v2836 = vmul.f32 %v2772, 0.7978846
      %v2837 = vmul.f32 %v2773, 0.7978846
      %v2838 = vmul.f32 %v2774, 0.7978846
      %v2839 = vmul.f32 %v2775, 0.7978846
      %v2840 = vmul.f32 %v2776, 0.7978846
      %v2841 = vmul.f32 %v2777, 0.7978846
      %v2842 = vmul.f32 %v2778, 0.7978846
      %v2843 = vmul.f32 %v2779, 0.7978846
      %v2844 = vmul.f32 %v2780, 0.7978846
      %v2845 = vmul.f32 %v2781, 0.7978846
      %v2846 = vmul.f32 %v2782, 0.7978846
      %v2847 = vmul.f32 %v2783, 0.7978846
      %v2848 = vmul.f32 %v2784, 0.7978846
      %v2849 = vmul.f32 %v2785, 0.7978846
      %v2850 = vmul.f32 %v2786, 0.7978846
      %v2851 = vmul.f32 %v2787, 0.7978846
      %v2852 = vmul.f32 %v2788, 0.7978846
      %v2853 = vmul.f32 %v2789, 0.7978846
      %v2854 = vmul.f32 %v2790, 0.7978846
      %v2855 = vmul.f32 %v2791, 0.7978846
      %v2856 = vmul.f32 %v2792, 0.7978846
      %v2857 = vmul.f32 %v2793, 0.7978846
      %v2858 = vmul.f32 %v2794, 0.7978846
      %v2859 = vmul.f32 %v2795, 0.7978846
      %v2860 = vmul.f32 %v2796, 0.7978846
      %v2861 = vmul.f32 %v2797, 0.7978846
      %v2862 = vmul.f32 %v2798, 0.7978846
      %v2863 = vmul.f32 %v2799, 0.7978846
      %v2864 = vmul.f32 %v2800, 0.7978846
      %v2865 = vmul.f32 %v2801, 0.7978846
      %v2866 = vmul.f32 %v2802, 0.7978846
      %v2867 = vmul.f32 %v2803, 0.7978846
      %v2868 = vmul.f32 %v2804, 0.7978846
      %v2869 = vmul.f32 %v2805, 0.7978846
      %v2870 = vmul.f32 %v2806, 0.7978846
      %v2871 = vmul.f32 %v2807, 0.7978846
      %v2872 = vmul.f32 %v2808, 0.7978846
      %v2873 = vmul.f32 %v2809, 0.7978846
      %v2874 = vmul.f32 %v2810, 0.7978846
      %v2875 = vmul.f32 %v2811, 0.7978846
      %v2876 = vmul.f32 %v2812, 0.7978846
      %v2877 = vmul.f32 %v2813, 0.7978846
      %v2878 = vmul.f32 %v2814, 0.7978846
      %v2879 = vmul.f32 %v2815, 0.7978846
      %v2880 = vmul.f32 %v2816, 0.7978846
      %v2881 = vmul.f32 %v2817, 0.7978846
      %v2882 = vmul.f32 %v2818, 0.7978846
      %v2883 = vtanh.pop %v2819
      %v2884 = vtanh.pop %v2820
      %v2885 = vtanh.pop %v2821
      %v2886 = vtanh.pop %v2822
      %v2887 = vtanh.pop %v2823
      %v2888 = vtanh.pop %v2824
      %v2889 = vtanh.pop %v2825
      %v2890 = vtanh.pop %v2826
      %v2891 = vtanh.pop %v2827
      %v2892 = vtanh.pop %v2828
      %v2893 = vtanh.pop %v2829
      %v2894 = vtanh.pop %v2830
      %v2895 = vtanh.pop %v2831
      %v2896 = vtanh.pop %v2832
      %v2897 = vtanh.pop %v2833
      %v2898 = vtanh.pop %v2834
      %v2899 = vtanh.pop %v2835
      %v2900 = vtanh.pop %v2836
      %v2901 = vtanh.pop %v2837
      %v2902 = vtanh.pop %v2838
      %v2903 = vtanh.pop %v2839
      %v2904 = vtanh.pop %v2840
      %v2905 = vtanh.pop %v2841
      %v2906 = vtanh.pop %v2842
      %v2907 = vtanh.pop %v2843
      %v2908 = vtanh.pop %v2844
      %v2909 = vtanh.pop %v2845
      %v2910 = vtanh.pop %v2846
      %v2911 = vtanh.pop %v2847
      %v2912 = vtanh.pop %v2848
      %v2913 = vtanh.pop %v2849
      %v2914 = vtanh.pop %v2850
      %v2915 = vtanh.pop %v2851
      %v2916 = vtanh.pop %v2852
      %v2917 = vtanh.pop %v2853
      %v2918 = vtanh.pop %v2854
      %v2919 = vtanh.pop %v2855
      %v2920 = vtanh.pop %v2856
      %v2921 = vtanh.pop %v2857
      %v2922 = vtanh.pop %v2858
      %v2923 = vtanh.pop %v2859
      %v2924 = vtanh.pop %v2860
      %v2925 = vtanh.pop %v2861
      %v2926 = vtanh.pop %v2862
      %v2927 = vtanh.pop %v2863
      %v2928 = vtanh.pop %v2864
      %v2929 = vtanh.pop %v2865
      %v2930 = vtanh.pop %v2866
      %v2931 = vtanh.pop %v2867
      %v2932 = vtanh.pop %v2868
      %v2933 = vtanh.pop %v2869
      %v2934 = vtanh.pop %v2870
      %v2935 = vtanh.pop %v2871
      %v2936 = vtanh.pop %v2872
      %v2937 = vtanh.pop %v2873
      %v2938 = vtanh.pop %v2874
      %v2939 = vtanh.pop %v2875
      %v2940 = vtanh.pop %v2876
      %v2941 = vtanh.pop %v2877
      %v2942 = vtanh.pop %v2878
      %v2943 = vtanh.pop %v2879
      %v2944 = vtanh.pop %v2880
      %v2945 = vtanh.pop %v2881
      %v2946 = vtanh.pop %v2882
      %v2947 = vadd.f32 %v2883, 1.0
      %v2948 = vadd.f32 %v2884, 1.0
      %v2949 = vadd.f32 %v2885, 1.0
      %v2950 = vadd.f32 %v2886, 1.0
      %v2951 = vadd.f32 %v2887, 1.0
      %v2952 = vadd.f32 %v2888, 1.0
      %v2953 = vadd.f32 %v2889, 1.0
      %v2954 = vadd.f32 %v2890, 1.0
      %v2955 = vadd.f32 %v2891, 1.0
      %v2956 = vadd.f32 %v2892, 1.0
      %v2957 = vadd.f32 %v2893, 1.0
      %v2958 = vadd.f32 %v2894, 1.0
      %v2959 = vadd.f32 %v2895, 1.0
      %v2960 = vadd.f32 %v2896, 1.0
      %v2961 = vadd.f32 %v2897, 1.0
      %v2962 = vadd.f32 %v2898, 1.0
      %v2963 = vadd.f32 %v2899, 1.0
      %v2964 = vadd.f32 %v2900, 1.0
      %v2965 = vadd.f32 %v2901, 1.0
      %v2966 = vadd.f32 %v2902, 1.0
      %v2967 = vadd.f32 %v2903, 1.0
      %v2968 = vadd.f32 %v2904, 1.0
      %v2969 = vadd.f32 %v2905, 1.0
      %v2970 = vadd.f32 %v2906, 1.0
      %v2971 = vadd.f32 %v2907, 1.0
      %v2972 = vadd.f32 %v2908, 1.0
      %v2973 = vadd.f32 %v2909, 1.0
      %v2974 = vadd.f32 %v2910, 1.0
      %v2975 = vadd.f32 %v2911, 1.0
      %v2976 = vadd.f32 %v2912, 1.0
      %v2977 = vadd.f32 %v2913, 1.0
      %v2978 = vadd.f32 %v2914, 1.0
      %v2979 = vadd.f32 %v2915, 1.0
      %v2980 = vadd.f32 %v2916, 1.0
      %v2981 = vadd.f32 %v2917, 1.0
      %v2982 = vadd.f32 %v2918, 1.0
      %v2983 = vadd.f32 %v2919, 1.0
      %v2984 = vadd.f32 %v2920, 1.0
      %v2985 = vadd.f32 %v2921, 1.0
      %v2986 = vadd.f32 %v2922, 1.0
      %v2987 = vadd.f32 %v2923, 1.0
      %v2988 = vadd.f32 %v2924, 1.0
      %v2989 = vadd.f32 %v2925, 1.0
      %v2990 = vadd.f32 %v2926, 1.0
      %v2991 = vadd.f32 %v2927, 1.0
      %v2992 = vadd.f32 %v2928, 1.0
      %v2993 = vadd.f32 %v2929, 1.0
      %v2994 = vadd.f32 %v2930, 1.0
      %v2995 = vadd.f32 %v2931, 1.0
      %v2996 = vadd.f32 %v2932, 1.0
      %v2997 = vadd.f32 %v2933, 1.0
      %v2998 = vadd.f32 %v2934, 1.0
      %v2999 = vadd.f32 %v2935, 1.0
      %v3000 = vadd.f32 %v2936, 1.0
      %v3001 = vadd.f32 %v2937, 1.0
      %v3002 = vadd.f32 %v2938, 1.0
      %v3003 = vadd.f32 %v2939, 1.0
      %v3004 = vadd.f32 %v2940, 1.0
      %v3005 = vadd.f32 %v2941, 1.0
      %v3006 = vadd.f32 %v2942, 1.0
      %v3007 = vadd.f32 %v2943, 1.0
      %v3008 = vadd.f32 %v2944, 1.0
      %v3009 = vadd.f32 %v2945, 1.0
      %v3010 = vadd.f32 %v2946, 1.0
      %v3011 = vmul.f32 %v2499, %v2947
      %v3012 = vmul.f32 %v2500, %v2948
      %v3013 = vmul.f32 %v2501, %v2949
      %v3014 = vmul.f32 %v2502, %v2950
      %v3015 = vmul.f32 %v2503, %v2951
      %v3016 = vmul.f32 %v2504, %v2952
      %v3017 = vmul.f32 %v2505, %v2953
      %v3018 = vmul.f32 %v2506, %v2954
      %v3019 = vmul.f32 %v2507, %v2955
      %v3020 = vmul.f32 %v2508, %v2956
      %v3021 = vmul.f32 %v2509, %v2957
      %v3022 = vmul.f32 %v2510, %v2958
      %v3023 = vmul.f32 %v2511, %v2959
      %v3024 = vmul.f32 %v2512, %v2960
      %v3025 = vmul.f32 %v2513, %v2961
      %v3026 = vmul.f32 %v2514, %v2962
      %v3027 = vmul.f32 %v2515, %v2963
      %v3028 = vmul.f32 %v2516, %v2964
      %v3029 = vmul.f32 %v2517, %v2965
      %v3030 = vmul.f32 %v2518, %v2966
      %v3031 = vmul.f32 %v2519, %v2967
      %v3032 = vmul.f32 %v2520, %v2968
      %v3033 = vmul.f32 %v2521, %v2969
      %v3034 = vmul.f32 %v2522, %v2970
      %v3035 = vmul.f32 %v2523, %v2971
      %v3036 = vmul.f32 %v2524, %v2972
      %v3037 = vmul.f32 %v2525, %v2973
      %v3038 = vmul.f32 %v2526, %v2974
      %v3039 = vmul.f32 %v2527, %v2975
      %v3040 = vmul.f32 %v2528, %v2976
      %v3041 = vmul.f32 %v2529, %v2977
      %v3042 = vmul.f32 %v2530, %v2978
      %v3043 = vmul.f32 %v2531, %v2979
      %v3044 = vmul.f32 %v2532, %v2980
      %v3045 = vmul.f32 %v2533, %v2981
      %v3046 = vmul.f32 %v2534, %v2982
      %v3047 = vmul.f32 %v2535, %v2983
      %v3048 = vmul.f32 %v2536, %v2984
      %v3049 = vmul.f32 %v2537, %v2985
      %v3050 = vmul.f32 %v2538, %v2986
      %v3051 = vmul.f32 %v2539, %v2987
      %v3052 = vmul.f32 %v2540, %v2988
      %v3053 = vmul.f32 %v2541, %v2989
      %v3054 = vmul.f32 %v2542, %v2990
      %v3055 = vmul.f32 %v2543, %v2991
      %v3056 = vmul.f32 %v2544, %v2992
      %v3057 = vmul.f32 %v2545, %v2993
      %v3058 = vmul.f32 %v2546, %v2994
      %v3059 = vmul.f32 %v2547, %v2995
      %v3060 = vmul.f32 %v2548, %v2996
      %v3061 = vmul.f32 %v2549, %v2997
      %v3062 = vmul.f32 %v2550, %v2998
      %v3063 = vmul.f32 %v2551, %v2999
      %v3064 = vmul.f32 %v2552, %v3000
      %v3065 = vmul.f32 %v2553, %v3001
      %v3066 = vmul.f32 %v2554, %v3002
      %v3067 = vmul.f32 %v2555, %v3003
      %v3068 = vmul.f32 %v2556, %v3004
      %v3069 = vmul.f32 %v2557, %v3005
      %v3070 = vmul.f32 %v2558, %v3006
      %v3071 = vmul.f32 %v2559, %v3007
      %v3072 = vmul.f32 %v2560, %v3008
      %v3073 = vmul.f32 %v2561, %v3009
      %v3074 = vmul.f32 %v2562, %v3010
      %v3075 = vld [vmem:[%s5] sm:$0xff]
      %v3076 = vld [vmem:[%s5 + $0x8] sm:$0xff]
      %v3077 = vld [vmem:[%s5 + $0x10] sm:$0xff]
      %v3078 = vld [vmem:[%s5 + $0x18] sm:$0xff]
      %v3079 = vld [vmem:[%s5 + $0x20] sm:$0xff]
      %v3080 = vld [vmem:[%s5 + $0x28] sm:$0xff]
      %v3081 = vld [vmem:[%s5 + $0x30] sm:$0xff]
      %v3082 = vld [vmem:[%s5 + $0x38] sm:$0xff]
      %v3083 = vld [vmem:[%s5 + $0x40] sm:$0xff]
      %v3084 = vld [vmem:[%s5 + $0x48] sm:$0xff]
      %v3085 = vld [vmem:[%s5 + $0x50] sm:$0xff]
      %v3086 = vld [vmem:[%s5 + $0x58] sm:$0xff]
      %v3087 = vld [vmem:[%s6] sm:$0x1]
      %v3089 = vperm.slane %v3087, 0
      %vm3091 = vcmask 785408
      %v3093 = vsel %vm3091, %v3011, 0
      %v3096 = vsel %vm3091, %v3012, 0
      %v3099 = vsel %vm3091, %v3013, 0
      %v3102 = vsel %vm3091, %v3014, 0
      %v3105 = vsel %vm3091, %v3015, 0
      %v3108 = vsel %vm3091, %v3016, 0
      %v3111 = vsel %vm3091, %v3017, 0
      %v3114 = vsel %vm3091, %v3018, 0
      %v3117 = vsel %vm3091, %v3019, 0
      %v3120 = vsel %vm3091, %v3020, 0
      %v3123 = vsel %vm3091, %v3021, 0
      %v3126 = vsel %vm3091, %v3022, 0
      %v3129 = vsel %vm3091, %v3023, 0
      %v3132 = vsel %vm3091, %v3024, 0
      %v3135 = vsel %vm3091, %v3025, 0
      %v3138 = vsel %vm3091, %v3026, 0
      %v3141 = vsel %vm3091, %v3027, 0
      %v3144 = vsel %vm3091, %v3028, 0
      %v3147 = vsel %vm3091, %v3029, 0
      %v3150 = vsel %vm3091, %v3030, 0
      %v3153 = vsel %vm3091, %v3031, 0
      %v3156 = vsel %vm3091, %v3032, 0
      %v3159 = vsel %vm3091, %v3033, 0
      %v3162 = vsel %vm3091, %v3034, 0
      %v3165 = vsel %vm3091, %v3035, 0
      %v3168 = vsel %vm3091, %v3036, 0
      %v3171 = vsel %vm3091, %v3037, 0
      %v3174 = vsel %vm3091, %v3038, 0
      %v3177 = vsel %vm3091, %v3039, 0
      %v3180 = vsel %vm3091, %v3040, 0
      %v3183 = vsel %vm3091, %v3041, 0
      %v3186 = vsel %vm3091, %v3042, 0
      %v3189 = vsel %vm3091, %v3043, 0
      %v3192 = vsel %vm3091, %v3044, 0
      %v3195 = vsel %vm3091, %v3045, 0
      %v3198 = vsel %vm3091, %v3046, 0
      %v3201 = vsel %vm3091, %v3047, 0
      %v3204 = vsel %vm3091, %v3048, 0
      %v3207 = vsel %vm3091, %v3049, 0
      %v3210 = vsel %vm3091, %v3050, 0
      %v3213 = vsel %vm3091, %v3051, 0
      %v3216 = vsel %vm3091, %v3052, 0
      %v3219 = vsel %vm3091, %v3053, 0
      %v3222 = vsel %vm3091, %v3054, 0
      %v3225 = vsel %vm3091, %v3055, 0
      %v3228 = vsel %vm3091, %v3056, 0
      %v3231 = vsel %vm3091, %v3057, 0
      %v3234 = vsel %vm3091, %v3058, 0
      %v3237 = vsel %vm3091, %v3059, 0
      %v3240 = vsel %vm3091, %v3060, 0
      %v3243 = vsel %vm3091, %v3061, 0
      %v3246 = vsel %vm3091, %v3062, 0
      %v3249 = vsel %vm3091, %v3063, 0
      %v3252 = vsel %vm3091, %v3064, 0
      %v3255 = vsel %vm3091, %v3065, 0
      %v3258 = vsel %vm3091, %v3066, 0
      %v3261 = vsel %vm3091, %v3067, 0
      %v3264 = vsel %vm3091, %v3068, 0
      %v3267 = vsel %vm3091, %v3069, 0
      %v3270 = vsel %vm3091, %v3070, 0
      %v3273 = vsel %vm3091, %v3071, 0
      %v3276 = vsel %vm3091, %v3072, 0
      %v3279 = vsel %vm3091, %v3073, 0
      %v3282 = vsel %vm3091, %v3074, 0
      %3284 = vmatpush.msra.mxu0 0.0
      %3285 = vmatpush.msra.mxu0 0.0
      %3286 = vmatpush.msra.mxu0 0.0
      %3287 = vmatpush.msra.mxu0 0.0
      %3288 = vmatpush.msra.mxu0 %v3086
      %3289 = vmatpush.msra.mxu0 %v3085
      %3290 = vmatpush.msra.mxu0 %v3084
      %3291 = vmatpush.msra.mxu0 %v3083
      %3292 = vmatpush.msra.mxu0 %v3082
      %3293 = vmatpush.msra.mxu0 %v3081
      %3294 = vmatpush.msra.mxu0 %v3080
      %3295 = vmatpush.msra.mxu0 %v3079
      %3296 = vmatpush.msra.mxu0 %v3078
      %3297 = vmatpush.msra.mxu0 %v3077
      %3298 = vmatpush.msra.mxu0 %v3076
      %3299 = vmatpush.msra.mxu0 %v3075
      %3300 = vmatmul.f32.gmra.mxu0 %v3093
      %v3301 = vpop.f32.mrf.mxu0
      %v3302 = vadd.f32 %v3089, %v3301
      %3303 = vmatmul.f32.gmra.mxu0 %v3096
      %v3304 = vpop.f32.mrf.mxu0
      %v3305 = vadd.f32 %v3089, %v3304
      %3306 = vmatmul.f32.gmra.mxu0 %v3099
      %v3307 = vpop.f32.mrf.mxu0
      %v3308 = vadd.f32 %v3089, %v3307
      %3309 = vmatmul.f32.gmra.mxu0 %v3102
      %v3310 = vpop.f32.mrf.mxu0
      %v3311 = vadd.f32 %v3089, %v3310
      %3312 = vmatmul.f32.gmra.mxu0 %v3105
      %v3313 = vpop.f32.mrf.mxu0
      %v3314 = vadd.f32 %v3089, %v3313
      %3315 = vmatmul.f32.gmra.mxu0 %v3108
      %v3316 = vpop.f32.mrf.mxu0
      %v3317 = vadd.f32 %v3089, %v3316
      %3318 = vmatmul.f32.gmra.mxu0 %v3111
      %v3319 = vpop.f32.mrf.mxu0
      %v3320 = vadd.f32 %v3089, %v3319
      %3321 = vmatmul.f32.gmra.mxu0 %v3114
      %v3322 = vpop.f32.mrf.mxu0
      %v3323 = vadd.f32 %v3089, %v3322
      %3324 = vmatmul.f32.gmra.mxu0 %v3117
      %v3325 = vpop.f32.mrf.mxu0
      %v3326 = vadd.f32 %v3089, %v3325
      %3327 = vmatmul.f32.gmra.mxu0 %v3120
      %v3328 = vpop.f32.mrf.mxu0
      %v3329 = vadd.f32 %v3089, %v3328
      %3330 = vmatmul.f32.gmra.mxu0 %v3123
      %v3331 = vpop.f32.mrf.mxu0
      %v3332 = vadd.f32 %v3089, %v3331
      %3333 = vmatmul.f32.gmra.mxu0 %v3126
      %v3334 = vpop.f32.mrf.mxu0
      %v3335 = vadd.f32 %v3089, %v3334
      %3336 = vmatmul.f32.gmra.mxu0 %v3129
      %v3337 = vpop.f32.mrf.mxu0
      %v3338 = vadd.f32 %v3089, %v3337
      %3339 = vmatmul.f32.gmra.mxu0 %v3132
      %v3340 = vpop.f32.mrf.mxu0
      %v3341 = vadd.f32 %v3089, %v3340
      %3342 = vmatmul.f32.gmra.mxu0 %v3135
      %v3343 = vpop.f32.mrf.mxu0
      %v3344 = vadd.f32 %v3089, %v3343
      %3345 = vmatmul.f32.gmra.mxu0 %v3138
      %v3346 = vpop.f32.mrf.mxu0
      %v3347 = vadd.f32 %v3089, %v3346
      %3348 = vmatmul.f32.gmra.mxu0 %v3141
      %v3349 = vpop.f32.mrf.mxu0
      %v3350 = vadd.f32 %v3089, %v3349
      %3351 = vmatmul.f32.gmra.mxu0 %v3144
      %v3352 = vpop.f32.mrf.mxu0
      %v3353 = vadd.f32 %v3089, %v3352
      %3354 = vmatmul.f32.gmra.mxu0 %v3147
      %v3355 = vpop.f32.mrf.mxu0
      %v3356 = vadd.f32 %v3089, %v3355
      %3357 = vmatmul.f32.gmra.mxu0 %v3150
      %v3358 = vpop.f32.mrf.mxu0
      %v3359 = vadd.f32 %v3089, %v3358
      %3360 = vmatmul.f32.gmra.mxu0 %v3153
      %v3361 = vpop.f32.mrf.mxu0
      %v3362 = vadd.f32 %v3089, %v3361
      %3363 = vmatmul.f32.gmra.mxu0 %v3156
      %v3364 = vpop.f32.mrf.mxu0
      %v3365 = vadd.f32 %v3089, %v3364
      %3366 = vmatmul.f32.gmra.mxu0 %v3159
      %v3367 = vpop.f32.mrf.mxu0
      %v3368 = vadd.f32 %v3089, %v3367
      %3369 = vmatmul.f32.gmra.mxu0 %v3162
      %v3370 = vpop.f32.mrf.mxu0
      %v3371 = vadd.f32 %v3089, %v3370
      %3372 = vmatmul.f32.gmra.mxu0 %v3165
      %v3373 = vpop.f32.mrf.mxu0
      %v3374 = vadd.f32 %v3089, %v3373
      %3375 = vmatmul.f32.gmra.mxu0 %v3168
      %v3376 = vpop.f32.mrf.mxu0
      %v3377 = vadd.f32 %v3089, %v3376
      %3378 = vmatmul.f32.gmra.mxu0 %v3171
      %v3379 = vpop.f32.mrf.mxu0
      %v3380 = vadd.f32 %v3089, %v3379
      %3381 = vmatmul.f32.gmra.mxu0 %v3174
      %v3382 = vpop.f32.mrf.mxu0
      %v3383 = vadd.f32 %v3089, %v3382
      %3384 = vmatmul.f32.gmra.mxu0 %v3177
      %v3385 = vpop.f32.mrf.mxu0
      %v3386 = vadd.f32 %v3089, %v3385
      %3387 = vmatmul.f32.gmra.mxu0 %v3180
      %v3388 = vpop.f32.mrf.mxu0
      %v3389 = vadd.f32 %v3089, %v3388
      %3390 = vmatmul.f32.gmra.mxu0 %v3183
      %v3391 = vpop.f32.mrf.mxu0
      %v3392 = vadd.f32 %v3089, %v3391
      %3393 = vmatmul.f32.gmra.mxu0 %v3186
      %v3394 = vpop.f32.mrf.mxu0
      %v3395 = vadd.f32 %v3089, %v3394
      %3396 = vmatmul.f32.gmra.mxu0 %v3189
      %v3397 = vpop.f32.mrf.mxu0
      %v3398 = vadd.f32 %v3089, %v3397
      %3399 = vmatmul.f32.gmra.mxu0 %v3192
      %v3400 = vpop.f32.mrf.mxu0
      %v3401 = vadd.f32 %v3089, %v3400
      %3402 = vmatmul.f32.gmra.mxu0 %v3195
      %v3403 = vpop.f32.mrf.mxu0
      %v3404 = vadd.f32 %v3089, %v3403
      %3405 = vmatmul.f32.gmra.mxu0 %v3198
      %v3406 = vpop.f32.mrf.mxu0
      %v3407 = vadd.f32 %v3089, %v3406
      %3408 = vmatmul.f32.gmra.mxu0 %v3201
      %v3409 = vpop.f32.mrf.mxu0
      %v3410 = vadd.f32 %v3089, %v3409
      %3411 = vmatmul.f32.gmra.mxu0 %v3204
      %v3412 = vpop.f32.mrf.mxu0
      %v3413 = vadd.f32 %v3089, %v3412
      %3414 = vmatmul.f32.gmra.mxu0 %v3207
      %v3415 = vpop.f32.mrf.mxu0
      %v3416 = vadd.f32 %v3089, %v3415
      %3417 = vmatmul.f32.gmra.mxu0 %v3210
      %v3418 = vpop.f32.mrf.mxu0
      %v3419 = vadd.f32 %v3089, %v3418
      %3420 = vmatmul.f32.gmra.mxu0 %v3213
      %v3421 = vpop.f32.mrf.mxu0
      %v3422 = vadd.f32 %v3089, %v3421
      %3423 = vmatmul.f32.gmra.mxu0 %v3216
      %v3424 = vpop.f32.mrf.mxu0
      %v3425 = vadd.f32 %v3089, %v3424
      %3426 = vmatmul.f32.gmra.mxu0 %v3219
      %v3427 = vpop.f32.mrf.mxu0
      %v3428 = vadd.f32 %v3089, %v3427
      %3429 = vmatmul.f32.gmra.mxu0 %v3222
      %v3430 = vpop.f32.mrf.mxu0
      %v3431 = vadd.f32 %v3089, %v3430
      %3432 = vmatmul.f32.gmra.mxu0 %v3225
      %v3433 = vpop.f32.mrf.mxu0
      %v3434 = vadd.f32 %v3089, %v3433
      %3435 = vmatmul.f32.gmra.mxu0 %v3228
      %v3436 = vpop.f32.mrf.mxu0
      %v3437 = vadd.f32 %v3089, %v3436
      %3438 = vmatmul.f32.gmra.mxu0 %v3231
      %v3439 = vpop.f32.mrf.mxu0
      %v3440 = vadd.f32 %v3089, %v3439
      %3441 = vmatmul.f32.gmra.mxu0 %v3234
      %v3442 = vpop.f32.mrf.mxu0
      %v3443 = vadd.f32 %v3089, %v3442
      %3444 = vmatmul.f32.gmra.mxu0 %v3237
      %v3445 = vpop.f32.mrf.mxu0
      %v3446 = vadd.f32 %v3089, %v3445
      %3447 = vmatmul.f32.gmra.mxu0 %v3240
      %v3448 = vpop.f32.mrf.mxu0
      %v3449 = vadd.f32 %v3089, %v3448
      %3450 = vmatmul.f32.gmra.mxu0 %v3243
      %v3451 = vpop.f32.mrf.mxu0
      %v3452 = vadd.f32 %v3089, %v3451
      %3453 = vmatmul.f32.gmra.mxu0 %v3246
      %v3454 = vpop.f32.mrf.mxu0
      %v3455 = vadd.f32 %v3089, %v3454
      %3456 = vmatmul.f32.gmra.mxu0 %v3249
      %v3457 = vpop.f32.mrf.mxu0
      %v3458 = vadd.f32 %v3089, %v3457
      %3459 = vmatmul.f32.gmra.mxu0 %v3252
      %v3460 = vpop.f32.mrf.mxu0
      %v3461 = vadd.f32 %v3089, %v3460
      %3462 = vmatmul.f32.gmra.mxu0 %v3255
      %v3463 = vpop.f32.mrf.mxu0
      %v3464 = vadd.f32 %v3089, %v3463
      %3465 = vmatmul.f32.gmra.mxu0 %v3258
      %v3466 = vpop.f32.mrf.mxu0
      %v3467 = vadd.f32 %v3089, %v3466
      %3468 = vmatmul.f32.gmra.mxu0 %v3261
      %v3469 = vpop.f32.mrf.mxu0
      %v3470 = vadd.f32 %v3089, %v3469
      %3471 = vmatmul.f32.gmra.mxu0 %v3264
      %v3472 = vpop.f32.mrf.mxu0
      %v3473 = vadd.f32 %v3089, %v3472
      %3474 = vmatmul.f32.gmra.mxu0 %v3267
      %v3475 = vpop.f32.mrf.mxu0
      %v3476 = vadd.f32 %v3089, %v3475
      %3477 = vmatmul.f32.gmra.mxu0 %v3270
      %v3478 = vpop.f32.mrf.mxu0
      %v3479 = vadd.f32 %v3089, %v3478
      %3480 = vmatmul.f32.gmra.mxu0 %v3273
      %v3481 = vpop.f32.mrf.mxu0
      %v3482 = vadd.f32 %v3089, %v3481
      %3483 = vmatmul.f32.gmra.mxu0 %v3276
      %v3484 = vpop.f32.mrf.mxu0
      %v3485 = vadd.f32 %v3089, %v3484
      %3486 = vmatmul.f32.gmra.mxu0 %v3279
      %v3487 = vpop.f32.mrf.mxu0
      %v3488 = vadd.f32 %v3089, %v3487
      %3489 = vmatmul.f32.gmra.mxu0 %v3282
      %v3490 = vpop.f32.mrf.mxu0
      %v3491 = vadd.f32 %v3089, %v3490
      %3492 = vdwg.mxu0
      %v3493 = vadd.f32 %v282, %v3302
      %v3494 = vadd.f32 %v283, %v3305
      %v3495 = vadd.f32 %v284, %v3308
      %v3496 = vadd.f32 %v285, %v3311
      %v3497 = vadd.f32 %v286, %v3314
      %v3498 = vadd.f32 %v287, %v3317
      %v3499 = vadd.f32 %v288, %v3320
      %v3500 = vadd.f32 %v289, %v3323
      %v3501 = vadd.f32 %v290, %v3326
      %v3502 = vadd.f32 %v291, %v3329
      %v3503 = vadd.f32 %v292, %v3332
      %v3504 = vadd.f32 %v293, %v3335
      %v3505 = vadd.f32 %v294, %v3338
      %v3506 = vadd.f32 %v295, %v3341
      %v3507 = vadd.f32 %v296, %v3344
      %v3508 = vadd.f32 %v297, %v3347
      %v3509 = vadd.f32 %v298, %v3350
      %v3510 = vadd.f32 %v299, %v3353
      %v3511 = vadd.f32 %v300, %v3356
      %v3512 = vadd.f32 %v301, %v3359
      %v3513 = vadd.f32 %v302, %v3362
      %v3514 = vadd.f32 %v303, %v3365
      %v3515 = vadd.f32 %v304, %v3368
      %v3516 = vadd.f32 %v305, %v3371
      %v3517 = vadd.f32 %v306, %v3374
      %v3518 = vadd.f32 %v307, %v3377
      %v3519 = vadd.f32 %v308, %v3380
      %v3520 = vadd.f32 %v309, %v3383
      %v3521 = vadd.f32 %v310, %v3386
      %v3522 = vadd.f32 %v311, %v3389
      %v3523 = vadd.f32 %v312, %v3392
      %v3524 = vadd.f32 %v313, %v3395
      %v3525 = vadd.f32 %v314, %v3398
      %v3526 = vadd.f32 %v315, %v3401
      %v3527 = vadd.f32 %v316, %v3404
      %v3528 = vadd.f32 %v317, %v3407
      %v3529 = vadd.f32 %v318, %v3410
      %v3530 = vadd.f32 %v319, %v3413
      %v3531 = vadd.f32 %v320, %v3416
      %v3532 = vadd.f32 %v321, %v3419
      %v3533 = vadd.f32 %v322, %v3422
      %v3534 = vadd.f32 %v323, %v3425
      %v3535 = vadd.f32 %v324, %v3428
      %v3536 = vadd.f32 %v325, %v3431
      %v3537 = vadd.f32 %v326, %v3434
      %v3538 = vadd.f32 %v327, %v3437
      %v3539 = vadd.f32 %v328, %v3440
      %v3540 = vadd.f32 %v329, %v3443
      %v3541 = vadd.f32 %v330, %v3446
      %v3542 = vadd.f32 %v331, %v3449
      %v3543 = vadd.f32 %v332, %v3452
      %v3544 = vadd.f32 %v333, %v3455
      %v3545 = vadd.f32 %v334, %v3458
      %v3546 = vadd.f32 %v335, %v3461
      %v3547 = vadd.f32 %v336, %v3464
      %v3548 = vadd.f32 %v337, %v3467
      %v3549 = vadd.f32 %v338, %v3470
      %v3550 = vadd.f32 %v339, %v3473
      %v3551 = vadd.f32 %v340, %v3476
      %v3552 = vadd.f32 %v341, %v3479
      %v3553 = vadd.f32 %v342, %v3482
      %v3554 = vadd.f32 %v343, %v3485
      %v3555 = vadd.f32 %v344, %v3488
      %v3556 = vadd.f32 %v345, %v3491
      %3557 = vst.msk [vmem:[%s280] sm:$0xff] %vm346, %v3493
      %3558 = vst.msk [vmem:[%s280 + $0x8] sm:$0xff] %vm346, %v3494
      %3559 = vst.msk [vmem:[%s280 + $0x10] sm:$0xff] %vm346, %v3495
      %3560 = vst.msk [vmem:[%s280 + $0x18] sm:$0xff] %vm346, %v3496
      %3561 = vst.msk [vmem:[%s280 + $0x20] sm:$0xff] %vm346, %v3497
      %3562 = vst.msk [vmem:[%s280 + $0x28] sm:$0xff] %vm346, %v3498
      %3563 = vst.msk [vmem:[%s280 + $0x30] sm:$0xff] %vm346, %v3499
      %3564 = vst.msk [vmem:[%s280 + $0x38] sm:$0xff] %vm346, %v3500
      %3565 = vst.msk [vmem:[%s280 + $0x40] sm:$0xff] %vm346, %v3501
      %3566 = vst.msk [vmem:[%s280 + $0x48] sm:$0xff] %vm346, %v3502
      %3567 = vst.msk [vmem:[%s280 + $0x50] sm:$0xff] %vm346, %v3503
      %3568 = vst.msk [vmem:[%s280 + $0x58] sm:$0xff] %vm346, %v3504
      %3569 = vst.msk [vmem:[%s280 + $0x60] sm:$0xff] %vm346, %v3505
      %3570 = vst.msk [vmem:[%s280 + $0x68] sm:$0xff] %vm346, %v3506
      %3571 = vst.msk [vmem:[%s280 + $0x70] sm:$0xff] %vm346, %v3507
      %3572 = vst.msk [vmem:[%s280 + $0x78] sm:$0xff] %vm346, %v3508
      %3573 = vst.msk [vmem:[%s280 + $0x80] sm:$0xff] %vm346, %v3509
      %3574 = vst.msk [vmem:[%s280 + $0x88] sm:$0xff] %vm346, %v3510
      %3575 = vst.msk [vmem:[%s280 + $0x90] sm:$0xff] %vm346, %v3511
      %3576 = vst.msk [vmem:[%s280 + $0x98] sm:$0xff] %vm346, %v3512
      %3577 = vst.msk [vmem:[%s280 + $0xa0] sm:$0xff] %vm346, %v3513
      %3578 = vst.msk [vmem:[%s280 + $0xa8] sm:$0xff] %vm346, %v3514
      %3579 = vst.msk [vmem:[%s280 + $0xb0] sm:$0xff] %vm346, %v3515
      %3580 = vst.msk [vmem:[%s280 + $0xb8] sm:$0xff] %vm346, %v3516
      %3581 = vst.msk [vmem:[%s280 + $0xc0] sm:$0xff] %vm346, %v3517
      %3582 = vst.msk [vmem:[%s280 + $0xc8] sm:$0xff] %vm346, %v3518
      %3583 = vst.msk [vmem:[%s280 + $0xd0] sm:$0xff] %vm346, %v3519
      %3584 = vst.msk [vmem:[%s280 + $0xd8] sm:$0xff] %vm346, %v3520
      %3585 = vst.msk [vmem:[%s280 + $0xe0] sm:$0xff] %vm346, %v3521
      %3586 = vst.msk [vmem:[%s280 + $0xe8] sm:$0xff] %vm346, %v3522
      %3587 = vst.msk [vmem:[%s280 + $0xf0] sm:$0xff] %vm346, %v3523
      %3588 = vst.msk [vmem:[%s280 + $0xf8] sm:$0xff] %vm346, %v3524
      %3589 = vst.msk [vmem:[%s280 + $0x100] sm:$0xff] %vm346, %v3525
      %3590 = vst.msk [vmem:[%s280 + $0x108] sm:$0xff] %vm346, %v3526
      %3591 = vst.msk [vmem:[%s280 + $0x110] sm:$0xff] %vm346, %v3527
      %3592 = vst.msk [vmem:[%s280 + $0x118] sm:$0xff] %vm346, %v3528
      %3593 = vst.msk [vmem:[%s280 + $0x120] sm:$0xff] %vm346, %v3529
      %3594 = vst.msk [vmem:[%s280 + $0x128] sm:$0xff] %vm346, %v3530
      %3595 = vst.msk [vmem:[%s280 + $0x130] sm:$0xff] %vm346, %v3531
      %3596 = vst.msk [vmem:[%s280 + $0x138] sm:$0xff] %vm346, %v3532
      %3597 = vst.msk [vmem:[%s280 + $0x140] sm:$0xff] %vm346, %v3533
      %3598 = vst.msk [vmem:[%s280 + $0x148] sm:$0xff] %vm346, %v3534
      %3599 = vst.msk [vmem:[%s280 + $0x150] sm:$0xff] %vm346, %v3535
      %3600 = vst.msk [vmem:[%s280 + $0x158] sm:$0xff] %vm346, %v3536
      %3601 = vst.msk [vmem:[%s280 + $0x160] sm:$0xff] %vm346, %v3537
      %3602 = vst.msk [vmem:[%s280 + $0x168] sm:$0xff] %vm346, %v3538
      %3603 = vst.msk [vmem:[%s280 + $0x170] sm:$0xff] %vm346, %v3539
      %3604 = vst.msk [vmem:[%s280 + $0x178] sm:$0xff] %vm346, %v3540
      %3605 = vst.msk [vmem:[%s280 + $0x180] sm:$0xff] %vm346, %v3541
      %3606 = vst.msk [vmem:[%s280 + $0x188] sm:$0xff] %vm346, %v3542
      %3607 = vst.msk [vmem:[%s280 + $0x190] sm:$0xff] %vm346, %v3543
      %3608 = vst.msk [vmem:[%s280 + $0x198] sm:$0xff] %vm346, %v3544
      %3609 = vst.msk [vmem:[%s280 + $0x1a0] sm:$0xff] %vm346, %v3545
      %3610 = vst.msk [vmem:[%s280 + $0x1a8] sm:$0xff] %vm346, %v3546
      %3611 = vst.msk [vmem:[%s280 + $0x1b0] sm:$0xff] %vm346, %v3547
      %3612 = vst.msk [vmem:[%s280 + $0x1b8] sm:$0xff] %vm346, %v3548
      %3613 = vst.msk [vmem:[%s280 + $0x1c0] sm:$0xff] %vm346, %v3549
      %3614 = vst.msk [vmem:[%s280 + $0x1c8] sm:$0xff] %vm346, %v3550
      %3615 = vst.msk [vmem:[%s280 + $0x1d0] sm:$0xff] %vm346, %v3551
      %3616 = vst.msk [vmem:[%s280 + $0x1d8] sm:$0xff] %vm346, %v3552
      %3617 = vst.msk [vmem:[%s280 + $0x1e0] sm:$0xff] %vm346, %v3553
      %3618 = vst.msk [vmem:[%s280 + $0x1e8] sm:$0xff] %vm346, %v3554
      %3619 = vst.msk [vmem:[%s280 + $0x1f0] sm:$0xff] %vm346, %v3555
      %3620 = vst.msk [vmem:[%s280 + $0x1f8] sm:$0xff] %vm346, %v3556
      %s3621 = smul.u32 64, %s18
      %p3622 = scmp.lt.s32.totalorder %s3621, 127
      %s3623 = scalar_select %p3622, %s3621, 127
      %s3624 = smul.addr %s3623, 8
      %s3625 = scalar_lea.vmem %s7, %s3624
      // Predicated region
      $region49: #{ssmlp_forward.38} parent=47 // pred_check
        %p3626 = pneg %p188
      $region50: #{ssmlp_forward.38} parent=47 // pred_check_branch
        %3628 = sbr.rel (%p3626) target = $region52
      $region51: #{ssmlp_forward.38} parent=47 // pred_region
        %s3629 = smul.u32 64, %s18
      $region52: #{ssmlp_forward.38} parent=47 // pred_fallthru
        _
    $region48: #{ssmlp_forward.38} parent=5 // pred_fallthru
      _
    %p3630 = scmp.le.s32.totalorder 2, %s13
    // Predicated region
    $region53: #{ssmlp_forward.38} parent=5 // pred_check
      %p3631 = pneg %p3630
    $region54: #{ssmlp_forward.38} parent=5 // pred_check_branch
      %3633 = sbr.rel (%p3631) target = $region56
    $region55: #{ssmlp_forward.38} parent=5 // pred_region
      %s3634 = ssub.s32 %s13, 2
      // Predicated region
      $region57: #{ssmlp_forward.38} parent=55 // pred_check
        %p3635 = pneg %p194
      $region58: #{ssmlp_forward.38} parent=55 // pred_check_branch
        %3637 = sbr.rel (%p3635) target = $region60
      $region59: #{ssmlp_forward.38} parent=55 // pred_region
        %s3638 = smul.u32 64, %s19
        %p3639 = scmp.lt.s32.totalorder %s3638, 127
        %s3640 = scalar_select %p3639, %s3638, 127
        %s3641 = smul.addr %s3640, 8
        %s3642 = scalar_lea.vmem %s7, %s3641
      $region60: #{ssmlp_forward.38} parent=55 // pred_fallthru
        _
    $region56: #{ssmlp_forward.38} parent=5 // pred_fallthru
      _
  $region6: #{ssmlp_forward.38} parent=0 // loop_footer
    %s17 = sadd.s32 1, %s13
  $region7: #{ssmlp_forward.38} parent=0 // loop_footer_branch
    %12 = sbr.rel target = $region3
  $region8: #{ssmlp_forward.38} parent=0 // loop_exit
    _

</llo_original>
